<compile_context>
chip_gen: v7x
topology: tpu7x:2x2x1
jax: 0.10.0
libtpu: 0.0.40
codegen_flags: <defaults>
</compile_context>

<pallas_src>
import jax
import jax.numpy as jnp
from jax.experimental import pallas as pl
from jax.experimental.pallas import tpu as pltpu

KSIZE = 4
STRIDE = 2
PAD = 1
EPS = 1e-5
LANE = 128  # lane-dense channel padding


def _round_up(v, m):
    return (v + m - 1) // m * m


def _pick_batch_group(n, ho, wo, target_rows=256):
    """Largest divisor of n whose GEMM-M (bn*ho*wo) stays <= target_rows
    (always >= one batch element).  Fills the MXU rows on v6e/v7x; for larger
    batches the grid stays > 1 so both v7x TensorCores get work."""
    bn = 1
    for cand in range(1, n + 1):
        if n % cand == 0 and cand * ho * wo <= max(target_rows, ho * wo):
            bn = cand
    return bn


# ----------------------------------------------------------------------------
# Fused kernel: LeakyReLU+Conv2d(s=2)  ->  ReLU+ConvTranspose2d(s=2) + BN sums
# ----------------------------------------------------------------------------
def _fused_kernel(xph_ref, wd_ref, wu_ref, y_ref, stat_ref, dpad_ref):
    """One batch group per grid step.

    xph_ref : (4, BN, HO+1, WQ, CI) f32   2x2 space-to-depth phases of padded x
    wd_ref  : (4, 4*CI, CM) bf16          down weights, phase 2*ph+pw, taps K-stacked
    wu_ref  : (4, 4*CM, CO) bf16          up weights,   phase 2*r+s,  taps K-stacked
    y_ref   : (4, BN, HO*WO, CO) f32      pre-BN up output, 4 sub-pixel phases
    stat_ref: (1, 2, CO) f32              per-step per-channel [sum, sum of squares]
    dpad_ref: (BN, HO+2, WP, CM) bf16     VMEM scratch: ReLU'd, zero-padded down out
    """
    _, bn, hp1, _, ci = xph_ref.shape
    ho = hp1 - 1
    howo = y_ref.shape[2]
    wo = howo // ho
    co = y_ref.shape[3]
    wp = dpad_ref.shape[2]
    cm = dpad_ref.shape[3]
    m = bn * ho * wo

    # ---- down: LeakyReLU(0.2) + Conv2d(k=4,s=2,p=1) as 4 K-stacked GEMMs ----
    acc_d = jnp.zeros((m, cm), jnp.float32)
    for ph in range(2):
        for pw in range(2):
            xp = xph_ref[2 * ph + pw]                          # (BN,HO+1,WQ,CI) f32
            xp = jnp.where(xp > 0, xp, 0.2 * xp).astype(jnp.bfloat16)  # cast hoisted
            win = jnp.concatenate(
                [xp[:, a:a + ho, b:b + wo, :].reshape(m, ci)
                 for a in range(2) for b in range(2)], axis=1)          # (M, 4*CI)
            acc_d = acc_d + jnp.dot(win, wd_ref[2 * ph + pw],
                                    preferred_element_type=jnp.float32)

    # up-path ReLU fused here; write interior of the bf16 scratch and zero only
    # the 1-pixel halo the up windows actually read (re-done each step so the
    # kernel stays correct under "parallel" grid sharding).
    zrow = jnp.zeros((bn, 1, wp, cm), dpad_ref.dtype)
    zcol = jnp.zeros((bn, ho + 2, 1, cm), dpad_ref.dtype)
    dpad_ref[:, 0:1, :, :] = zrow
    dpad_ref[:, ho + 1:ho + 2, :, :] = zrow
    dpad_ref[:, :, 0:1, :] = zcol
    dpad_ref[:, :, wo + 1:wo + 2, :] = zcol
    dpad_ref[:, 1:1 + ho, 1:1 + wo, :] = (
        jnp.maximum(acc_d, 0.0).reshape(bn, ho, wo, cm).astype(dpad_ref.dtype))

    # ---- up: ConvTranspose2d(k=4,s=2,p=1) via sub-pixel phases + BN sums ----
    d = dpad_ref[...]                                          # (BN,HO+2,WP,CM) bf16
    s_sum = jnp.zeros((1, co), jnp.float32)
    s_sq = jnp.zeros((1, co), jnp.float32)
    for r in range(2):
        for s in range(2):
            win = jnp.concatenate(
                [d[:, r + a:r + a + ho, s + b:s + b + wo, :].reshape(m, cm)
                 for a in range(2) for b in range(2)], axis=1)          # (M, 4*CM)
            # out[2i+r, 2j+s] = sum_{a,b} d_pad[i+r+a, j+s+b] @ W[3-r-2a, 3-s-2b]
            acc = jnp.dot(win, wu_ref[2 * r + s],
                          preferred_element_type=jnp.float32)           # (M, CO)
            y_ref[2 * r + s] = acc.reshape(bn, howo, co)
            s_sum = s_sum + jnp.sum(acc, axis=0, keepdims=True)
            s_sq = s_sq + jnp.sum(acc * acc, axis=0, keepdims=True)
    stat_ref[0, 0:1, :] = s_sum
    stat_ref[0, 1:2, :] = s_sq


# ----------------------------------------------------------------------------
# pallas_call wrapper
# ----------------------------------------------------------------------------
def _fused_call(xph, wd4, wu4, wo, bn):
    _, n, hp1, wq, ci = xph.shape
    ho = hp1 - 1
    cm = wd4.shape[2]
    co = wu4.shape[2]
    g = n // bn
    wp = _round_up(wo + 2, 8)

    flops = 2 * n * ho * wo * 16 * (ci * cm + cm * co)
    bytes_accessed = (xph.size * 4 + wd4.size * 2 + wu4.size * 2
                      + 4 * n * ho * wo * co * 4 + g * 2 * co * 4)

    return pl.pallas_call(
        _fused_kernel,
        out_shape=(jax.ShapeDtypeStruct((4, n, ho * wo, co), jnp.float32),
                   jax.ShapeDtypeStruct((g, 2, co), jnp.float32)),
        grid=(g,),
        in_specs=[
            pl.BlockSpec((4, bn, hp1, wq, ci), lambda i: (0, i, 0, 0, 0)),
            pl.BlockSpec((4, 4 * ci, cm), lambda i: (0, 0, 0)),   # resident weights
            pl.BlockSpec((4, 4 * cm, co), lambda i: (0, 0, 0)),   # resident weights
        ],
        out_specs=(pl.BlockSpec((4, bn, ho * wo, co), lambda i: (0, i, 0, 0)),
                   pl.BlockSpec((1, 2, co), lambda i: (i, 0, 0))),
        scratch_shapes=[pltpu.VMEM((bn, ho + 2, wp, cm), jnp.bfloat16)],
        compiler_params=pltpu.CompilerParams(dimension_semantics=("parallel",)),
        cost_estimate=pl.CostEstimate(flops=flops, transcendentals=0,
                                      bytes_accessed=bytes_accessed),
    )(xph, wd4, wu4)


# ----------------------------------------------------------------------------
# Forward pass (JAX glue is O(input)/O(params) layout only; GEMMs live in Pallas)
# ----------------------------------------------------------------------------
def unet_innermost_forward(x, params):
    w_down, w_up, gamma, beta = params
    n, c_in, h, w = x.shape
    inner_nc, outer_nc = w_down.shape[0], w_down.shape[1]
    assert h % 2 == 0 and w % 2 == 0 and c_in == outer_nc
    ho, wo = h // 2, w // 2
    ci = _round_up(c_in, LANE)        # lane-dense channel padding
    cm = _round_up(inner_nc, LANE)
    co = _round_up(outer_nc, LANE)
    wq = _round_up(wo + 1, 8)         # sublane-aligned W extent for xph

    # ---- layout prep: NHWC pad + 2x2 space-to-depth phases (phase-major) ----
    xt = jnp.transpose(x, (0, 2, 3, 1))
    xt = jnp.pad(xt, ((0, 0), (1, 1), (1, 1), (0, ci - c_in)))
    xph = (xt.reshape(n, ho + 1, 2, wo + 1, 2, ci)
             .transpose(2, 4, 0, 1, 3, 5)                  # (ph, pw, n, ho+1, wo+1, ci)
             .reshape(4, n, ho + 1, wo + 1, ci))
    xph = jnp.pad(xph, ((0, 0), (0, 0), (0, 0), (0, wq - (wo + 1)), (0, 0)))

    # ---- weight re-layout: HWIO, channel pad, bf16, K-stacked taps ----------
    # (tiny; in a real model this is hoisted / constant-folded once)
    wd = jnp.transpose(w_down, (2, 3, 1, 0))               # (kh, kw, in, out)
    wd = jnp.pad(wd, ((0, 0), (0, 0), (0, ci - c_in), (0, cm - inner_nc)))
    wd = wd.astype(jnp.bfloat16)
    wd4 = jnp.stack(
        [jnp.concatenate([wd[2 * a + ph, 2 * b + pw]
                          for a in range(2) for b in range(2)], axis=0)
         for ph in range(2) for pw in range(2)], axis=0)   # (4, 4*ci, cm)

    wu = jnp.transpose(w_up, (2, 3, 0, 1))                 # (kh, kw, in, out)
    wu = jnp.pad(wu, ((0, 0), (0, 0), (0, cm - inner_nc), (0, co - outer_nc)))
    wu = wu.astype(jnp.bfloat16)
    wu4 = jnp.stack(
        [jnp.concatenate([wu[3 - r - 2 * a, 3 - s - 2 * b]
                          for a in range(2) for b in range(2)], axis=0)
         for r in range(2) for s in range(2)], axis=0)     # (4, 4*cm, co)

    bn = _pick_batch_group(n, ho, wo)

    # ---- fused down conv + up conv + BN partial sums (single pallas_call) ---
    y, stats = _fused_call(xph, wd4, wu4, wo, bn)   # (4,N,HO*WO,CO), (G,2,CO)

    # ---- exact batch statistics: tiny O(G*C) reduction + affine fold --------
    m_total = n * 4 * ho * wo                        # == N * (2*HO) * (2*WO)
    ssum = jnp.sum(stats[:, 0, :], axis=0)
    ssq = jnp.sum(stats[:, 1, :], axis=0)
    mean = ssum / m_total
    # TODO(synk): single-pass E[y^2]-E[y]^2 can cancel for large activations;
    #             fine at this scale, use a shifted/two-pass form in production.
    var = ssq / m_total - mean * mean
    gamma_p = jnp.pad(gamma, (0, co - outer_nc))
    beta_p = jnp.pad(beta, (0, co - outer_nc))
    inv = jax.lax.rsqrt(var + EPS)
    scale = gamma_p * inv
    shift = beta_p - mean * gamma_p * inv

    # ---- BN apply folded into the pixel-shuffle (one fused XLA pass) --------
    u = y * scale + shift                            # (4, N, HO*WO, CO)
    u = (u.reshape(2, 2, n, ho, wo, co)              # (r, s, n, i, j, c)
          .transpose(2, 5, 3, 0, 4, 1)               # (n, c, i, r, j, s)
          .reshape(n, co, h, w)[:, :outer_nc])
    return jnp.concatenate([u, x], axis=1)


# ----------------------------------------------------------------------------
# Pure-JAX reference (XLA convs) with the same bf16-at-MXU precision policy
# ----------------------------------------------------------------------------
def reference_forward(x, params):
    w_down, w_up, gamma, beta = params
    lrelu = jnp.where(x > 0, x, 0.2 * x)
    d = jax.lax.conv_general_dilated(
        lrelu.astype(jnp.bfloat16), w_down.astype(jnp.bfloat16),
        (STRIDE, STRIDE), ((PAD, PAD), (PAD, PAD)),
        dimension_numbers=("NCHW", "OIHW", "NCHW"),
        preferred_element_type=jnp.float32)
    r = jnp.maximum(d, 0.0)
    w_conv = jnp.flip(w_up, axis=(2, 3)).transpose(1, 0, 2, 3)
    u = jax.lax.conv_general_dilated(
        r.astype(jnp.bfloat16), w_conv.astype(jnp.bfloat16),
        (1, 1), ((KSIZE - 1 - PAD,) * 2, (KSIZE - 1 - PAD,) * 2),
        lhs_dilation=(STRIDE, STRIDE),
        dimension_numbers=("NCHW", "OIHW", "NCHW"),
        preferred_element_type=jnp.float32)
    mean = jnp.mean(u, axis=(0, 2, 3), keepdims=True)
    var = jnp.mean((u - mean) ** 2, axis=(0, 2, 3), keepdims=True)
    u = (u - mean) * jax.lax.rsqrt(var + EPS)
    u = u * gamma.reshape(1, -1, 1, 1) + beta.reshape(1, -1, 1, 1)
    return jnp.concatenate([u, x], axis=1)


if __name__ == "__main__":
    N, outer_nc, inner_nc, H, W = 2, 4, 8, 16, 16

    key = jax.random.PRNGKey(0)
    kx, kd, ku = jax.random.split(key, 3)
    x = jax.random.normal(kx, (N, outer_nc, H, W), jnp.float32)
    # DeblurGAN-style init N(0, 0.02); Conv2d weight (out, in, kh, kw),
    # ConvTranspose2d weight (in, out, kh, kw); bias=False (BatchNorm norm layer).
    w_down = 0.02 * jax.random.normal(kd, (inner_nc, outer_nc, KSIZE, KSIZE), jnp.float32)
    w_up = 0.02 * jax.random.normal(ku, (inner_nc, outer_nc, KSIZE, KSIZE), jnp.float32)
    gamma = jnp.ones((outer_nc,), jnp.float32)   # BatchNorm2d default weight
    beta = jnp.zeros((outer_nc,), jnp.float32)   # BatchNorm2d default bias
    params = (w_down, w_up, gamma, beta)

    fwd = jax.jit(unet_innermost_forward)
    out = jax.block_until_ready(fwd(x, params))
    ref = jax.block_until_ready(reference_forward(x, params))

    assert out.shape == (N, 2 * outer_nc, H, W), out.shape
    err = float(jnp.max(jnp.abs(out - ref)))
    assert jnp.allclose(out, ref, atol=1e-2, rtol=1e-2), err
    print("KERNEL_OK")
</pallas_src>

<mosaic_0001>
module attributes {stable_mosaic.version = 11 : i64} {
  func.func @_fused_kernel(%arg0: i32, %arg1: memref<4x2x9x16x128xf32, #tpu.memory_space<vmem>>, %arg2: memref<4x512x128xbf16, #tpu.memory_space<vmem>>, %arg3: memref<4x512x128xbf16, #tpu.memory_space<vmem>>, %arg4: memref<4x2x64x128xf32, #tpu.memory_space<vmem>>, %arg5: memref<1x2x128xf32, #tpu.memory_space<vmem>>, %arg6: memref<2x10x16x128xbf16, #tpu.memory_space<vmem>>) attributes {dimension_semantics = [#tpu.dimension_semantics<parallel>], iteration_bounds = array<i64: 1>, scalar_prefetch = 0 : i64, scratch_operands = 1 : i64, tpu.core_type = #tpu.core_type<tc>, window_params = [{transform_indices = @transform_0, window_bounds = array<i64: 4, 2, 9, 16, 128>}, {pipeline_mode = #tpu.pipeline_mode<synchronous>, transform_indices = @transform_1, window_bounds = array<i64: 4, 512, 128>}, {pipeline_mode = #tpu.pipeline_mode<synchronous>, transform_indices = @transform_2, window_bounds = array<i64: 4, 512, 128>}, {transform_indices = @transform_3, window_bounds = array<i64: 4, 2, 64, 128>}, {transform_indices = @transform_4, window_bounds = array<i64: 1, 2, 128>}]} {
    %cst = arith.constant 0.000000e+00 : f32
    %0 = vector.broadcast %cst : f32 to vector<128x128xf32>
    %c0 = arith.constant 0 : index
    %c0_0 = arith.constant 0 : index
    %c0_1 = arith.constant 0 : index
    %c0_2 = arith.constant 0 : index
    %c0_3 = arith.constant 0 : index
    %1 = vector.load %arg1[%c0, %c0_0, %c0_1, %c0_2, %c0_3] : memref<4x2x9x16x128xf32, #tpu.memory_space<vmem>>, vector<1x2x9x16x128xf32>
    %2 = vector.shape_cast %1 : vector<1x2x9x16x128xf32> to vector<2x9x16x128xf32>
    %cst_4 = arith.constant 0.000000e+00 : f32
    %3 = vector.broadcast %cst_4 : f32 to vector<2x9x16x128xf32>
    %4 = arith.cmpf ogt, %2, %3 : vector<2x9x16x128xf32>
    %cst_5 = arith.constant 2.000000e-01 : f32
    %5 = vector.broadcast %cst_5 : f32 to vector<2x9x16x128xf32>
    %6 = arith.mulf %5, %2 : vector<2x9x16x128xf32>
    %7 = arith.select %4, %2, %6 : vector<2x9x16x128xi1>, vector<2x9x16x128xf32>
    %8 = arith.truncf %7 : vector<2x9x16x128xf32> to vector<2x9x16x128xbf16>
    %9 = vector.extract_strided_slice %8 {offsets = [0, 0, 0, 0], sizes = [2, 8, 8, 128], strides = [1, 1, 1, 1]} : vector<2x9x16x128xbf16> to vector<2x8x8x128xbf16>
    %10 = vector.shape_cast %9 : vector<2x8x8x128xbf16> to vector<128x128xbf16>
    %11 = vector.extract_strided_slice %8 {offsets = [0, 0, 1, 0], sizes = [2, 8, 8, 128], strides = [1, 1, 1, 1]} : vector<2x9x16x128xbf16> to vector<2x8x8x128xbf16>
    %12 = vector.shape_cast %11 : vector<2x8x8x128xbf16> to vector<128x128xbf16>
    %13 = vector.extract_strided_slice %8 {offsets = [0, 1, 0, 0], sizes = [2, 8, 8, 128], strides = [1, 1, 1, 1]} : vector<2x9x16x128xbf16> to vector<2x8x8x128xbf16>
    %14 = vector.shape_cast %13 : vector<2x8x8x128xbf16> to vector<128x128xbf16>
    %15 = vector.extract_strided_slice %8 {offsets = [0, 1, 1, 0], sizes = [2, 8, 8, 128], strides = [1, 1, 1, 1]} : vector<2x9x16x128xbf16> to vector<2x8x8x128xbf16>
    %16 = vector.shape_cast %15 : vector<2x8x8x128xbf16> to vector<128x128xbf16>
    %17 = tpu.concatenate %10, %12, %14, %16 in 1 : vector<128x128xbf16>, vector<128x128xbf16>, vector<128x128xbf16>, vector<128x128xbf16> -> vector<128x512xbf16>
    %c0_6 = arith.constant 0 : index
    %c0_7 = arith.constant 0 : index
    %c0_8 = arith.constant 0 : index
    %18 = vector.load %arg2[%c0_6, %c0_7, %c0_8] : memref<4x512x128xbf16, #tpu.memory_space<vmem>>, vector<1x512x128xbf16>
    %19 = vector.shape_cast %18 : vector<1x512x128xbf16> to vector<512x128xbf16>
    %cst_9 = arith.constant dense<0.000000e+00> : vector<128x128xf32>
    %20 = tpu.matmul %17, %19, %cst_9 {dimension_numbers = #tpu.dot_dimension_numbers<[1], [0], [0], [1], [0, 0, 1, 1], [], []>} : vector<128x512xbf16>, vector<512x128xbf16>, vector<128x128xf32> -> vector<128x128xf32>
    %21 = arith.addf %0, %20 : vector<128x128xf32>
    %c1 = arith.constant 1 : index
    %c0_10 = arith.constant 0 : index
    %c0_11 = arith.constant 0 : index
    %c0_12 = arith.constant 0 : index
    %c0_13 = arith.constant 0 : index
    %22 = vector.load %arg1[%c1, %c0_10, %c0_11, %c0_12, %c0_13] : memref<4x2x9x16x128xf32, #tpu.memory_space<vmem>>, vector<1x2x9x16x128xf32>
    %23 = vector.shape_cast %22 : vector<1x2x9x16x128xf32> to vector<2x9x16x128xf32>
    %cst_14 = arith.constant 0.000000e+00 : f32
    %24 = vector.broadcast %cst_14 : f32 to vector<2x9x16x128xf32>
    %25 = arith.cmpf ogt, %23, %24 : vector<2x9x16x128xf32>
    %cst_15 = arith.constant 2.000000e-01 : f32
    %26 = vector.broadcast %cst_15 : f32 to vector<2x9x16x128xf32>
    %27 = arith.mulf %26, %23 : vector<2x9x16x128xf32>
    %28 = arith.select %25, %23, %27 : vector<2x9x16x128xi1>, vector<2x9x16x128xf32>
    %29 = arith.truncf %28 : vector<2x9x16x128xf32> to vector<2x9x16x128xbf16>
    %30 = vector.extract_strided_slice %29 {offsets = [0, 0, 0, 0], sizes = [2, 8, 8, 128], strides = [1, 1, 1, 1]} : vector<2x9x16x128xbf16> to vector<2x8x8x128xbf16>
    %31 = vector.shape_cast %30 : vector<2x8x8x128xbf16> to vector<128x128xbf16>
    %32 = vector.extract_strided_slice %29 {offsets = [0, 0, 1, 0], sizes = [2, 8, 8, 128], strides = [1, 1, 1, 1]} : vector<2x9x16x128xbf16> to vector<2x8x8x128xbf16>
    %33 = vector.shape_cast %32 : vector<2x8x8x128xbf16> to vector<128x128xbf16>
    %34 = vector.extract_strided_slice %29 {offsets = [0, 1, 0, 0], sizes = [2, 8, 8, 128], strides = [1, 1, 1, 1]} : vector<2x9x16x128xbf16> to vector<2x8x8x128xbf16>
    %35 = vector.shape_cast %34 : vector<2x8x8x128xbf16> to vector<128x128xbf16>
    %36 = vector.extract_strided_slice %29 {offsets = [0, 1, 1, 0], sizes = [2, 8, 8, 128], strides = [1, 1, 1, 1]} : vector<2x9x16x128xbf16> to vector<2x8x8x128xbf16>
    %37 = vector.shape_cast %36 : vector<2x8x8x128xbf16> to vector<128x128xbf16>
    %38 = tpu.concatenate %31, %33, %35, %37 in 1 : vector<128x128xbf16>, vector<128x128xbf16>, vector<128x128xbf16>, vector<128x128xbf16> -> vector<128x512xbf16>
    %c1_16 = arith.constant 1 : index
    %c0_17 = arith.constant 0 : index
    %c0_18 = arith.constant 0 : index
    %39 = vector.load %arg2[%c1_16, %c0_17, %c0_18] : memref<4x512x128xbf16, #tpu.memory_space<vmem>>, vector<1x512x128xbf16>
    %40 = vector.shape_cast %39 : vector<1x512x128xbf16> to vector<512x128xbf16>
    %cst_19 = arith.constant dense<0.000000e+00> : vector<128x128xf32>
    %41 = tpu.matmul %38, %40, %cst_19 {dimension_numbers = #tpu.dot_dimension_numbers<[1], [0], [0], [1], [0, 0, 1, 1], [], []>} : vector<128x512xbf16>, vector<512x128xbf16>, vector<128x128xf32> -> vector<128x128xf32>
    %42 = arith.addf %21, %41 : vector<128x128xf32>
    %c2 = arith.constant 2 : index
    %c0_20 = arith.constant 0 : index
    %c0_21 = arith.constant 0 : index
    %c0_22 = arith.constant 0 : index
    %c0_23 = arith.constant 0 : index
    %43 = vector.load %arg1[%c2, %c0_20, %c0_21, %c0_22, %c0_23] : memref<4x2x9x16x128xf32, #tpu.memory_space<vmem>>, vector<1x2x9x16x128xf32>
    %44 = vector.shape_cast %43 : vector<1x2x9x16x128xf32> to vector<2x9x16x128xf32>
    %cst_24 = arith.constant 0.000000e+00 : f32
    %45 = vector.broadcast %cst_24 : f32 to vector<2x9x16x128xf32>
    %46 = arith.cmpf ogt, %44, %45 : vector<2x9x16x128xf32>
    %cst_25 = arith.constant 2.000000e-01 : f32
    %47 = vector.broadcast %cst_25 : f32 to vector<2x9x16x128xf32>
    %48 = arith.mulf %47, %44 : vector<2x9x16x128xf32>
    %49 = arith.select %46, %44, %48 : vector<2x9x16x128xi1>, vector<2x9x16x128xf32>
    %50 = arith.truncf %49 : vector<2x9x16x128xf32> to vector<2x9x16x128xbf16>
    %51 = vector.extract_strided_slice %50 {offsets = [0, 0, 0, 0], sizes = [2, 8, 8, 128], strides = [1, 1, 1, 1]} : vector<2x9x16x128xbf16> to vector<2x8x8x128xbf16>
    %52 = vector.shape_cast %51 : vector<2x8x8x128xbf16> to vector<128x128xbf16>
    %53 = vector.extract_strided_slice %50 {offsets = [0, 0, 1, 0], sizes = [2, 8, 8, 128], strides = [1, 1, 1, 1]} : vector<2x9x16x128xbf16> to vector<2x8x8x128xbf16>
    %54 = vector.shape_cast %53 : vector<2x8x8x128xbf16> to vector<128x128xbf16>
    %55 = vector.extract_strided_slice %50 {offsets = [0, 1, 0, 0], sizes = [2, 8, 8, 128], strides = [1, 1, 1, 1]} : vector<2x9x16x128xbf16> to vector<2x8x8x128xbf16>
    %56 = vector.shape_cast %55 : vector<2x8x8x128xbf16> to vector<128x128xbf16>
    %57 = vector.extract_strided_slice %50 {offsets = [0, 1, 1, 0], sizes = [2, 8, 8, 128], strides = [1, 1, 1, 1]} : vector<2x9x16x128xbf16> to vector<2x8x8x128xbf16>
    %58 = vector.shape_cast %57 : vector<2x8x8x128xbf16> to vector<128x128xbf16>
    %59 = tpu.concatenate %52, %54, %56, %58 in 1 : vector<128x128xbf16>, vector<128x128xbf16>, vector<128x128xbf16>, vector<128x128xbf16> -> vector<128x512xbf16>
    %c2_26 = arith.constant 2 : index
    %c0_27 = arith.constant 0 : index
    %c0_28 = arith.constant 0 : index
    %60 = vector.load %arg2[%c2_26, %c0_27, %c0_28] : memref<4x512x128xbf16, #tpu.memory_space<vmem>>, vector<1x512x128xbf16>
    %61 = vector.shape_cast %60 : vector<1x512x128xbf16> to vector<512x128xbf16>
    %cst_29 = arith.constant dense<0.000000e+00> : vector<128x128xf32>
    %62 = tpu.matmul %59, %61, %cst_29 {dimension_numbers = #tpu.dot_dimension_numbers<[1], [0], [0], [1], [0, 0, 1, 1], [], []>} : vector<128x512xbf16>, vector<512x128xbf16>, vector<128x128xf32> -> vector<128x128xf32>
    %63 = arith.addf %42, %62 : vector<128x128xf32>
    %c3 = arith.constant 3 : index
    %c0_30 = arith.constant 0 : index
    %c0_31 = arith.constant 0 : index
    %c0_32 = arith.constant 0 : index
    %c0_33 = arith.constant 0 : index
    %64 = vector.load %arg1[%c3, %c0_30, %c0_31, %c0_32, %c0_33] : memref<4x2x9x16x128xf32, #tpu.memory_space<vmem>>, vector<1x2x9x16x128xf32>
    %65 = vector.shape_cast %64 : vector<1x2x9x16x128xf32> to vector<2x9x16x128xf32>
    %cst_34 = arith.constant 0.000000e+00 : f32
    %66 = vector.broadcast %cst_34 : f32 to vector<2x9x16x128xf32>
    %67 = arith.cmpf ogt, %65, %66 : vector<2x9x16x128xf32>
    %cst_35 = arith.constant 2.000000e-01 : f32
    %68 = vector.broadcast %cst_35 : f32 to vector<2x9x16x128xf32>
    %69 = arith.mulf %68, %65 : vector<2x9x16x128xf32>
    %70 = arith.select %67, %65, %69 : vector<2x9x16x128xi1>, vector<2x9x16x128xf32>
    %71 = arith.truncf %70 : vector<2x9x16x128xf32> to vector<2x9x16x128xbf16>
    %72 = vector.extract_strided_slice %71 {offsets = [0, 0, 0, 0], sizes = [2, 8, 8, 128], strides = [1, 1, 1, 1]} : vector<2x9x16x128xbf16> to vector<2x8x8x128xbf16>
    %73 = vector.shape_cast %72 : vector<2x8x8x128xbf16> to vector<128x128xbf16>
    %74 = vector.extract_strided_slice %71 {offsets = [0, 0, 1, 0], sizes = [2, 8, 8, 128], strides = [1, 1, 1, 1]} : vector<2x9x16x128xbf16> to vector<2x8x8x128xbf16>
    %75 = vector.shape_cast %74 : vector<2x8x8x128xbf16> to vector<128x128xbf16>
    %76 = vector.extract_strided_slice %71 {offsets = [0, 1, 0, 0], sizes = [2, 8, 8, 128], strides = [1, 1, 1, 1]} : vector<2x9x16x128xbf16> to vector<2x8x8x128xbf16>
    %77 = vector.shape_cast %76 : vector<2x8x8x128xbf16> to vector<128x128xbf16>
    %78 = vector.extract_strided_slice %71 {offsets = [0, 1, 1, 0], sizes = [2, 8, 8, 128], strides = [1, 1, 1, 1]} : vector<2x9x16x128xbf16> to vector<2x8x8x128xbf16>
    %79 = vector.shape_cast %78 : vector<2x8x8x128xbf16> to vector<128x128xbf16>
    %80 = tpu.concatenate %73, %75, %77, %79 in 1 : vector<128x128xbf16>, vector<128x128xbf16>, vector<128x128xbf16>, vector<128x128xbf16> -> vector<128x512xbf16>
    %c3_36 = arith.constant 3 : index
    %c0_37 = arith.constant 0 : index
    %c0_38 = arith.constant 0 : index
    %81 = vector.load %arg2[%c3_36, %c0_37, %c0_38] : memref<4x512x128xbf16, #tpu.memory_space<vmem>>, vector<1x512x128xbf16>
    %82 = vector.shape_cast %81 : vector<1x512x128xbf16> to vector<512x128xbf16>
    %cst_39 = arith.constant dense<0.000000e+00> : vector<128x128xf32>
    %83 = tpu.matmul %80, %82, %cst_39 {dimension_numbers = #tpu.dot_dimension_numbers<[1], [0], [0], [1], [0, 0, 1, 1], [], []>} : vector<128x512xbf16>, vector<512x128xbf16>, vector<128x128xf32> -> vector<128x128xf32>
    %84 = arith.addf %63, %83 : vector<128x128xf32>
    %cst_40 = arith.constant 0.000000e+00 : bf16
    %85 = vector.broadcast %cst_40 : bf16 to vector<2x1x16x128xbf16>
    %cst_41 = arith.constant 0.000000e+00 : bf16
    %86 = vector.broadcast %cst_41 : bf16 to vector<2x10x1x128xbf16>
    %c0_42 = arith.constant 0 : index
    %c0_43 = arith.constant 0 : index
    %c0_44 = arith.constant 0 : index
    %c0_45 = arith.constant 0 : index
    %87 = vector.load %arg6[%c0_42, %c0_43, %c0_44, %c0_45] : memref<2x10x16x128xbf16, #tpu.memory_space<vmem>>, vector<2x1x16x128xbf16>
    tpu.vector_store %arg6[%c0_42, %c0_43, %c0_44, %c0_45], %85 {strides = array<i32>} : memref<2x10x16x128xbf16, #tpu.memory_space<vmem>>, vector<2x1x16x128xbf16>,
    %c0_46 = arith.constant 0 : index
    %c9 = arith.constant 9 : index
    %c0_47 = arith.constant 0 : index
    %c0_48 = arith.constant 0 : index
    %88 = vector.load %arg6[%c0_46, %c9, %c0_47, %c0_48] : memref<2x10x16x128xbf16, #tpu.memory_space<vmem>>, vector<2x1x16x128xbf16>
    tpu.vector_store %arg6[%c0_46, %c9, %c0_47, %c0_48], %85 {strides = array<i32>} : memref<2x10x16x128xbf16, #tpu.memory_space<vmem>>, vector<2x1x16x128xbf16>,
    %c0_49 = arith.constant 0 : index
    %c0_50 = arith.constant 0 : index
    %c0_51 = arith.constant 0 : index
    %c0_52 = arith.constant 0 : index
    %89 = vector.load %arg6[%c0_49, %c0_50, %c0_51, %c0_52] : memref<2x10x16x128xbf16, #tpu.memory_space<vmem>>, vector<2x10x1x128xbf16>
    tpu.vector_store %arg6[%c0_49, %c0_50, %c0_51, %c0_52], %86 {strides = array<i32>} : memref<2x10x16x128xbf16, #tpu.memory_space<vmem>>, vector<2x10x1x128xbf16>,
    %c0_53 = arith.constant 0 : index
    %c0_54 = arith.constant 0 : index
    %c9_55 = arith.constant 9 : index
    %c0_56 = arith.constant 0 : index
    %90 = vector.load %arg6[%c0_53, %c0_54, %c9_55, %c0_56] : memref<2x10x16x128xbf16, #tpu.memory_space<vmem>>, vector<2x10x1x128xbf16>
    tpu.vector_store %arg6[%c0_53, %c0_54, %c9_55, %c0_56], %86 {strides = array<i32>} : memref<2x10x16x128xbf16, #tpu.memory_space<vmem>>, vector<2x10x1x128xbf16>,
    %cst_57 = arith.constant 0.000000e+00 : f32
    %91 = vector.broadcast %cst_57 : f32 to vector<128x128xf32>
    %92 = arith.maximumf %84, %91 : vector<128x128xf32>
    %93 = vector.shape_cast %92 : vector<128x128xf32> to vector<2x8x8x128xf32>
    %94 = arith.truncf %93 : vector<2x8x8x128xf32> to vector<2x8x8x128xbf16>
    %c0_58 = arith.constant 0 : index
    %c1_59 = arith.constant 1 : index
    %c1_60 = arith.constant 1 : index
    %c0_61 = arith.constant 0 : index
    %95 = vector.load %arg6[%c0_58, %c1_59, %c1_60, %c0_61] : memref<2x10x16x128xbf16, #tpu.memory_space<vmem>>, vector<2x8x8x128xbf16>
    tpu.vector_store %arg6[%c0_58, %c1_59, %c1_60, %c0_61], %94 {strides = array<i32>} : memref<2x10x16x128xbf16, #tpu.memory_space<vmem>>, vector<2x8x8x128xbf16>,
    %c0_62 = arith.constant 0 : index
    %c0_63 = arith.constant 0 : index
    %c0_64 = arith.constant 0 : index
    %c0_65 = arith.constant 0 : index
    %96 = vector.load %arg6[%c0_62, %c0_63, %c0_64, %c0_65] : memref<2x10x16x128xbf16, #tpu.memory_space<vmem>>, vector<2x10x16x128xbf16>
    %cst_66 = arith.constant 0.000000e+00 : f32
    %97 = vector.broadcast %cst_66 : f32 to vector<1x128xf32>
    %cst_67 = arith.constant 0.000000e+00 : f32
    %98 = vector.broadcast %cst_67 : f32 to vector<1x128xf32>
    %99 = vector.extract_strided_slice %96 {offsets = [0, 0, 0, 0], sizes = [2, 8, 8, 128], strides = [1, 1, 1, 1]} : vector<2x10x16x128xbf16> to vector<2x8x8x128xbf16>
    %100 = vector.shape_cast %99 : vector<2x8x8x128xbf16> to vector<128x128xbf16>
    %101 = vector.extract_strided_slice %96 {offsets = [0, 0, 1, 0], sizes = [2, 8, 8, 128], strides = [1, 1, 1, 1]} : vector<2x10x16x128xbf16> to vector<2x8x8x128xbf16>
    %102 = vector.shape_cast %101 : vector<2x8x8x128xbf16> to vector<128x128xbf16>
    %103 = vector.extract_strided_slice %96 {offsets = [0, 1, 0, 0], sizes = [2, 8, 8, 128], strides = [1, 1, 1, 1]} : vector<2x10x16x128xbf16> to vector<2x8x8x128xbf16>
    %104 = vector.shape_cast %103 : vector<2x8x8x128xbf16> to vector<128x128xbf16>
    %105 = vector.extract_strided_slice %96 {offsets = [0, 1, 1, 0], sizes = [2, 8, 8, 128], strides = [1, 1, 1, 1]} : vector<2x10x16x128xbf16> to vector<2x8x8x128xbf16>
    %106 = vector.shape_cast %105 : vector<2x8x8x128xbf16> to vector<128x128xbf16>
    %107 = tpu.concatenate %100, %102, %104, %106 in 1 : vector<128x128xbf16>, vector<128x128xbf16>, vector<128x128xbf16>, vector<128x128xbf16> -> vector<128x512xbf16>
    %c0_68 = arith.constant 0 : index
    %c0_69 = arith.constant 0 : index
    %c0_70 = arith.constant 0 : index
    %108 = vector.load %arg3[%c0_68, %c0_69, %c0_70] : memref<4x512x128xbf16, #tpu.memory_space<vmem>>, vector<1x512x128xbf16>
    %109 = vector.shape_cast %108 : vector<1x512x128xbf16> to vector<512x128xbf16>
    %cst_71 = arith.constant dense<0.000000e+00> : vector<128x128xf32>
    %110 = tpu.matmul %107, %109, %cst_71 {dimension_numbers = #tpu.dot_dimension_numbers<[1], [0], [0], [1], [0, 0, 1, 1], [], []>} : vector<128x512xbf16>, vector<512x128xbf16>, vector<128x128xf32> -> vector<128x128xf32>
    %111 = vector.shape_cast %110 : vector<128x128xf32> to vector<2x64x128xf32>
    %c0_72 = arith.constant 0 : index
    %c0_73 = arith.constant 0 : index
    %c0_74 = arith.constant 0 : index
    %c0_75 = arith.constant 0 : index
    %112 = vector.load %arg4[%c0_72, %c0_73, %c0_74, %c0_75] : memref<4x2x64x128xf32, #tpu.memory_space<vmem>>, vector<1x2x64x128xf32>
    %113 = vector.shape_cast %112 : vector<1x2x64x128xf32> to vector<2x64x128xf32>
    %114 = vector.shape_cast %111 : vector<2x64x128xf32> to vector<1x2x64x128xf32>
    tpu.vector_store %arg4[%c0_72, %c0_73, %c0_74, %c0_75], %114 {strides = array<i32>} : memref<4x2x64x128xf32, #tpu.memory_space<vmem>>, vector<1x2x64x128xf32>,
    %cst_76 = arith.constant dense<0.000000e+00> : vector<128xf32>
    %115 = vector.multi_reduction <add>, %110, %cst_76 [0] : vector<128x128xf32> to vector<128xf32>
    %116 = vector.shape_cast %115 : vector<128xf32> to vector<1x128xf32>
    %117 = arith.addf %97, %116 : vector<1x128xf32>
    %118 = arith.mulf %110, %110 : vector<128x128xf32>
    %cst_77 = arith.constant dense<0.000000e+00> : vector<128xf32>
    %119 = vector.multi_reduction <add>, %118, %cst_77 [0] : vector<128x128xf32> to vector<128xf32>
    %120 = vector.shape_cast %119 : vector<128xf32> to vector<1x128xf32>
    %121 = arith.addf %98, %120 : vector<1x128xf32>
    %122 = vector.extract_strided_slice %96 {offsets = [0, 0, 1, 0], sizes = [2, 8, 8, 128], strides = [1, 1, 1, 1]} : vector<2x10x16x128xbf16> to vector<2x8x8x128xbf16>
    %123 = vector.shape_cast %122 : vector<2x8x8x128xbf16> to vector<128x128xbf16>
    %124 = vector.extract_strided_slice %96 {offsets = [0, 0, 2, 0], sizes = [2, 8, 8, 128], strides = [1, 1, 1, 1]} : vector<2x10x16x128xbf16> to vector<2x8x8x128xbf16>
    %125 = vector.shape_cast %124 : vector<2x8x8x128xbf16> to vector<128x128xbf16>
    %126 = vector.extract_strided_slice %96 {offsets = [0, 1, 1, 0], sizes = [2, 8, 8, 128], strides = [1, 1, 1, 1]} : vector<2x10x16x128xbf16> to vector<2x8x8x128xbf16>
    %127 = vector.shape_cast %126 : vector<2x8x8x128xbf16> to vector<128x128xbf16>
    %128 = vector.extract_strided_slice %96 {offsets = [0, 1, 2, 0], sizes = [2, 8, 8, 128], strides = [1, 1, 1, 1]} : vector<2x10x16x128xbf16> to vector<2x8x8x128xbf16>
    %129 = vector.shape_cast %128 : vector<2x8x8x128xbf16> to vector<128x128xbf16>
    %130 = tpu.concatenate %123, %125, %127, %129 in 1 : vector<128x128xbf16>, vector<128x128xbf16>, vector<128x128xbf16>, vector<128x128xbf16> -> vector<128x512xbf16>
    %c1_78 = arith.constant 1 : index
    %c0_79 = arith.constant 0 : index
    %c0_80 = arith.constant 0 : index
    %131 = vector.load %arg3[%c1_78, %c0_79, %c0_80] : memref<4x512x128xbf16, #tpu.memory_space<vmem>>, vector<1x512x128xbf16>
    %132 = vector.shape_cast %131 : vector<1x512x128xbf16> to vector<512x128xbf16>
    %cst_81 = arith.constant dense<0.000000e+00> : vector<128x128xf32>
    %133 = tpu.matmul %130, %132, %cst_81 {dimension_numbers = #tpu.dot_dimension_numbers<[1], [0], [0], [1], [0, 0, 1, 1], [], []>} : vector<128x512xbf16>, vector<512x128xbf16>, vector<128x128xf32> -> vector<128x128xf32>
    %134 = vector.shape_cast %133 : vector<128x128xf32> to vector<2x64x128xf32>
    %c1_82 = arith.constant 1 : index
    %c0_83 = arith.constant 0 : index
    %c0_84 = arith.constant 0 : index
    %c0_85 = arith.constant 0 : index
    %135 = vector.load %arg4[%c1_82, %c0_83, %c0_84, %c0_85] : memref<4x2x64x128xf32, #tpu.memory_space<vmem>>, vector<1x2x64x128xf32>
    %136 = vector.shape_cast %135 : vector<1x2x64x128xf32> to vector<2x64x128xf32>
    %137 = vector.shape_cast %134 : vector<2x64x128xf32> to vector<1x2x64x128xf32>
    tpu.vector_store %arg4[%c1_82, %c0_83, %c0_84, %c0_85], %137 {strides = array<i32>} : memref<4x2x64x128xf32, #tpu.memory_space<vmem>>, vector<1x2x64x128xf32>,
    %cst_86 = arith.constant dense<0.000000e+00> : vector<128xf32>
    %138 = vector.multi_reduction <add>, %133, %cst_86 [0] : vector<128x128xf32> to vector<128xf32>
    %139 = vector.shape_cast %138 : vector<128xf32> to vector<1x128xf32>
    %140 = arith.addf %117, %139 : vector<1x128xf32>
    %141 = arith.mulf %133, %133 : vector<128x128xf32>
    %cst_87 = arith.constant dense<0.000000e+00> : vector<128xf32>
    %142 = vector.multi_reduction <add>, %141, %cst_87 [0] : vector<128x128xf32> to vector<128xf32>
    %143 = vector.shape_cast %142 : vector<128xf32> to vector<1x128xf32>
    %144 = arith.addf %121, %143 : vector<1x128xf32>
    %145 = vector.extract_strided_slice %96 {offsets = [0, 1, 0, 0], sizes = [2, 8, 8, 128], strides = [1, 1, 1, 1]} : vector<2x10x16x128xbf16> to vector<2x8x8x128xbf16>
    %146 = vector.shape_cast %145 : vector<2x8x8x128xbf16> to vector<128x128xbf16>
    %147 = vector.extract_strided_slice %96 {offsets = [0, 1, 1, 0], sizes = [2, 8, 8, 128], strides = [1, 1, 1, 1]} : vector<2x10x16x128xbf16> to vector<2x8x8x128xbf16>
    %148 = vector.shape_cast %147 : vector<2x8x8x128xbf16> to vector<128x128xbf16>
    %149 = vector.extract_strided_slice %96 {offsets = [0, 2, 0, 0], sizes = [2, 8, 8, 128], strides = [1, 1, 1, 1]} : vector<2x10x16x128xbf16> to vector<2x8x8x128xbf16>
    %150 = vector.shape_cast %149 : vector<2x8x8x128xbf16> to vector<128x128xbf16>
    %151 = vector.extract_strided_slice %96 {offsets = [0, 2, 1, 0], sizes = [2, 8, 8, 128], strides = [1, 1, 1, 1]} : vector<2x10x16x128xbf16> to vector<2x8x8x128xbf16>
    %152 = vector.shape_cast %151 : vector<2x8x8x128xbf16> to vector<128x128xbf16>
    %153 = tpu.concatenate %146, %148, %150, %152 in 1 : vector<128x128xbf16>, vector<128x128xbf16>, vector<128x128xbf16>, vector<128x128xbf16> -> vector<128x512xbf16>
    %c2_88 = arith.constant 2 : index
    %c0_89 = arith.constant 0 : index
    %c0_90 = arith.constant 0 : index
    %154 = vector.load %arg3[%c2_88, %c0_89, %c0_90] : memref<4x512x128xbf16, #tpu.memory_space<vmem>>, vector<1x512x128xbf16>
    %155 = vector.shape_cast %154 : vector<1x512x128xbf16> to vector<512x128xbf16>
    %cst_91 = arith.constant dense<0.000000e+00> : vector<128x128xf32>
    %156 = tpu.matmul %153, %155, %cst_91 {dimension_numbers = #tpu.dot_dimension_numbers<[1], [0], [0], [1], [0, 0, 1, 1], [], []>} : vector<128x512xbf16>, vector<512x128xbf16>, vector<128x128xf32> -> vector<128x128xf32>
    %157 = vector.shape_cast %156 : vector<128x128xf32> to vector<2x64x128xf32>
    %c2_92 = arith.constant 2 : index
    %c0_93 = arith.constant 0 : index
    %c0_94 = arith.constant 0 : index
    %c0_95 = arith.constant 0 : index
    %158 = vector.load %arg4[%c2_92, %c0_93, %c0_94, %c0_95] : memref<4x2x64x128xf32, #tpu.memory_space<vmem>>, vector<1x2x64x128xf32>
    %159 = vector.shape_cast %158 : vector<1x2x64x128xf32> to vector<2x64x128xf32>
    %160 = vector.shape_cast %157 : vector<2x64x128xf32> to vector<1x2x64x128xf32>
    tpu.vector_store %arg4[%c2_92, %c0_93, %c0_94, %c0_95], %160 {strides = array<i32>} : memref<4x2x64x128xf32, #tpu.memory_space<vmem>>, vector<1x2x64x128xf32>,
    %cst_96 = arith.constant dense<0.000000e+00> : vector<128xf32>
    %161 = vector.multi_reduction <add>, %156, %cst_96 [0] : vector<128x128xf32> to vector<128xf32>
    %162 = vector.shape_cast %161 : vector<128xf32> to vector<1x128xf32>
    %163 = arith.addf %140, %162 : vector<1x128xf32>
    %164 = arith.mulf %156, %156 : vector<128x128xf32>
    %cst_97 = arith.constant dense<0.000000e+00> : vector<128xf32>
    %165 = vector.multi_reduction <add>, %164, %cst_97 [0] : vector<128x128xf32> to vector<128xf32>
    %166 = vector.shape_cast %165 : vector<128xf32> to vector<1x128xf32>
    %167 = arith.addf %144, %166 : vector<1x128xf32>
    %168 = vector.extract_strided_slice %96 {offsets = [0, 1, 1, 0], sizes = [2, 8, 8, 128], strides = [1, 1, 1, 1]} : vector<2x10x16x128xbf16> to vector<2x8x8x128xbf16>
    %169 = vector.shape_cast %168 : vector<2x8x8x128xbf16> to vector<128x128xbf16>
    %170 = vector.extract_strided_slice %96 {offsets = [0, 1, 2, 0], sizes = [2, 8, 8, 128], strides = [1, 1, 1, 1]} : vector<2x10x16x128xbf16> to vector<2x8x8x128xbf16>
    %171 = vector.shape_cast %170 : vector<2x8x8x128xbf16> to vector<128x128xbf16>
    %172 = vector.extract_strided_slice %96 {offsets = [0, 2, 1, 0], sizes = [2, 8, 8, 128], strides = [1, 1, 1, 1]} : vector<2x10x16x128xbf16> to vector<2x8x8x128xbf16>
    %173 = vector.shape_cast %172 : vector<2x8x8x128xbf16> to vector<128x128xbf16>
    %174 = vector.extract_strided_slice %96 {offsets = [0, 2, 2, 0], sizes = [2, 8, 8, 128], strides = [1, 1, 1, 1]} : vector<2x10x16x128xbf16> to vector<2x8x8x128xbf16>
    %175 = vector.shape_cast %174 : vector<2x8x8x128xbf16> to vector<128x128xbf16>
    %176 = tpu.concatenate %169, %171, %173, %175 in 1 : vector<128x128xbf16>, vector<128x128xbf16>, vector<128x128xbf16>, vector<128x128xbf16> -> vector<128x512xbf16>
    %c3_98 = arith.constant 3 : index
    %c0_99 = arith.constant 0 : index
    %c0_100 = arith.constant 0 : index
    %177 = vector.load %arg3[%c3_98, %c0_99, %c0_100] : memref<4x512x128xbf16, #tpu.memory_space<vmem>>, vector<1x512x128xbf16>
    %178 = vector.shape_cast %177 : vector<1x512x128xbf16> to vector<512x128xbf16>
    %cst_101 = arith.constant dense<0.000000e+00> : vector<128x128xf32>
    %179 = tpu.matmul %176, %178, %cst_101 {dimension_numbers = #tpu.dot_dimension_numbers<[1], [0], [0], [1], [0, 0, 1, 1], [], []>} : vector<128x512xbf16>, vector<512x128xbf16>, vector<128x128xf32> -> vector<128x128xf32>
    %180 = vector.shape_cast %179 : vector<128x128xf32> to vector<2x64x128xf32>
    %c3_102 = arith.constant 3 : index
    %c0_103 = arith.constant 0 : index
    %c0_104 = arith.constant 0 : index
    %c0_105 = arith.constant 0 : index
    %181 = vector.load %arg4[%c3_102, %c0_103, %c0_104, %c0_105] : memref<4x2x64x128xf32, #tpu.memory_space<vmem>>, vector<1x2x64x128xf32>
    %182 = vector.shape_cast %181 : vector<1x2x64x128xf32> to vector<2x64x128xf32>
    %183 = vector.shape_cast %180 : vector<2x64x128xf32> to vector<1x2x64x128xf32>
    tpu.vector_store %arg4[%c3_102, %c0_103, %c0_104, %c0_105], %183 {strides = array<i32>} : memref<4x2x64x128xf32, #tpu.memory_space<vmem>>, vector<1x2x64x128xf32>,
    %cst_106 = arith.constant dense<0.000000e+00> : vector<128xf32>
    %184 = vector.multi_reduction <add>, %179, %cst_106 [0] : vector<128x128xf32> to vector<128xf32>
    %185 = vector.shape_cast %184 : vector<128xf32> to vector<1x128xf32>
    %186 = arith.addf %163, %185 : vector<1x128xf32>
    %187 = arith.mulf %179, %179 : vector<128x128xf32>
    %cst_107 = arith.constant dense<0.000000e+00> : vector<128xf32>
    %188 = vector.multi_reduction <add>, %187, %cst_107 [0] : vector<128x128xf32> to vector<128xf32>
    %189 = vector.shape_cast %188 : vector<128xf32> to vector<1x128xf32>
    %190 = arith.addf %167, %189 : vector<1x128xf32>
    %c0_108 = arith.constant 0 : index
    %c0_109 = arith.constant 0 : index
    %c0_110 = arith.constant 0 : index
    %191 = vector.load %arg5[%c0_108, %c0_109, %c0_110] : memref<1x2x128xf32, #tpu.memory_space<vmem>>, vector<1x1x128xf32>
    %192 = vector.shape_cast %191 : vector<1x1x128xf32> to vector<1x128xf32>
    %193 = vector.shape_cast %186 : vector<1x128xf32> to vector<1x1x128xf32>
    tpu.vector_store %arg5[%c0_108, %c0_109, %c0_110], %193 {strides = array<i32>} : memref<1x2x128xf32, #tpu.memory_space<vmem>>, vector<1x1x128xf32>,
    %c0_111 = arith.constant 0 : index
    %c1_112 = arith.constant 1 : index
    %c0_113 = arith.constant 0 : index
    %194 = vector.load %arg5[%c0_111, %c1_112, %c0_113] : memref<1x2x128xf32, #tpu.memory_space<vmem>>, vector<1x1x128xf32>
    %195 = vector.shape_cast %194 : vector<1x1x128xf32> to vector<1x128xf32>
    %196 = vector.shape_cast %190 : vector<1x128xf32> to vector<1x1x128xf32>
    tpu.vector_store %arg5[%c0_111, %c1_112, %c0_113], %196 {strides = array<i32>} : memref<1x2x128xf32, #tpu.memory_space<vmem>>, vector<1x1x128xf32>,
    return
  }
  func.func @transform_0(%arg0: i32) -> (i32, i32, i32, i32, i32) {
    %c0_i32 = arith.constant 0 : i32
    %c0_i32_0 = arith.constant 0 : i32
    %c0_i32_1 = arith.constant 0 : i32
    %c0_i32_2 = arith.constant 0 : i32
    %c0_i32_3 = arith.constant 0 : i32
    return %c0_i32, %arg0, %c0_i32_0, %c0_i32_1, %c0_i32_2 : i32, i32, i32, i32, i32
  }
  func.func @transform_1(%arg0: i32) -> (i32, i32, i32) {
    %c0_i32 = arith.constant 0 : i32
    %c0_i32_0 = arith.constant 0 : i32
    %c0_i32_1 = arith.constant 0 : i32
    %c0_i32_2 = arith.constant 0 : i32
    return %c0_i32, %c0_i32_0, %c0_i32_1 : i32, i32, i32
  }
  func.func @transform_2(%arg0: i32) -> (i32, i32, i32) {
    %c0_i32 = arith.constant 0 : i32
    %c0_i32_0 = arith.constant 0 : i32
    %c0_i32_1 = arith.constant 0 : i32
    %c0_i32_2 = arith.constant 0 : i32
    return %c0_i32, %c0_i32_0, %c0_i32_1 : i32, i32, i32
  }
  func.func @transform_3(%arg0: i32) -> (i32, i32, i32, i32) {
    %c0_i32 = arith.constant 0 : i32
    %c0_i32_0 = arith.constant 0 : i32
    %c0_i32_1 = arith.constant 0 : i32
    %c0_i32_2 = arith.constant 0 : i32
    return %c0_i32, %arg0, %c0_i32_0, %c0_i32_1 : i32, i32, i32, i32
  }
  func.func @transform_4(%arg0: i32) -> (i32, i32, i32) {
    %c0_i32 = arith.constant 0 : i32
    %c0_i32_0 = arith.constant 0 : i32
    %c0_i32_1 = arith.constant 0 : i32
    return %arg0, %c0_i32, %c0_i32_0 : i32, i32, i32
  }
}

</mosaic_0001>

<llo_original>
// kernel: unet_innermost_forward.1
$region0: #{unet_innermost_forward.1}
  #allocation0 [shape = 'u32[]', space=smem, size = 0x4, offset = 0x4, fixed_abs, tag = 'smem constant byte address 0x4 - core index']
  #allocation1 [shape = 'u32[144,128]{1,0:T(1,128)}', space=vmem, size = 0x12000, scoped, tag = 'internal scratch']
  #allocation2 [shape = 'bf16[2,10,16,128]{3,2,1,0:T(16,128)(2,1)}', space=vmem, size = 0x14000, scoped, tag = 'scratch operand']
  %s0 = inlined_call_operand.vmem [shape: f32[4,2,9,16,128], index: 0, kind: input, shape index: {}]
  %s1 = inlined_call_operand.vmem [shape: bf16[4,512,128], index: 1, kind: input, shape index: {}]
  %s2 = inlined_call_operand.vmem [shape: bf16[4,512,128], index: 2, kind: input, shape index: {}]
  %s3 = inlined_call_operand.vmem [shape: f32[4,2,64,128], index: 3, kind: output, shape index: {0}]
  %s4 = inlined_call_operand.vmem [shape: f32[1,2,128], index: 4, kind: output, shape index: {1}]
  %5 = xla_tuple %s3, %s4
  %s6 = sld [smem:[#allocation0]]
  $region30: #{unet_innermost_forward.1} parent=0
    _
  %s8 = ssub.s32 1, %s6
  %s9 = scalar_select 0, %s8, %s6
  // Predicated region
  $region2: #{unet_innermost_forward.1} parent=0 // pred_check
    _
  $region3: #{unet_innermost_forward.1} parent=0 // pred_check_branch
    %11 = sbr.rel (0) target = $region5
  $region4: #{unet_innermost_forward.1} parent=0 // pred_region
    _
  $region5: #{unet_innermost_forward.1} parent=0 // pred_fallthru
    _
  // Predicated region
  $region6: #{unet_innermost_forward.1} parent=0 // pred_check
    _
  $region7: #{unet_innermost_forward.1} parent=0 // pred_check_branch
    %13 = sbr.rel (0) target = $region9
  $region8: #{unet_innermost_forward.1} parent=0 // pred_region
    _
  $region9: #{unet_innermost_forward.1} parent=0 // pred_fallthru
    _
  // Predicated region
  $region10: #{unet_innermost_forward.1} parent=0 // pred_check
    _
  $region11: #{unet_innermost_forward.1} parent=0 // pred_check_branch
    %15 = sbr.rel (0) target = $region13
  $region12: #{unet_innermost_forward.1} parent=0 // pred_region
    _
  $region13: #{unet_innermost_forward.1} parent=0 // pred_fallthru
    _
  %v17 = vld [vmem:[%s0] sm:$0xff]
  %v18 = vld [vmem:[%s0 + $0x8] sm:$0xff]
  %v19 = vld [vmem:[%s0 + $0x10] sm:$0xff]
  %v20 = vld [vmem:[%s0 + $0x18] sm:$0xff]
  %v21 = vld [vmem:[%s0 + $0x20] sm:$0xff]
  %v22 = vld [vmem:[%s0 + $0x28] sm:$0xff]
  %v23 = vld [vmem:[%s0 + $0x30] sm:$0xff]
  %v24 = vld [vmem:[%s0 + $0x38] sm:$0xff]
  %v25 = vld [vmem:[%s0 + $0x40] sm:$0xff]
  %v26 = vld [vmem:[%s0 + $0x48] sm:$0xff]
  %v27 = vld [vmem:[%s0 + $0x50] sm:$0xff]
  %v28 = vld [vmem:[%s0 + $0x58] sm:$0xff]
  %v29 = vld [vmem:[%s0 + $0x60] sm:$0xff]
  %v30 = vld [vmem:[%s0 + $0x68] sm:$0xff]
  %v31 = vld [vmem:[%s0 + $0x70] sm:$0xff]
  %v32 = vld [vmem:[%s0 + $0x78] sm:$0xff]
  %v33 = vld [vmem:[%s0 + $0x80] sm:$0xff]
  %v34 = vld [vmem:[%s0 + $0x88] sm:$0xff]
  %v35 = vld [vmem:[%s0 + $0x90] sm:$0xff]
  %v36 = vld [vmem:[%s0 + $0x98] sm:$0xff]
  %v37 = vld [vmem:[%s0 + $0xa0] sm:$0xff]
  %v38 = vld [vmem:[%s0 + $0xa8] sm:$0xff]
  %v39 = vld [vmem:[%s0 + $0xb0] sm:$0xff]
  %v40 = vld [vmem:[%s0 + $0xb8] sm:$0xff]
  %v41 = vld [vmem:[%s0 + $0xc0] sm:$0xff]
  %v42 = vld [vmem:[%s0 + $0xc8] sm:$0xff]
  %v43 = vld [vmem:[%s0 + $0xd0] sm:$0xff]
  %v44 = vld [vmem:[%s0 + $0xd8] sm:$0xff]
  %v45 = vld [vmem:[%s0 + $0xe0] sm:$0xff]
  %v46 = vld [vmem:[%s0 + $0xe8] sm:$0xff]
  %v47 = vld [vmem:[%s0 + $0xf0] sm:$0xff]
  %v48 = vld [vmem:[%s0 + $0xf8] sm:$0xff]
  %v49 = vld [vmem:[%s0 + $0x100] sm:$0xff]
  %v50 = vld [vmem:[%s0 + $0x108] sm:$0xff]
  %v51 = vld [vmem:[%s0 + $0x110] sm:$0xff]
  %v52 = vld [vmem:[%s0 + $0x118] sm:$0xff]
  %vm53 = vcmp.gt.f32.partialorder %v17, 0.0
  %vm54 = vcmp.gt.f32.partialorder %v18, 0.0
  %vm55 = vcmp.gt.f32.partialorder %v19, 0.0
  %vm56 = vcmp.gt.f32.partialorder %v20, 0.0
  %vm57 = vcmp.gt.f32.partialorder %v21, 0.0
  %vm58 = vcmp.gt.f32.partialorder %v22, 0.0
  %vm59 = vcmp.gt.f32.partialorder %v23, 0.0
  %vm60 = vcmp.gt.f32.partialorder %v24, 0.0
  %vm61 = vcmp.gt.f32.partialorder %v25, 0.0
  %vm62 = vcmp.gt.f32.partialorder %v26, 0.0
  %vm63 = vcmp.gt.f32.partialorder %v27, 0.0
  %vm64 = vcmp.gt.f32.partialorder %v28, 0.0
  %vm65 = vcmp.gt.f32.partialorder %v29, 0.0
  %vm66 = vcmp.gt.f32.partialorder %v30, 0.0
  %vm67 = vcmp.gt.f32.partialorder %v31, 0.0
  %vm68 = vcmp.gt.f32.partialorder %v32, 0.0
  %vm69 = vcmp.gt.f32.partialorder %v33, 0.0
  %vm70 = vcmp.gt.f32.partialorder %v34, 0.0
  %vm71 = vcmp.gt.f32.partialorder %v35, 0.0
  %vm72 = vcmp.gt.f32.partialorder %v36, 0.0
  %vm73 = vcmp.gt.f32.partialorder %v37, 0.0
  %vm74 = vcmp.gt.f32.partialorder %v38, 0.0
  %vm75 = vcmp.gt.f32.partialorder %v39, 0.0
  %vm76 = vcmp.gt.f32.partialorder %v40, 0.0
  %vm77 = vcmp.gt.f32.partialorder %v41, 0.0
  %vm78 = vcmp.gt.f32.partialorder %v42, 0.0
  %vm79 = vcmp.gt.f32.partialorder %v43, 0.0
  %vm80 = vcmp.gt.f32.partialorder %v44, 0.0
  %vm81 = vcmp.gt.f32.partialorder %v45, 0.0
  %vm82 = vcmp.gt.f32.partialorder %v46, 0.0
  %vm83 = vcmp.gt.f32.partialorder %v47, 0.0
  %vm84 = vcmp.gt.f32.partialorder %v48, 0.0
  %vm85 = vcmp.gt.f32.partialorder %v49, 0.0
  %vm86 = vcmp.gt.f32.partialorder %v50, 0.0
  %vm87 = vcmp.gt.f32.partialorder %v51, 0.0
  %vm88 = vcmp.gt.f32.partialorder %v52, 0.0
  %v89 = vmul.f32 %v17, 0.2
  %v90 = vmul.f32 %v18, 0.2
  %v91 = vmul.f32 %v19, 0.2
  %v92 = vmul.f32 %v20, 0.2
  %v93 = vmul.f32 %v21, 0.2
  %v94 = vmul.f32 %v22, 0.2
  %v95 = vmul.f32 %v23, 0.2
  %v96 = vmul.f32 %v24, 0.2
  %v97 = vmul.f32 %v25, 0.2
  %v98 = vmul.f32 %v26, 0.2
  %v99 = vmul.f32 %v27, 0.2
  %v100 = vmul.f32 %v28, 0.2
  %v101 = vmul.f32 %v29, 0.2
  %v102 = vmul.f32 %v30, 0.2
  %v103 = vmul.f32 %v31, 0.2
  %v104 = vmul.f32 %v32, 0.2
  %v105 = vmul.f32 %v33, 0.2
  %v106 = vmul.f32 %v34, 0.2
  %v107 = vmul.f32 %v35, 0.2
  %v108 = vmul.f32 %v36, 0.2
  %v109 = vmul.f32 %v37, 0.2
  %v110 = vmul.f32 %v38, 0.2
  %v111 = vmul.f32 %v39, 0.2
  %v112 = vmul.f32 %v40, 0.2
  %v113 = vmul.f32 %v41, 0.2
  %v114 = vmul.f32 %v42, 0.2
  %v115 = vmul.f32 %v43, 0.2
  %v116 = vmul.f32 %v44, 0.2
  %v117 = vmul.f32 %v45, 0.2
  %v118 = vmul.f32 %v46, 0.2
  %v119 = vmul.f32 %v47, 0.2
  %v120 = vmul.f32 %v48, 0.2
  %v121 = vmul.f32 %v49, 0.2
  %v122 = vmul.f32 %v50, 0.2
  %v123 = vmul.f32 %v51, 0.2
  %v124 = vmul.f32 %v52, 0.2
  %v125 = vsel %vm53, %v17, %v89
  %v126 = vsel %vm54, %v18, %v90
  %v127 = vsel %vm55, %v19, %v91
  %v128 = vsel %vm56, %v20, %v92
  %v129 = vsel %vm57, %v21, %v93
  %v130 = vsel %vm58, %v22, %v94
  %v131 = vsel %vm59, %v23, %v95
  %v132 = vsel %vm60, %v24, %v96
  %v133 = vsel %vm61, %v25, %v97
  %v134 = vsel %vm62, %v26, %v98
  %v135 = vsel %vm63, %v27, %v99
  %v136 = vsel %vm64, %v28, %v100
  %v137 = vsel %vm65, %v29, %v101
  %v138 = vsel %vm66, %v30, %v102
  %v139 = vsel %vm67, %v31, %v103
  %v140 = vsel %vm68, %v32, %v104
  %v141 = vsel %vm69, %v33, %v105
  %v142 = vsel %vm70, %v34, %v106
  %v143 = vsel %vm71, %v35, %v107
  %v144 = vsel %vm72, %v36, %v108
  %v145 = vsel %vm73, %v37, %v109
  %v146 = vsel %vm74, %v38, %v110
  %v147 = vsel %vm75, %v39, %v111
  %v148 = vsel %vm76, %v40, %v112
  %v149 = vsel %vm77, %v41, %v113
  %v150 = vsel %vm78, %v42, %v114
  %v151 = vsel %vm79, %v43, %v115
  %v152 = vsel %vm80, %v44, %v116
  %v153 = vsel %vm81, %v45, %v117
  %v154 = vsel %vm82, %v46, %v118
  %v155 = vsel %vm83, %v47, %v119
  %v156 = vsel %vm84, %v48, %v120
  %v157 = vsel %vm85, %v49, %v121
  %v158 = vsel %vm86, %v50, %v122
  %v159 = vsel %vm87, %v51, %v123
  %v160 = vsel %vm88, %v52, %v124
  %v161 = vpack.c.bf16 %v126, %v125
  %v162 = vpack.c.bf16 %v128, %v127
  %v163 = vpack.c.bf16 %v130, %v129
  %v164 = vpack.c.bf16 %v132, %v131
  %v165 = vpack.c.bf16 %v134, %v133
  %v166 = vpack.c.bf16 %v136, %v135
  %v167 = vpack.c.bf16 %v138, %v137
  %v168 = vpack.c.bf16 %v140, %v139
  %v169 = vpack.c.bf16 %v142, %v141
  %v170 = vpack.c.bf16 %v144, %v143
  %v171 = vpack.c.bf16 %v146, %v145
  %v172 = vpack.c.bf16 %v148, %v147
  %v173 = vpack.c.bf16 %v150, %v149
  %v174 = vpack.c.bf16 %v152, %v151
  %v175 = vpack.c.bf16 %v154, %v153
  %v176 = vpack.c.bf16 %v156, %v155
  %v177 = vpack.c.bf16 %v158, %v157
  %v178 = vpack.c.bf16 %v160, %v159
  %v195 = vunpack.c.l.b16 %v161
  %v196 = vunpack.c.h.b16 %v161
  %v197 = vunpack.c.l.b16 %v162
  %v198 = vunpack.c.h.b16 %v162
  %v199 = vunpack.c.l.b16 %v163
  %v200 = vunpack.c.h.b16 %v163
  %v201 = vunpack.c.l.b16 %v164
  %v202 = vunpack.c.h.b16 %v164
  %v203 = vunpack.c.l.b16 %v165
  %v204 = vunpack.c.h.b16 %v165
  %v205 = vunpack.c.l.b16 %v166
  %v206 = vunpack.c.h.b16 %v166
  %v207 = vunpack.c.l.b16 %v167
  %v208 = vunpack.c.h.b16 %v167
  %v209 = vunpack.c.l.b16 %v168
  %v210 = vunpack.c.h.b16 %v168
  %v211 = vunpack.c.l.b16 %v170
  %v212 = vunpack.c.h.b16 %v170
  %v213 = vunpack.c.l.b16 %v171
  %v214 = vunpack.c.h.b16 %v171
  %v215 = vunpack.c.l.b16 %v172
  %v216 = vunpack.c.h.b16 %v172
  %v217 = vunpack.c.l.b16 %v173
  %v218 = vunpack.c.h.b16 %v173
  %v219 = vunpack.c.l.b16 %v174
  %v220 = vunpack.c.h.b16 %v174
  %v221 = vunpack.c.l.b16 %v175
  %v222 = vunpack.c.h.b16 %v175
  %v223 = vunpack.c.l.b16 %v176
  %v224 = vunpack.c.h.b16 %v176
  %v225 = vunpack.c.l.b16 %v177
  %v226 = vunpack.c.h.b16 %v177
  %v227 = vpack.c.b16 %v195, %v195
  %v228 = vpack.c.b16 %v196, %v196
  %v229 = vpack.c.b16 %v197, %v197
  %v230 = vpack.c.b16 %v198, %v198
  %v231 = vpack.c.b16 %v199, %v199
  %v232 = vpack.c.b16 %v200, %v200
  %v233 = vpack.c.b16 %v201, %v201
  %v234 = vpack.c.b16 %v202, %v202
  %v235 = vpack.c.b16 %v203, %v203
  %v236 = vpack.c.b16 %v204, %v204
  %v237 = vpack.c.b16 %v205, %v205
  %v238 = vpack.c.b16 %v206, %v206
  %v239 = vpack.c.b16 %v207, %v207
  %v240 = vpack.c.b16 %v208, %v208
  %v241 = vpack.c.b16 %v209, %v209
  %v242 = vpack.c.b16 %v210, %v210
  %v243 = vpack.c.b16 %v211, %v211
  %v244 = vpack.c.b16 %v212, %v212
  %v245 = vpack.c.b16 %v213, %v213
  %v246 = vpack.c.b16 %v214, %v214
  %v247 = vpack.c.b16 %v215, %v215
  %v248 = vpack.c.b16 %v216, %v216
  %v249 = vpack.c.b16 %v217, %v217
  %v250 = vpack.c.b16 %v218, %v218
  %v251 = vpack.c.b16 %v219, %v219
  %v252 = vpack.c.b16 %v220, %v220
  %v253 = vpack.c.b16 %v221, %v221
  %v254 = vpack.c.b16 %v222, %v222
  %v255 = vpack.c.b16 %v223, %v223
  %v256 = vpack.c.b16 %v224, %v224
  %v257 = vpack.c.b16 %v225, %v225
  %v258 = vpack.c.b16 %v226, %v226
  %vm259 = vsmask.f32 3328
  %vm260 = vsmask.f32 7440
  %vm261 = vmor %vm259, %vm260
  %v263 = vshrl.u32 %v227, 16
  %v265 = vrot.slane %v263, 4
  %v266 = vshll.u32 %v227, 16
  %v268 = vrot.slane %v266, 5
  %v269 = vor.u32 %v265, %v268
  %v270 = vrot.slane %v269, 4
  %v272 = vshll.u32 %v228, 16
  %v274 = vrot.slane %v272, 5
  %v275 = vsel %vm261, %v270, %v274
  %v277 = vshrl.u32 %v229, 16
  %v279 = vrot.slane %v277, 4
  %v280 = vshll.u32 %v229, 16
  %v282 = vrot.slane %v280, 5
  %v283 = vor.u32 %v279, %v282
  %v284 = vrot.slane %v283, 4
  %v286 = vshll.u32 %v230, 16
  %v288 = vrot.slane %v286, 5
  %v289 = vsel %vm261, %v284, %v288
  %v291 = vshrl.u32 %v231, 16
  %v293 = vrot.slane %v291, 4
  %v294 = vshll.u32 %v231, 16
  %v296 = vrot.slane %v294, 5
  %v297 = vor.u32 %v293, %v296
  %v298 = vrot.slane %v297, 4
  %v300 = vshll.u32 %v232, 16
  %v302 = vrot.slane %v300, 5
  %v303 = vsel %vm261, %v298, %v302
  %v305 = vshrl.u32 %v233, 16
  %v307 = vrot.slane %v305, 4
  %v308 = vshll.u32 %v233, 16
  %v310 = vrot.slane %v308, 5
  %v311 = vor.u32 %v307, %v310
  %v312 = vrot.slane %v311, 4
  %v314 = vshll.u32 %v234, 16
  %v316 = vrot.slane %v314, 5
  %v317 = vsel %vm261, %v312, %v316
  %v319 = vshrl.u32 %v235, 16
  %v321 = vrot.slane %v319, 4
  %v322 = vshll.u32 %v235, 16
  %v324 = vrot.slane %v322, 5
  %v325 = vor.u32 %v321, %v324
  %v326 = vrot.slane %v325, 4
  %v328 = vshll.u32 %v236, 16
  %v330 = vrot.slane %v328, 5
  %v331 = vsel %vm261, %v326, %v330
  %v333 = vshrl.u32 %v237, 16
  %v335 = vrot.slane %v333, 4
  %v336 = vshll.u32 %v237, 16
  %v338 = vrot.slane %v336, 5
  %v339 = vor.u32 %v335, %v338
  %v340 = vrot.slane %v339, 4
  %v342 = vshll.u32 %v238, 16
  %v344 = vrot.slane %v342, 5
  %v345 = vsel %vm261, %v340, %v344
  %v347 = vshrl.u32 %v239, 16
  %v349 = vrot.slane %v347, 4
  %v350 = vshll.u32 %v239, 16
  %v352 = vrot.slane %v350, 5
  %v353 = vor.u32 %v349, %v352
  %v354 = vrot.slane %v353, 4
  %v356 = vshll.u32 %v240, 16
  %v358 = vrot.slane %v356, 5
  %v359 = vsel %vm261, %v354, %v358
  %v361 = vshrl.u32 %v241, 16
  %v363 = vrot.slane %v361, 4
  %v364 = vshll.u32 %v241, 16
  %v366 = vrot.slane %v364, 5
  %v367 = vor.u32 %v363, %v366
  %v368 = vrot.slane %v367, 4
  %v370 = vshll.u32 %v242, 16
  %v372 = vrot.slane %v370, 5
  %v373 = vsel %vm261, %v368, %v372
  %v375 = vshrl.u32 %v243, 16
  %v377 = vrot.slane %v375, 4
  %v378 = vshll.u32 %v243, 16
  %v380 = vrot.slane %v378, 5
  %v381 = vor.u32 %v377, %v380
  %v382 = vrot.slane %v381, 4
  %v384 = vshll.u32 %v244, 16
  %v386 = vrot.slane %v384, 5
  %v387 = vsel %vm261, %v382, %v386
  %v389 = vshrl.u32 %v245, 16
  %v391 = vrot.slane %v389, 4
  %v392 = vshll.u32 %v245, 16
  %v394 = vrot.slane %v392, 5
  %v395 = vor.u32 %v391, %v394
  %v396 = vrot.slane %v395, 4
  %v398 = vshll.u32 %v246, 16
  %v400 = vrot.slane %v398, 5
  %v401 = vsel %vm261, %v396, %v400
  %v403 = vshrl.u32 %v247, 16
  %v405 = vrot.slane %v403, 4
  %v406 = vshll.u32 %v247, 16
  %v408 = vrot.slane %v406, 5
  %v409 = vor.u32 %v405, %v408
  %v410 = vrot.slane %v409, 4
  %v412 = vshll.u32 %v248, 16
  %v414 = vrot.slane %v412, 5
  %v415 = vsel %vm261, %v410, %v414
  %v417 = vshrl.u32 %v249, 16
  %v419 = vrot.slane %v417, 4
  %v420 = vshll.u32 %v249, 16
  %v422 = vrot.slane %v420, 5
  %v423 = vor.u32 %v419, %v422
  %v424 = vrot.slane %v423, 4
  %v426 = vshll.u32 %v250, 16
  %v428 = vrot.slane %v426, 5
  %v429 = vsel %vm261, %v424, %v428
  %v431 = vshrl.u32 %v251, 16
  %v433 = vrot.slane %v431, 4
  %v434 = vshll.u32 %v251, 16
  %v436 = vrot.slane %v434, 5
  %v437 = vor.u32 %v433, %v436
  %v438 = vrot.slane %v437, 4
  %v440 = vshll.u32 %v252, 16
  %v442 = vrot.slane %v440, 5
  %v443 = vsel %vm261, %v438, %v442
  %v445 = vshrl.u32 %v253, 16
  %v447 = vrot.slane %v445, 4
  %v448 = vshll.u32 %v253, 16
  %v450 = vrot.slane %v448, 5
  %v451 = vor.u32 %v447, %v450
  %v452 = vrot.slane %v451, 4
  %v454 = vshll.u32 %v254, 16
  %v456 = vrot.slane %v454, 5
  %v457 = vsel %vm261, %v452, %v456
  %v459 = vshrl.u32 %v255, 16
  %v461 = vrot.slane %v459, 4
  %v462 = vshll.u32 %v255, 16
  %v464 = vrot.slane %v462, 5
  %v465 = vor.u32 %v461, %v464
  %v466 = vrot.slane %v465, 4
  %v468 = vshll.u32 %v256, 16
  %v470 = vrot.slane %v468, 5
  %v471 = vsel %vm261, %v466, %v470
  %v473 = vshrl.u32 %v257, 16
  %v475 = vrot.slane %v473, 4
  %v476 = vshll.u32 %v257, 16
  %v478 = vrot.slane %v476, 5
  %v479 = vor.u32 %v475, %v478
  %v480 = vrot.slane %v479, 4
  %v482 = vshll.u32 %v258, 16
  %v484 = vrot.slane %v482, 5
  %v485 = vsel %vm261, %v480, %v484
  %v488 = vunpack.c.l.b16 %v169
  %v489 = vunpack.c.h.b16 %v169
  %v490 = vunpack.c.l.b16 %v178
  %v491 = vunpack.c.h.b16 %v178
  %v492 = vpack.c.b16 %v488, %v488
  %v493 = vpack.c.b16 %v489, %v489
  %v494 = vpack.c.b16 %v490, %v490
  %v495 = vpack.c.b16 %v491, %v491
  %v497 = vshrl.u32 %v492, 16
  %v499 = vrot.slane %v497, 4
  %v500 = vshll.u32 %v492, 16
  %v502 = vrot.slane %v500, 5
  %v503 = vor.u32 %v499, %v502
  %v504 = vrot.slane %v503, 4
  %v506 = vshll.u32 %v493, 16
  %v508 = vrot.slane %v506, 5
  %v509 = vsel %vm261, %v504, %v508
  %v511 = vshrl.u32 %v494, 16
  %v513 = vrot.slane %v511, 4
  %v514 = vshll.u32 %v494, 16
  %v516 = vrot.slane %v514, 5
  %v517 = vor.u32 %v513, %v516
  %v518 = vrot.slane %v517, 4
  %v520 = vshll.u32 %v495, 16
  %v522 = vrot.slane %v520, 5
  %v523 = vsel %vm261, %v518, %v522
  %v524 = vpack.c.b16 %v197, %v195
  %v525 = vpack.c.b16 %v201, %v199
  %v526 = vpack.c.b16 %v205, %v203
  %v527 = vpack.c.b16 %v209, %v207
  %v528 = vpack.c.b16 %v213, %v211
  %v529 = vpack.c.b16 %v217, %v215
  %v530 = vpack.c.b16 %v221, %v219
  %v531 = vpack.c.b16 %v225, %v223
  %v540 = vunpack.c.l.b16 %v275
  %v541 = vunpack.c.l.b16 %v289
  %v542 = vunpack.c.l.b16 %v303
  %v543 = vunpack.c.l.b16 %v317
  %v544 = vunpack.c.l.b16 %v331
  %v545 = vunpack.c.l.b16 %v345
  %v546 = vunpack.c.l.b16 %v359
  %v547 = vunpack.c.l.b16 %v373
  %v548 = vunpack.c.l.b16 %v387
  %v549 = vunpack.c.l.b16 %v401
  %v550 = vunpack.c.l.b16 %v415
  %v551 = vunpack.c.l.b16 %v429
  %v552 = vunpack.c.l.b16 %v443
  %v553 = vunpack.c.l.b16 %v457
  %v554 = vunpack.c.l.b16 %v471
  %v555 = vunpack.c.l.b16 %v485
  %v556 = vpack.c.b16 %v541, %v540
  %v557 = vpack.c.b16 %v543, %v542
  %v558 = vpack.c.b16 %v545, %v544
  %v559 = vpack.c.b16 %v547, %v546
  %v560 = vpack.c.b16 %v549, %v548
  %v561 = vpack.c.b16 %v551, %v550
  %v562 = vpack.c.b16 %v553, %v552
  %v563 = vpack.c.b16 %v555, %v554
  %v572 = vpack.c.b16 %v199, %v197
  %v573 = vpack.c.b16 %v203, %v201
  %v574 = vpack.c.b16 %v207, %v205
  %v575 = vpack.c.b16 %v488, %v209
  %v576 = vpack.c.b16 %v215, %v213
  %v577 = vpack.c.b16 %v219, %v217
  %v578 = vpack.c.b16 %v223, %v221
  %v579 = vpack.c.b16 %v490, %v225
  %v588 = vunpack.c.l.b16 %v509
  %v589 = vunpack.c.l.b16 %v523
  %v590 = vpack.c.b16 %v542, %v541
  %v591 = vpack.c.b16 %v544, %v543
  %v592 = vpack.c.b16 %v546, %v545
  %v593 = vpack.c.b16 %v588, %v547
  %v594 = vpack.c.b16 %v550, %v549
  %v595 = vpack.c.b16 %v552, %v551
  %v596 = vpack.c.b16 %v554, %v553
  %v597 = vpack.c.b16 %v589, %v555
  %v606 = vld [vmem:[%s1] sm:$0xf]
  %v607 = vld [vmem:[%s1 + $0x4] sm:$0xf]
  %v608 = vld [vmem:[%s1 + $0x8] sm:$0xf]
  %v609 = vld [vmem:[%s1 + $0xc] sm:$0xf]
  %v610 = vld [vmem:[%s1 + $0x10] sm:$0xf]
  %v611 = vld [vmem:[%s1 + $0x14] sm:$0xf]
  %v612 = vld [vmem:[%s1 + $0x18] sm:$0xf]
  %v613 = vld [vmem:[%s1 + $0x1c] sm:$0xf]
  %v614 = vld [vmem:[%s1 + $0x20] sm:$0xf]
  %v615 = vld [vmem:[%s1 + $0x24] sm:$0xf]
  %v616 = vld [vmem:[%s1 + $0x28] sm:$0xf]
  %v617 = vld [vmem:[%s1 + $0x2c] sm:$0xf]
  %v618 = vld [vmem:[%s1 + $0x30] sm:$0xf]
  %v619 = vld [vmem:[%s1 + $0x34] sm:$0xf]
  %v620 = vld [vmem:[%s1 + $0x38] sm:$0xf]
  %v621 = vld [vmem:[%s1 + $0x3c] sm:$0xf]
  %v622 = vld [vmem:[%s1 + $0x40] sm:$0xf]
  %v623 = vld [vmem:[%s1 + $0x44] sm:$0xf]
  %v624 = vld [vmem:[%s1 + $0x48] sm:$0xf]
  %v625 = vld [vmem:[%s1 + $0x4c] sm:$0xf]
  %v626 = vld [vmem:[%s1 + $0x50] sm:$0xf]
  %v627 = vld [vmem:[%s1 + $0x54] sm:$0xf]
  %v628 = vld [vmem:[%s1 + $0x58] sm:$0xf]
  %v629 = vld [vmem:[%s1 + $0x5c] sm:$0xf]
  %v630 = vld [vmem:[%s1 + $0x60] sm:$0xf]
  %v631 = vld [vmem:[%s1 + $0x64] sm:$0xf]
  %v632 = vld [vmem:[%s1 + $0x68] sm:$0xf]
  %v633 = vld [vmem:[%s1 + $0x6c] sm:$0xf]
  %v634 = vld [vmem:[%s1 + $0x70] sm:$0xf]
  %v635 = vld [vmem:[%s1 + $0x74] sm:$0xf]
  %v636 = vld [vmem:[%s1 + $0x78] sm:$0xf]
  %v637 = vld [vmem:[%s1 + $0x7c] sm:$0xf]
  %v638 = vld [vmem:[%s1 + $0x80] sm:$0xf]
  %v639 = vld [vmem:[%s1 + $0x84] sm:$0xf]
  %v640 = vld [vmem:[%s1 + $0x88] sm:$0xf]
  %v641 = vld [vmem:[%s1 + $0x8c] sm:$0xf]
  %v642 = vld [vmem:[%s1 + $0x90] sm:$0xf]
  %v643 = vld [vmem:[%s1 + $0x94] sm:$0xf]
  %v644 = vld [vmem:[%s1 + $0x98] sm:$0xf]
  %v645 = vld [vmem:[%s1 + $0x9c] sm:$0xf]
  %v646 = vld [vmem:[%s1 + $0xa0] sm:$0xf]
  %v647 = vld [vmem:[%s1 + $0xa4] sm:$0xf]
  %v648 = vld [vmem:[%s1 + $0xa8] sm:$0xf]
  %v649 = vld [vmem:[%s1 + $0xac] sm:$0xf]
  %v650 = vld [vmem:[%s1 + $0xb0] sm:$0xf]
  %v651 = vld [vmem:[%s1 + $0xb4] sm:$0xf]
  %v652 = vld [vmem:[%s1 + $0xb8] sm:$0xf]
  %v653 = vld [vmem:[%s1 + $0xbc] sm:$0xf]
  %v654 = vld [vmem:[%s1 + $0xc0] sm:$0xf]
  %v655 = vld [vmem:[%s1 + $0xc4] sm:$0xf]
  %v656 = vld [vmem:[%s1 + $0xc8] sm:$0xf]
  %v657 = vld [vmem:[%s1 + $0xcc] sm:$0xf]
  %v658 = vld [vmem:[%s1 + $0xd0] sm:$0xf]
  %v659 = vld [vmem:[%s1 + $0xd4] sm:$0xf]
  %v660 = vld [vmem:[%s1 + $0xd8] sm:$0xf]
  %v661 = vld [vmem:[%s1 + $0xdc] sm:$0xf]
  %v662 = vld [vmem:[%s1 + $0xe0] sm:$0xf]
  %v663 = vld [vmem:[%s1 + $0xe4] sm:$0xf]
  %v664 = vld [vmem:[%s1 + $0xe8] sm:$0xf]
  %v665 = vld [vmem:[%s1 + $0xec] sm:$0xf]
  %v666 = vld [vmem:[%s1 + $0xf0] sm:$0xf]
  %v667 = vld [vmem:[%s1 + $0xf4] sm:$0xf]
  %v668 = vld [vmem:[%s1 + $0xf8] sm:$0xf]
  %v669 = vld [vmem:[%s1 + $0xfc] sm:$0xf]
  %s670 = scalar_lea.vmem %s0, 288
  %v671 = vld [vmem:[%s670] sm:$0xff]
  %v672 = vld [vmem:[%s670 + $0x8] sm:$0xff]
  %v673 = vld [vmem:[%s670 + $0x10] sm:$0xff]
  %v674 = vld [vmem:[%s670 + $0x18] sm:$0xff]
  %v675 = vld [vmem:[%s670 + $0x20] sm:$0xff]
  %v676 = vld [vmem:[%s670 + $0x28] sm:$0xff]
  %v677 = vld [vmem:[%s670 + $0x30] sm:$0xff]
  %v678 = vld [vmem:[%s670 + $0x38] sm:$0xff]
  %v679 = vld [vmem:[%s670 + $0x40] sm:$0xff]
  %v680 = vld [vmem:[%s670 + $0x48] sm:$0xff]
  %v681 = vld [vmem:[%s670 + $0x50] sm:$0xff]
  %v682 = vld [vmem:[%s670 + $0x58] sm:$0xff]
  %v683 = vld [vmem:[%s670 + $0x60] sm:$0xff]
  %v684 = vld [vmem:[%s670 + $0x68] sm:$0xff]
  %v685 = vld [vmem:[%s670 + $0x70] sm:$0xff]
  %v686 = vld [vmem:[%s670 + $0x78] sm:$0xff]
  %v687 = vld [vmem:[%s670 + $0x80] sm:$0xff]
  %v688 = vld [vmem:[%s670 + $0x88] sm:$0xff]
  %v689 = vld [vmem:[%s670 + $0x90] sm:$0xff]
  %v690 = vld [vmem:[%s670 + $0x98] sm:$0xff]
  %v691 = vld [vmem:[%s670 + $0xa0] sm:$0xff]
  %v692 = vld [vmem:[%s670 + $0xa8] sm:$0xff]
  %v693 = vld [vmem:[%s670 + $0xb0] sm:$0xff]
  %v694 = vld [vmem:[%s670 + $0xb8] sm:$0xff]
  %v695 = vld [vmem:[%s670 + $0xc0] sm:$0xff]
  %v696 = vld [vmem:[%s670 + $0xc8] sm:$0xff]
  %v697 = vld [vmem:[%s670 + $0xd0] sm:$0xff]
  %v698 = vld [vmem:[%s670 + $0xd8] sm:$0xff]
  %v699 = vld [vmem:[%s670 + $0xe0] sm:$0xff]
  %v700 = vld [vmem:[%s670 + $0xe8] sm:$0xff]
  %v701 = vld [vmem:[%s670 + $0xf0] sm:$0xff]
  %v702 = vld [vmem:[%s670 + $0xf8] sm:$0xff]
  %v703 = vld [vmem:[%s670 + $0x100] sm:$0xff]
  %v704 = vld [vmem:[%s670 + $0x108] sm:$0xff]
  %v705 = vld [vmem:[%s670 + $0x110] sm:$0xff]
  %v706 = vld [vmem:[%s670 + $0x118] sm:$0xff]
  %vm707 = vcmp.gt.f32.partialorder %v671, 0.0
  %vm708 = vcmp.gt.f32.partialorder %v672, 0.0
  %vm709 = vcmp.gt.f32.partialorder %v673, 0.0
  %vm710 = vcmp.gt.f32.partialorder %v674, 0.0
  %vm711 = vcmp.gt.f32.partialorder %v675, 0.0
  %vm712 = vcmp.gt.f32.partialorder %v676, 0.0
  %vm713 = vcmp.gt.f32.partialorder %v677, 0.0
  %vm714 = vcmp.gt.f32.partialorder %v678, 0.0
  %vm715 = vcmp.gt.f32.partialorder %v679, 0.0
  %vm716 = vcmp.gt.f32.partialorder %v680, 0.0
  %vm717 = vcmp.gt.f32.partialorder %v681, 0.0
  %vm718 = vcmp.gt.f32.partialorder %v682, 0.0
  %vm719 = vcmp.gt.f32.partialorder %v683, 0.0
  %vm720 = vcmp.gt.f32.partialorder %v684, 0.0
  %vm721 = vcmp.gt.f32.partialorder %v685, 0.0
  %vm722 = vcmp.gt.f32.partialorder %v686, 0.0
  %vm723 = vcmp.gt.f32.partialorder %v687, 0.0
  %vm724 = vcmp.gt.f32.partialorder %v688, 0.0
  %vm725 = vcmp.gt.f32.partialorder %v689, 0.0
  %vm726 = vcmp.gt.f32.partialorder %v690, 0.0
  %vm727 = vcmp.gt.f32.partialorder %v691, 0.0
  %vm728 = vcmp.gt.f32.partialorder %v692, 0.0
  %vm729 = vcmp.gt.f32.partialorder %v693, 0.0
  %vm730 = vcmp.gt.f32.partialorder %v694, 0.0
  %vm731 = vcmp.gt.f32.partialorder %v695, 0.0
  %vm732 = vcmp.gt.f32.partialorder %v696, 0.0
  %vm733 = vcmp.gt.f32.partialorder %v697, 0.0
  %vm734 = vcmp.gt.f32.partialorder %v698, 0.0
  %vm735 = vcmp.gt.f32.partialorder %v699, 0.0
  %vm736 = vcmp.gt.f32.partialorder %v700, 0.0
  %vm737 = vcmp.gt.f32.partialorder %v701, 0.0
  %vm738 = vcmp.gt.f32.partialorder %v702, 0.0
  %vm739 = vcmp.gt.f32.partialorder %v703, 0.0
  %vm740 = vcmp.gt.f32.partialorder %v704, 0.0
  %vm741 = vcmp.gt.f32.partialorder %v705, 0.0
  %vm742 = vcmp.gt.f32.partialorder %v706, 0.0
  %v743 = vmul.f32 %v671, 0.2
  %v744 = vmul.f32 %v672, 0.2
  %v745 = vmul.f32 %v673, 0.2
  %v746 = vmul.f32 %v674, 0.2
  %v747 = vmul.f32 %v675, 0.2
  %v748 = vmul.f32 %v676, 0.2
  %v749 = vmul.f32 %v677, 0.2
  %v750 = vmul.f32 %v678, 0.2
  %v751 = vmul.f32 %v679, 0.2
  %v752 = vmul.f32 %v680, 0.2
  %v753 = vmul.f32 %v681, 0.2
  %v754 = vmul.f32 %v682, 0.2
  %v755 = vmul.f32 %v683, 0.2
  %v756 = vmul.f32 %v684, 0.2
  %v757 = vmul.f32 %v685, 0.2
  %v758 = vmul.f32 %v686, 0.2
  %v759 = vmul.f32 %v687, 0.2
  %v760 = vmul.f32 %v688, 0.2
  %v761 = vmul.f32 %v689, 0.2
  %v762 = vmul.f32 %v690, 0.2
  %v763 = vmul.f32 %v691, 0.2
  %v764 = vmul.f32 %v692, 0.2
  %v765 = vmul.f32 %v693, 0.2
  %v766 = vmul.f32 %v694, 0.2
  %v767 = vmul.f32 %v695, 0.2
  %v768 = vmul.f32 %v696, 0.2
  %v769 = vmul.f32 %v697, 0.2
  %v770 = vmul.f32 %v698, 0.2
  %v771 = vmul.f32 %v699, 0.2
  %v772 = vmul.f32 %v700, 0.2
  %v773 = vmul.f32 %v701, 0.2
  %v774 = vmul.f32 %v702, 0.2
  %v775 = vmul.f32 %v703, 0.2
  %v776 = vmul.f32 %v704, 0.2
  %v777 = vmul.f32 %v705, 0.2
  %v778 = vmul.f32 %v706, 0.2
  %v779 = vsel %vm707, %v671, %v743
  %v780 = vsel %vm708, %v672, %v744
  %v781 = vsel %vm709, %v673, %v745
  %v782 = vsel %vm710, %v674, %v746
  %v783 = vsel %vm711, %v675, %v747
  %v784 = vsel %vm712, %v676, %v748
  %v785 = vsel %vm713, %v677, %v749
  %v786 = vsel %vm714, %v678, %v750
  %v787 = vsel %vm715, %v679, %v751
  %v788 = vsel %vm716, %v680, %v752
  %v789 = vsel %vm717, %v681, %v753
  %v790 = vsel %vm718, %v682, %v754
  %v791 = vsel %vm719, %v683, %v755
  %v792 = vsel %vm720, %v684, %v756
  %v793 = vsel %vm721, %v685, %v757
  %v794 = vsel %vm722, %v686, %v758
  %v795 = vsel %vm723, %v687, %v759
  %v796 = vsel %vm724, %v688, %v760
  %v797 = vsel %vm725, %v689, %v761
  %v798 = vsel %vm726, %v690, %v762
  %v799 = vsel %vm727, %v691, %v763
  %v800 = vsel %vm728, %v692, %v764
  %v801 = vsel %vm729, %v693, %v765
  %v802 = vsel %vm730, %v694, %v766
  %v803 = vsel %vm731, %v695, %v767
  %v804 = vsel %vm732, %v696, %v768
  %v805 = vsel %vm733, %v697, %v769
  %v806 = vsel %vm734, %v698, %v770
  %v807 = vsel %vm735, %v699, %v771
  %v808 = vsel %vm736, %v700, %v772
  %v809 = vsel %vm737, %v701, %v773
  %v810 = vsel %vm738, %v702, %v774
  %v811 = vsel %vm739, %v703, %v775
  %v812 = vsel %vm740, %v704, %v776
  %v813 = vsel %vm741, %v705, %v777
  %v814 = vsel %vm742, %v706, %v778
  %v815 = vpack.c.bf16 %v780, %v779
  %v816 = vpack.c.bf16 %v782, %v781
  %v817 = vpack.c.bf16 %v784, %v783
  %v818 = vpack.c.bf16 %v786, %v785
  %v819 = vpack.c.bf16 %v788, %v787
  %v820 = vpack.c.bf16 %v790, %v789
  %v821 = vpack.c.bf16 %v792, %v791
  %v822 = vpack.c.bf16 %v794, %v793
  %v823 = vpack.c.bf16 %v796, %v795
  %v824 = vpack.c.bf16 %v798, %v797
  %v825 = vpack.c.bf16 %v800, %v799
  %v826 = vpack.c.bf16 %v802, %v801
  %v827 = vpack.c.bf16 %v804, %v803
  %v828 = vpack.c.bf16 %v806, %v805
  %v829 = vpack.c.bf16 %v808, %v807
  %v830 = vpack.c.bf16 %v810, %v809
  %v831 = vpack.c.bf16 %v812, %v811
  %v832 = vpack.c.bf16 %v814, %v813
  %v849 = vunpack.c.l.b16 %v815
  %v850 = vunpack.c.h.b16 %v815
  %v851 = vunpack.c.l.b16 %v816
  %v852 = vunpack.c.h.b16 %v816
  %v853 = vunpack.c.l.b16 %v817
  %v854 = vunpack.c.h.b16 %v817
  %v855 = vunpack.c.l.b16 %v818
  %v856 = vunpack.c.h.b16 %v818
  %v857 = vunpack.c.l.b16 %v819
  %v858 = vunpack.c.h.b16 %v819
  %v859 = vunpack.c.l.b16 %v820
  %v860 = vunpack.c.h.b16 %v820
  %v861 = vunpack.c.l.b16 %v821
  %v862 = vunpack.c.h.b16 %v821
  %v863 = vunpack.c.l.b16 %v822
  %v864 = vunpack.c.h.b16 %v822
  %v865 = vunpack.c.l.b16 %v824
  %v866 = vunpack.c.h.b16 %v824
  %v867 = vunpack.c.l.b16 %v825
  %v868 = vunpack.c.h.b16 %v825
  %v869 = vunpack.c.l.b16 %v826
  %v870 = vunpack.c.h.b16 %v826
  %v871 = vunpack.c.l.b16 %v827
  %v872 = vunpack.c.h.b16 %v827
  %v873 = vunpack.c.l.b16 %v828
  %v874 = vunpack.c.h.b16 %v828
  %v875 = vunpack.c.l.b16 %v829
  %v876 = vunpack.c.h.b16 %v829
  %v877 = vunpack.c.l.b16 %v830
  %v878 = vunpack.c.h.b16 %v830
  %v879 = vunpack.c.l.b16 %v831
  %v880 = vunpack.c.h.b16 %v831
  %v881 = vpack.c.b16 %v849, %v849
  %v882 = vpack.c.b16 %v850, %v850
  %v883 = vpack.c.b16 %v851, %v851
  %v884 = vpack.c.b16 %v852, %v852
  %v885 = vpack.c.b16 %v853, %v853
  %v886 = vpack.c.b16 %v854, %v854
  %v887 = vpack.c.b16 %v855, %v855
  %v888 = vpack.c.b16 %v856, %v856
  %v889 = vpack.c.b16 %v857, %v857
  %v890 = vpack.c.b16 %v858, %v858
  %v891 = vpack.c.b16 %v859, %v859
  %v892 = vpack.c.b16 %v860, %v860
  %v893 = vpack.c.b16 %v861, %v861
  %v894 = vpack.c.b16 %v862, %v862
  %v895 = vpack.c.b16 %v863, %v863
  %v896 = vpack.c.b16 %v864, %v864
  %v897 = vpack.c.b16 %v865, %v865
  %v898 = vpack.c.b16 %v866, %v866
  %v899 = vpack.c.b16 %v867, %v867
  %v900 = vpack.c.b16 %v868, %v868
  %v901 = vpack.c.b16 %v869, %v869
  %v902 = vpack.c.b16 %v870, %v870
  %v903 = vpack.c.b16 %v871, %v871
  %v904 = vpack.c.b16 %v872, %v872
  %v905 = vpack.c.b16 %v873, %v873
  %v906 = vpack.c.b16 %v874, %v874
  %v907 = vpack.c.b16 %v875, %v875
  %v908 = vpack.c.b16 %v876, %v876
  %v909 = vpack.c.b16 %v877, %v877
  %v910 = vpack.c.b16 %v878, %v878
  %v911 = vpack.c.b16 %v879, %v879
  %v912 = vpack.c.b16 %v880, %v880
  %v914 = vshrl.u32 %v881, 16
  %v916 = vrot.slane %v914, 4
  %v917 = vshll.u32 %v881, 16
  %v919 = vrot.slane %v917, 5
  %v920 = vor.u32 %v916, %v919
  %v921 = vrot.slane %v920, 4
  %v923 = vshll.u32 %v882, 16
  %v925 = vrot.slane %v923, 5
  %v926 = vsel %vm261, %v921, %v925
  %v928 = vshrl.u32 %v883, 16
  %v930 = vrot.slane %v928, 4
  %v931 = vshll.u32 %v883, 16
  %v933 = vrot.slane %v931, 5
  %v934 = vor.u32 %v930, %v933
  %v935 = vrot.slane %v934, 4
  %v937 = vshll.u32 %v884, 16
  %v939 = vrot.slane %v937, 5
  %v940 = vsel %vm261, %v935, %v939
  %v942 = vshrl.u32 %v885, 16
  %v944 = vrot.slane %v942, 4
  %v945 = vshll.u32 %v885, 16
  %v947 = vrot.slane %v945, 5
  %v948 = vor.u32 %v944, %v947
  %v949 = vrot.slane %v948, 4
  %v951 = vshll.u32 %v886, 16
  %v953 = vrot.slane %v951, 5
  %v954 = vsel %vm261, %v949, %v953
  %v956 = vshrl.u32 %v887, 16
  %v958 = vrot.slane %v956, 4
  %v959 = vshll.u32 %v887, 16
  %v961 = vrot.slane %v959, 5
  %v962 = vor.u32 %v958, %v961
  %v963 = vrot.slane %v962, 4
  %v965 = vshll.u32 %v888, 16
  %v967 = vrot.slane %v965, 5
  %v968 = vsel %vm261, %v963, %v967
  %v970 = vshrl.u32 %v889, 16
  %v972 = vrot.slane %v970, 4
  %v973 = vshll.u32 %v889, 16
  %v975 = vrot.slane %v973, 5
  %v976 = vor.u32 %v972, %v975
  %v977 = vrot.slane %v976, 4
  %v979 = vshll.u32 %v890, 16
  %v981 = vrot.slane %v979, 5
  %v982 = vsel %vm261, %v977, %v981
  %v984 = vshrl.u32 %v891, 16
  %v986 = vrot.slane %v984, 4
  %v987 = vshll.u32 %v891, 16
  %v989 = vrot.slane %v987, 5
  %v990 = vor.u32 %v986, %v989
  %v991 = vrot.slane %v990, 4
  %v993 = vshll.u32 %v892, 16
  %v995 = vrot.slane %v993, 5
  %v996 = vsel %vm261, %v991, %v995
  %v998 = vshrl.u32 %v893, 16
  %v1000 = vrot.slane %v998, 4
  %v1001 = vshll.u32 %v893, 16
  %v1003 = vrot.slane %v1001, 5
  %v1004 = vor.u32 %v1000, %v1003
  %v1005 = vrot.slane %v1004, 4
  %v1007 = vshll.u32 %v894, 16
  %v1009 = vrot.slane %v1007, 5
  %v1010 = vsel %vm261, %v1005, %v1009
  %v1012 = vshrl.u32 %v895, 16
  %v1014 = vrot.slane %v1012, 4
  %v1015 = vshll.u32 %v895, 16
  %v1017 = vrot.slane %v1015, 5
  %v1018 = vor.u32 %v1014, %v1017
  %v1019 = vrot.slane %v1018, 4
  %v1021 = vshll.u32 %v896, 16
  %v1023 = vrot.slane %v1021, 5
  %v1024 = vsel %vm261, %v1019, %v1023
  %v1026 = vshrl.u32 %v897, 16
  %v1028 = vrot.slane %v1026, 4
  %v1029 = vshll.u32 %v897, 16
  %v1031 = vrot.slane %v1029, 5
  %v1032 = vor.u32 %v1028, %v1031
  %v1033 = vrot.slane %v1032, 4
  %v1035 = vshll.u32 %v898, 16
  %v1037 = vrot.slane %v1035, 5
  %v1038 = vsel %vm261, %v1033, %v1037
  %v1040 = vshrl.u32 %v899, 16
  %v1042 = vrot.slane %v1040, 4
  %v1043 = vshll.u32 %v899, 16
  %v1045 = vrot.slane %v1043, 5
  %v1046 = vor.u32 %v1042, %v1045
  %v1047 = vrot.slane %v1046, 4
  %v1049 = vshll.u32 %v900, 16
  %v1051 = vrot.slane %v1049, 5
  %v1052 = vsel %vm261, %v1047, %v1051
  %v1054 = vshrl.u32 %v901, 16
  %v1056 = vrot.slane %v1054, 4
  %v1057 = vshll.u32 %v901, 16
  %v1059 = vrot.slane %v1057, 5
  %v1060 = vor.u32 %v1056, %v1059
  %v1061 = vrot.slane %v1060, 4
  %v1063 = vshll.u32 %v902, 16
  %v1065 = vrot.slane %v1063, 5
  %v1066 = vsel %vm261, %v1061, %v1065
  %v1068 = vshrl.u32 %v903, 16
  %v1070 = vrot.slane %v1068, 4
  %v1071 = vshll.u32 %v903, 16
  %v1073 = vrot.slane %v1071, 5
  %v1074 = vor.u32 %v1070, %v1073
  %v1075 = vrot.slane %v1074, 4
  %v1077 = vshll.u32 %v904, 16
  %v1079 = vrot.slane %v1077, 5
  %v1080 = vsel %vm261, %v1075, %v1079
  %v1082 = vshrl.u32 %v905, 16
  %v1084 = vrot.slane %v1082, 4
  %v1085 = vshll.u32 %v905, 16
  %v1087 = vrot.slane %v1085, 5
  %v1088 = vor.u32 %v1084, %v1087
  %v1089 = vrot.slane %v1088, 4
  %v1091 = vshll.u32 %v906, 16
  %v1093 = vrot.slane %v1091, 5
  %v1094 = vsel %vm261, %v1089, %v1093
  %v1096 = vshrl.u32 %v907, 16
  %v1098 = vrot.slane %v1096, 4
  %v1099 = vshll.u32 %v907, 16
  %v1101 = vrot.slane %v1099, 5
  %v1102 = vor.u32 %v1098, %v1101
  %v1103 = vrot.slane %v1102, 4
  %v1105 = vshll.u32 %v908, 16
  %v1107 = vrot.slane %v1105, 5
  %v1108 = vsel %vm261, %v1103, %v1107
  %v1110 = vshrl.u32 %v909, 16
  %v1112 = vrot.slane %v1110, 4
  %v1113 = vshll.u32 %v909, 16
  %v1115 = vrot.slane %v1113, 5
  %v1116 = vor.u32 %v1112, %v1115
  %v1117 = vrot.slane %v1116, 4
  %v1119 = vshll.u32 %v910, 16
  %v1121 = vrot.slane %v1119, 5
  %v1122 = vsel %vm261, %v1117, %v1121
  %v1124 = vshrl.u32 %v911, 16
  %v1126 = vrot.slane %v1124, 4
  %v1127 = vshll.u32 %v911, 16
  %v1129 = vrot.slane %v1127, 5
  %v1130 = vor.u32 %v1126, %v1129
  %v1131 = vrot.slane %v1130, 4
  %v1133 = vshll.u32 %v912, 16
  %v1135 = vrot.slane %v1133, 5
  %v1136 = vsel %vm261, %v1131, %v1135
  %v1139 = vunpack.c.l.b16 %v823
  %v1140 = vunpack.c.h.b16 %v823
  %v1141 = vunpack.c.l.b16 %v832
  %v1142 = vunpack.c.h.b16 %v832
  %v1143 = vpack.c.b16 %v1139, %v1139
  %v1144 = vpack.c.b16 %v1140, %v1140
  %v1145 = vpack.c.b16 %v1141, %v1141
  %v1146 = vpack.c.b16 %v1142, %v1142
  %v1148 = vshrl.u32 %v1143, 16
  %v1150 = vrot.slane %v1148, 4
  %v1151 = vshll.u32 %v1143, 16
  %v1153 = vrot.slane %v1151, 5
  %v1154 = vor.u32 %v1150, %v1153
  %v1155 = vrot.slane %v1154, 4
  %v1157 = vshll.u32 %v1144, 16
  %v1159 = vrot.slane %v1157, 5
  %v1160 = vsel %vm261, %v1155, %v1159
  %v1162 = vshrl.u32 %v1145, 16
  %v1164 = vrot.slane %v1162, 4
  %v1165 = vshll.u32 %v1145, 16
  %v1167 = vrot.slane %v1165, 5
  %v1168 = vor.u32 %v1164, %v1167
  %v1169 = vrot.slane %v1168, 4
  %v1171 = vshll.u32 %v1146, 16
  %v1173 = vrot.slane %v1171, 5
  %v1174 = vsel %vm261, %v1169, %v1173
  %v1175 = vpack.c.b16 %v851, %v849
  %v1176 = vpack.c.b16 %v855, %v853
  %v1177 = vpack.c.b16 %v859, %v857
  %v1178 = vpack.c.b16 %v863, %v861
  %v1179 = vpack.c.b16 %v867, %v865
  %v1180 = vpack.c.b16 %v871, %v869
  %v1181 = vpack.c.b16 %v875, %v873
  %v1182 = vpack.c.b16 %v879, %v877
  %v1191 = vunpack.c.l.b16 %v926
  %v1192 = vunpack.c.l.b16 %v940
  %v1193 = vunpack.c.l.b16 %v954
  %v1194 = vunpack.c.l.b16 %v968
  %v1195 = vunpack.c.l.b16 %v982
  %v1196 = vunpack.c.l.b16 %v996
  %v1197 = vunpack.c.l.b16 %v1010
  %v1198 = vunpack.c.l.b16 %v1024
  %v1199 = vunpack.c.l.b16 %v1038
  %v1200 = vunpack.c.l.b16 %v1052
  %v1201 = vunpack.c.l.b16 %v1066
  %v1202 = vunpack.c.l.b16 %v1080
  %v1203 = vunpack.c.l.b16 %v1094
  %v1204 = vunpack.c.l.b16 %v1108
  %v1205 = vunpack.c.l.b16 %v1122
  %v1206 = vunpack.c.l.b16 %v1136
  %v1207 = vpack.c.b16 %v1192, %v1191
  %v1208 = vpack.c.b16 %v1194, %v1193
  %v1209 = vpack.c.b16 %v1196, %v1195
  %v1210 = vpack.c.b16 %v1198, %v1197
  %v1211 = vpack.c.b16 %v1200, %v1199
  %v1212 = vpack.c.b16 %v1202, %v1201
  %v1213 = vpack.c.b16 %v1204, %v1203
  %v1214 = vpack.c.b16 %v1206, %v1205
  %v1223 = vpack.c.b16 %v853, %v851
  %v1224 = vpack.c.b16 %v857, %v855
  %v1225 = vpack.c.b16 %v861, %v859
  %v1226 = vpack.c.b16 %v1139, %v863
  %v1227 = vpack.c.b16 %v869, %v867
  %v1228 = vpack.c.b16 %v873, %v871
  %v1229 = vpack.c.b16 %v877, %v875
  %v1230 = vpack.c.b16 %v1141, %v879
  %v1239 = vunpack.c.l.b16 %v1160
  %v1240 = vunpack.c.l.b16 %v1174
  %v1241 = vpack.c.b16 %v1193, %v1192
  %v1242 = vpack.c.b16 %v1195, %v1194
  %v1243 = vpack.c.b16 %v1197, %v1196
  %v1244 = vpack.c.b16 %v1239, %v1198
  %v1245 = vpack.c.b16 %v1201, %v1200
  %v1246 = vpack.c.b16 %v1203, %v1202
  %v1247 = vpack.c.b16 %v1205, %v1204
  %v1248 = vpack.c.b16 %v1240, %v1206
  %s1257 = scalar_lea.vmem %s1, 256
  %v1258 = vld [vmem:[%s1257] sm:$0xf]
  %v1259 = vld [vmem:[%s1257 + $0x4] sm:$0xf]
  %v1260 = vld [vmem:[%s1257 + $0x8] sm:$0xf]
  %v1261 = vld [vmem:[%s1257 + $0xc] sm:$0xf]
  %v1262 = vld [vmem:[%s1257 + $0x10] sm:$0xf]
  %v1263 = vld [vmem:[%s1257 + $0x14] sm:$0xf]
  %v1264 = vld [vmem:[%s1257 + $0x18] sm:$0xf]
  %v1265 = vld [vmem:[%s1257 + $0x1c] sm:$0xf]
  %v1266 = vld [vmem:[%s1257 + $0x20] sm:$0xf]
  %v1267 = vld [vmem:[%s1257 + $0x24] sm:$0xf]
  %v1268 = vld [vmem:[%s1257 + $0x28] sm:$0xf]
  %v1269 = vld [vmem:[%s1257 + $0x2c] sm:$0xf]
  %v1270 = vld [vmem:[%s1257 + $0x30] sm:$0xf]
  %v1271 = vld [vmem:[%s1257 + $0x34] sm:$0xf]
  %v1272 = vld [vmem:[%s1257 + $0x38] sm:$0xf]
  %v1273 = vld [vmem:[%s1257 + $0x3c] sm:$0xf]
  %v1274 = vld [vmem:[%s1257 + $0x40] sm:$0xf]
  %v1275 = vld [vmem:[%s1257 + $0x44] sm:$0xf]
  %v1276 = vld [vmem:[%s1257 + $0x48] sm:$0xf]
  %v1277 = vld [vmem:[%s1257 + $0x4c] sm:$0xf]
  %v1278 = vld [vmem:[%s1257 + $0x50] sm:$0xf]
  %v1279 = vld [vmem:[%s1257 + $0x54] sm:$0xf]
  %v1280 = vld [vmem:[%s1257 + $0x58] sm:$0xf]
  %v1281 = vld [vmem:[%s1257 + $0x5c] sm:$0xf]
  %v1282 = vld [vmem:[%s1257 + $0x60] sm:$0xf]
  %v1283 = vld [vmem:[%s1257 + $0x64] sm:$0xf]
  %v1284 = vld [vmem:[%s1257 + $0x68] sm:$0xf]
  %v1285 = vld [vmem:[%s1257 + $0x6c] sm:$0xf]
  %v1286 = vld [vmem:[%s1257 + $0x70] sm:$0xf]
  %v1287 = vld [vmem:[%s1257 + $0x74] sm:$0xf]
  %v1288 = vld [vmem:[%s1257 + $0x78] sm:$0xf]
  %v1289 = vld [vmem:[%s1257 + $0x7c] sm:$0xf]
  %v1290 = vld [vmem:[%s1257 + $0x80] sm:$0xf]
  %v1291 = vld [vmem:[%s1257 + $0x84] sm:$0xf]
  %v1292 = vld [vmem:[%s1257 + $0x88] sm:$0xf]
  %v1293 = vld [vmem:[%s1257 + $0x8c] sm:$0xf]
  %v1294 = vld [vmem:[%s1257 + $0x90] sm:$0xf]
  %v1295 = vld [vmem:[%s1257 + $0x94] sm:$0xf]
  %v1296 = vld [vmem:[%s1257 + $0x98] sm:$0xf]
  %v1297 = vld [vmem:[%s1257 + $0x9c] sm:$0xf]
  %v1298 = vld [vmem:[%s1257 + $0xa0] sm:$0xf]
  %v1299 = vld [vmem:[%s1257 + $0xa4] sm:$0xf]
  %v1300 = vld [vmem:[%s1257 + $0xa8] sm:$0xf]
  %v1301 = vld [vmem:[%s1257 + $0xac] sm:$0xf]
  %v1302 = vld [vmem:[%s1257 + $0xb0] sm:$0xf]
  %v1303 = vld [vmem:[%s1257 + $0xb4] sm:$0xf]
  %v1304 = vld [vmem:[%s1257 + $0xb8] sm:$0xf]
  %v1305 = vld [vmem:[%s1257 + $0xbc] sm:$0xf]
  %v1306 = vld [vmem:[%s1257 + $0xc0] sm:$0xf]
  %v1307 = vld [vmem:[%s1257 + $0xc4] sm:$0xf]
  %v1308 = vld [vmem:[%s1257 + $0xc8] sm:$0xf]
  %v1309 = vld [vmem:[%s1257 + $0xcc] sm:$0xf]
  %v1310 = vld [vmem:[%s1257 + $0xd0] sm:$0xf]
  %v1311 = vld [vmem:[%s1257 + $0xd4] sm:$0xf]
  %v1312 = vld [vmem:[%s1257 + $0xd8] sm:$0xf]
  %v1313 = vld [vmem:[%s1257 + $0xdc] sm:$0xf]
  %v1314 = vld [vmem:[%s1257 + $0xe0] sm:$0xf]
  %v1315 = vld [vmem:[%s1257 + $0xe4] sm:$0xf]
  %v1316 = vld [vmem:[%s1257 + $0xe8] sm:$0xf]
  %v1317 = vld [vmem:[%s1257 + $0xec] sm:$0xf]
  %v1318 = vld [vmem:[%s1257 + $0xf0] sm:$0xf]
  %v1319 = vld [vmem:[%s1257 + $0xf4] sm:$0xf]
  %v1320 = vld [vmem:[%s1257 + $0xf8] sm:$0xf]
  %v1321 = vld [vmem:[%s1257 + $0xfc] sm:$0xf]
  %v1386 = vunpack.c.l.b16 %v1258
  %v1387 = vunpack.c.l.b16 %v1259
  %v1388 = vunpack.c.l.b16 %v1260
  %v1389 = vunpack.c.l.b16 %v1261
  %v1390 = vunpack.c.l.b16 %v1262
  %v1391 = vunpack.c.l.b16 %v1263
  %v1392 = vunpack.c.l.b16 %v1264
  %v1393 = vunpack.c.l.b16 %v1265
  %v1394 = vunpack.c.l.b16 %v1266
  %v1395 = vunpack.c.l.b16 %v1267
  %v1396 = vunpack.c.l.b16 %v1268
  %v1397 = vunpack.c.l.b16 %v1269
  %v1398 = vunpack.c.l.b16 %v1270
  %v1399 = vunpack.c.l.b16 %v1271
  %v1400 = vunpack.c.l.b16 %v1272
  %v1401 = vunpack.c.l.b16 %v1273
  %v1402 = vunpack.c.l.b16 %v1274
  %v1403 = vunpack.c.l.b16 %v1275
  %v1404 = vunpack.c.l.b16 %v1276
  %v1405 = vunpack.c.l.b16 %v1277
  %v1406 = vunpack.c.l.b16 %v1278
  %v1407 = vunpack.c.l.b16 %v1279
  %v1408 = vunpack.c.l.b16 %v1280
  %v1409 = vunpack.c.l.b16 %v1281
  %v1410 = vunpack.c.l.b16 %v1282
  %v1411 = vunpack.c.l.b16 %v1283
  %v1412 = vunpack.c.l.b16 %v1284
  %v1413 = vunpack.c.l.b16 %v1285
  %v1414 = vunpack.c.l.b16 %v1286
  %v1415 = vunpack.c.l.b16 %v1287
  %v1416 = vunpack.c.l.b16 %v1288
  %v1417 = vunpack.c.l.b16 %v1289
  %v1418 = vunpack.c.l.b16 %v1290
  %v1419 = vunpack.c.l.b16 %v1291
  %v1420 = vunpack.c.l.b16 %v1292
  %v1421 = vunpack.c.l.b16 %v1293
  %v1422 = vunpack.c.l.b16 %v1294
  %v1423 = vunpack.c.l.b16 %v1295
  %v1424 = vunpack.c.l.b16 %v1296
  %v1425 = vunpack.c.l.b16 %v1297
  %v1426 = vunpack.c.l.b16 %v1298
  %v1427 = vunpack.c.l.b16 %v1299
  %v1428 = vunpack.c.l.b16 %v1300
  %v1429 = vunpack.c.l.b16 %v1301
  %v1430 = vunpack.c.l.b16 %v1302
  %v1431 = vunpack.c.l.b16 %v1303
  %v1432 = vunpack.c.l.b16 %v1304
  %v1433 = vunpack.c.l.b16 %v1305
  %v1434 = vunpack.c.l.b16 %v1306
  %v1435 = vunpack.c.l.b16 %v1307
  %v1436 = vunpack.c.l.b16 %v1308
  %v1437 = vunpack.c.l.b16 %v1309
  %v1438 = vunpack.c.l.b16 %v1310
  %v1439 = vunpack.c.l.b16 %v1311
  %v1440 = vunpack.c.l.b16 %v1312
  %v1441 = vunpack.c.l.b16 %v1313
  %v1442 = vunpack.c.l.b16 %v1314
  %v1443 = vunpack.c.l.b16 %v1315
  %v1444 = vunpack.c.l.b16 %v1316
  %v1445 = vunpack.c.l.b16 %v1317
  %v1446 = vunpack.c.l.b16 %v1318
  %v1447 = vunpack.c.l.b16 %v1319
  %v1448 = vunpack.c.l.b16 %v1320
  %v1449 = vunpack.c.l.b16 %v1321
  %v1450 = vpack.c.b16 %v1387, %v1386
  %v1451 = vpack.c.b16 %v1389, %v1388
  %v1452 = vpack.c.b16 %v1391, %v1390
  %v1453 = vpack.c.b16 %v1393, %v1392
  %v1454 = vpack.c.b16 %v1395, %v1394
  %v1455 = vpack.c.b16 %v1397, %v1396
  %v1456 = vpack.c.b16 %v1399, %v1398
  %v1457 = vpack.c.b16 %v1401, %v1400
  %v1458 = vpack.c.b16 %v1403, %v1402
  %v1459 = vpack.c.b16 %v1405, %v1404
  %v1460 = vpack.c.b16 %v1407, %v1406
  %v1461 = vpack.c.b16 %v1409, %v1408
  %v1462 = vpack.c.b16 %v1411, %v1410
  %v1463 = vpack.c.b16 %v1413, %v1412
  %v1464 = vpack.c.b16 %v1415, %v1414
  %v1465 = vpack.c.b16 %v1417, %v1416
  %v1466 = vpack.c.b16 %v1419, %v1418
  %v1467 = vpack.c.b16 %v1421, %v1420
  %v1468 = vpack.c.b16 %v1423, %v1422
  %v1469 = vpack.c.b16 %v1425, %v1424
  %v1470 = vpack.c.b16 %v1427, %v1426
  %v1471 = vpack.c.b16 %v1429, %v1428
  %v1472 = vpack.c.b16 %v1431, %v1430
  %v1473 = vpack.c.b16 %v1433, %v1432
  %v1474 = vpack.c.b16 %v1435, %v1434
  %v1475 = vpack.c.b16 %v1437, %v1436
  %v1476 = vpack.c.b16 %v1439, %v1438
  %v1477 = vpack.c.b16 %v1441, %v1440
  %v1478 = vpack.c.b16 %v1443, %v1442
  %v1479 = vpack.c.b16 %v1445, %v1444
  %v1480 = vpack.c.b16 %v1447, %v1446
  %v1481 = vpack.c.b16 %v1449, %v1448
  %1514 = vmatprep.subr.bf16.mxu0 0
  %1515 = vmatpush1.bf16.msra.mxu0 %v1450
  %1516 = vmatprep.subr.bf16.mxu0 0
  %1517 = vmatpush1.bf16.msra.mxu0 %v1451
  %1518 = vmatprep.subr.bf16.mxu0 0
  %1519 = vmatpush1.bf16.msra.mxu0 %v1452
  %1520 = vmatprep.subr.bf16.mxu0 0
  %1521 = vmatpush1.bf16.msra.mxu0 %v1453
  %1522 = vmatprep.subr.bf16.mxu0 0
  %1523 = vmatpush1.bf16.msra.mxu0 %v1454
  %1524 = vmatprep.subr.bf16.mxu0 0
  %1525 = vmatpush1.bf16.msra.mxu0 %v1455
  %1526 = vmatprep.subr.bf16.mxu0 0
  %1527 = vmatpush1.bf16.msra.mxu0 %v1456
  %1528 = vmatprep.subr.bf16.mxu0 0
  %1529 = vmatpush1.bf16.msra.mxu0 %v1457
  %1530 = vmatprep.subr.bf16.mxu0 0
  %1531 = vmatpush1.bf16.msra.mxu0 %v1458
  %1532 = vmatprep.subr.bf16.mxu0 0
  %1533 = vmatpush1.bf16.msra.mxu0 %v1459
  %1534 = vmatprep.subr.bf16.mxu0 0
  %1535 = vmatpush1.bf16.msra.mxu0 %v1460
  %1536 = vmatprep.subr.bf16.mxu0 0
  %1537 = vmatpush1.bf16.msra.mxu0 %v1461
  %1538 = vmatprep.subr.bf16.mxu0 0
  %1539 = vmatpush1.bf16.msra.mxu0 %v1462
  %1540 = vmatprep.subr.bf16.mxu0 0
  %1541 = vmatpush1.bf16.msra.mxu0 %v1463
  %1542 = vmatprep.subr.bf16.mxu0 0
  %1543 = vmatpush1.bf16.msra.mxu0 %v1464
  %1544 = vmatprep.subr.bf16.mxu0 0
  %1545 = vmatpush1.bf16.msra.mxu0 %v1465
  %1546 = vmatprep.mubr.bf16.mxu0 %v1207
  %1547 = vmatmul.mubr.bf16.gmra.mrb[0].mxu0 %v1175
  %v1548 = vpop.f32.mrb[0].mxu0
  %v1549 = vadd.f32 0.0, %v1548
  %v1550 = vpop.f32.mrb[0].mxu0
  %v1551 = vpop.f32.mrb[0].mxu0
  %v1552 = vadd.f32 0.0, %v1551
  %v1553 = vpop.f32.mrb[0].mxu0
  %1554 = vmatprep.mubr.bf16.mxu0 %v1208
  %1555 = vmatmul.mubr.bf16.gmra.mrb[0].mxu0 %v1176
  %v1556 = vpop.f32.mrb[0].mxu0
  %v1557 = vadd.f32 0.0, %v1556
  %v1558 = vpop.f32.mrb[0].mxu0
  %v1559 = vpop.f32.mrb[0].mxu0
  %v1560 = vadd.f32 0.0, %v1559
  %v1561 = vpop.f32.mrb[0].mxu0
  %1562 = vmatprep.mubr.bf16.mxu0 %v1209
  %1563 = vmatmul.mubr.bf16.gmra.mrb[0].mxu0 %v1177
  %v1564 = vpop.f32.mrb[0].mxu0
  %v1565 = vadd.f32 0.0, %v1564
  %v1566 = vpop.f32.mrb[0].mxu0
  %v1567 = vpop.f32.mrb[0].mxu0
  %v1568 = vadd.f32 0.0, %v1567
  %v1569 = vpop.f32.mrb[0].mxu0
  %1570 = vmatprep.mubr.bf16.mxu0 %v1210
  %1571 = vmatmul.mubr.bf16.gmra.mrb[0].mxu0 %v1178
  %v1572 = vpop.f32.mrb[0].mxu0
  %v1573 = vadd.f32 0.0, %v1572
  %v1574 = vpop.f32.mrb[0].mxu0
  %v1575 = vpop.f32.mrb[0].mxu0
  %v1576 = vadd.f32 0.0, %v1575
  %v1577 = vpop.f32.mrb[0].mxu0
  %1578 = vmatprep.mubr.bf16.mxu0 %v1211
  %1579 = vmatmul.mubr.bf16.gmra.mrb[0].mxu0 %v1179
  %v1580 = vpop.f32.mrb[0].mxu0
  %v1581 = vadd.f32 0.0, %v1580
  %v1582 = vpop.f32.mrb[0].mxu0
  %v1583 = vpop.f32.mrb[0].mxu0
  %v1584 = vadd.f32 0.0, %v1583
  %v1585 = vpop.f32.mrb[0].mxu0
  %1586 = vmatprep.mubr.bf16.mxu0 %v1212
  %1587 = vmatmul.mubr.bf16.gmra.mrb[0].mxu0 %v1180
  %v1588 = vpop.f32.mrb[0].mxu0
  %v1589 = vadd.f32 0.0, %v1588
  %v1590 = vpop.f32.mrb[0].mxu0
  %v1591 = vpop.f32.mrb[0].mxu0
  %v1592 = vadd.f32 0.0, %v1591
  %v1593 = vpop.f32.mrb[0].mxu0
  %1594 = vmatprep.mubr.bf16.mxu0 %v1213
  %1595 = vmatmul.mubr.bf16.gmra.mrb[0].mxu0 %v1181
  %v1596 = vpop.f32.mrb[0].mxu0
  %v1597 = vadd.f32 0.0, %v1596
  %v1598 = vpop.f32.mrb[0].mxu0
  %v1599 = vpop.f32.mrb[0].mxu0
  %v1600 = vadd.f32 0.0, %v1599
  %v1601 = vpop.f32.mrb[0].mxu0
  %1602 = vmatprep.mubr.bf16.mxu0 %v1214
  %1603 = vmatmul.mubr.bf16.gmra.mrb[0].mxu0 %v1182
  %v1604 = vpop.f32.mrb[0].mxu0
  %v1605 = vadd.f32 0.0, %v1604
  %v1606 = vpop.f32.mrb[0].mxu0
  %v1607 = vpop.f32.mrb[0].mxu0
  %v1608 = vadd.f32 0.0, %v1607
  %v1609 = vpop.f32.mrb[0].mxu0
  %1610 = vdwg.mxu0
  %1611 = vmatprep.subr.bf16.mxu0 0
  %1612 = vmatpush1.bf16.msra.mxu0 %v1466
  %1613 = vmatprep.subr.bf16.mxu0 0
  %1614 = vmatpush1.bf16.msra.mxu0 %v1467
  %1615 = vmatprep.subr.bf16.mxu0 0
  %1616 = vmatpush1.bf16.msra.mxu0 %v1468
  %1617 = vmatprep.subr.bf16.mxu0 0
  %1618 = vmatpush1.bf16.msra.mxu0 %v1469
  %1619 = vmatprep.subr.bf16.mxu0 0
  %1620 = vmatpush1.bf16.msra.mxu0 %v1470
  %1621 = vmatprep.subr.bf16.mxu0 0
  %1622 = vmatpush1.bf16.msra.mxu0 %v1471
  %1623 = vmatprep.subr.bf16.mxu0 0
  %1624 = vmatpush1.bf16.msra.mxu0 %v1472
  %1625 = vmatprep.subr.bf16.mxu0 0
  %1626 = vmatpush1.bf16.msra.mxu0 %v1473
  %1627 = vmatprep.subr.bf16.mxu0 0
  %1628 = vmatpush1.bf16.msra.mxu0 %v1474
  %1629 = vmatprep.subr.bf16.mxu0 0
  %1630 = vmatpush1.bf16.msra.mxu0 %v1475
  %1631 = vmatprep.subr.bf16.mxu0 0
  %1632 = vmatpush1.bf16.msra.mxu0 %v1476
  %1633 = vmatprep.subr.bf16.mxu0 0
  %1634 = vmatpush1.bf16.msra.mxu0 %v1477
  %1635 = vmatprep.subr.bf16.mxu0 0
  %1636 = vmatpush1.bf16.msra.mxu0 %v1478
  %1637 = vmatprep.subr.bf16.mxu0 0
  %1638 = vmatpush1.bf16.msra.mxu0 %v1479
  %1639 = vmatprep.subr.bf16.mxu0 0
  %1640 = vmatpush1.bf16.msra.mxu0 %v1480
  %1641 = vmatprep.subr.bf16.mxu0 0
  %1642 = vmatpush1.bf16.msra.mxu0 %v1481
  %1643 = vmatprep.mubr.bf16.mxu0 %v1241
  %1644 = vmatmul.mubr.bf16.gmra.mrb[0].mxu0 %v1223
  %v1645 = vpop.f32.mrb[0].mxu0
  %v1646 = vadd.f32 %v1549, %v1645
  %v1647 = vpop.f32.mrb[0].mxu0
  %v1648 = vpop.f32.mrb[0].mxu0
  %v1649 = vadd.f32 %v1552, %v1648
  %v1650 = vpop.f32.mrb[0].mxu0
  %1651 = vmatprep.mubr.bf16.mxu0 %v1242
  %1652 = vmatmul.mubr.bf16.gmra.mrb[0].mxu0 %v1224
  %v1653 = vpop.f32.mrb[0].mxu0
  %v1654 = vadd.f32 %v1557, %v1653
  %v1655 = vpop.f32.mrb[0].mxu0
  %v1656 = vpop.f32.mrb[0].mxu0
  %v1657 = vadd.f32 %v1560, %v1656
  %v1658 = vpop.f32.mrb[0].mxu0
  %1659 = vmatprep.mubr.bf16.mxu0 %v1243
  %1660 = vmatmul.mubr.bf16.gmra.mrb[0].mxu0 %v1225
  %v1661 = vpop.f32.mrb[0].mxu0
  %v1662 = vadd.f32 %v1565, %v1661
  %v1663 = vpop.f32.mrb[0].mxu0
  %v1664 = vpop.f32.mrb[0].mxu0
  %v1665 = vadd.f32 %v1568, %v1664
  %v1666 = vpop.f32.mrb[0].mxu0
  %1667 = vmatprep.mubr.bf16.mxu0 %v1244
  %1668 = vmatmul.mubr.bf16.gmra.mrb[0].mxu0 %v1226
  %v1669 = vpop.f32.mrb[0].mxu0
  %v1670 = vadd.f32 %v1573, %v1669
  %v1671 = vpop.f32.mrb[0].mxu0
  %v1672 = vpop.f32.mrb[0].mxu0
  %v1673 = vadd.f32 %v1576, %v1672
  %v1674 = vpop.f32.mrb[0].mxu0
  %1675 = vmatprep.mubr.bf16.mxu0 %v1245
  %1676 = vmatmul.mubr.bf16.gmra.mrb[0].mxu0 %v1227
  %v1677 = vpop.f32.mrb[0].mxu0
  %v1678 = vadd.f32 %v1581, %v1677
  %v1679 = vpop.f32.mrb[0].mxu0
  %v1680 = vpop.f32.mrb[0].mxu0
  %v1681 = vadd.f32 %v1584, %v1680
  %v1682 = vpop.f32.mrb[0].mxu0
  %1683 = vmatprep.mubr.bf16.mxu0 %v1246
  %1684 = vmatmul.mubr.bf16.gmra.mrb[0].mxu0 %v1228
  %v1685 = vpop.f32.mrb[0].mxu0
  %v1686 = vadd.f32 %v1589, %v1685
  %v1687 = vpop.f32.mrb[0].mxu0
  %v1688 = vpop.f32.mrb[0].mxu0
  %v1689 = vadd.f32 %v1592, %v1688
  %v1690 = vpop.f32.mrb[0].mxu0
  %1691 = vmatprep.mubr.bf16.mxu0 %v1247
  %1692 = vmatmul.mubr.bf16.gmra.mrb[0].mxu0 %v1229
  %v1693 = vpop.f32.mrb[0].mxu0
  %v1694 = vadd.f32 %v1597, %v1693
  %v1695 = vpop.f32.mrb[0].mxu0
  %v1696 = vpop.f32.mrb[0].mxu0
  %v1697 = vadd.f32 %v1600, %v1696
  %v1698 = vpop.f32.mrb[0].mxu0
  %1699 = vmatprep.mubr.bf16.mxu0 %v1248
  %1700 = vmatmul.mubr.bf16.gmra.mrb[0].mxu0 %v1230
  %v1701 = vpop.f32.mrb[0].mxu0
  %v1702 = vadd.f32 %v1605, %v1701
  %v1703 = vpop.f32.mrb[0].mxu0
  %v1704 = vpop.f32.mrb[0].mxu0
  %v1705 = vadd.f32 %v1608, %v1704
  %v1706 = vpop.f32.mrb[0].mxu0
  %1707 = vdwg.mxu0
  %v1772 = vunpack.c.l.b16 %v606
  %v1773 = vunpack.c.l.b16 %v607
  %v1774 = vunpack.c.l.b16 %v608
  %v1775 = vunpack.c.l.b16 %v609
  %v1776 = vunpack.c.l.b16 %v610
  %v1777 = vunpack.c.l.b16 %v611
  %v1778 = vunpack.c.l.b16 %v612
  %v1779 = vunpack.c.l.b16 %v613
  %v1780 = vunpack.c.l.b16 %v614
  %v1781 = vunpack.c.l.b16 %v615
  %v1782 = vunpack.c.l.b16 %v616
  %v1783 = vunpack.c.l.b16 %v617
  %v1784 = vunpack.c.l.b16 %v618
  %v1785 = vunpack.c.l.b16 %v619
  %v1786 = vunpack.c.l.b16 %v620
  %v1787 = vunpack.c.l.b16 %v621
  %v1788 = vunpack.c.l.b16 %v622
  %v1789 = vunpack.c.l.b16 %v623
  %v1790 = vunpack.c.l.b16 %v624
  %v1791 = vunpack.c.l.b16 %v625
  %v1792 = vunpack.c.l.b16 %v626
  %v1793 = vunpack.c.l.b16 %v627
  %v1794 = vunpack.c.l.b16 %v628
  %v1795 = vunpack.c.l.b16 %v629
  %v1796 = vunpack.c.l.b16 %v630
  %v1797 = vunpack.c.l.b16 %v631
  %v1798 = vunpack.c.l.b16 %v632
  %v1799 = vunpack.c.l.b16 %v633
  %v1800 = vunpack.c.l.b16 %v634
  %v1801 = vunpack.c.l.b16 %v635
  %v1802 = vunpack.c.l.b16 %v636
  %v1803 = vunpack.c.l.b16 %v637
  %v1804 = vunpack.c.l.b16 %v638
  %v1805 = vunpack.c.l.b16 %v639
  %v1806 = vunpack.c.l.b16 %v640
  %v1807 = vunpack.c.l.b16 %v641
  %v1808 = vunpack.c.l.b16 %v642
  %v1809 = vunpack.c.l.b16 %v643
  %v1810 = vunpack.c.l.b16 %v644
  %v1811 = vunpack.c.l.b16 %v645
  %v1812 = vunpack.c.l.b16 %v646
  %v1813 = vunpack.c.l.b16 %v647
  %v1814 = vunpack.c.l.b16 %v648
  %v1815 = vunpack.c.l.b16 %v649
  %v1816 = vunpack.c.l.b16 %v650
  %v1817 = vunpack.c.l.b16 %v651
  %v1818 = vunpack.c.l.b16 %v652
  %v1819 = vunpack.c.l.b16 %v653
  %v1820 = vunpack.c.l.b16 %v654
  %v1821 = vunpack.c.l.b16 %v655
  %v1822 = vunpack.c.l.b16 %v656
  %v1823 = vunpack.c.l.b16 %v657
  %v1824 = vunpack.c.l.b16 %v658
  %v1825 = vunpack.c.l.b16 %v659
  %v1826 = vunpack.c.l.b16 %v660
  %v1827 = vunpack.c.l.b16 %v661
  %v1828 = vunpack.c.l.b16 %v662
  %v1829 = vunpack.c.l.b16 %v663
  %v1830 = vunpack.c.l.b16 %v664
  %v1831 = vunpack.c.l.b16 %v665
  %v1832 = vunpack.c.l.b16 %v666
  %v1833 = vunpack.c.l.b16 %v667
  %v1834 = vunpack.c.l.b16 %v668
  %v1835 = vunpack.c.l.b16 %v669
  %v1836 = vpack.c.b16 %v1773, %v1772
  %v1837 = vpack.c.b16 %v1775, %v1774
  %v1838 = vpack.c.b16 %v1777, %v1776
  %v1839 = vpack.c.b16 %v1779, %v1778
  %v1840 = vpack.c.b16 %v1781, %v1780
  %v1841 = vpack.c.b16 %v1783, %v1782
  %v1842 = vpack.c.b16 %v1785, %v1784
  %v1843 = vpack.c.b16 %v1787, %v1786
  %v1844 = vpack.c.b16 %v1789, %v1788
  %v1845 = vpack.c.b16 %v1791, %v1790
  %v1846 = vpack.c.b16 %v1793, %v1792
  %v1847 = vpack.c.b16 %v1795, %v1794
  %v1848 = vpack.c.b16 %v1797, %v1796
  %v1849 = vpack.c.b16 %v1799, %v1798
  %v1850 = vpack.c.b16 %v1801, %v1800
  %v1851 = vpack.c.b16 %v1803, %v1802
  %v1852 = vpack.c.b16 %v1805, %v1804
  %v1853 = vpack.c.b16 %v1807, %v1806
  %v1854 = vpack.c.b16 %v1809, %v1808
  %v1855 = vpack.c.b16 %v1811, %v1810
  %v1856 = vpack.c.b16 %v1813, %v1812
  %v1857 = vpack.c.b16 %v1815, %v1814
  %v1858 = vpack.c.b16 %v1817, %v1816
  %v1859 = vpack.c.b16 %v1819, %v1818
  %v1860 = vpack.c.b16 %v1821, %v1820
  %v1861 = vpack.c.b16 %v1823, %v1822
  %v1862 = vpack.c.b16 %v1825, %v1824
  %v1863 = vpack.c.b16 %v1827, %v1826
  %v1864 = vpack.c.b16 %v1829, %v1828
  %v1865 = vpack.c.b16 %v1831, %v1830
  %v1866 = vpack.c.b16 %v1833, %v1832
  %v1867 = vpack.c.b16 %v1835, %v1834
  %1900 = vmatprep.subr.bf16.mxu0 0
  %1901 = vmatpush1.bf16.msra.mxu0 %v1836
  %1902 = vmatprep.subr.bf16.mxu0 0
  %1903 = vmatpush1.bf16.msra.mxu0 %v1837
  %1904 = vmatprep.subr.bf16.mxu0 0
  %1905 = vmatpush1.bf16.msra.mxu0 %v1838
  %1906 = vmatprep.subr.bf16.mxu0 0
  %1907 = vmatpush1.bf16.msra.mxu0 %v1839
  %1908 = vmatprep.subr.bf16.mxu0 0
  %1909 = vmatpush1.bf16.msra.mxu0 %v1840
  %1910 = vmatprep.subr.bf16.mxu0 0
  %1911 = vmatpush1.bf16.msra.mxu0 %v1841
  %1912 = vmatprep.subr.bf16.mxu0 0
  %1913 = vmatpush1.bf16.msra.mxu0 %v1842
  %1914 = vmatprep.subr.bf16.mxu0 0
  %1915 = vmatpush1.bf16.msra.mxu0 %v1843
  %1916 = vmatprep.subr.bf16.mxu0 0
  %1917 = vmatpush1.bf16.msra.mxu0 %v1844
  %1918 = vmatprep.subr.bf16.mxu0 0
  %1919 = vmatpush1.bf16.msra.mxu0 %v1845
  %1920 = vmatprep.subr.bf16.mxu0 0
  %1921 = vmatpush1.bf16.msra.mxu0 %v1846
  %1922 = vmatprep.subr.bf16.mxu0 0
  %1923 = vmatpush1.bf16.msra.mxu0 %v1847
  %1924 = vmatprep.subr.bf16.mxu0 0
  %1925 = vmatpush1.bf16.msra.mxu0 %v1848
  %1926 = vmatprep.subr.bf16.mxu0 0
  %1927 = vmatpush1.bf16.msra.mxu0 %v1849
  %1928 = vmatprep.subr.bf16.mxu0 0
  %1929 = vmatpush1.bf16.msra.mxu0 %v1850
  %1930 = vmatprep.subr.bf16.mxu0 0
  %1931 = vmatpush1.bf16.msra.mxu0 %v1851
  %1932 = vmatprep.mubr.bf16.mxu0 %v556
  %1933 = vmatmul.mubr.bf16.gmra.mrb[0].mxu0 %v524
  %v1934 = vpop.f32.mrb[0].mxu0
  %v1935 = vadd.f32 %v1646, %v1934
  %v1936 = vpop.f32.mrb[0].mxu0
  %v1937 = vpop.f32.mrb[0].mxu0
  %v1938 = vadd.f32 %v1649, %v1937
  %v1939 = vpop.f32.mrb[0].mxu0
  %1940 = vmatprep.mubr.bf16.mxu0 %v557
  %1941 = vmatmul.mubr.bf16.gmra.mrb[0].mxu0 %v525
  %v1942 = vpop.f32.mrb[0].mxu0
  %v1943 = vadd.f32 %v1654, %v1942
  %v1944 = vpop.f32.mrb[0].mxu0
  %v1945 = vpop.f32.mrb[0].mxu0
  %v1946 = vadd.f32 %v1657, %v1945
  %v1947 = vpop.f32.mrb[0].mxu0
  %1948 = vmatprep.mubr.bf16.mxu0 %v558
  %1949 = vmatmul.mubr.bf16.gmra.mrb[0].mxu0 %v526
  %v1950 = vpop.f32.mrb[0].mxu0
  %v1951 = vadd.f32 %v1662, %v1950
  %v1952 = vpop.f32.mrb[0].mxu0
  %v1953 = vpop.f32.mrb[0].mxu0
  %v1954 = vadd.f32 %v1665, %v1953
  %v1955 = vpop.f32.mrb[0].mxu0
  %1956 = vmatprep.mubr.bf16.mxu0 %v559
  %1957 = vmatmul.mubr.bf16.gmra.mrb[0].mxu0 %v527
  %v1958 = vpop.f32.mrb[0].mxu0
  %v1959 = vadd.f32 %v1670, %v1958
  %v1960 = vpop.f32.mrb[0].mxu0
  %v1961 = vpop.f32.mrb[0].mxu0
  %v1962 = vadd.f32 %v1673, %v1961
  %v1963 = vpop.f32.mrb[0].mxu0
  %1964 = vmatprep.mubr.bf16.mxu0 %v560
  %1965 = vmatmul.mubr.bf16.gmra.mrb[0].mxu0 %v528
  %v1966 = vpop.f32.mrb[0].mxu0
  %v1967 = vadd.f32 %v1678, %v1966
  %v1968 = vpop.f32.mrb[0].mxu0
  %v1969 = vpop.f32.mrb[0].mxu0
  %v1970 = vadd.f32 %v1681, %v1969
  %v1971 = vpop.f32.mrb[0].mxu0
  %1972 = vmatprep.mubr.bf16.mxu0 %v561
  %1973 = vmatmul.mubr.bf16.gmra.mrb[0].mxu0 %v529
  %v1974 = vpop.f32.mrb[0].mxu0
  %v1975 = vadd.f32 %v1686, %v1974
  %v1976 = vpop.f32.mrb[0].mxu0
  %v1977 = vpop.f32.mrb[0].mxu0
  %v1978 = vadd.f32 %v1689, %v1977
  %v1979 = vpop.f32.mrb[0].mxu0
  %1980 = vmatprep.mubr.bf16.mxu0 %v562
  %1981 = vmatmul.mubr.bf16.gmra.mrb[0].mxu0 %v530
  %v1982 = vpop.f32.mrb[0].mxu0
  %v1983 = vadd.f32 %v1694, %v1982
  %v1984 = vpop.f32.mrb[0].mxu0
  %v1985 = vpop.f32.mrb[0].mxu0
  %v1986 = vadd.f32 %v1697, %v1985
  %v1987 = vpop.f32.mrb[0].mxu0
  %1988 = vmatprep.mubr.bf16.mxu0 %v563
  %1989 = vmatmul.mubr.bf16.gmra.mrb[0].mxu0 %v531
  %v1990 = vpop.f32.mrb[0].mxu0
  %v1991 = vadd.f32 %v1702, %v1990
  %v1992 = vpop.f32.mrb[0].mxu0
  %v1993 = vpop.f32.mrb[0].mxu0
  %v1994 = vadd.f32 %v1705, %v1993
  %v1995 = vpop.f32.mrb[0].mxu0
  %1996 = vdwg.mxu0
  %1997 = vmatprep.subr.bf16.mxu0 0
  %1998 = vmatpush1.bf16.msra.mxu0 %v1852
  %1999 = vmatprep.subr.bf16.mxu0 0
  %2000 = vmatpush1.bf16.msra.mxu0 %v1853
  %2001 = vmatprep.subr.bf16.mxu0 0
  %2002 = vmatpush1.bf16.msra.mxu0 %v1854
  %2003 = vmatprep.subr.bf16.mxu0 0
  %2004 = vmatpush1.bf16.msra.mxu0 %v1855
  %2005 = vmatprep.subr.bf16.mxu0 0
  %2006 = vmatpush1.bf16.msra.mxu0 %v1856
  %2007 = vmatprep.subr.bf16.mxu0 0
  %2008 = vmatpush1.bf16.msra.mxu0 %v1857
  %2009 = vmatprep.subr.bf16.mxu0 0
  %2010 = vmatpush1.bf16.msra.mxu0 %v1858
  %2011 = vmatprep.subr.bf16.mxu0 0
  %2012 = vmatpush1.bf16.msra.mxu0 %v1859
  %2013 = vmatprep.subr.bf16.mxu0 0
  %2014 = vmatpush1.bf16.msra.mxu0 %v1860
  %2015 = vmatprep.subr.bf16.mxu0 0
  %2016 = vmatpush1.bf16.msra.mxu0 %v1861
  %2017 = vmatprep.subr.bf16.mxu0 0
  %2018 = vmatpush1.bf16.msra.mxu0 %v1862
  %2019 = vmatprep.subr.bf16.mxu0 0
  %2020 = vmatpush1.bf16.msra.mxu0 %v1863
  %2021 = vmatprep.subr.bf16.mxu0 0
  %2022 = vmatpush1.bf16.msra.mxu0 %v1864
  %2023 = vmatprep.subr.bf16.mxu0 0
  %2024 = vmatpush1.bf16.msra.mxu0 %v1865
  %2025 = vmatprep.subr.bf16.mxu0 0
  %2026 = vmatpush1.bf16.msra.mxu0 %v1866
  %2027 = vmatprep.subr.bf16.mxu0 0
  %2028 = vmatpush1.bf16.msra.mxu0 %v1867
  %2029 = vmatprep.mubr.bf16.mxu0 %v590
  %2030 = vmatmul.mubr.bf16.gmra.mrb[0].mxu0 %v572
  %v2031 = vpop.f32.mrb[0].mxu0
  %v2032 = vadd.f32 %v1935, %v2031
  %v2033 = vpop.f32.mrb[0].mxu0
  %v2034 = vpop.f32.mrb[0].mxu0
  %v2035 = vadd.f32 %v1938, %v2034
  %v2036 = vpop.f32.mrb[0].mxu0
  %2037 = vmatprep.mubr.bf16.mxu0 %v591
  %2038 = vmatmul.mubr.bf16.gmra.mrb[0].mxu0 %v573
  %v2039 = vpop.f32.mrb[0].mxu0
  %v2040 = vadd.f32 %v1943, %v2039
  %v2041 = vpop.f32.mrb[0].mxu0
  %v2042 = vpop.f32.mrb[0].mxu0
  %v2043 = vadd.f32 %v1946, %v2042
  %v2044 = vpop.f32.mrb[0].mxu0
  %2045 = vmatprep.mubr.bf16.mxu0 %v592
  %2046 = vmatmul.mubr.bf16.gmra.mrb[0].mxu0 %v574
  %v2047 = vpop.f32.mrb[0].mxu0
  %v2048 = vadd.f32 %v1951, %v2047
  %v2049 = vpop.f32.mrb[0].mxu0
  %v2050 = vpop.f32.mrb[0].mxu0
  %v2051 = vadd.f32 %v1954, %v2050
  %v2052 = vpop.f32.mrb[0].mxu0
  %2053 = vmatprep.mubr.bf16.mxu0 %v593
  %2054 = vmatmul.mubr.bf16.gmra.mrb[0].mxu0 %v575
  %v2055 = vpop.f32.mrb[0].mxu0
  %v2056 = vadd.f32 %v1959, %v2055
  %v2057 = vpop.f32.mrb[0].mxu0
  %v2058 = vpop.f32.mrb[0].mxu0
  %v2059 = vadd.f32 %v1962, %v2058
  %v2060 = vpop.f32.mrb[0].mxu0
  %2061 = vmatprep.mubr.bf16.mxu0 %v594
  %2062 = vmatmul.mubr.bf16.gmra.mrb[0].mxu0 %v576
  %v2063 = vpop.f32.mrb[0].mxu0
  %v2064 = vadd.f32 %v1967, %v2063
  %v2065 = vpop.f32.mrb[0].mxu0
  %v2066 = vpop.f32.mrb[0].mxu0
  %v2067 = vadd.f32 %v1970, %v2066
  %v2068 = vpop.f32.mrb[0].mxu0
  %2069 = vmatprep.mubr.bf16.mxu0 %v595
  %2070 = vmatmul.mubr.bf16.gmra.mrb[0].mxu0 %v577
  %v2071 = vpop.f32.mrb[0].mxu0
  %v2072 = vadd.f32 %v1975, %v2071
  %v2073 = vpop.f32.mrb[0].mxu0
  %v2074 = vpop.f32.mrb[0].mxu0
  %v2075 = vadd.f32 %v1978, %v2074
  %v2076 = vpop.f32.mrb[0].mxu0
  %2077 = vmatprep.mubr.bf16.mxu0 %v596
  %2078 = vmatmul.mubr.bf16.gmra.mrb[0].mxu0 %v578
  %v2079 = vpop.f32.mrb[0].mxu0
  %v2080 = vadd.f32 %v1983, %v2079
  %v2081 = vpop.f32.mrb[0].mxu0
  %v2082 = vpop.f32.mrb[0].mxu0
  %v2083 = vadd.f32 %v1986, %v2082
  %v2084 = vpop.f32.mrb[0].mxu0
  %2085 = vmatprep.mubr.bf16.mxu0 %v597
  %2086 = vmatmul.mubr.bf16.gmra.mrb[0].mxu0 %v579
  %v2087 = vpop.f32.mrb[0].mxu0
  %v2088 = vadd.f32 %v1991, %v2087
  %v2089 = vpop.f32.mrb[0].mxu0
  %v2090 = vpop.f32.mrb[0].mxu0
  %v2091 = vadd.f32 %v1994, %v2090
  %v2092 = vpop.f32.mrb[0].mxu0
  %2093 = vdwg.mxu0
  %s2094 = scalar_lea.vmem %s0, 576
  %v2095 = vld [vmem:[%s2094] sm:$0xff]
  %v2096 = vld [vmem:[%s2094 + $0x8] sm:$0xff]
  %v2097 = vld [vmem:[%s2094 + $0x10] sm:$0xff]
  %v2098 = vld [vmem:[%s2094 + $0x18] sm:$0xff]
  %v2099 = vld [vmem:[%s2094 + $0x20] sm:$0xff]
  %v2100 = vld [vmem:[%s2094 + $0x28] sm:$0xff]
  %v2101 = vld [vmem:[%s2094 + $0x30] sm:$0xff]
  %v2102 = vld [vmem:[%s2094 + $0x38] sm:$0xff]
  %v2103 = vld [vmem:[%s2094 + $0x40] sm:$0xff]
  %v2104 = vld [vmem:[%s2094 + $0x48] sm:$0xff]
  %v2105 = vld [vmem:[%s2094 + $0x50] sm:$0xff]
  %v2106 = vld [vmem:[%s2094 + $0x58] sm:$0xff]
  %v2107 = vld [vmem:[%s2094 + $0x60] sm:$0xff]
  %v2108 = vld [vmem:[%s2094 + $0x68] sm:$0xff]
  %v2109 = vld [vmem:[%s2094 + $0x70] sm:$0xff]
  %v2110 = vld [vmem:[%s2094 + $0x78] sm:$0xff]
  %v2111 = vld [vmem:[%s2094 + $0x80] sm:$0xff]
  %v2112 = vld [vmem:[%s2094 + $0x88] sm:$0xff]
  %v2113 = vld [vmem:[%s2094 + $0x90] sm:$0xff]
  %v2114 = vld [vmem:[%s2094 + $0x98] sm:$0xff]
  %v2115 = vld [vmem:[%s2094 + $0xa0] sm:$0xff]
  %v2116 = vld [vmem:[%s2094 + $0xa8] sm:$0xff]
  %v2117 = vld [vmem:[%s2094 + $0xb0] sm:$0xff]
  %v2118 = vld [vmem:[%s2094 + $0xb8] sm:$0xff]
  %v2119 = vld [vmem:[%s2094 + $0xc0] sm:$0xff]
  %v2120 = vld [vmem:[%s2094 + $0xc8] sm:$0xff]
  %v2121 = vld [vmem:[%s2094 + $0xd0] sm:$0xff]
  %v2122 = vld [vmem:[%s2094 + $0xd8] sm:$0xff]
  %v2123 = vld [vmem:[%s2094 + $0xe0] sm:$0xff]
  %v2124 = vld [vmem:[%s2094 + $0xe8] sm:$0xff]
  %v2125 = vld [vmem:[%s2094 + $0xf0] sm:$0xff]
  %v2126 = vld [vmem:[%s2094 + $0xf8] sm:$0xff]
  %v2127 = vld [vmem:[%s2094 + $0x100] sm:$0xff]
  %v2128 = vld [vmem:[%s2094 + $0x108] sm:$0xff]
  %v2129 = vld [vmem:[%s2094 + $0x110] sm:$0xff]
  %v2130 = vld [vmem:[%s2094 + $0x118] sm:$0xff]
  %vm2131 = vcmp.gt.f32.partialorder %v2095, 0.0
  %vm2132 = vcmp.gt.f32.partialorder %v2096, 0.0
  %vm2133 = vcmp.gt.f32.partialorder %v2097, 0.0
  %vm2134 = vcmp.gt.f32.partialorder %v2098, 0.0
  %vm2135 = vcmp.gt.f32.partialorder %v2099, 0.0
  %vm2136 = vcmp.gt.f32.partialorder %v2100, 0.0
  %vm2137 = vcmp.gt.f32.partialorder %v2101, 0.0
  %vm2138 = vcmp.gt.f32.partialorder %v2102, 0.0
  %vm2139 = vcmp.gt.f32.partialorder %v2103, 0.0
  %vm2140 = vcmp.gt.f32.partialorder %v2104, 0.0
  %vm2141 = vcmp.gt.f32.partialorder %v2105, 0.0
  %vm2142 = vcmp.gt.f32.partialorder %v2106, 0.0
  %vm2143 = vcmp.gt.f32.partialorder %v2107, 0.0
  %vm2144 = vcmp.gt.f32.partialorder %v2108, 0.0
  %vm2145 = vcmp.gt.f32.partialorder %v2109, 0.0
  %vm2146 = vcmp.gt.f32.partialorder %v2110, 0.0
  %vm2147 = vcmp.gt.f32.partialorder %v2111, 0.0
  %vm2148 = vcmp.gt.f32.partialorder %v2112, 0.0
  %vm2149 = vcmp.gt.f32.partialorder %v2113, 0.0
  %vm2150 = vcmp.gt.f32.partialorder %v2114, 0.0
  %vm2151 = vcmp.gt.f32.partialorder %v2115, 0.0
  %vm2152 = vcmp.gt.f32.partialorder %v2116, 0.0
  %vm2153 = vcmp.gt.f32.partialorder %v2117, 0.0
  %vm2154 = vcmp.gt.f32.partialorder %v2118, 0.0
  %vm2155 = vcmp.gt.f32.partialorder %v2119, 0.0
  %vm2156 = vcmp.gt.f32.partialorder %v2120, 0.0
  %vm2157 = vcmp.gt.f32.partialorder %v2121, 0.0
  %vm2158 = vcmp.gt.f32.partialorder %v2122, 0.0
  %vm2159 = vcmp.gt.f32.partialorder %v2123, 0.0
  %vm2160 = vcmp.gt.f32.partialorder %v2124, 0.0
  %vm2161 = vcmp.gt.f32.partialorder %v2125, 0.0
  %vm2162 = vcmp.gt.f32.partialorder %v2126, 0.0
  %vm2163 = vcmp.gt.f32.partialorder %v2127, 0.0
  %vm2164 = vcmp.gt.f32.partialorder %v2128, 0.0
  %vm2165 = vcmp.gt.f32.partialorder %v2129, 0.0
  %vm2166 = vcmp.gt.f32.partialorder %v2130, 0.0
  %v2167 = vmul.f32 %v2095, 0.2
  %v2168 = vmul.f32 %v2096, 0.2
  %v2169 = vmul.f32 %v2097, 0.2
  %v2170 = vmul.f32 %v2098, 0.2
  %v2171 = vmul.f32 %v2099, 0.2
  %v2172 = vmul.f32 %v2100, 0.2
  %v2173 = vmul.f32 %v2101, 0.2
  %v2174 = vmul.f32 %v2102, 0.2
  %v2175 = vmul.f32 %v2103, 0.2
  %v2176 = vmul.f32 %v2104, 0.2
  %v2177 = vmul.f32 %v2105, 0.2
  %v2178 = vmul.f32 %v2106, 0.2
  %v2179 = vmul.f32 %v2107, 0.2
  %v2180 = vmul.f32 %v2108, 0.2
  %v2181 = vmul.f32 %v2109, 0.2
  %v2182 = vmul.f32 %v2110, 0.2
  %v2183 = vmul.f32 %v2111, 0.2
  %v2184 = vmul.f32 %v2112, 0.2
  %v2185 = vmul.f32 %v2113, 0.2
  %v2186 = vmul.f32 %v2114, 0.2
  %v2187 = vmul.f32 %v2115, 0.2
  %v2188 = vmul.f32 %v2116, 0.2
  %v2189 = vmul.f32 %v2117, 0.2
  %v2190 = vmul.f32 %v2118, 0.2
  %v2191 = vmul.f32 %v2119, 0.2
  %v2192 = vmul.f32 %v2120, 0.2
  %v2193 = vmul.f32 %v2121, 0.2
  %v2194 = vmul.f32 %v2122, 0.2
  %v2195 = vmul.f32 %v2123, 0.2
  %v2196 = vmul.f32 %v2124, 0.2
  %v2197 = vmul.f32 %v2125, 0.2
  %v2198 = vmul.f32 %v2126, 0.2
  %v2199 = vmul.f32 %v2127, 0.2
  %v2200 = vmul.f32 %v2128, 0.2
  %v2201 = vmul.f32 %v2129, 0.2
  %v2202 = vmul.f32 %v2130, 0.2
  %v2203 = vsel %vm2131, %v2095, %v2167
  %v2204 = vsel %vm2132, %v2096, %v2168
  %v2205 = vsel %vm2133, %v2097, %v2169
  %v2206 = vsel %vm2134, %v2098, %v2170
  %v2207 = vsel %vm2135, %v2099, %v2171
  %v2208 = vsel %vm2136, %v2100, %v2172
  %v2209 = vsel %vm2137, %v2101, %v2173
  %v2210 = vsel %vm2138, %v2102, %v2174
  %v2211 = vsel %vm2139, %v2103, %v2175
  %v2212 = vsel %vm2140, %v2104, %v2176
  %v2213 = vsel %vm2141, %v2105, %v2177
  %v2214 = vsel %vm2142, %v2106, %v2178
  %v2215 = vsel %vm2143, %v2107, %v2179
  %v2216 = vsel %vm2144, %v2108, %v2180
  %v2217 = vsel %vm2145, %v2109, %v2181
  %v2218 = vsel %vm2146, %v2110, %v2182
  %v2219 = vsel %vm2147, %v2111, %v2183
  %v2220 = vsel %vm2148, %v2112, %v2184
  %v2221 = vsel %vm2149, %v2113, %v2185
  %v2222 = vsel %vm2150, %v2114, %v2186
  %v2223 = vsel %vm2151, %v2115, %v2187
  %v2224 = vsel %vm2152, %v2116, %v2188
  %v2225 = vsel %vm2153, %v2117, %v2189
  %v2226 = vsel %vm2154, %v2118, %v2190
  %v2227 = vsel %vm2155, %v2119, %v2191
  %v2228 = vsel %vm2156, %v2120, %v2192
  %v2229 = vsel %vm2157, %v2121, %v2193
  %v2230 = vsel %vm2158, %v2122, %v2194
  %v2231 = vsel %vm2159, %v2123, %v2195
  %v2232 = vsel %vm2160, %v2124, %v2196
  %v2233 = vsel %vm2161, %v2125, %v2197
  %v2234 = vsel %vm2162, %v2126, %v2198
  %v2235 = vsel %vm2163, %v2127, %v2199
  %v2236 = vsel %vm2164, %v2128, %v2200
  %v2237 = vsel %vm2165, %v2129, %v2201
  %v2238 = vsel %vm2166, %v2130, %v2202
  %v2239 = vpack.c.bf16 %v2204, %v2203
  %v2240 = vpack.c.bf16 %v2206, %v2205
  %v2241 = vpack.c.bf16 %v2208, %v2207
  %v2242 = vpack.c.bf16 %v2210, %v2209
  %v2243 = vpack.c.bf16 %v2212, %v2211
  %v2244 = vpack.c.bf16 %v2214, %v2213
  %v2245 = vpack.c.bf16 %v2216, %v2215
  %v2246 = vpack.c.bf16 %v2218, %v2217
  %v2247 = vpack.c.bf16 %v2220, %v2219
  %v2248 = vpack.c.bf16 %v2222, %v2221
  %v2249 = vpack.c.bf16 %v2224, %v2223
  %v2250 = vpack.c.bf16 %v2226, %v2225
  %v2251 = vpack.c.bf16 %v2228, %v2227
  %v2252 = vpack.c.bf16 %v2230, %v2229
  %v2253 = vpack.c.bf16 %v2232, %v2231
  %v2254 = vpack.c.bf16 %v2234, %v2233
  %v2255 = vpack.c.bf16 %v2236, %v2235
  %v2256 = vpack.c.bf16 %v2238, %v2237
  %v2273 = vunpack.c.l.b16 %v2239
  %v2274 = vunpack.c.h.b16 %v2239
  %v2275 = vunpack.c.l.b16 %v2240
  %v2276 = vunpack.c.h.b16 %v2240
  %v2277 = vunpack.c.l.b16 %v2241
  %v2278 = vunpack.c.h.b16 %v2241
  %v2279 = vunpack.c.l.b16 %v2242
  %v2280 = vunpack.c.h.b16 %v2242
  %v2281 = vunpack.c.l.b16 %v2243
  %v2282 = vunpack.c.h.b16 %v2243
  %v2283 = vunpack.c.l.b16 %v2244
  %v2284 = vunpack.c.h.b16 %v2244
  %v2285 = vunpack.c.l.b16 %v2245
  %v2286 = vunpack.c.h.b16 %v2245
  %v2287 = vunpack.c.l.b16 %v2246
  %v2288 = vunpack.c.h.b16 %v2246
  %v2289 = vunpack.c.l.b16 %v2248
  %v2290 = vunpack.c.h.b16 %v2248
  %v2291 = vunpack.c.l.b16 %v2249
  %v2292 = vunpack.c.h.b16 %v2249
  %v2293 = vunpack.c.l.b16 %v2250
  %v2294 = vunpack.c.h.b16 %v2250
  %v2295 = vunpack.c.l.b16 %v2251
  %v2296 = vunpack.c.h.b16 %v2251
  %v2297 = vunpack.c.l.b16 %v2252
  %v2298 = vunpack.c.h.b16 %v2252
  %v2299 = vunpack.c.l.b16 %v2253
  %v2300 = vunpack.c.h.b16 %v2253
  %v2301 = vunpack.c.l.b16 %v2254
  %v2302 = vunpack.c.h.b16 %v2254
  %v2303 = vunpack.c.l.b16 %v2255
  %v2304 = vunpack.c.h.b16 %v2255
  %v2305 = vpack.c.b16 %v2273, %v2273
  %v2306 = vpack.c.b16 %v2274, %v2274
  %v2307 = vpack.c.b16 %v2275, %v2275
  %v2308 = vpack.c.b16 %v2276, %v2276
  %v2309 = vpack.c.b16 %v2277, %v2277
  %v2310 = vpack.c.b16 %v2278, %v2278
  %v2311 = vpack.c.b16 %v2279, %v2279
  %v2312 = vpack.c.b16 %v2280, %v2280
  %v2313 = vpack.c.b16 %v2281, %v2281
  %v2314 = vpack.c.b16 %v2282, %v2282
  %v2315 = vpack.c.b16 %v2283, %v2283
  %v2316 = vpack.c.b16 %v2284, %v2284
  %v2317 = vpack.c.b16 %v2285, %v2285
  %v2318 = vpack.c.b16 %v2286, %v2286
  %v2319 = vpack.c.b16 %v2287, %v2287
  %v2320 = vpack.c.b16 %v2288, %v2288
  %v2321 = vpack.c.b16 %v2289, %v2289
  %v2322 = vpack.c.b16 %v2290, %v2290
  %v2323 = vpack.c.b16 %v2291, %v2291
  %v2324 = vpack.c.b16 %v2292, %v2292
  %v2325 = vpack.c.b16 %v2293, %v2293
  %v2326 = vpack.c.b16 %v2294, %v2294
  %v2327 = vpack.c.b16 %v2295, %v2295
  %v2328 = vpack.c.b16 %v2296, %v2296
  %v2329 = vpack.c.b16 %v2297, %v2297
  %v2330 = vpack.c.b16 %v2298, %v2298
  %v2331 = vpack.c.b16 %v2299, %v2299
  %v2332 = vpack.c.b16 %v2300, %v2300
  %v2333 = vpack.c.b16 %v2301, %v2301
  %v2334 = vpack.c.b16 %v2302, %v2302
  %v2335 = vpack.c.b16 %v2303, %v2303
  %v2336 = vpack.c.b16 %v2304, %v2304
  %v2338 = vshrl.u32 %v2305, 16
  %v2340 = vrot.slane %v2338, 4
  %v2341 = vshll.u32 %v2305, 16
  %v2343 = vrot.slane %v2341, 5
  %v2344 = vor.u32 %v2340, %v2343
  %v2345 = vrot.slane %v2344, 4
  %v2347 = vshll.u32 %v2306, 16
  %v2349 = vrot.slane %v2347, 5
  %v2350 = vsel %vm261, %v2345, %v2349
  %v2352 = vshrl.u32 %v2307, 16
  %v2354 = vrot.slane %v2352, 4
  %v2355 = vshll.u32 %v2307, 16
  %v2357 = vrot.slane %v2355, 5
  %v2358 = vor.u32 %v2354, %v2357
  %v2359 = vrot.slane %v2358, 4
  %v2361 = vshll.u32 %v2308, 16
  %v2363 = vrot.slane %v2361, 5
  %v2364 = vsel %vm261, %v2359, %v2363
  %v2366 = vshrl.u32 %v2309, 16
  %v2368 = vrot.slane %v2366, 4
  %v2369 = vshll.u32 %v2309, 16
  %v2371 = vrot.slane %v2369, 5
  %v2372 = vor.u32 %v2368, %v2371
  %v2373 = vrot.slane %v2372, 4
  %v2375 = vshll.u32 %v2310, 16
  %v2377 = vrot.slane %v2375, 5
  %v2378 = vsel %vm261, %v2373, %v2377
  %v2380 = vshrl.u32 %v2311, 16
  %v2382 = vrot.slane %v2380, 4
  %v2383 = vshll.u32 %v2311, 16
  %v2385 = vrot.slane %v2383, 5
  %v2386 = vor.u32 %v2382, %v2385
  %v2387 = vrot.slane %v2386, 4
  %v2389 = vshll.u32 %v2312, 16
  %v2391 = vrot.slane %v2389, 5
  %v2392 = vsel %vm261, %v2387, %v2391
  %v2394 = vshrl.u32 %v2313, 16
  %v2396 = vrot.slane %v2394, 4
  %v2397 = vshll.u32 %v2313, 16
  %v2399 = vrot.slane %v2397, 5
  %v2400 = vor.u32 %v2396, %v2399
  %v2401 = vrot.slane %v2400, 4
  %v2403 = vshll.u32 %v2314, 16
  %v2405 = vrot.slane %v2403, 5
  %v2406 = vsel %vm261, %v2401, %v2405
  %v2408 = vshrl.u32 %v2315, 16
  %v2410 = vrot.slane %v2408, 4
  %v2411 = vshll.u32 %v2315, 16
  %v2413 = vrot.slane %v2411, 5
  %v2414 = vor.u32 %v2410, %v2413
  %v2415 = vrot.slane %v2414, 4
  %v2417 = vshll.u32 %v2316, 16
  %v2419 = vrot.slane %v2417, 5
  %v2420 = vsel %vm261, %v2415, %v2419
  %v2422 = vshrl.u32 %v2317, 16
  %v2424 = vrot.slane %v2422, 4
  %v2425 = vshll.u32 %v2317, 16
  %v2427 = vrot.slane %v2425, 5
  %v2428 = vor.u32 %v2424, %v2427
  %v2429 = vrot.slane %v2428, 4
  %v2431 = vshll.u32 %v2318, 16
  %v2433 = vrot.slane %v2431, 5
  %v2434 = vsel %vm261, %v2429, %v2433
  %v2436 = vshrl.u32 %v2319, 16
  %v2438 = vrot.slane %v2436, 4
  %v2439 = vshll.u32 %v2319, 16
  %v2441 = vrot.slane %v2439, 5
  %v2442 = vor.u32 %v2438, %v2441
  %v2443 = vrot.slane %v2442, 4
  %v2445 = vshll.u32 %v2320, 16
  %v2447 = vrot.slane %v2445, 5
  %v2448 = vsel %vm261, %v2443, %v2447
  %v2450 = vshrl.u32 %v2321, 16
  %v2452 = vrot.slane %v2450, 4
  %v2453 = vshll.u32 %v2321, 16
  %v2455 = vrot.slane %v2453, 5
  %v2456 = vor.u32 %v2452, %v2455
  %v2457 = vrot.slane %v2456, 4
  %v2459 = vshll.u32 %v2322, 16
  %v2461 = vrot.slane %v2459, 5
  %v2462 = vsel %vm261, %v2457, %v2461
  %v2464 = vshrl.u32 %v2323, 16
  %v2466 = vrot.slane %v2464, 4
  %v2467 = vshll.u32 %v2323, 16
  %v2469 = vrot.slane %v2467, 5
  %v2470 = vor.u32 %v2466, %v2469
  %v2471 = vrot.slane %v2470, 4
  %v2473 = vshll.u32 %v2324, 16
  %v2475 = vrot.slane %v2473, 5
  %v2476 = vsel %vm261, %v2471, %v2475
  %v2478 = vshrl.u32 %v2325, 16
  %v2480 = vrot.slane %v2478, 4
  %v2481 = vshll.u32 %v2325, 16
  %v2483 = vrot.slane %v2481, 5
  %v2484 = vor.u32 %v2480, %v2483
  %v2485 = vrot.slane %v2484, 4
  %v2487 = vshll.u32 %v2326, 16
  %v2489 = vrot.slane %v2487, 5
  %v2490 = vsel %vm261, %v2485, %v2489
  %v2492 = vshrl.u32 %v2327, 16
  %v2494 = vrot.slane %v2492, 4
  %v2495 = vshll.u32 %v2327, 16
  %v2497 = vrot.slane %v2495, 5
  %v2498 = vor.u32 %v2494, %v2497
  %v2499 = vrot.slane %v2498, 4
  %v2501 = vshll.u32 %v2328, 16
  %v2503 = vrot.slane %v2501, 5
  %v2504 = vsel %vm261, %v2499, %v2503
  %v2506 = vshrl.u32 %v2329, 16
  %v2508 = vrot.slane %v2506, 4
  %v2509 = vshll.u32 %v2329, 16
  %v2511 = vrot.slane %v2509, 5
  %v2512 = vor.u32 %v2508, %v2511
  %v2513 = vrot.slane %v2512, 4
  %v2515 = vshll.u32 %v2330, 16
  %v2517 = vrot.slane %v2515, 5
  %v2518 = vsel %vm261, %v2513, %v2517
  %v2520 = vshrl.u32 %v2331, 16
  %v2522 = vrot.slane %v2520, 4
  %v2523 = vshll.u32 %v2331, 16
  %v2525 = vrot.slane %v2523, 5
  %v2526 = vor.u32 %v2522, %v2525
  %v2527 = vrot.slane %v2526, 4
  %v2529 = vshll.u32 %v2332, 16
  %v2531 = vrot.slane %v2529, 5
  %v2532 = vsel %vm261, %v2527, %v2531
  %v2534 = vshrl.u32 %v2333, 16
  %v2536 = vrot.slane %v2534, 4
  %v2537 = vshll.u32 %v2333, 16
  %v2539 = vrot.slane %v2537, 5
  %v2540 = vor.u32 %v2536, %v2539
  %v2541 = vrot.slane %v2540, 4
  %v2543 = vshll.u32 %v2334, 16
  %v2545 = vrot.slane %v2543, 5
  %v2546 = vsel %vm261, %v2541, %v2545
  %v2548 = vshrl.u32 %v2335, 16
  %v2550 = vrot.slane %v2548, 4
  %v2551 = vshll.u32 %v2335, 16
  %v2553 = vrot.slane %v2551, 5
  %v2554 = vor.u32 %v2550, %v2553
  %v2555 = vrot.slane %v2554, 4
  %v2557 = vshll.u32 %v2336, 16
  %v2559 = vrot.slane %v2557, 5
  %v2560 = vsel %vm261, %v2555, %v2559
  %v2563 = vunpack.c.l.b16 %v2247
  %v2564 = vunpack.c.h.b16 %v2247
  %v2565 = vunpack.c.l.b16 %v2256
  %v2566 = vunpack.c.h.b16 %v2256
  %v2567 = vpack.c.b16 %v2563, %v2563
  %v2568 = vpack.c.b16 %v2564, %v2564
  %v2569 = vpack.c.b16 %v2565, %v2565
  %v2570 = vpack.c.b16 %v2566, %v2566
  %v2572 = vshrl.u32 %v2567, 16
  %v2574 = vrot.slane %v2572, 4
  %v2575 = vshll.u32 %v2567, 16
  %v2577 = vrot.slane %v2575, 5
  %v2578 = vor.u32 %v2574, %v2577
  %v2579 = vrot.slane %v2578, 4
  %v2581 = vshll.u32 %v2568, 16
  %v2583 = vrot.slane %v2581, 5
  %v2584 = vsel %vm261, %v2579, %v2583
  %v2586 = vshrl.u32 %v2569, 16
  %v2588 = vrot.slane %v2586, 4
  %v2589 = vshll.u32 %v2569, 16
  %v2591 = vrot.slane %v2589, 5
  %v2592 = vor.u32 %v2588, %v2591
  %v2593 = vrot.slane %v2592, 4
  %v2595 = vshll.u32 %v2570, 16
  %v2597 = vrot.slane %v2595, 5
  %v2598 = vsel %vm261, %v2593, %v2597
  %v2599 = vpack.c.b16 %v2275, %v2273
  %v2600 = vpack.c.b16 %v2279, %v2277
  %v2601 = vpack.c.b16 %v2283, %v2281
  %v2602 = vpack.c.b16 %v2287, %v2285
  %v2603 = vpack.c.b16 %v2291, %v2289
  %v2604 = vpack.c.b16 %v2295, %v2293
  %v2605 = vpack.c.b16 %v2299, %v2297
  %v2606 = vpack.c.b16 %v2303, %v2301
  %v2615 = vunpack.c.l.b16 %v2350
  %v2616 = vunpack.c.l.b16 %v2364
  %v2617 = vunpack.c.l.b16 %v2378
  %v2618 = vunpack.c.l.b16 %v2392
  %v2619 = vunpack.c.l.b16 %v2406
  %v2620 = vunpack.c.l.b16 %v2420
  %v2621 = vunpack.c.l.b16 %v2434
  %v2622 = vunpack.c.l.b16 %v2448
  %v2623 = vunpack.c.l.b16 %v2462
  %v2624 = vunpack.c.l.b16 %v2476
  %v2625 = vunpack.c.l.b16 %v2490
  %v2626 = vunpack.c.l.b16 %v2504
  %v2627 = vunpack.c.l.b16 %v2518
  %v2628 = vunpack.c.l.b16 %v2532
  %v2629 = vunpack.c.l.b16 %v2546
  %v2630 = vunpack.c.l.b16 %v2560
  %v2631 = vpack.c.b16 %v2616, %v2615
  %v2632 = vpack.c.b16 %v2618, %v2617
  %v2633 = vpack.c.b16 %v2620, %v2619
  %v2634 = vpack.c.b16 %v2622, %v2621
  %v2635 = vpack.c.b16 %v2624, %v2623
  %v2636 = vpack.c.b16 %v2626, %v2625
  %v2637 = vpack.c.b16 %v2628, %v2627
  %v2638 = vpack.c.b16 %v2630, %v2629
  %v2647 = vpack.c.b16 %v2277, %v2275
  %v2648 = vpack.c.b16 %v2281, %v2279
  %v2649 = vpack.c.b16 %v2285, %v2283
  %v2650 = vpack.c.b16 %v2563, %v2287
  %v2651 = vpack.c.b16 %v2293, %v2291
  %v2652 = vpack.c.b16 %v2297, %v2295
  %v2653 = vpack.c.b16 %v2301, %v2299
  %v2654 = vpack.c.b16 %v2565, %v2303
  %v2663 = vunpack.c.l.b16 %v2584
  %v2664 = vunpack.c.l.b16 %v2598
  %v2665 = vpack.c.b16 %v2617, %v2616
  %v2666 = vpack.c.b16 %v2619, %v2618
  %v2667 = vpack.c.b16 %v2621, %v2620
  %v2668 = vpack.c.b16 %v2663, %v2622
  %v2669 = vpack.c.b16 %v2625, %v2624
  %v2670 = vpack.c.b16 %v2627, %v2626
  %v2671 = vpack.c.b16 %v2629, %v2628
  %v2672 = vpack.c.b16 %v2664, %v2630
  %s2681 = scalar_lea.vmem %s1, 512
  %v2682 = vld [vmem:[%s2681] sm:$0xf]
  %v2683 = vld [vmem:[%s2681 + $0x4] sm:$0xf]
  %v2684 = vld [vmem:[%s2681 + $0x8] sm:$0xf]
  %v2685 = vld [vmem:[%s2681 + $0xc] sm:$0xf]
  %v2686 = vld [vmem:[%s2681 + $0x10] sm:$0xf]
  %v2687 = vld [vmem:[%s2681 + $0x14] sm:$0xf]
  %v2688 = vld [vmem:[%s2681 + $0x18] sm:$0xf]
  %v2689 = vld [vmem:[%s2681 + $0x1c] sm:$0xf]
  %v2690 = vld [vmem:[%s2681 + $0x20] sm:$0xf]
  %v2691 = vld [vmem:[%s2681 + $0x24] sm:$0xf]
  %v2692 = vld [vmem:[%s2681 + $0x28] sm:$0xf]
  %v2693 = vld [vmem:[%s2681 + $0x2c] sm:$0xf]
  %v2694 = vld [vmem:[%s2681 + $0x30] sm:$0xf]
  %v2695 = vld [vmem:[%s2681 + $0x34] sm:$0xf]
  %v2696 = vld [vmem:[%s2681 + $0x38] sm:$0xf]
  %v2697 = vld [vmem:[%s2681 + $0x3c] sm:$0xf]
  %v2698 = vld [vmem:[%s2681 + $0x40] sm:$0xf]
  %v2699 = vld [vmem:[%s2681 + $0x44] sm:$0xf]
  %v2700 = vld [vmem:[%s2681 + $0x48] sm:$0xf]
  %v2701 = vld [vmem:[%s2681 + $0x4c] sm:$0xf]
  %v2702 = vld [vmem:[%s2681 + $0x50] sm:$0xf]
  %v2703 = vld [vmem:[%s2681 + $0x54] sm:$0xf]
  %v2704 = vld [vmem:[%s2681 + $0x58] sm:$0xf]
  %v2705 = vld [vmem:[%s2681 + $0x5c] sm:$0xf]
  %v2706 = vld [vmem:[%s2681 + $0x60] sm:$0xf]
  %v2707 = vld [vmem:[%s2681 + $0x64] sm:$0xf]
  %v2708 = vld [vmem:[%s2681 + $0x68] sm:$0xf]
  %v2709 = vld [vmem:[%s2681 + $0x6c] sm:$0xf]
  %v2710 = vld [vmem:[%s2681 + $0x70] sm:$0xf]
  %v2711 = vld [vmem:[%s2681 + $0x74] sm:$0xf]
  %v2712 = vld [vmem:[%s2681 + $0x78] sm:$0xf]
  %v2713 = vld [vmem:[%s2681 + $0x7c] sm:$0xf]
  %v2714 = vld [vmem:[%s2681 + $0x80] sm:$0xf]
  %v2715 = vld [vmem:[%s2681 + $0x84] sm:$0xf]
  %v2716 = vld [vmem:[%s2681 + $0x88] sm:$0xf]
  %v2717 = vld [vmem:[%s2681 + $0x8c] sm:$0xf]
  %v2718 = vld [vmem:[%s2681 + $0x90] sm:$0xf]
  %v2719 = vld [vmem:[%s2681 + $0x94] sm:$0xf]
  %v2720 = vld [vmem:[%s2681 + $0x98] sm:$0xf]
  %v2721 = vld [vmem:[%s2681 + $0x9c] sm:$0xf]
  %v2722 = vld [vmem:[%s2681 + $0xa0] sm:$0xf]
  %v2723 = vld [vmem:[%s2681 + $0xa4] sm:$0xf]
  %v2724 = vld [vmem:[%s2681 + $0xa8] sm:$0xf]
  %v2725 = vld [vmem:[%s2681 + $0xac] sm:$0xf]
  %v2726 = vld [vmem:[%s2681 + $0xb0] sm:$0xf]
  %v2727 = vld [vmem:[%s2681 + $0xb4] sm:$0xf]
  %v2728 = vld [vmem:[%s2681 + $0xb8] sm:$0xf]
  %v2729 = vld [vmem:[%s2681 + $0xbc] sm:$0xf]
  %v2730 = vld [vmem:[%s2681 + $0xc0] sm:$0xf]
  %v2731 = vld [vmem:[%s2681 + $0xc4] sm:$0xf]
  %v2732 = vld [vmem:[%s2681 + $0xc8] sm:$0xf]
  %v2733 = vld [vmem:[%s2681 + $0xcc] sm:$0xf]
  %v2734 = vld [vmem:[%s2681 + $0xd0] sm:$0xf]
  %v2735 = vld [vmem:[%s2681 + $0xd4] sm:$0xf]
  %v2736 = vld [vmem:[%s2681 + $0xd8] sm:$0xf]
  %v2737 = vld [vmem:[%s2681 + $0xdc] sm:$0xf]
  %v2738 = vld [vmem:[%s2681 + $0xe0] sm:$0xf]
  %v2739 = vld [vmem:[%s2681 + $0xe4] sm:$0xf]
  %v2740 = vld [vmem:[%s2681 + $0xe8] sm:$0xf]
  %v2741 = vld [vmem:[%s2681 + $0xec] sm:$0xf]
  %v2742 = vld [vmem:[%s2681 + $0xf0] sm:$0xf]
  %v2743 = vld [vmem:[%s2681 + $0xf4] sm:$0xf]
  %v2744 = vld [vmem:[%s2681 + $0xf8] sm:$0xf]
  %v2745 = vld [vmem:[%s2681 + $0xfc] sm:$0xf]
  %v2810 = vunpack.c.l.b16 %v2682
  %v2811 = vunpack.c.l.b16 %v2683
  %v2812 = vunpack.c.l.b16 %v2684
  %v2813 = vunpack.c.l.b16 %v2685
  %v2814 = vunpack.c.l.b16 %v2686
  %v2815 = vunpack.c.l.b16 %v2687
  %v2816 = vunpack.c.l.b16 %v2688
  %v2817 = vunpack.c.l.b16 %v2689
  %v2818 = vunpack.c.l.b16 %v2690
  %v2819 = vunpack.c.l.b16 %v2691
  %v2820 = vunpack.c.l.b16 %v2692
  %v2821 = vunpack.c.l.b16 %v2693
  %v2822 = vunpack.c.l.b16 %v2694
  %v2823 = vunpack.c.l.b16 %v2695
  %v2824 = vunpack.c.l.b16 %v2696
  %v2825 = vunpack.c.l.b16 %v2697
  %v2826 = vunpack.c.l.b16 %v2698
  %v2827 = vunpack.c.l.b16 %v2699
  %v2828 = vunpack.c.l.b16 %v2700
  %v2829 = vunpack.c.l.b16 %v2701
  %v2830 = vunpack.c.l.b16 %v2702
  %v2831 = vunpack.c.l.b16 %v2703
  %v2832 = vunpack.c.l.b16 %v2704
  %v2833 = vunpack.c.l.b16 %v2705
  %v2834 = vunpack.c.l.b16 %v2706
  %v2835 = vunpack.c.l.b16 %v2707
  %v2836 = vunpack.c.l.b16 %v2708
  %v2837 = vunpack.c.l.b16 %v2709
  %v2838 = vunpack.c.l.b16 %v2710
  %v2839 = vunpack.c.l.b16 %v2711
  %v2840 = vunpack.c.l.b16 %v2712
  %v2841 = vunpack.c.l.b16 %v2713
  %v2842 = vunpack.c.l.b16 %v2714
  %v2843 = vunpack.c.l.b16 %v2715
  %v2844 = vunpack.c.l.b16 %v2716
  %v2845 = vunpack.c.l.b16 %v2717
  %v2846 = vunpack.c.l.b16 %v2718
  %v2847 = vunpack.c.l.b16 %v2719
  %v2848 = vunpack.c.l.b16 %v2720
  %v2849 = vunpack.c.l.b16 %v2721
  %v2850 = vunpack.c.l.b16 %v2722
  %v2851 = vunpack.c.l.b16 %v2723
  %v2852 = vunpack.c.l.b16 %v2724
  %v2853 = vunpack.c.l.b16 %v2725
  %v2854 = vunpack.c.l.b16 %v2726
  %v2855 = vunpack.c.l.b16 %v2727
  %v2856 = vunpack.c.l.b16 %v2728
  %v2857 = vunpack.c.l.b16 %v2729
  %v2858 = vunpack.c.l.b16 %v2730
  %v2859 = vunpack.c.l.b16 %v2731
  %v2860 = vunpack.c.l.b16 %v2732
  %v2861 = vunpack.c.l.b16 %v2733
  %v2862 = vunpack.c.l.b16 %v2734
  %v2863 = vunpack.c.l.b16 %v2735
  %v2864 = vunpack.c.l.b16 %v2736
  %v2865 = vunpack.c.l.b16 %v2737
  %v2866 = vunpack.c.l.b16 %v2738
  %v2867 = vunpack.c.l.b16 %v2739
  %v2868 = vunpack.c.l.b16 %v2740
  %v2869 = vunpack.c.l.b16 %v2741
  %v2870 = vunpack.c.l.b16 %v2742
  %v2871 = vunpack.c.l.b16 %v2743
  %v2872 = vunpack.c.l.b16 %v2744
  %v2873 = vunpack.c.l.b16 %v2745
  %v2874 = vpack.c.b16 %v2811, %v2810
  %v2875 = vpack.c.b16 %v2813, %v2812
  %v2876 = vpack.c.b16 %v2815, %v2814
  %v2877 = vpack.c.b16 %v2817, %v2816
  %v2878 = vpack.c.b16 %v2819, %v2818
  %v2879 = vpack.c.b16 %v2821, %v2820
  %v2880 = vpack.c.b16 %v2823, %v2822
  %v2881 = vpack.c.b16 %v2825, %v2824
  %v2882 = vpack.c.b16 %v2827, %v2826
  %v2883 = vpack.c.b16 %v2829, %v2828
  %v2884 = vpack.c.b16 %v2831, %v2830
  %v2885 = vpack.c.b16 %v2833, %v2832
  %v2886 = vpack.c.b16 %v2835, %v2834
  %v2887 = vpack.c.b16 %v2837, %v2836
  %v2888 = vpack.c.b16 %v2839, %v2838
  %v2889 = vpack.c.b16 %v2841, %v2840
  %v2890 = vpack.c.b16 %v2843, %v2842
  %v2891 = vpack.c.b16 %v2845, %v2844
  %v2892 = vpack.c.b16 %v2847, %v2846
  %v2893 = vpack.c.b16 %v2849, %v2848
  %v2894 = vpack.c.b16 %v2851, %v2850
  %v2895 = vpack.c.b16 %v2853, %v2852
  %v2896 = vpack.c.b16 %v2855, %v2854
  %v2897 = vpack.c.b16 %v2857, %v2856
  %v2898 = vpack.c.b16 %v2859, %v2858
  %v2899 = vpack.c.b16 %v2861, %v2860
  %v2900 = vpack.c.b16 %v2863, %v2862
  %v2901 = vpack.c.b16 %v2865, %v2864
  %v2902 = vpack.c.b16 %v2867, %v2866
  %v2903 = vpack.c.b16 %v2869, %v2868
  %v2904 = vpack.c.b16 %v2871, %v2870
  %v2905 = vpack.c.b16 %v2873, %v2872
  %2938 = vmatprep.subr.bf16.mxu0 0
  %2939 = vmatpush1.bf16.msra.mxu0 %v2874
  %2940 = vmatprep.subr.bf16.mxu0 0
  %2941 = vmatpush1.bf16.msra.mxu0 %v2875
  %2942 = vmatprep.subr.bf16.mxu0 0
  %2943 = vmatpush1.bf16.msra.mxu0 %v2876
  %2944 = vmatprep.subr.bf16.mxu0 0
  %2945 = vmatpush1.bf16.msra.mxu0 %v2877
  %2946 = vmatprep.subr.bf16.mxu0 0
  %2947 = vmatpush1.bf16.msra.mxu0 %v2878
  %2948 = vmatprep.subr.bf16.mxu0 0
  %2949 = vmatpush1.bf16.msra.mxu0 %v2879
  %2950 = vmatprep.subr.bf16.mxu0 0
  %2951 = vmatpush1.bf16.msra.mxu0 %v2880
  %2952 = vmatprep.subr.bf16.mxu0 0
  %2953 = vmatpush1.bf16.msra.mxu0 %v2881
  %2954 = vmatprep.subr.bf16.mxu0 0
  %2955 = vmatpush1.bf16.msra.mxu0 %v2882
  %2956 = vmatprep.subr.bf16.mxu0 0
  %2957 = vmatpush1.bf16.msra.mxu0 %v2883
  %2958 = vmatprep.subr.bf16.mxu0 0
  %2959 = vmatpush1.bf16.msra.mxu0 %v2884
  %2960 = vmatprep.subr.bf16.mxu0 0
  %2961 = vmatpush1.bf16.msra.mxu0 %v2885
  %2962 = vmatprep.subr.bf16.mxu0 0
  %2963 = vmatpush1.bf16.msra.mxu0 %v2886
  %2964 = vmatprep.subr.bf16.mxu0 0
  %2965 = vmatpush1.bf16.msra.mxu0 %v2887
  %2966 = vmatprep.subr.bf16.mxu0 0
  %2967 = vmatpush1.bf16.msra.mxu0 %v2888
  %2968 = vmatprep.subr.bf16.mxu0 0
  %2969 = vmatpush1.bf16.msra.mxu0 %v2889
  %2970 = vmatprep.mubr.bf16.mxu0 %v2631
  %2971 = vmatmul.mubr.bf16.gmra.mrb[0].mxu0 %v2599
  %v2972 = vpop.f32.mrb[0].mxu0
  %v2973 = vadd.f32 0.0, %v2972
  %v2974 = vpop.f32.mrb[0].mxu0
  %v2975 = vpop.f32.mrb[0].mxu0
  %v2976 = vadd.f32 0.0, %v2975
  %v2977 = vpop.f32.mrb[0].mxu0
  %2978 = vmatprep.mubr.bf16.mxu0 %v2632
  %2979 = vmatmul.mubr.bf16.gmra.mrb[0].mxu0 %v2600
  %v2980 = vpop.f32.mrb[0].mxu0
  %v2981 = vadd.f32 0.0, %v2980
  %v2982 = vpop.f32.mrb[0].mxu0
  %v2983 = vpop.f32.mrb[0].mxu0
  %v2984 = vadd.f32 0.0, %v2983
  %v2985 = vpop.f32.mrb[0].mxu0
  %2986 = vmatprep.mubr.bf16.mxu0 %v2633
  %2987 = vmatmul.mubr.bf16.gmra.mrb[0].mxu0 %v2601
  %v2988 = vpop.f32.mrb[0].mxu0
  %v2989 = vadd.f32 0.0, %v2988
  %v2990 = vpop.f32.mrb[0].mxu0
  %v2991 = vpop.f32.mrb[0].mxu0
  %v2992 = vadd.f32 0.0, %v2991
  %v2993 = vpop.f32.mrb[0].mxu0
  %2994 = vmatprep.mubr.bf16.mxu0 %v2634
  %2995 = vmatmul.mubr.bf16.gmra.mrb[0].mxu0 %v2602
  %v2996 = vpop.f32.mrb[0].mxu0
  %v2997 = vadd.f32 0.0, %v2996
  %v2998 = vpop.f32.mrb[0].mxu0
  %v2999 = vpop.f32.mrb[0].mxu0
  %v3000 = vadd.f32 0.0, %v2999
  %v3001 = vpop.f32.mrb[0].mxu0
  %3002 = vmatprep.mubr.bf16.mxu0 %v2635
  %3003 = vmatmul.mubr.bf16.gmra.mrb[0].mxu0 %v2603
  %v3004 = vpop.f32.mrb[0].mxu0
  %v3005 = vadd.f32 0.0, %v3004
  %v3006 = vpop.f32.mrb[0].mxu0
  %v3007 = vpop.f32.mrb[0].mxu0
  %v3008 = vadd.f32 0.0, %v3007
  %v3009 = vpop.f32.mrb[0].mxu0
  %3010 = vmatprep.mubr.bf16.mxu0 %v2636
  %3011 = vmatmul.mubr.bf16.gmra.mrb[0].mxu0 %v2604
  %v3012 = vpop.f32.mrb[0].mxu0
  %v3013 = vadd.f32 0.0, %v3012
  %v3014 = vpop.f32.mrb[0].mxu0
  %v3015 = vpop.f32.mrb[0].mxu0
  %v3016 = vadd.f32 0.0, %v3015
  %v3017 = vpop.f32.mrb[0].mxu0
  %3018 = vmatprep.mubr.bf16.mxu0 %v2637
  %3019 = vmatmul.mubr.bf16.gmra.mrb[0].mxu0 %v2605
  %v3020 = vpop.f32.mrb[0].mxu0
  %v3021 = vadd.f32 0.0, %v3020
  %v3022 = vpop.f32.mrb[0].mxu0
  %v3023 = vpop.f32.mrb[0].mxu0
  %v3024 = vadd.f32 0.0, %v3023
  %v3025 = vpop.f32.mrb[0].mxu0
  %3026 = vmatprep.mubr.bf16.mxu0 %v2638
  %3027 = vmatmul.mubr.bf16.gmra.mrb[0].mxu0 %v2606
  %v3028 = vpop.f32.mrb[0].mxu0
  %v3029 = vadd.f32 0.0, %v3028
  %v3030 = vpop.f32.mrb[0].mxu0
  %v3031 = vpop.f32.mrb[0].mxu0
  %v3032 = vadd.f32 0.0, %v3031
  %v3033 = vpop.f32.mrb[0].mxu0
  %3034 = vdwg.mxu0
  %3035 = vmatprep.subr.bf16.mxu0 0
  %3036 = vmatpush1.bf16.msra.mxu0 %v2890
  %3037 = vmatprep.subr.bf16.mxu0 0
  %3038 = vmatpush1.bf16.msra.mxu0 %v2891
  %3039 = vmatprep.subr.bf16.mxu0 0
  %3040 = vmatpush1.bf16.msra.mxu0 %v2892
  %3041 = vmatprep.subr.bf16.mxu0 0
  %3042 = vmatpush1.bf16.msra.mxu0 %v2893
  %3043 = vmatprep.subr.bf16.mxu0 0
  %3044 = vmatpush1.bf16.msra.mxu0 %v2894
  %3045 = vmatprep.subr.bf16.mxu0 0
  %3046 = vmatpush1.bf16.msra.mxu0 %v2895
  %3047 = vmatprep.subr.bf16.mxu0 0
  %3048 = vmatpush1.bf16.msra.mxu0 %v2896
  %3049 = vmatprep.subr.bf16.mxu0 0
  %3050 = vmatpush1.bf16.msra.mxu0 %v2897
  %3051 = vmatprep.subr.bf16.mxu0 0
  %3052 = vmatpush1.bf16.msra.mxu0 %v2898
  %3053 = vmatprep.subr.bf16.mxu0 0
  %3054 = vmatpush1.bf16.msra.mxu0 %v2899
  %3055 = vmatprep.subr.bf16.mxu0 0
  %3056 = vmatpush1.bf16.msra.mxu0 %v2900
  %3057 = vmatprep.subr.bf16.mxu0 0
  %3058 = vmatpush1.bf16.msra.mxu0 %v2901
  %3059 = vmatprep.subr.bf16.mxu0 0
  %3060 = vmatpush1.bf16.msra.mxu0 %v2902
  %3061 = vmatprep.subr.bf16.mxu0 0
  %3062 = vmatpush1.bf16.msra.mxu0 %v2903
  %3063 = vmatprep.subr.bf16.mxu0 0
  %3064 = vmatpush1.bf16.msra.mxu0 %v2904
  %3065 = vmatprep.subr.bf16.mxu0 0
  %3066 = vmatpush1.bf16.msra.mxu0 %v2905
  %3067 = vmatprep.mubr.bf16.mxu0 %v2665
  %3068 = vmatmul.mubr.bf16.gmra.mrb[0].mxu0 %v2647
  %v3069 = vpop.f32.mrb[0].mxu0
  %v3070 = vadd.f32 %v2973, %v3069
  %v3071 = vpop.f32.mrb[0].mxu0
  %v3072 = vpop.f32.mrb[0].mxu0
  %v3073 = vadd.f32 %v2976, %v3072
  %v3074 = vpop.f32.mrb[0].mxu0
  %3075 = vmatprep.mubr.bf16.mxu0 %v2666
  %3076 = vmatmul.mubr.bf16.gmra.mrb[0].mxu0 %v2648
  %v3077 = vpop.f32.mrb[0].mxu0
  %v3078 = vadd.f32 %v2981, %v3077
  %v3079 = vpop.f32.mrb[0].mxu0
  %v3080 = vpop.f32.mrb[0].mxu0
  %v3081 = vadd.f32 %v2984, %v3080
  %v3082 = vpop.f32.mrb[0].mxu0
  %3083 = vmatprep.mubr.bf16.mxu0 %v2667
  %3084 = vmatmul.mubr.bf16.gmra.mrb[0].mxu0 %v2649
  %v3085 = vpop.f32.mrb[0].mxu0
  %v3086 = vadd.f32 %v2989, %v3085
  %v3087 = vpop.f32.mrb[0].mxu0
  %v3088 = vpop.f32.mrb[0].mxu0
  %v3089 = vadd.f32 %v2992, %v3088
  %v3090 = vpop.f32.mrb[0].mxu0
  %3091 = vmatprep.mubr.bf16.mxu0 %v2668
  %3092 = vmatmul.mubr.bf16.gmra.mrb[0].mxu0 %v2650
  %v3093 = vpop.f32.mrb[0].mxu0
  %v3094 = vadd.f32 %v2997, %v3093
  %v3095 = vpop.f32.mrb[0].mxu0
  %v3096 = vpop.f32.mrb[0].mxu0
  %v3097 = vadd.f32 %v3000, %v3096
  %v3098 = vpop.f32.mrb[0].mxu0
  %3099 = vmatprep.mubr.bf16.mxu0 %v2669
  %3100 = vmatmul.mubr.bf16.gmra.mrb[0].mxu0 %v2651
  %v3101 = vpop.f32.mrb[0].mxu0
  %v3102 = vadd.f32 %v3005, %v3101
  %v3103 = vpop.f32.mrb[0].mxu0
  %v3104 = vpop.f32.mrb[0].mxu0
  %v3105 = vadd.f32 %v3008, %v3104
  %v3106 = vpop.f32.mrb[0].mxu0
  %3107 = vmatprep.mubr.bf16.mxu0 %v2670
  %3108 = vmatmul.mubr.bf16.gmra.mrb[0].mxu0 %v2652
  %v3109 = vpop.f32.mrb[0].mxu0
  %v3110 = vadd.f32 %v3013, %v3109
  %v3111 = vpop.f32.mrb[0].mxu0
  %v3112 = vpop.f32.mrb[0].mxu0
  %v3113 = vadd.f32 %v3016, %v3112
  %v3114 = vpop.f32.mrb[0].mxu0
  %3115 = vmatprep.mubr.bf16.mxu0 %v2671
  %3116 = vmatmul.mubr.bf16.gmra.mrb[0].mxu0 %v2653
  %v3117 = vpop.f32.mrb[0].mxu0
  %v3118 = vadd.f32 %v3021, %v3117
  %v3119 = vpop.f32.mrb[0].mxu0
  %v3120 = vpop.f32.mrb[0].mxu0
  %v3121 = vadd.f32 %v3024, %v3120
  %v3122 = vpop.f32.mrb[0].mxu0
  %3123 = vmatprep.mubr.bf16.mxu0 %v2672
  %3124 = vmatmul.mubr.bf16.gmra.mrb[0].mxu0 %v2654
  %v3125 = vpop.f32.mrb[0].mxu0
  %v3126 = vadd.f32 %v3029, %v3125
  %v3127 = vpop.f32.mrb[0].mxu0
  %v3128 = vpop.f32.mrb[0].mxu0
  %v3129 = vadd.f32 %v3032, %v3128
  %v3130 = vpop.f32.mrb[0].mxu0
  %3131 = vdwg.mxu0
  %v3132 = vadd.f32 %v2032, %v3070
  %v3133 = vadd.f32 %v2035, %v3073
  %v3134 = vadd.f32 %v2040, %v3078
  %v3135 = vadd.f32 %v2043, %v3081
  %v3136 = vadd.f32 %v2048, %v3086
  %v3137 = vadd.f32 %v2051, %v3089
  %v3138 = vadd.f32 %v2056, %v3094
  %v3139 = vadd.f32 %v2059, %v3097
  %v3140 = vadd.f32 %v2064, %v3102
  %v3141 = vadd.f32 %v2067, %v3105
  %v3142 = vadd.f32 %v2072, %v3110
  %v3143 = vadd.f32 %v2075, %v3113
  %v3144 = vadd.f32 %v2080, %v3118
  %v3145 = vadd.f32 %v2083, %v3121
  %v3146 = vadd.f32 %v2088, %v3126
  %v3147 = vadd.f32 %v2091, %v3129
  %s3148 = scalar_lea.vmem %s0, 864
  %v3149 = vld [vmem:[%s3148] sm:$0xff]
  %v3150 = vld [vmem:[%s3148 + $0x8] sm:$0xff]
  %v3151 = vld [vmem:[%s3148 + $0x10] sm:$0xff]
  %v3152 = vld [vmem:[%s3148 + $0x18] sm:$0xff]
  %v3153 = vld [vmem:[%s3148 + $0x20] sm:$0xff]
  %v3154 = vld [vmem:[%s3148 + $0x28] sm:$0xff]
  %v3155 = vld [vmem:[%s3148 + $0x30] sm:$0xff]
  %v3156 = vld [vmem:[%s3148 + $0x38] sm:$0xff]
  %v3157 = vld [vmem:[%s3148 + $0x40] sm:$0xff]
  %v3158 = vld [vmem:[%s3148 + $0x48] sm:$0xff]
  %v3159 = vld [vmem:[%s3148 + $0x50] sm:$0xff]
  %v3160 = vld [vmem:[%s3148 + $0x58] sm:$0xff]
  %v3161 = vld [vmem:[%s3148 + $0x60] sm:$0xff]
  %v3162 = vld [vmem:[%s3148 + $0x68] sm:$0xff]
  %v3163 = vld [vmem:[%s3148 + $0x70] sm:$0xff]
  %v3164 = vld [vmem:[%s3148 + $0x78] sm:$0xff]
  %v3165 = vld [vmem:[%s3148 + $0x80] sm:$0xff]
  %v3166 = vld [vmem:[%s3148 + $0x88] sm:$0xff]
  %v3167 = vld [vmem:[%s3148 + $0x90] sm:$0xff]
  %v3168 = vld [vmem:[%s3148 + $0x98] sm:$0xff]
  %v3169 = vld [vmem:[%s3148 + $0xa0] sm:$0xff]
  %v3170 = vld [vmem:[%s3148 + $0xa8] sm:$0xff]
  %v3171 = vld [vmem:[%s3148 + $0xb0] sm:$0xff]
  %v3172 = vld [vmem:[%s3148 + $0xb8] sm:$0xff]
  %v3173 = vld [vmem:[%s3148 + $0xc0] sm:$0xff]
  %v3174 = vld [vmem:[%s3148 + $0xc8] sm:$0xff]
  %v3175 = vld [vmem:[%s3148 + $0xd0] sm:$0xff]
  %v3176 = vld [vmem:[%s3148 + $0xd8] sm:$0xff]
  %v3177 = vld [vmem:[%s3148 + $0xe0] sm:$0xff]
  %v3178 = vld [vmem:[%s3148 + $0xe8] sm:$0xff]
  %v3179 = vld [vmem:[%s3148 + $0xf0] sm:$0xff]
  %v3180 = vld [vmem:[%s3148 + $0xf8] sm:$0xff]
  %v3181 = vld [vmem:[%s3148 + $0x100] sm:$0xff]
  %v3182 = vld [vmem:[%s3148 + $0x108] sm:$0xff]
  %v3183 = vld [vmem:[%s3148 + $0x110] sm:$0xff]
  %v3184 = vld [vmem:[%s3148 + $0x118] sm:$0xff]
  %vm3185 = vcmp.gt.f32.partialorder %v3149, 0.0
  %vm3186 = vcmp.gt.f32.partialorder %v3150, 0.0
  %vm3187 = vcmp.gt.f32.partialorder %v3151, 0.0
  %vm3188 = vcmp.gt.f32.partialorder %v3152, 0.0
  %vm3189 = vcmp.gt.f32.partialorder %v3153, 0.0
  %vm3190 = vcmp.gt.f32.partialorder %v3154, 0.0
  %vm3191 = vcmp.gt.f32.partialorder %v3155, 0.0
  %vm3192 = vcmp.gt.f32.partialorder %v3156, 0.0
  %vm3193 = vcmp.gt.f32.partialorder %v3157, 0.0
  %vm3194 = vcmp.gt.f32.partialorder %v3158, 0.0
  %vm3195 = vcmp.gt.f32.partialorder %v3159, 0.0
  %vm3196 = vcmp.gt.f32.partialorder %v3160, 0.0
  %vm3197 = vcmp.gt.f32.partialorder %v3161, 0.0
  %vm3198 = vcmp.gt.f32.partialorder %v3162, 0.0
  %vm3199 = vcmp.gt.f32.partialorder %v3163, 0.0
  %vm3200 = vcmp.gt.f32.partialorder %v3164, 0.0
  %vm3201 = vcmp.gt.f32.partialorder %v3165, 0.0
  %vm3202 = vcmp.gt.f32.partialorder %v3166, 0.0
  %vm3203 = vcmp.gt.f32.partialorder %v3167, 0.0
  %vm3204 = vcmp.gt.f32.partialorder %v3168, 0.0
  %vm3205 = vcmp.gt.f32.partialorder %v3169, 0.0
  %vm3206 = vcmp.gt.f32.partialorder %v3170, 0.0
  %vm3207 = vcmp.gt.f32.partialorder %v3171, 0.0
  %vm3208 = vcmp.gt.f32.partialorder %v3172, 0.0
  %vm3209 = vcmp.gt.f32.partialorder %v3173, 0.0
  %vm3210 = vcmp.gt.f32.partialorder %v3174, 0.0
  %vm3211 = vcmp.gt.f32.partialorder %v3175, 0.0
  %vm3212 = vcmp.gt.f32.partialorder %v3176, 0.0
  %vm3213 = vcmp.gt.f32.partialorder %v3177, 0.0
  %vm3214 = vcmp.gt.f32.partialorder %v3178, 0.0
  %vm3215 = vcmp.gt.f32.partialorder %v3179, 0.0
  %vm3216 = vcmp.gt.f32.partialorder %v3180, 0.0
  %vm3217 = vcmp.gt.f32.partialorder %v3181, 0.0
  %vm3218 = vcmp.gt.f32.partialorder %v3182, 0.0
  %vm3219 = vcmp.gt.f32.partialorder %v3183, 0.0
  %vm3220 = vcmp.gt.f32.partialorder %v3184, 0.0
  %v3221 = vmul.f32 %v3149, 0.2
  %v3222 = vmul.f32 %v3150, 0.2
  %v3223 = vmul.f32 %v3151, 0.2
  %v3224 = vmul.f32 %v3152, 0.2
  %v3225 = vmul.f32 %v3153, 0.2
  %v3226 = vmul.f32 %v3154, 0.2
  %v3227 = vmul.f32 %v3155, 0.2
  %v3228 = vmul.f32 %v3156, 0.2
  %v3229 = vmul.f32 %v3157, 0.2
  %v3230 = vmul.f32 %v3158, 0.2
  %v3231 = vmul.f32 %v3159, 0.2
  %v3232 = vmul.f32 %v3160, 0.2
  %v3233 = vmul.f32 %v3161, 0.2
  %v3234 = vmul.f32 %v3162, 0.2
  %v3235 = vmul.f32 %v3163, 0.2
  %v3236 = vmul.f32 %v3164, 0.2
  %v3237 = vmul.f32 %v3165, 0.2
  %v3238 = vmul.f32 %v3166, 0.2
  %v3239 = vmul.f32 %v3167, 0.2
  %v3240 = vmul.f32 %v3168, 0.2
  %v3241 = vmul.f32 %v3169, 0.2
  %v3242 = vmul.f32 %v3170, 0.2
  %v3243 = vmul.f32 %v3171, 0.2
  %v3244 = vmul.f32 %v3172, 0.2
  %v3245 = vmul.f32 %v3173, 0.2
  %v3246 = vmul.f32 %v3174, 0.2
  %v3247 = vmul.f32 %v3175, 0.2
  %v3248 = vmul.f32 %v3176, 0.2
  %v3249 = vmul.f32 %v3177, 0.2
  %v3250 = vmul.f32 %v3178, 0.2
  %v3251 = vmul.f32 %v3179, 0.2
  %v3252 = vmul.f32 %v3180, 0.2
  %v3253 = vmul.f32 %v3181, 0.2
  %v3254 = vmul.f32 %v3182, 0.2
  %v3255 = vmul.f32 %v3183, 0.2
  %v3256 = vmul.f32 %v3184, 0.2
  %v3257 = vsel %vm3185, %v3149, %v3221
  %v3258 = vsel %vm3186, %v3150, %v3222
  %v3259 = vsel %vm3187, %v3151, %v3223
  %v3260 = vsel %vm3188, %v3152, %v3224
  %v3261 = vsel %vm3189, %v3153, %v3225
  %v3262 = vsel %vm3190, %v3154, %v3226
  %v3263 = vsel %vm3191, %v3155, %v3227
  %v3264 = vsel %vm3192, %v3156, %v3228
  %v3265 = vsel %vm3193, %v3157, %v3229
  %v3266 = vsel %vm3194, %v3158, %v3230
  %v3267 = vsel %vm3195, %v3159, %v3231
  %v3268 = vsel %vm3196, %v3160, %v3232
  %v3269 = vsel %vm3197, %v3161, %v3233
  %v3270 = vsel %vm3198, %v3162, %v3234
  %v3271 = vsel %vm3199, %v3163, %v3235
  %v3272 = vsel %vm3200, %v3164, %v3236
  %v3273 = vsel %vm3201, %v3165, %v3237
  %v3274 = vsel %vm3202, %v3166, %v3238
  %v3275 = vsel %vm3203, %v3167, %v3239
  %v3276 = vsel %vm3204, %v3168, %v3240
  %v3277 = vsel %vm3205, %v3169, %v3241
  %v3278 = vsel %vm3206, %v3170, %v3242
  %v3279 = vsel %vm3207, %v3171, %v3243
  %v3280 = vsel %vm3208, %v3172, %v3244
  %v3281 = vsel %vm3209, %v3173, %v3245
  %v3282 = vsel %vm3210, %v3174, %v3246
  %v3283 = vsel %vm3211, %v3175, %v3247
  %v3284 = vsel %vm3212, %v3176, %v3248
  %v3285 = vsel %vm3213, %v3177, %v3249
  %v3286 = vsel %vm3214, %v3178, %v3250
  %v3287 = vsel %vm3215, %v3179, %v3251
  %v3288 = vsel %vm3216, %v3180, %v3252
  %v3289 = vsel %vm3217, %v3181, %v3253
  %v3290 = vsel %vm3218, %v3182, %v3254
  %v3291 = vsel %vm3219, %v3183, %v3255
  %v3292 = vsel %vm3220, %v3184, %v3256
  %v3293 = vpack.c.bf16 %v3258, %v3257
  %v3294 = vpack.c.bf16 %v3260, %v3259
  %v3295 = vpack.c.bf16 %v3262, %v3261
  %v3296 = vpack.c.bf16 %v3264, %v3263
  %v3297 = vpack.c.bf16 %v3266, %v3265
  %v3298 = vpack.c.bf16 %v3268, %v3267
  %v3299 = vpack.c.bf16 %v3270, %v3269
  %v3300 = vpack.c.bf16 %v3272, %v3271
  %v3301 = vpack.c.bf16 %v3274, %v3273
  %v3302 = vpack.c.bf16 %v3276, %v3275
  %v3303 = vpack.c.bf16 %v3278, %v3277
  %v3304 = vpack.c.bf16 %v3280, %v3279
  %v3305 = vpack.c.bf16 %v3282, %v3281
  %v3306 = vpack.c.bf16 %v3284, %v3283
  %v3307 = vpack.c.bf16 %v3286, %v3285
  %v3308 = vpack.c.bf16 %v3288, %v3287
  %v3309 = vpack.c.bf16 %v3290, %v3289
  %v3310 = vpack.c.bf16 %v3292, %v3291
  %v3327 = vunpack.c.l.b16 %v3293
  %v3328 = vunpack.c.h.b16 %v3293
  %v3329 = vunpack.c.l.b16 %v3294
  %v3330 = vunpack.c.h.b16 %v3294
  %v3331 = vunpack.c.l.b16 %v3295
  %v3332 = vunpack.c.h.b16 %v3295
  %v3333 = vunpack.c.l.b16 %v3296
  %v3334 = vunpack.c.h.b16 %v3296
  %v3335 = vunpack.c.l.b16 %v3297
  %v3336 = vunpack.c.h.b16 %v3297
  %v3337 = vunpack.c.l.b16 %v3298
  %v3338 = vunpack.c.h.b16 %v3298
  %v3339 = vunpack.c.l.b16 %v3299
  %v3340 = vunpack.c.h.b16 %v3299
  %v3341 = vunpack.c.l.b16 %v3300
  %v3342 = vunpack.c.h.b16 %v3300
  %v3343 = vunpack.c.l.b16 %v3302
  %v3344 = vunpack.c.h.b16 %v3302
  %v3345 = vunpack.c.l.b16 %v3303
  %v3346 = vunpack.c.h.b16 %v3303
  %v3347 = vunpack.c.l.b16 %v3304
  %v3348 = vunpack.c.h.b16 %v3304
  %v3349 = vunpack.c.l.b16 %v3305
  %v3350 = vunpack.c.h.b16 %v3305
  %v3351 = vunpack.c.l.b16 %v3306
  %v3352 = vunpack.c.h.b16 %v3306
  %v3353 = vunpack.c.l.b16 %v3307
  %v3354 = vunpack.c.h.b16 %v3307
  %v3355 = vunpack.c.l.b16 %v3308
  %v3356 = vunpack.c.h.b16 %v3308
  %v3357 = vunpack.c.l.b16 %v3309
  %v3358 = vunpack.c.h.b16 %v3309
  %v3359 = vpack.c.b16 %v3327, %v3327
  %v3360 = vpack.c.b16 %v3328, %v3328
  %v3361 = vpack.c.b16 %v3329, %v3329
  %v3362 = vpack.c.b16 %v3330, %v3330
  %v3363 = vpack.c.b16 %v3331, %v3331
  %v3364 = vpack.c.b16 %v3332, %v3332
  %v3365 = vpack.c.b16 %v3333, %v3333
  %v3366 = vpack.c.b16 %v3334, %v3334
  %v3367 = vpack.c.b16 %v3335, %v3335
  %v3368 = vpack.c.b16 %v3336, %v3336
  %v3369 = vpack.c.b16 %v3337, %v3337
  %v3370 = vpack.c.b16 %v3338, %v3338
  %v3371 = vpack.c.b16 %v3339, %v3339
  %v3372 = vpack.c.b16 %v3340, %v3340
  %v3373 = vpack.c.b16 %v3341, %v3341
  %v3374 = vpack.c.b16 %v3342, %v3342
  %v3375 = vpack.c.b16 %v3343, %v3343
  %v3376 = vpack.c.b16 %v3344, %v3344
  %v3377 = vpack.c.b16 %v3345, %v3345
  %v3378 = vpack.c.b16 %v3346, %v3346
  %v3379 = vpack.c.b16 %v3347, %v3347
  %v3380 = vpack.c.b16 %v3348, %v3348
  %v3381 = vpack.c.b16 %v3349, %v3349
  %v3382 = vpack.c.b16 %v3350, %v3350
  %v3383 = vpack.c.b16 %v3351, %v3351
  %v3384 = vpack.c.b16 %v3352, %v3352
  %v3385 = vpack.c.b16 %v3353, %v3353
  %v3386 = vpack.c.b16 %v3354, %v3354
  %v3387 = vpack.c.b16 %v3355, %v3355
  %v3388 = vpack.c.b16 %v3356, %v3356
  %v3389 = vpack.c.b16 %v3357, %v3357
  %v3390 = vpack.c.b16 %v3358, %v3358
  %v3392 = vshrl.u32 %v3359, 16
  %v3394 = vrot.slane %v3392, 4
  %v3395 = vshll.u32 %v3359, 16
  %v3397 = vrot.slane %v3395, 5
  %v3398 = vor.u32 %v3394, %v3397
  %v3399 = vrot.slane %v3398, 4
  %v3401 = vshll.u32 %v3360, 16
  %v3403 = vrot.slane %v3401, 5
  %v3404 = vsel %vm261, %v3399, %v3403
  %v3406 = vshrl.u32 %v3361, 16
  %v3408 = vrot.slane %v3406, 4
  %v3409 = vshll.u32 %v3361, 16
  %v3411 = vrot.slane %v3409, 5
  %v3412 = vor.u32 %v3408, %v3411
  %v3413 = vrot.slane %v3412, 4
  %v3415 = vshll.u32 %v3362, 16
  %v3417 = vrot.slane %v3415, 5
  %v3418 = vsel %vm261, %v3413, %v3417
  %v3420 = vshrl.u32 %v3363, 16
  %v3422 = vrot.slane %v3420, 4
  %v3423 = vshll.u32 %v3363, 16
  %v3425 = vrot.slane %v3423, 5
  %v3426 = vor.u32 %v3422, %v3425
  %v3427 = vrot.slane %v3426, 4
  %v3429 = vshll.u32 %v3364, 16
  %v3431 = vrot.slane %v3429, 5
  %v3432 = vsel %vm261, %v3427, %v3431
  %v3434 = vshrl.u32 %v3365, 16
  %v3436 = vrot.slane %v3434, 4
  %v3437 = vshll.u32 %v3365, 16
  %v3439 = vrot.slane %v3437, 5
  %v3440 = vor.u32 %v3436, %v3439
  %v3441 = vrot.slane %v3440, 4
  %v3443 = vshll.u32 %v3366, 16
  %v3445 = vrot.slane %v3443, 5
  %v3446 = vsel %vm261, %v3441, %v3445
  %v3448 = vshrl.u32 %v3367, 16
  %v3450 = vrot.slane %v3448, 4
  %v3451 = vshll.u32 %v3367, 16
  %v3453 = vrot.slane %v3451, 5
  %v3454 = vor.u32 %v3450, %v3453
  %v3455 = vrot.slane %v3454, 4
  %v3457 = vshll.u32 %v3368, 16
  %v3459 = vrot.slane %v3457, 5
  %v3460 = vsel %vm261, %v3455, %v3459
  %v3462 = vshrl.u32 %v3369, 16
  %v3464 = vrot.slane %v3462, 4
  %v3465 = vshll.u32 %v3369, 16
  %v3467 = vrot.slane %v3465, 5
  %v3468 = vor.u32 %v3464, %v3467
  %v3469 = vrot.slane %v3468, 4
  %v3471 = vshll.u32 %v3370, 16
  %v3473 = vrot.slane %v3471, 5
  %v3474 = vsel %vm261, %v3469, %v3473
  %v3476 = vshrl.u32 %v3371, 16
  %v3478 = vrot.slane %v3476, 4
  %v3479 = vshll.u32 %v3371, 16
  %v3481 = vrot.slane %v3479, 5
  %v3482 = vor.u32 %v3478, %v3481
  %v3483 = vrot.slane %v3482, 4
  %v3485 = vshll.u32 %v3372, 16
  %v3487 = vrot.slane %v3485, 5
  %v3488 = vsel %vm261, %v3483, %v3487
  %v3490 = vshrl.u32 %v3373, 16
  %v3492 = vrot.slane %v3490, 4
  %v3493 = vshll.u32 %v3373, 16
  %v3495 = vrot.slane %v3493, 5
  %v3496 = vor.u32 %v3492, %v3495
  %v3497 = vrot.slane %v3496, 4
  %v3499 = vshll.u32 %v3374, 16
  %v3501 = vrot.slane %v3499, 5
  %v3502 = vsel %vm261, %v3497, %v3501
  %v3504 = vshrl.u32 %v3375, 16
  %v3506 = vrot.slane %v3504, 4
  %v3507 = vshll.u32 %v3375, 16
  %v3509 = vrot.slane %v3507, 5
  %v3510 = vor.u32 %v3506, %v3509
  %v3511 = vrot.slane %v3510, 4
  %v3513 = vshll.u32 %v3376, 16
  %v3515 = vrot.slane %v3513, 5
  %v3516 = vsel %vm261, %v3511, %v3515
  %v3518 = vshrl.u32 %v3377, 16
  %v3520 = vrot.slane %v3518, 4
  %v3521 = vshll.u32 %v3377, 16
  %v3523 = vrot.slane %v3521, 5
  %v3524 = vor.u32 %v3520, %v3523
  %v3525 = vrot.slane %v3524, 4
  %v3527 = vshll.u32 %v3378, 16
  %v3529 = vrot.slane %v3527, 5
  %v3530 = vsel %vm261, %v3525, %v3529
  %v3532 = vshrl.u32 %v3379, 16
  %v3534 = vrot.slane %v3532, 4
  %v3535 = vshll.u32 %v3379, 16
  %v3537 = vrot.slane %v3535, 5
  %v3538 = vor.u32 %v3534, %v3537
  %v3539 = vrot.slane %v3538, 4
  %v3541 = vshll.u32 %v3380, 16
  %v3543 = vrot.slane %v3541, 5
  %v3544 = vsel %vm261, %v3539, %v3543
  %v3546 = vshrl.u32 %v3381, 16
  %v3548 = vrot.slane %v3546, 4
  %v3549 = vshll.u32 %v3381, 16
  %v3551 = vrot.slane %v3549, 5
  %v3552 = vor.u32 %v3548, %v3551
  %v3553 = vrot.slane %v3552, 4
  %v3555 = vshll.u32 %v3382, 16
  %v3557 = vrot.slane %v3555, 5
  %v3558 = vsel %vm261, %v3553, %v3557
  %v3560 = vshrl.u32 %v3383, 16
  %v3562 = vrot.slane %v3560, 4
  %v3563 = vshll.u32 %v3383, 16
  %v3565 = vrot.slane %v3563, 5
  %v3566 = vor.u32 %v3562, %v3565
  %v3567 = vrot.slane %v3566, 4
  %v3569 = vshll.u32 %v3384, 16
  %v3571 = vrot.slane %v3569, 5
  %v3572 = vsel %vm261, %v3567, %v3571
  %v3574 = vshrl.u32 %v3385, 16
  %v3576 = vrot.slane %v3574, 4
  %v3577 = vshll.u32 %v3385, 16
  %v3579 = vrot.slane %v3577, 5
  %v3580 = vor.u32 %v3576, %v3579
  %v3581 = vrot.slane %v3580, 4
  %v3583 = vshll.u32 %v3386, 16
  %v3585 = vrot.slane %v3583, 5
  %v3586 = vsel %vm261, %v3581, %v3585
  %v3588 = vshrl.u32 %v3387, 16
  %v3590 = vrot.slane %v3588, 4
  %v3591 = vshll.u32 %v3387, 16
  %v3593 = vrot.slane %v3591, 5
  %v3594 = vor.u32 %v3590, %v3593
  %v3595 = vrot.slane %v3594, 4
  %v3597 = vshll.u32 %v3388, 16
  %v3599 = vrot.slane %v3597, 5
  %v3600 = vsel %vm261, %v3595, %v3599
  %v3602 = vshrl.u32 %v3389, 16
  %v3604 = vrot.slane %v3602, 4
  %v3605 = vshll.u32 %v3389, 16
  %v3607 = vrot.slane %v3605, 5
  %v3608 = vor.u32 %v3604, %v3607
  %v3609 = vrot.slane %v3608, 4
  %v3611 = vshll.u32 %v3390, 16
  %v3613 = vrot.slane %v3611, 5
  %v3614 = vsel %vm261, %v3609, %v3613
  %v3617 = vunpack.c.l.b16 %v3301
  %v3618 = vunpack.c.h.b16 %v3301
  %v3619 = vunpack.c.l.b16 %v3310
  %v3620 = vunpack.c.h.b16 %v3310
  %v3621 = vpack.c.b16 %v3617, %v3617
  %v3622 = vpack.c.b16 %v3618, %v3618
  %v3623 = vpack.c.b16 %v3619, %v3619
  %v3624 = vpack.c.b16 %v3620, %v3620
  %v3626 = vshrl.u32 %v3621, 16
  %v3628 = vrot.slane %v3626, 4
  %v3629 = vshll.u32 %v3621, 16
  %v3631 = vrot.slane %v3629, 5
  %v3632 = vor.u32 %v3628, %v3631
  %v3633 = vrot.slane %v3632, 4
  %v3635 = vshll.u32 %v3622, 16
  %v3637 = vrot.slane %v3635, 5
  %v3638 = vsel %vm261, %v3633, %v3637
  %v3640 = vshrl.u32 %v3623, 16
  %v3642 = vrot.slane %v3640, 4
  %v3643 = vshll.u32 %v3623, 16
  %v3645 = vrot.slane %v3643, 5
  %v3646 = vor.u32 %v3642, %v3645
  %v3647 = vrot.slane %v3646, 4
  %v3649 = vshll.u32 %v3624, 16
  %v3651 = vrot.slane %v3649, 5
  %v3652 = vsel %vm261, %v3647, %v3651
  %v3653 = vpack.c.b16 %v3329, %v3327
  %v3654 = vpack.c.b16 %v3333, %v3331
  %v3655 = vpack.c.b16 %v3337, %v3335
  %v3656 = vpack.c.b16 %v3341, %v3339
  %v3657 = vpack.c.b16 %v3345, %v3343
  %v3658 = vpack.c.b16 %v3349, %v3347
  %v3659 = vpack.c.b16 %v3353, %v3351
  %v3660 = vpack.c.b16 %v3357, %v3355
  %v3669 = vunpack.c.l.b16 %v3404
  %v3670 = vunpack.c.l.b16 %v3418
  %v3671 = vunpack.c.l.b16 %v3432
  %v3672 = vunpack.c.l.b16 %v3446
  %v3673 = vunpack.c.l.b16 %v3460
  %v3674 = vunpack.c.l.b16 %v3474
  %v3675 = vunpack.c.l.b16 %v3488
  %v3676 = vunpack.c.l.b16 %v3502
  %v3677 = vunpack.c.l.b16 %v3516
  %v3678 = vunpack.c.l.b16 %v3530
  %v3679 = vunpack.c.l.b16 %v3544
  %v3680 = vunpack.c.l.b16 %v3558
  %v3681 = vunpack.c.l.b16 %v3572
  %v3682 = vunpack.c.l.b16 %v3586
  %v3683 = vunpack.c.l.b16 %v3600
  %v3684 = vunpack.c.l.b16 %v3614
  %v3685 = vpack.c.b16 %v3670, %v3669
  %v3686 = vpack.c.b16 %v3672, %v3671
  %v3687 = vpack.c.b16 %v3674, %v3673
  %v3688 = vpack.c.b16 %v3676, %v3675
  %v3689 = vpack.c.b16 %v3678, %v3677
  %v3690 = vpack.c.b16 %v3680, %v3679
  %v3691 = vpack.c.b16 %v3682, %v3681
  %v3692 = vpack.c.b16 %v3684, %v3683
  %v3701 = vpack.c.b16 %v3331, %v3329
  %v3702 = vpack.c.b16 %v3335, %v3333
  %v3703 = vpack.c.b16 %v3339, %v3337
  %v3704 = vpack.c.b16 %v3617, %v3341
  %v3705 = vpack.c.b16 %v3347, %v3345
  %v3706 = vpack.c.b16 %v3351, %v3349
  %v3707 = vpack.c.b16 %v3355, %v3353
  %v3708 = vpack.c.b16 %v3619, %v3357
  %v3717 = vunpack.c.l.b16 %v3638
  %v3718 = vunpack.c.l.b16 %v3652
  %v3719 = vpack.c.b16 %v3671, %v3670
  %v3720 = vpack.c.b16 %v3673, %v3672
  %v3721 = vpack.c.b16 %v3675, %v3674
  %v3722 = vpack.c.b16 %v3717, %v3676
  %v3723 = vpack.c.b16 %v3679, %v3678
  %v3724 = vpack.c.b16 %v3681, %v3680
  %v3725 = vpack.c.b16 %v3683, %v3682
  %v3726 = vpack.c.b16 %v3718, %v3684
  %s3735 = scalar_lea.vmem %s1, 768
  %v3736 = vld [vmem:[%s3735] sm:$0xf]
  %v3737 = vld [vmem:[%s3735 + $0x4] sm:$0xf]
  %v3738 = vld [vmem:[%s3735 + $0x8] sm:$0xf]
  %v3739 = vld [vmem:[%s3735 + $0xc] sm:$0xf]
  %v3740 = vld [vmem:[%s3735 + $0x10] sm:$0xf]
  %v3741 = vld [vmem:[%s3735 + $0x14] sm:$0xf]
  %v3742 = vld [vmem:[%s3735 + $0x18] sm:$0xf]
  %v3743 = vld [vmem:[%s3735 + $0x1c] sm:$0xf]
  %v3744 = vld [vmem:[%s3735 + $0x20] sm:$0xf]
  %v3745 = vld [vmem:[%s3735 + $0x24] sm:$0xf]
  %v3746 = vld [vmem:[%s3735 + $0x28] sm:$0xf]
  %v3747 = vld [vmem:[%s3735 + $0x2c] sm:$0xf]
  %v3748 = vld [vmem:[%s3735 + $0x30] sm:$0xf]
  %v3749 = vld [vmem:[%s3735 + $0x34] sm:$0xf]
  %v3750 = vld [vmem:[%s3735 + $0x38] sm:$0xf]
  %v3751 = vld [vmem:[%s3735 + $0x3c] sm:$0xf]
  %v3752 = vld [vmem:[%s3735 + $0x40] sm:$0xf]
  %v3753 = vld [vmem:[%s3735 + $0x44] sm:$0xf]
  %v3754 = vld [vmem:[%s3735 + $0x48] sm:$0xf]
  %v3755 = vld [vmem:[%s3735 + $0x4c] sm:$0xf]
  %v3756 = vld [vmem:[%s3735 + $0x50] sm:$0xf]
  %v3757 = vld [vmem:[%s3735 + $0x54] sm:$0xf]
  %v3758 = vld [vmem:[%s3735 + $0x58] sm:$0xf]
  %v3759 = vld [vmem:[%s3735 + $0x5c] sm:$0xf]
  %v3760 = vld [vmem:[%s3735 + $0x60] sm:$0xf]
  %v3761 = vld [vmem:[%s3735 + $0x64] sm:$0xf]
  %v3762 = vld [vmem:[%s3735 + $0x68] sm:$0xf]
  %v3763 = vld [vmem:[%s3735 + $0x6c] sm:$0xf]
  %v3764 = vld [vmem:[%s3735 + $0x70] sm:$0xf]
  %v3765 = vld [vmem:[%s3735 + $0x74] sm:$0xf]
  %v3766 = vld [vmem:[%s3735 + $0x78] sm:$0xf]
  %v3767 = vld [vmem:[%s3735 + $0x7c] sm:$0xf]
  %v3768 = vld [vmem:[%s3735 + $0x80] sm:$0xf]
  %v3769 = vld [vmem:[%s3735 + $0x84] sm:$0xf]
  %v3770 = vld [vmem:[%s3735 + $0x88] sm:$0xf]
  %v3771 = vld [vmem:[%s3735 + $0x8c] sm:$0xf]
  %v3772 = vld [vmem:[%s3735 + $0x90] sm:$0xf]
  %v3773 = vld [vmem:[%s3735 + $0x94] sm:$0xf]
  %v3774 = vld [vmem:[%s3735 + $0x98] sm:$0xf]
  %v3775 = vld [vmem:[%s3735 + $0x9c] sm:$0xf]
  %v3776 = vld [vmem:[%s3735 + $0xa0] sm:$0xf]
  %v3777 = vld [vmem:[%s3735 + $0xa4] sm:$0xf]
  %v3778 = vld [vmem:[%s3735 + $0xa8] sm:$0xf]
  %v3779 = vld [vmem:[%s3735 + $0xac] sm:$0xf]
  %v3780 = vld [vmem:[%s3735 + $0xb0] sm:$0xf]
  %v3781 = vld [vmem:[%s3735 + $0xb4] sm:$0xf]
  %v3782 = vld [vmem:[%s3735 + $0xb8] sm:$0xf]
  %v3783 = vld [vmem:[%s3735 + $0xbc] sm:$0xf]
  %v3784 = vld [vmem:[%s3735 + $0xc0] sm:$0xf]
  %v3785 = vld [vmem:[%s3735 + $0xc4] sm:$0xf]
  %v3786 = vld [vmem:[%s3735 + $0xc8] sm:$0xf]
  %v3787 = vld [vmem:[%s3735 + $0xcc] sm:$0xf]
  %v3788 = vld [vmem:[%s3735 + $0xd0] sm:$0xf]
  %v3789 = vld [vmem:[%s3735 + $0xd4] sm:$0xf]
  %v3790 = vld [vmem:[%s3735 + $0xd8] sm:$0xf]
  %v3791 = vld [vmem:[%s3735 + $0xdc] sm:$0xf]
  %v3792 = vld [vmem:[%s3735 + $0xe0] sm:$0xf]
  %v3793 = vld [vmem:[%s3735 + $0xe4] sm:$0xf]
  %v3794 = vld [vmem:[%s3735 + $0xe8] sm:$0xf]
  %v3795 = vld [vmem:[%s3735 + $0xec] sm:$0xf]
  %v3796 = vld [vmem:[%s3735 + $0xf0] sm:$0xf]
  %v3797 = vld [vmem:[%s3735 + $0xf4] sm:$0xf]
  %v3798 = vld [vmem:[%s3735 + $0xf8] sm:$0xf]
  %v3799 = vld [vmem:[%s3735 + $0xfc] sm:$0xf]
  %v3864 = vunpack.c.l.b16 %v3736
  %v3865 = vunpack.c.l.b16 %v3737
  %v3866 = vunpack.c.l.b16 %v3738
  %v3867 = vunpack.c.l.b16 %v3739
  %v3868 = vunpack.c.l.b16 %v3740
  %v3869 = vunpack.c.l.b16 %v3741
  %v3870 = vunpack.c.l.b16 %v3742
  %v3871 = vunpack.c.l.b16 %v3743
  %v3872 = vunpack.c.l.b16 %v3744
  %v3873 = vunpack.c.l.b16 %v3745
  %v3874 = vunpack.c.l.b16 %v3746
  %v3875 = vunpack.c.l.b16 %v3747
  %v3876 = vunpack.c.l.b16 %v3748
  %v3877 = vunpack.c.l.b16 %v3749
  %v3878 = vunpack.c.l.b16 %v3750
  %v3879 = vunpack.c.l.b16 %v3751
  %v3880 = vunpack.c.l.b16 %v3752
  %v3881 = vunpack.c.l.b16 %v3753
  %v3882 = vunpack.c.l.b16 %v3754
  %v3883 = vunpack.c.l.b16 %v3755
  %v3884 = vunpack.c.l.b16 %v3756
  %v3885 = vunpack.c.l.b16 %v3757
  %v3886 = vunpack.c.l.b16 %v3758
  %v3887 = vunpack.c.l.b16 %v3759
  %v3888 = vunpack.c.l.b16 %v3760
  %v3889 = vunpack.c.l.b16 %v3761
  %v3890 = vunpack.c.l.b16 %v3762
  %v3891 = vunpack.c.l.b16 %v3763
  %v3892 = vunpack.c.l.b16 %v3764
  %v3893 = vunpack.c.l.b16 %v3765
  %v3894 = vunpack.c.l.b16 %v3766
  %v3895 = vunpack.c.l.b16 %v3767
  %v3896 = vunpack.c.l.b16 %v3768
  %v3897 = vunpack.c.l.b16 %v3769
  %v3898 = vunpack.c.l.b16 %v3770
  %v3899 = vunpack.c.l.b16 %v3771
  %v3900 = vunpack.c.l.b16 %v3772
  %v3901 = vunpack.c.l.b16 %v3773
  %v3902 = vunpack.c.l.b16 %v3774
  %v3903 = vunpack.c.l.b16 %v3775
  %v3904 = vunpack.c.l.b16 %v3776
  %v3905 = vunpack.c.l.b16 %v3777
  %v3906 = vunpack.c.l.b16 %v3778
  %v3907 = vunpack.c.l.b16 %v3779
  %v3908 = vunpack.c.l.b16 %v3780
  %v3909 = vunpack.c.l.b16 %v3781
  %v3910 = vunpack.c.l.b16 %v3782
  %v3911 = vunpack.c.l.b16 %v3783
  %v3912 = vunpack.c.l.b16 %v3784
  %v3913 = vunpack.c.l.b16 %v3785
  %v3914 = vunpack.c.l.b16 %v3786
  %v3915 = vunpack.c.l.b16 %v3787
  %v3916 = vunpack.c.l.b16 %v3788
  %v3917 = vunpack.c.l.b16 %v3789
  %v3918 = vunpack.c.l.b16 %v3790
  %v3919 = vunpack.c.l.b16 %v3791
  %v3920 = vunpack.c.l.b16 %v3792
  %v3921 = vunpack.c.l.b16 %v3793
  %v3922 = vunpack.c.l.b16 %v3794
  %v3923 = vunpack.c.l.b16 %v3795
  %v3924 = vunpack.c.l.b16 %v3796
  %v3925 = vunpack.c.l.b16 %v3797
  %v3926 = vunpack.c.l.b16 %v3798
  %v3927 = vunpack.c.l.b16 %v3799
  %v3928 = vpack.c.b16 %v3865, %v3864
  %v3929 = vpack.c.b16 %v3867, %v3866
  %v3930 = vpack.c.b16 %v3869, %v3868
  %v3931 = vpack.c.b16 %v3871, %v3870
  %v3932 = vpack.c.b16 %v3873, %v3872
  %v3933 = vpack.c.b16 %v3875, %v3874
  %v3934 = vpack.c.b16 %v3877, %v3876
  %v3935 = vpack.c.b16 %v3879, %v3878
  %v3936 = vpack.c.b16 %v3881, %v3880
  %v3937 = vpack.c.b16 %v3883, %v3882
  %v3938 = vpack.c.b16 %v3885, %v3884
  %v3939 = vpack.c.b16 %v3887, %v3886
  %v3940 = vpack.c.b16 %v3889, %v3888
  %v3941 = vpack.c.b16 %v3891, %v3890
  %v3942 = vpack.c.b16 %v3893, %v3892
  %v3943 = vpack.c.b16 %v3895, %v3894
  %v3944 = vpack.c.b16 %v3897, %v3896
  %v3945 = vpack.c.b16 %v3899, %v3898
  %v3946 = vpack.c.b16 %v3901, %v3900
  %v3947 = vpack.c.b16 %v3903, %v3902
  %v3948 = vpack.c.b16 %v3905, %v3904
  %v3949 = vpack.c.b16 %v3907, %v3906
  %v3950 = vpack.c.b16 %v3909, %v3908
  %v3951 = vpack.c.b16 %v3911, %v3910
  %v3952 = vpack.c.b16 %v3913, %v3912
  %v3953 = vpack.c.b16 %v3915, %v3914
  %v3954 = vpack.c.b16 %v3917, %v3916
  %v3955 = vpack.c.b16 %v3919, %v3918
  %v3956 = vpack.c.b16 %v3921, %v3920
  %v3957 = vpack.c.b16 %v3923, %v3922
  %v3958 = vpack.c.b16 %v3925, %v3924
  %v3959 = vpack.c.b16 %v3927, %v3926
  %3992 = vmatprep.subr.bf16.mxu0 0
  %3993 = vmatpush1.bf16.msra.mxu0 %v3928
  %3994 = vmatprep.subr.bf16.mxu0 0
  %3995 = vmatpush1.bf16.msra.mxu0 %v3929
  %3996 = vmatprep.subr.bf16.mxu0 0
  %3997 = vmatpush1.bf16.msra.mxu0 %v3930
  %3998 = vmatprep.subr.bf16.mxu0 0
  %3999 = vmatpush1.bf16.msra.mxu0 %v3931
  %4000 = vmatprep.subr.bf16.mxu0 0
  %4001 = vmatpush1.bf16.msra.mxu0 %v3932
  %4002 = vmatprep.subr.bf16.mxu0 0
  %4003 = vmatpush1.bf16.msra.mxu0 %v3933
  %4004 = vmatprep.subr.bf16.mxu0 0
  %4005 = vmatpush1.bf16.msra.mxu0 %v3934
  %4006 = vmatprep.subr.bf16.mxu0 0
  %4007 = vmatpush1.bf16.msra.mxu0 %v3935
  %4008 = vmatprep.subr.bf16.mxu0 0
  %4009 = vmatpush1.bf16.msra.mxu0 %v3936
  %4010 = vmatprep.subr.bf16.mxu0 0
  %4011 = vmatpush1.bf16.msra.mxu0 %v3937
  %4012 = vmatprep.subr.bf16.mxu0 0
  %4013 = vmatpush1.bf16.msra.mxu0 %v3938
  %4014 = vmatprep.subr.bf16.mxu0 0
  %4015 = vmatpush1.bf16.msra.mxu0 %v3939
  %4016 = vmatprep.subr.bf16.mxu0 0
  %4017 = vmatpush1.bf16.msra.mxu0 %v3940
  %4018 = vmatprep.subr.bf16.mxu0 0
  %4019 = vmatpush1.bf16.msra.mxu0 %v3941
  %4020 = vmatprep.subr.bf16.mxu0 0
  %4021 = vmatpush1.bf16.msra.mxu0 %v3942
  %4022 = vmatprep.subr.bf16.mxu0 0
  %4023 = vmatpush1.bf16.msra.mxu0 %v3943
  %4024 = vmatprep.mubr.bf16.mxu0 %v3685
  %4025 = vmatmul.mubr.bf16.gmra.mrb[0].mxu0 %v3653
  %v4026 = vpop.f32.mrb[0].mxu0
  %v4027 = vadd.f32 0.0, %v4026
  %v4028 = vpop.f32.mrb[0].mxu0
  %v4029 = vpop.f32.mrb[0].mxu0
  %v4030 = vadd.f32 0.0, %v4029
  %v4031 = vpop.f32.mrb[0].mxu0
  %4032 = vmatprep.mubr.bf16.mxu0 %v3686
  %4033 = vmatmul.mubr.bf16.gmra.mrb[0].mxu0 %v3654
  %v4034 = vpop.f32.mrb[0].mxu0
  %v4035 = vadd.f32 0.0, %v4034
  %v4036 = vpop.f32.mrb[0].mxu0
  %v4037 = vpop.f32.mrb[0].mxu0
  %v4038 = vadd.f32 0.0, %v4037
  %v4039 = vpop.f32.mrb[0].mxu0
  %4040 = vmatprep.mubr.bf16.mxu0 %v3687
  %4041 = vmatmul.mubr.bf16.gmra.mrb[0].mxu0 %v3655
  %v4042 = vpop.f32.mrb[0].mxu0
  %v4043 = vadd.f32 0.0, %v4042
  %v4044 = vpop.f32.mrb[0].mxu0
  %v4045 = vpop.f32.mrb[0].mxu0
  %v4046 = vadd.f32 0.0, %v4045
  %v4047 = vpop.f32.mrb[0].mxu0
  %4048 = vmatprep.mubr.bf16.mxu0 %v3688
  %4049 = vmatmul.mubr.bf16.gmra.mrb[0].mxu0 %v3656
  %v4050 = vpop.f32.mrb[0].mxu0
  %v4051 = vadd.f32 0.0, %v4050
  %v4052 = vpop.f32.mrb[0].mxu0
  %v4053 = vpop.f32.mrb[0].mxu0
  %v4054 = vadd.f32 0.0, %v4053
  %v4055 = vpop.f32.mrb[0].mxu0
  %4056 = vmatprep.mubr.bf16.mxu0 %v3689
  %4057 = vmatmul.mubr.bf16.gmra.mrb[0].mxu0 %v3657
  %v4058 = vpop.f32.mrb[0].mxu0
  %v4059 = vadd.f32 0.0, %v4058
  %v4060 = vpop.f32.mrb[0].mxu0
  %v4061 = vpop.f32.mrb[0].mxu0
  %v4062 = vadd.f32 0.0, %v4061
  %v4063 = vpop.f32.mrb[0].mxu0
  %4064 = vmatprep.mubr.bf16.mxu0 %v3690
  %4065 = vmatmul.mubr.bf16.gmra.mrb[0].mxu0 %v3658
  %v4066 = vpop.f32.mrb[0].mxu0
  %v4067 = vadd.f32 0.0, %v4066
  %v4068 = vpop.f32.mrb[0].mxu0
  %v4069 = vpop.f32.mrb[0].mxu0
  %v4070 = vadd.f32 0.0, %v4069
  %v4071 = vpop.f32.mrb[0].mxu0
  %4072 = vmatprep.mubr.bf16.mxu0 %v3691
  %4073 = vmatmul.mubr.bf16.gmra.mrb[0].mxu0 %v3659
  %v4074 = vpop.f32.mrb[0].mxu0
  %v4075 = vadd.f32 0.0, %v4074
  %v4076 = vpop.f32.mrb[0].mxu0
  %v4077 = vpop.f32.mrb[0].mxu0
  %v4078 = vadd.f32 0.0, %v4077
  %v4079 = vpop.f32.mrb[0].mxu0
  %4080 = vmatprep.mubr.bf16.mxu0 %v3692
  %4081 = vmatmul.mubr.bf16.gmra.mrb[0].mxu0 %v3660
  %v4082 = vpop.f32.mrb[0].mxu0
  %v4083 = vadd.f32 0.0, %v4082
  %v4084 = vpop.f32.mrb[0].mxu0
  %v4085 = vpop.f32.mrb[0].mxu0
  %v4086 = vadd.f32 0.0, %v4085
  %v4087 = vpop.f32.mrb[0].mxu0
  %4088 = vdwg.mxu0
  %4089 = vmatprep.subr.bf16.mxu0 0
  %4090 = vmatpush1.bf16.msra.mxu0 %v3944
  %4091 = vmatprep.subr.bf16.mxu0 0
  %4092 = vmatpush1.bf16.msra.mxu0 %v3945
  %4093 = vmatprep.subr.bf16.mxu0 0
  %4094 = vmatpush1.bf16.msra.mxu0 %v3946
  %4095 = vmatprep.subr.bf16.mxu0 0
  %4096 = vmatpush1.bf16.msra.mxu0 %v3947
  %4097 = vmatprep.subr.bf16.mxu0 0
  %4098 = vmatpush1.bf16.msra.mxu0 %v3948
  %4099 = vmatprep.subr.bf16.mxu0 0
  %4100 = vmatpush1.bf16.msra.mxu0 %v3949
  %4101 = vmatprep.subr.bf16.mxu0 0
  %4102 = vmatpush1.bf16.msra.mxu0 %v3950
  %4103 = vmatprep.subr.bf16.mxu0 0
  %4104 = vmatpush1.bf16.msra.mxu0 %v3951
  %4105 = vmatprep.subr.bf16.mxu0 0
  %4106 = vmatpush1.bf16.msra.mxu0 %v3952
  %4107 = vmatprep.subr.bf16.mxu0 0
  %4108 = vmatpush1.bf16.msra.mxu0 %v3953
  %4109 = vmatprep.subr.bf16.mxu0 0
  %4110 = vmatpush1.bf16.msra.mxu0 %v3954
  %4111 = vmatprep.subr.bf16.mxu0 0
  %4112 = vmatpush1.bf16.msra.mxu0 %v3955
  %4113 = vmatprep.subr.bf16.mxu0 0
  %4114 = vmatpush1.bf16.msra.mxu0 %v3956
  %4115 = vmatprep.subr.bf16.mxu0 0
  %4116 = vmatpush1.bf16.msra.mxu0 %v3957
  %4117 = vmatprep.subr.bf16.mxu0 0
  %4118 = vmatpush1.bf16.msra.mxu0 %v3958
  %4119 = vmatprep.subr.bf16.mxu0 0
  %4120 = vmatpush1.bf16.msra.mxu0 %v3959
  %4121 = vmatprep.mubr.bf16.mxu0 %v3719
  %4122 = vmatmul.mubr.bf16.gmra.mrb[0].mxu0 %v3701
  %v4123 = vpop.f32.mrb[0].mxu0
  %v4124 = vadd.f32 %v4027, %v4123
  %v4125 = vpop.f32.mrb[0].mxu0
  %v4126 = vpop.f32.mrb[0].mxu0
  %v4127 = vadd.f32 %v4030, %v4126
  %v4128 = vpop.f32.mrb[0].mxu0
  %4129 = vmatprep.mubr.bf16.mxu0 %v3720
  %4130 = vmatmul.mubr.bf16.gmra.mrb[0].mxu0 %v3702
  %v4131 = vpop.f32.mrb[0].mxu0
  %v4132 = vadd.f32 %v4035, %v4131
  %v4133 = vpop.f32.mrb[0].mxu0
  %v4134 = vpop.f32.mrb[0].mxu0
  %v4135 = vadd.f32 %v4038, %v4134
  %v4136 = vpop.f32.mrb[0].mxu0
  %4137 = vmatprep.mubr.bf16.mxu0 %v3721
  %4138 = vmatmul.mubr.bf16.gmra.mrb[0].mxu0 %v3703
  %v4139 = vpop.f32.mrb[0].mxu0
  %v4140 = vadd.f32 %v4043, %v4139
  %v4141 = vpop.f32.mrb[0].mxu0
  %v4142 = vpop.f32.mrb[0].mxu0
  %v4143 = vadd.f32 %v4046, %v4142
  %v4144 = vpop.f32.mrb[0].mxu0
  %4145 = vmatprep.mubr.bf16.mxu0 %v3722
  %4146 = vmatmul.mubr.bf16.gmra.mrb[0].mxu0 %v3704
  %v4147 = vpop.f32.mrb[0].mxu0
  %v4148 = vadd.f32 %v4051, %v4147
  %v4149 = vpop.f32.mrb[0].mxu0
  %v4150 = vpop.f32.mrb[0].mxu0
  %v4151 = vadd.f32 %v4054, %v4150
  %v4152 = vpop.f32.mrb[0].mxu0
  %4153 = vmatprep.mubr.bf16.mxu0 %v3723
  %4154 = vmatmul.mubr.bf16.gmra.mrb[0].mxu0 %v3705
  %v4155 = vpop.f32.mrb[0].mxu0
  %v4156 = vadd.f32 %v4059, %v4155
  %v4157 = vpop.f32.mrb[0].mxu0
  %v4158 = vpop.f32.mrb[0].mxu0
  %v4159 = vadd.f32 %v4062, %v4158
  %v4160 = vpop.f32.mrb[0].mxu0
  %4161 = vmatprep.mubr.bf16.mxu0 %v3724
  %4162 = vmatmul.mubr.bf16.gmra.mrb[0].mxu0 %v3706
  %v4163 = vpop.f32.mrb[0].mxu0
  %v4164 = vadd.f32 %v4067, %v4163
  %v4165 = vpop.f32.mrb[0].mxu0
  %v4166 = vpop.f32.mrb[0].mxu0
  %v4167 = vadd.f32 %v4070, %v4166
  %v4168 = vpop.f32.mrb[0].mxu0
  %4169 = vmatprep.mubr.bf16.mxu0 %v3725
  %4170 = vmatmul.mubr.bf16.gmra.mrb[0].mxu0 %v3707
  %v4171 = vpop.f32.mrb[0].mxu0
  %v4172 = vadd.f32 %v4075, %v4171
  %v4173 = vpop.f32.mrb[0].mxu0
  %v4174 = vpop.f32.mrb[0].mxu0
  %v4175 = vadd.f32 %v4078, %v4174
  %v4176 = vpop.f32.mrb[0].mxu0
  %4177 = vmatprep.mubr.bf16.mxu0 %v3726
  %4178 = vmatmul.mubr.bf16.gmra.mrb[0].mxu0 %v3708
  %v4179 = vpop.f32.mrb[0].mxu0
  %v4180 = vadd.f32 %v4083, %v4179
  %v4181 = vpop.f32.mrb[0].mxu0
  %v4182 = vpop.f32.mrb[0].mxu0
  %v4183 = vadd.f32 %v4086, %v4182
  %v4184 = vpop.f32.mrb[0].mxu0
  %4185 = vdwg.mxu0
  %v4186 = vadd.f32 %v3132, %v4124
  %v4187 = vadd.f32 %v3133, %v4127
  %v4188 = vadd.f32 %v3134, %v4132
  %v4189 = vadd.f32 %v3135, %v4135
  %v4190 = vadd.f32 %v3136, %v4140
  %v4191 = vadd.f32 %v3137, %v4143
  %v4192 = vadd.f32 %v3138, %v4148
  %v4193 = vadd.f32 %v3139, %v4151
  %v4194 = vadd.f32 %v3140, %v4156
  %v4195 = vadd.f32 %v3141, %v4159
  %v4196 = vadd.f32 %v3142, %v4164
  %v4197 = vadd.f32 %v3143, %v4167
  %v4198 = vadd.f32 %v3144, %v4172
  %v4199 = vadd.f32 %v3145, %v4175
  %v4200 = vadd.f32 %v3146, %v4180
  %v4201 = vadd.f32 %v3147, %v4183
  %4202 = vst [vmem:[#allocation2] sm:$0xff] 0
  %4203 = vst [vmem:[#allocation2 + $0x50] sm:$0xff] 0
  %s4204 = scalar_lea.vmem [#allocation2], 72
  %4205 = vst [vmem:[%s4204] sm:$0xff] 0
  %4206 = vst [vmem:[%s4204 + $0x50] sm:$0xff] 0
  %vm4207 = vcmask 1040384
  %vm4208 = vsmask.f32 256
  %vm4209 = vmand %vm4207, %vm4208
  %v4210 = vld [vmem:[#allocation2] sm:$0x1]
  %v4211 = vsel %vm4209, 0, %v4210
  %4212 = vst [vmem:[#allocation2] sm:$0x1] %v4211
  %v4213 = vld [vmem:[#allocation2 + $0x8] sm:$0x1]
  %v4214 = vsel %vm4209, 0, %v4213
  %4215 = vst [vmem:[#allocation2 + $0x8] sm:$0x1] %v4214
  %v4216 = vld [vmem:[#allocation2 + $0x10] sm:$0x1]
  %v4217 = vsel %vm4209, 0, %v4216
  %4218 = vst [vmem:[#allocation2 + $0x10] sm:$0x1] %v4217
  %v4219 = vld [vmem:[#allocation2 + $0x18] sm:$0x1]
  %v4220 = vsel %vm4209, 0, %v4219
  %4221 = vst [vmem:[#allocation2 + $0x18] sm:$0x1] %v4220
  %v4222 = vld [vmem:[#allocation2 + $0x20] sm:$0x1]
  %v4223 = vsel %vm4209, 0, %v4222
  %4224 = vst [vmem:[#allocation2 + $0x20] sm:$0x1] %v4223
  %v4225 = vld [vmem:[#allocation2 + $0x28] sm:$0x1]
  %v4226 = vsel %vm4209, 0, %v4225
  %4227 = vst [vmem:[#allocation2 + $0x28] sm:$0x1] %v4226
  %v4228 = vld [vmem:[#allocation2 + $0x30] sm:$0x1]
  %v4229 = vsel %vm4209, 0, %v4228
  %4230 = vst [vmem:[#allocation2 + $0x30] sm:$0x1] %v4229
  %v4231 = vld [vmem:[#allocation2 + $0x38] sm:$0x1]
  %v4232 = vsel %vm4209, 0, %v4231
  %4233 = vst [vmem:[#allocation2 + $0x38] sm:$0x1] %v4232
  %v4234 = vld [vmem:[#allocation2 + $0x40] sm:$0x1]
  %v4235 = vsel %vm4209, 0, %v4234
  %4236 = vst [vmem:[#allocation2 + $0x40] sm:$0x1] %v4235
  %v4237 = vld [vmem:[#allocation2 + $0x48] sm:$0x1]
  %v4238 = vsel %vm4209, 0, %v4237
  %4239 = vst [vmem:[#allocation2 + $0x48] sm:$0x1] %v4238
  %v4240 = vld [vmem:[#allocation2 + $0x50] sm:$0x1]
  %v4241 = vsel %vm4209, 0, %v4240
  %4242 = vst [vmem:[#allocation2 + $0x50] sm:$0x1] %v4241
  %v4243 = vld [vmem:[#allocation2 + $0x58] sm:$0x1]
  %v4244 = vsel %vm4209, 0, %v4243
  %4245 = vst [vmem:[#allocation2 + $0x58] sm:$0x1] %v4244
  %v4246 = vld [vmem:[#allocation2 + $0x60] sm:$0x1]
  %v4247 = vsel %vm4209, 0, %v4246
  %4248 = vst [vmem:[#allocation2 + $0x60] sm:$0x1] %v4247
  %v4249 = vld [vmem:[#allocation2 + $0x68] sm:$0x1]
  %v4250 = vsel %vm4209, 0, %v4249
  %4251 = vst [vmem:[#allocation2 + $0x68] sm:$0x1] %v4250
  %v4252 = vld [vmem:[#allocation2 + $0x70] sm:$0x1]
  %v4253 = vsel %vm4209, 0, %v4252
  %4254 = vst [vmem:[#allocation2 + $0x70] sm:$0x1] %v4253
  %v4255 = vld [vmem:[#allocation2 + $0x78] sm:$0x1]
  %v4256 = vsel %vm4209, 0, %v4255
  %4257 = vst [vmem:[#allocation2 + $0x78] sm:$0x1] %v4256
  %v4258 = vld [vmem:[#allocation2 + $0x80] sm:$0x1]
  %v4259 = vsel %vm4209, 0, %v4258
  %4260 = vst [vmem:[#allocation2 + $0x80] sm:$0x1] %v4259
  %v4261 = vld [vmem:[#allocation2 + $0x88] sm:$0x1]
  %v4262 = vsel %vm4209, 0, %v4261
  %4263 = vst [vmem:[#allocation2 + $0x88] sm:$0x1] %v4262
  %v4264 = vld [vmem:[#allocation2 + $0x90] sm:$0x1]
  %v4265 = vsel %vm4209, 0, %v4264
  %4266 = vst [vmem:[#allocation2 + $0x90] sm:$0x1] %v4265
  %v4267 = vld [vmem:[#allocation2 + $0x98] sm:$0x1]
  %v4268 = vsel %vm4209, 0, %v4267
  %4269 = vst [vmem:[#allocation2 + $0x98] sm:$0x1] %v4268
  %vm4270 = vcmask 1044484
  %vm4271 = vsmask.f32 7954
  %vm4272 = vmand %vm4270, %vm4271
  %v4273 = vld [vmem:[#allocation2] sm:$0x10]
  %v4274 = vsel %vm4272, 0, %v4273
  %4275 = vst [vmem:[#allocation2] sm:$0x10] %v4274
  %v4276 = vld [vmem:[#allocation2 + $0x8] sm:$0x10]
  %v4277 = vsel %vm4272, 0, %v4276
  %4278 = vst [vmem:[#allocation2 + $0x8] sm:$0x10] %v4277
  %v4279 = vld [vmem:[#allocation2 + $0x10] sm:$0x10]
  %v4280 = vsel %vm4272, 0, %v4279
  %4281 = vst [vmem:[#allocation2 + $0x10] sm:$0x10] %v4280
  %v4282 = vld [vmem:[#allocation2 + $0x18] sm:$0x10]
  %v4283 = vsel %vm4272, 0, %v4282
  %4284 = vst [vmem:[#allocation2 + $0x18] sm:$0x10] %v4283
  %v4285 = vld [vmem:[#allocation2 + $0x20] sm:$0x10]
  %v4286 = vsel %vm4272, 0, %v4285
  %4287 = vst [vmem:[#allocation2 + $0x20] sm:$0x10] %v4286
  %v4288 = vld [vmem:[#allocation2 + $0x28] sm:$0x10]
  %v4289 = vsel %vm4272, 0, %v4288
  %4290 = vst [vmem:[#allocation2 + $0x28] sm:$0x10] %v4289
  %v4291 = vld [vmem:[#allocation2 + $0x30] sm:$0x10]
  %v4292 = vsel %vm4272, 0, %v4291
  %4293 = vst [vmem:[#allocation2 + $0x30] sm:$0x10] %v4292
  %v4294 = vld [vmem:[#allocation2 + $0x38] sm:$0x10]
  %v4295 = vsel %vm4272, 0, %v4294
  %4296 = vst [vmem:[#allocation2 + $0x38] sm:$0x10] %v4295
  %v4297 = vld [vmem:[#allocation2 + $0x40] sm:$0x10]
  %v4298 = vsel %vm4272, 0, %v4297
  %4299 = vst [vmem:[#allocation2 + $0x40] sm:$0x10] %v4298
  %v4300 = vld [vmem:[#allocation2 + $0x48] sm:$0x10]
  %v4301 = vsel %vm4272, 0, %v4300
  %4302 = vst [vmem:[#allocation2 + $0x48] sm:$0x10] %v4301
  %v4303 = vld [vmem:[#allocation2 + $0x50] sm:$0x10]
  %v4304 = vsel %vm4272, 0, %v4303
  %4305 = vst [vmem:[#allocation2 + $0x50] sm:$0x10] %v4304
  %v4306 = vld [vmem:[#allocation2 + $0x58] sm:$0x10]
  %v4307 = vsel %vm4272, 0, %v4306
  %4308 = vst [vmem:[#allocation2 + $0x58] sm:$0x10] %v4307
  %v4309 = vld [vmem:[#allocation2 + $0x60] sm:$0x10]
  %v4310 = vsel %vm4272, 0, %v4309
  %4311 = vst [vmem:[#allocation2 + $0x60] sm:$0x10] %v4310
  %v4312 = vld [vmem:[#allocation2 + $0x68] sm:$0x10]
  %v4313 = vsel %vm4272, 0, %v4312
  %4314 = vst [vmem:[#allocation2 + $0x68] sm:$0x10] %v4313
  %v4315 = vld [vmem:[#allocation2 + $0x70] sm:$0x10]
  %v4316 = vsel %vm4272, 0, %v4315
  %4317 = vst [vmem:[#allocation2 + $0x70] sm:$0x10] %v4316
  %v4318 = vld [vmem:[#allocation2 + $0x78] sm:$0x10]
  %v4319 = vsel %vm4272, 0, %v4318
  %4320 = vst [vmem:[#allocation2 + $0x78] sm:$0x10] %v4319
  %v4321 = vld [vmem:[#allocation2 + $0x80] sm:$0x10]
  %v4322 = vsel %vm4272, 0, %v4321
  %4323 = vst [vmem:[#allocation2 + $0x80] sm:$0x10] %v4322
  %v4324 = vld [vmem:[#allocation2 + $0x88] sm:$0x10]
  %v4325 = vsel %vm4272, 0, %v4324
  %4326 = vst [vmem:[#allocation2 + $0x88] sm:$0x10] %v4325
  %v4327 = vld [vmem:[#allocation2 + $0x90] sm:$0x10]
  %v4328 = vsel %vm4272, 0, %v4327
  %4329 = vst [vmem:[#allocation2 + $0x90] sm:$0x10] %v4328
  %v4330 = vld [vmem:[#allocation2 + $0x98] sm:$0x10]
  %v4331 = vsel %vm4272, 0, %v4330
  %4332 = vst [vmem:[#allocation2 + $0x98] sm:$0x10] %v4331
  %v4333 = vmax.f32 %v4186, 0.0
  %v4334 = vmax.f32 %v4187, 0.0
  %v4335 = vmax.f32 %v4188, 0.0
  %v4336 = vmax.f32 %v4189, 0.0
  %v4337 = vmax.f32 %v4190, 0.0
  %v4338 = vmax.f32 %v4191, 0.0
  %v4339 = vmax.f32 %v4192, 0.0
  %v4340 = vmax.f32 %v4193, 0.0
  %v4341 = vmax.f32 %v4194, 0.0
  %v4342 = vmax.f32 %v4195, 0.0
  %v4343 = vmax.f32 %v4196, 0.0
  %v4344 = vmax.f32 %v4197, 0.0
  %v4345 = vmax.f32 %v4198, 0.0
  %v4346 = vmax.f32 %v4199, 0.0
  %v4347 = vmax.f32 %v4200, 0.0
  %v4348 = vmax.f32 %v4201, 0.0
  %v4349 = vpack.c.bf16 %v4333, %v4333
  %v4350 = vpack.c.bf16 %v4334, %v4334
  %v4351 = vpack.c.bf16 %v4335, %v4335
  %v4352 = vpack.c.bf16 %v4336, %v4336
  %v4353 = vpack.c.bf16 %v4337, %v4337
  %v4354 = vpack.c.bf16 %v4338, %v4338
  %v4355 = vpack.c.bf16 %v4339, %v4339
  %v4356 = vpack.c.bf16 %v4340, %v4340
  %v4357 = vpack.c.bf16 %v4341, %v4341
  %v4358 = vpack.c.bf16 %v4342, %v4342
  %v4359 = vpack.c.bf16 %v4343, %v4343
  %v4360 = vpack.c.bf16 %v4344, %v4344
  %v4361 = vpack.c.bf16 %v4345, %v4345
  %v4362 = vpack.c.bf16 %v4346, %v4346
  %v4363 = vpack.c.bf16 %v4347, %v4347
  %v4364 = vpack.c.bf16 %v4348, %v4348
  %v4366 = vshrl.u32 %v4349, 16
  %v4368 = vrot.slane %v4366, 7
  %v4369 = vshll.u32 %v4349, 16
  %v4371 = vor.u32 %v4368, %v4369
  %v4373 = vshrl.u32 %v4350, 16
  %v4375 = vrot.slane %v4373, 7
  %v4376 = vshll.u32 %v4350, 16
  %v4378 = vor.u32 %v4375, %v4376
  %v4380 = vshrl.u32 %v4351, 16
  %v4382 = vrot.slane %v4380, 7
  %v4383 = vshll.u32 %v4351, 16
  %v4385 = vor.u32 %v4382, %v4383
  %v4387 = vshrl.u32 %v4352, 16
  %v4389 = vrot.slane %v4387, 7
  %v4390 = vshll.u32 %v4352, 16
  %v4392 = vor.u32 %v4389, %v4390
  %v4394 = vshrl.u32 %v4353, 16
  %v4396 = vrot.slane %v4394, 7
  %v4397 = vshll.u32 %v4353, 16
  %v4399 = vor.u32 %v4396, %v4397
  %v4401 = vshrl.u32 %v4354, 16
  %v4403 = vrot.slane %v4401, 7
  %v4404 = vshll.u32 %v4354, 16
  %v4406 = vor.u32 %v4403, %v4404
  %v4408 = vshrl.u32 %v4355, 16
  %v4410 = vrot.slane %v4408, 7
  %v4411 = vshll.u32 %v4355, 16
  %v4413 = vor.u32 %v4410, %v4411
  %v4415 = vshrl.u32 %v4356, 16
  %v4417 = vrot.slane %v4415, 7
  %v4418 = vshll.u32 %v4356, 16
  %v4420 = vor.u32 %v4417, %v4418
  %v4422 = vshrl.u32 %v4357, 16
  %v4424 = vrot.slane %v4422, 7
  %v4425 = vshll.u32 %v4357, 16
  %v4427 = vor.u32 %v4424, %v4425
  %v4429 = vshrl.u32 %v4358, 16
  %v4431 = vrot.slane %v4429, 7
  %v4432 = vshll.u32 %v4358, 16
  %v4434 = vor.u32 %v4431, %v4432
  %v4436 = vshrl.u32 %v4359, 16
  %v4438 = vrot.slane %v4436, 7
  %v4439 = vshll.u32 %v4359, 16
  %v4441 = vor.u32 %v4438, %v4439
  %v4443 = vshrl.u32 %v4360, 16
  %v4445 = vrot.slane %v4443, 7
  %v4446 = vshll.u32 %v4360, 16
  %v4448 = vor.u32 %v4445, %v4446
  %v4450 = vshrl.u32 %v4361, 16
  %v4452 = vrot.slane %v4450, 7
  %v4453 = vshll.u32 %v4361, 16
  %v4455 = vor.u32 %v4452, %v4453
  %v4457 = vshrl.u32 %v4362, 16
  %v4459 = vrot.slane %v4457, 7
  %v4460 = vshll.u32 %v4362, 16
  %v4462 = vor.u32 %v4459, %v4460
  %v4464 = vshrl.u32 %v4363, 16
  %v4466 = vrot.slane %v4464, 7
  %v4467 = vshll.u32 %v4363, 16
  %v4469 = vor.u32 %v4466, %v4467
  %v4471 = vshrl.u32 %v4364, 16
  %v4473 = vrot.slane %v4471, 7
  %v4474 = vshll.u32 %v4364, 16
  %v4476 = vor.u32 %v4473, %v4474
  %s4493 = scalar_lea.vmem [#allocation2], 8
  %vm4494 = vcmask 1044480
  %vm4495 = vsmask.f32 4354
  %vm4496 = vmand %vm4494, %vm4495
  %v4497 = vld [vmem:[%s4493] sm:$0x1f]
  %v4498 = vsel %vm4496, %v4371, %v4497
  %4499 = vst [vmem:[%s4493] sm:$0x1f] %v4498
  %v4500 = vld [vmem:[%s4493 + $0x8] sm:$0x1f]
  %v4501 = vsel %vm4496, %v4378, %v4500
  %4502 = vst [vmem:[%s4493 + $0x8] sm:$0x1f] %v4501
  %v4503 = vld [vmem:[%s4493 + $0x10] sm:$0x1f]
  %v4504 = vsel %vm4496, %v4385, %v4503
  %4505 = vst [vmem:[%s4493 + $0x10] sm:$0x1f] %v4504
  %v4506 = vld [vmem:[%s4493 + $0x18] sm:$0x1f]
  %v4507 = vsel %vm4496, %v4392, %v4506
  %4508 = vst [vmem:[%s4493 + $0x18] sm:$0x1f] %v4507
  %v4509 = vld [vmem:[%s4493 + $0x20] sm:$0x1f]
  %v4510 = vsel %vm4496, %v4399, %v4509
  %4511 = vst [vmem:[%s4493 + $0x20] sm:$0x1f] %v4510
  %v4512 = vld [vmem:[%s4493 + $0x28] sm:$0x1f]
  %v4513 = vsel %vm4496, %v4406, %v4512
  %4514 = vst [vmem:[%s4493 + $0x28] sm:$0x1f] %v4513
  %v4515 = vld [vmem:[%s4493 + $0x30] sm:$0x1f]
  %v4516 = vsel %vm4496, %v4413, %v4515
  %4517 = vst [vmem:[%s4493 + $0x30] sm:$0x1f] %v4516
  %v4518 = vld [vmem:[%s4493 + $0x38] sm:$0x1f]
  %v4519 = vsel %vm4496, %v4420, %v4518
  %4520 = vst [vmem:[%s4493 + $0x38] sm:$0x1f] %v4519
  %v4521 = vld [vmem:[%s4493 + $0x50] sm:$0x1f]
  %v4522 = vsel %vm4496, %v4427, %v4521
  %4523 = vst [vmem:[%s4493 + $0x50] sm:$0x1f] %v4522
  %v4524 = vld [vmem:[%s4493 + $0x58] sm:$0x1f]
  %v4525 = vsel %vm4496, %v4434, %v4524
  %4526 = vst [vmem:[%s4493 + $0x58] sm:$0x1f] %v4525
  %v4527 = vld [vmem:[%s4493 + $0x60] sm:$0x1f]
  %v4528 = vsel %vm4496, %v4441, %v4527
  %4529 = vst [vmem:[%s4493 + $0x60] sm:$0x1f] %v4528
  %v4530 = vld [vmem:[%s4493 + $0x68] sm:$0x1f]
  %v4531 = vsel %vm4496, %v4448, %v4530
  %4532 = vst [vmem:[%s4493 + $0x68] sm:$0x1f] %v4531
  %v4533 = vld [vmem:[%s4493 + $0x70] sm:$0x1f]
  %v4534 = vsel %vm4496, %v4455, %v4533
  %4535 = vst [vmem:[%s4493 + $0x70] sm:$0x1f] %v4534
  %v4536 = vld [vmem:[%s4493 + $0x78] sm:$0x1f]
  %v4537 = vsel %vm4496, %v4462, %v4536
  %4538 = vst [vmem:[%s4493 + $0x78] sm:$0x1f] %v4537
  %v4539 = vld [vmem:[%s4493 + $0x80] sm:$0x1f]
  %v4540 = vsel %vm4496, %v4469, %v4539
  %4541 = vst [vmem:[%s4493 + $0x80] sm:$0x1f] %v4540
  %v4542 = vld [vmem:[%s4493 + $0x88] sm:$0x1f]
  %v4543 = vsel %vm4496, %v4476, %v4542
  %4544 = vst [vmem:[%s4493 + $0x88] sm:$0x1f] %v4543
  %v4545 = vld [vmem:[#allocation2] sm:$0xff]
  %v4546 = vld [vmem:[#allocation2 + $0x8] sm:$0xff]
  %v4547 = vld [vmem:[#allocation2 + $0x10] sm:$0xff]
  %v4548 = vld [vmem:[#allocation2 + $0x18] sm:$0xff]
  %v4549 = vld [vmem:[#allocation2 + $0x20] sm:$0xff]
  %v4550 = vld [vmem:[#allocation2 + $0x28] sm:$0xff]
  %v4551 = vld [vmem:[#allocation2 + $0x30] sm:$0xff]
  %v4552 = vld [vmem:[#allocation2 + $0x38] sm:$0xff]
  %v4553 = vld [vmem:[#allocation2 + $0x40] sm:$0xff]
  %v4554 = vld [vmem:[#allocation2 + $0x48] sm:$0xff]
  %v4555 = vld [vmem:[#allocation2 + $0x50] sm:$0xff]
  %v4556 = vld [vmem:[#allocation2 + $0x58] sm:$0xff]
  %v4557 = vld [vmem:[#allocation2 + $0x60] sm:$0xff]
  %v4558 = vld [vmem:[#allocation2 + $0x68] sm:$0xff]
  %v4559 = vld [vmem:[#allocation2 + $0x70] sm:$0xff]
  %v4560 = vld [vmem:[#allocation2 + $0x78] sm:$0xff]
  %v4561 = vld [vmem:[#allocation2 + $0x80] sm:$0xff]
  %v4562 = vld [vmem:[#allocation2 + $0x88] sm:$0xff]
  %v4563 = vld [vmem:[#allocation2 + $0x90] sm:$0xff]
  %v4564 = vld [vmem:[#allocation2 + $0x98] sm:$0xff]
  %v4581 = vunpack.c.l.b16 %v4545
  %v4582 = vunpack.c.h.b16 %v4545
  %v4583 = vunpack.c.l.b16 %v4546
  %v4584 = vunpack.c.h.b16 %v4546
  %v4585 = vunpack.c.l.b16 %v4547
  %v4586 = vunpack.c.h.b16 %v4547
  %v4587 = vunpack.c.l.b16 %v4548
  %v4588 = vunpack.c.h.b16 %v4548
  %v4589 = vunpack.c.l.b16 %v4549
  %v4590 = vunpack.c.h.b16 %v4549
  %v4591 = vunpack.c.l.b16 %v4550
  %v4592 = vunpack.c.h.b16 %v4550
  %v4593 = vunpack.c.l.b16 %v4551
  %v4594 = vunpack.c.h.b16 %v4551
  %v4595 = vunpack.c.l.b16 %v4552
  %v4596 = vunpack.c.h.b16 %v4552
  %v4597 = vunpack.c.l.b16 %v4555
  %v4598 = vunpack.c.h.b16 %v4555
  %v4599 = vunpack.c.l.b16 %v4556
  %v4600 = vunpack.c.h.b16 %v4556
  %v4601 = vunpack.c.l.b16 %v4557
  %v4602 = vunpack.c.h.b16 %v4557
  %v4603 = vunpack.c.l.b16 %v4558
  %v4604 = vunpack.c.h.b16 %v4558
  %v4605 = vunpack.c.l.b16 %v4559
  %v4606 = vunpack.c.h.b16 %v4559
  %v4607 = vunpack.c.l.b16 %v4560
  %v4608 = vunpack.c.h.b16 %v4560
  %v4609 = vunpack.c.l.b16 %v4561
  %v4610 = vunpack.c.h.b16 %v4561
  %v4611 = vunpack.c.l.b16 %v4562
  %v4612 = vunpack.c.h.b16 %v4562
  %v4613 = vpack.c.b16 %v4581, %v4581
  %v4614 = vpack.c.b16 %v4582, %v4582
  %v4615 = vpack.c.b16 %v4583, %v4583
  %v4616 = vpack.c.b16 %v4584, %v4584
  %v4617 = vpack.c.b16 %v4585, %v4585
  %v4618 = vpack.c.b16 %v4586, %v4586
  %v4619 = vpack.c.b16 %v4587, %v4587
  %v4620 = vpack.c.b16 %v4588, %v4588
  %v4621 = vpack.c.b16 %v4589, %v4589
  %v4622 = vpack.c.b16 %v4590, %v4590
  %v4623 = vpack.c.b16 %v4591, %v4591
  %v4624 = vpack.c.b16 %v4592, %v4592
  %v4625 = vpack.c.b16 %v4593, %v4593
  %v4626 = vpack.c.b16 %v4594, %v4594
  %v4627 = vpack.c.b16 %v4595, %v4595
  %v4628 = vpack.c.b16 %v4596, %v4596
  %v4629 = vpack.c.b16 %v4597, %v4597
  %v4630 = vpack.c.b16 %v4598, %v4598
  %v4631 = vpack.c.b16 %v4599, %v4599
  %v4632 = vpack.c.b16 %v4600, %v4600
  %v4633 = vpack.c.b16 %v4601, %v4601
  %v4634 = vpack.c.b16 %v4602, %v4602
  %v4635 = vpack.c.b16 %v4603, %v4603
  %v4636 = vpack.c.b16 %v4604, %v4604
  %v4637 = vpack.c.b16 %v4605, %v4605
  %v4638 = vpack.c.b16 %v4606, %v4606
  %v4639 = vpack.c.b16 %v4607, %v4607
  %v4640 = vpack.c.b16 %v4608, %v4608
  %v4641 = vpack.c.b16 %v4609, %v4609
  %v4642 = vpack.c.b16 %v4610, %v4610
  %v4643 = vpack.c.b16 %v4611, %v4611
  %v4644 = vpack.c.b16 %v4612, %v4612
  %v4646 = vshrl.u32 %v4613, 16
  %v4648 = vrot.slane %v4646, 4
  %v4649 = vshll.u32 %v4613, 16
  %v4651 = vrot.slane %v4649, 5
  %v4652 = vor.u32 %v4648, %v4651
  %v4653 = vrot.slane %v4652, 4
  %v4655 = vshll.u32 %v4614, 16
  %v4657 = vrot.slane %v4655, 5
  %v4658 = vsel %vm261, %v4653, %v4657
  %v4660 = vshrl.u32 %v4615, 16
  %v4662 = vrot.slane %v4660, 4
  %v4663 = vshll.u32 %v4615, 16
  %v4665 = vrot.slane %v4663, 5
  %v4666 = vor.u32 %v4662, %v4665
  %v4667 = vrot.slane %v4666, 4
  %v4669 = vshll.u32 %v4616, 16
  %v4671 = vrot.slane %v4669, 5
  %v4672 = vsel %vm261, %v4667, %v4671
  %v4674 = vshrl.u32 %v4617, 16
  %v4676 = vrot.slane %v4674, 4
  %v4677 = vshll.u32 %v4617, 16
  %v4679 = vrot.slane %v4677, 5
  %v4680 = vor.u32 %v4676, %v4679
  %v4681 = vrot.slane %v4680, 4
  %v4683 = vshll.u32 %v4618, 16
  %v4685 = vrot.slane %v4683, 5
  %v4686 = vsel %vm261, %v4681, %v4685
  %v4688 = vshrl.u32 %v4619, 16
  %v4690 = vrot.slane %v4688, 4
  %v4691 = vshll.u32 %v4619, 16
  %v4693 = vrot.slane %v4691, 5
  %v4694 = vor.u32 %v4690, %v4693
  %v4695 = vrot.slane %v4694, 4
  %v4697 = vshll.u32 %v4620, 16
  %v4699 = vrot.slane %v4697, 5
  %v4700 = vsel %vm261, %v4695, %v4699
  %v4702 = vshrl.u32 %v4621, 16
  %v4704 = vrot.slane %v4702, 4
  %v4705 = vshll.u32 %v4621, 16
  %v4707 = vrot.slane %v4705, 5
  %v4708 = vor.u32 %v4704, %v4707
  %v4709 = vrot.slane %v4708, 4
  %v4711 = vshll.u32 %v4622, 16
  %v4713 = vrot.slane %v4711, 5
  %v4714 = vsel %vm261, %v4709, %v4713
  %v4716 = vshrl.u32 %v4623, 16
  %v4718 = vrot.slane %v4716, 4
  %v4719 = vshll.u32 %v4623, 16
  %v4721 = vrot.slane %v4719, 5
  %v4722 = vor.u32 %v4718, %v4721
  %v4723 = vrot.slane %v4722, 4
  %v4725 = vshll.u32 %v4624, 16
  %v4727 = vrot.slane %v4725, 5
  %v4728 = vsel %vm261, %v4723, %v4727
  %v4730 = vshrl.u32 %v4625, 16
  %v4732 = vrot.slane %v4730, 4
  %v4733 = vshll.u32 %v4625, 16
  %v4735 = vrot.slane %v4733, 5
  %v4736 = vor.u32 %v4732, %v4735
  %v4737 = vrot.slane %v4736, 4
  %v4739 = vshll.u32 %v4626, 16
  %v4741 = vrot.slane %v4739, 5
  %v4742 = vsel %vm261, %v4737, %v4741
  %v4744 = vshrl.u32 %v4627, 16
  %v4746 = vrot.slane %v4744, 4
  %v4747 = vshll.u32 %v4627, 16
  %v4749 = vrot.slane %v4747, 5
  %v4750 = vor.u32 %v4746, %v4749
  %v4751 = vrot.slane %v4750, 4
  %v4753 = vshll.u32 %v4628, 16
  %v4755 = vrot.slane %v4753, 5
  %v4756 = vsel %vm261, %v4751, %v4755
  %v4758 = vshrl.u32 %v4629, 16
  %v4760 = vrot.slane %v4758, 4
  %v4761 = vshll.u32 %v4629, 16
  %v4763 = vrot.slane %v4761, 5
  %v4764 = vor.u32 %v4760, %v4763
  %v4765 = vrot.slane %v4764, 4
  %v4767 = vshll.u32 %v4630, 16
  %v4769 = vrot.slane %v4767, 5
  %v4770 = vsel %vm261, %v4765, %v4769
  %v4772 = vshrl.u32 %v4631, 16
  %v4774 = vrot.slane %v4772, 4
  %v4775 = vshll.u32 %v4631, 16
  %v4777 = vrot.slane %v4775, 5
  %v4778 = vor.u32 %v4774, %v4777
  %v4779 = vrot.slane %v4778, 4
  %v4781 = vshll.u32 %v4632, 16
  %v4783 = vrot.slane %v4781, 5
  %v4784 = vsel %vm261, %v4779, %v4783
  %v4786 = vshrl.u32 %v4633, 16
  %v4788 = vrot.slane %v4786, 4
  %v4789 = vshll.u32 %v4633, 16
  %v4791 = vrot.slane %v4789, 5
  %v4792 = vor.u32 %v4788, %v4791
  %v4793 = vrot.slane %v4792, 4
  %v4795 = vshll.u32 %v4634, 16
  %v4797 = vrot.slane %v4795, 5
  %v4798 = vsel %vm261, %v4793, %v4797
  %v4800 = vshrl.u32 %v4635, 16
  %v4802 = vrot.slane %v4800, 4
  %v4803 = vshll.u32 %v4635, 16
  %v4805 = vrot.slane %v4803, 5
  %v4806 = vor.u32 %v4802, %v4805
  %v4807 = vrot.slane %v4806, 4
  %v4809 = vshll.u32 %v4636, 16
  %v4811 = vrot.slane %v4809, 5
  %v4812 = vsel %vm261, %v4807, %v4811
  %v4814 = vshrl.u32 %v4637, 16
  %v4816 = vrot.slane %v4814, 4
  %v4817 = vshll.u32 %v4637, 16
  %v4819 = vrot.slane %v4817, 5
  %v4820 = vor.u32 %v4816, %v4819
  %v4821 = vrot.slane %v4820, 4
  %v4823 = vshll.u32 %v4638, 16
  %v4825 = vrot.slane %v4823, 5
  %v4826 = vsel %vm261, %v4821, %v4825
  %v4828 = vshrl.u32 %v4639, 16
  %v4830 = vrot.slane %v4828, 4
  %v4831 = vshll.u32 %v4639, 16
  %v4833 = vrot.slane %v4831, 5
  %v4834 = vor.u32 %v4830, %v4833
  %v4835 = vrot.slane %v4834, 4
  %v4837 = vshll.u32 %v4640, 16
  %v4839 = vrot.slane %v4837, 5
  %v4840 = vsel %vm261, %v4835, %v4839
  %v4842 = vshrl.u32 %v4641, 16
  %v4844 = vrot.slane %v4842, 4
  %v4845 = vshll.u32 %v4641, 16
  %v4847 = vrot.slane %v4845, 5
  %v4848 = vor.u32 %v4844, %v4847
  %v4849 = vrot.slane %v4848, 4
  %v4851 = vshll.u32 %v4642, 16
  %v4853 = vrot.slane %v4851, 5
  %v4854 = vsel %vm261, %v4849, %v4853
  %v4856 = vshrl.u32 %v4643, 16
  %v4858 = vrot.slane %v4856, 4
  %v4859 = vshll.u32 %v4643, 16
  %v4861 = vrot.slane %v4859, 5
  %v4862 = vor.u32 %v4858, %v4861
  %v4863 = vrot.slane %v4862, 4
  %v4865 = vshll.u32 %v4644, 16
  %v4867 = vrot.slane %v4865, 5
  %v4868 = vsel %vm261, %v4863, %v4867
  %v4871 = vunpack.c.l.b16 %v4553
  %v4872 = vunpack.c.h.b16 %v4553
  %v4873 = vunpack.c.l.b16 %v4563
  %v4874 = vunpack.c.h.b16 %v4563
  %v4875 = vpack.c.b16 %v4871, %v4871
  %v4876 = vpack.c.b16 %v4872, %v4872
  %v4877 = vpack.c.b16 %v4873, %v4873
  %v4878 = vpack.c.b16 %v4874, %v4874
  %v4880 = vshrl.u32 %v4875, 16
  %v4882 = vrot.slane %v4880, 4
  %v4883 = vshll.u32 %v4875, 16
  %v4885 = vrot.slane %v4883, 5
  %v4886 = vor.u32 %v4882, %v4885
  %v4887 = vrot.slane %v4886, 4
  %v4889 = vshll.u32 %v4876, 16
  %v4891 = vrot.slane %v4889, 5
  %v4892 = vsel %vm261, %v4887, %v4891
  %v4894 = vshrl.u32 %v4877, 16
  %v4896 = vrot.slane %v4894, 4
  %v4897 = vshll.u32 %v4877, 16
  %v4899 = vrot.slane %v4897, 5
  %v4900 = vor.u32 %v4896, %v4899
  %v4901 = vrot.slane %v4900, 4
  %v4903 = vshll.u32 %v4878, 16
  %v4905 = vrot.slane %v4903, 5
  %v4906 = vsel %vm261, %v4901, %v4905
  %v4907 = vpack.c.b16 %v4583, %v4581
  %v4908 = vpack.c.b16 %v4587, %v4585
  %v4909 = vpack.c.b16 %v4591, %v4589
  %v4910 = vpack.c.b16 %v4595, %v4593
  %v4911 = vpack.c.b16 %v4599, %v4597
  %v4912 = vpack.c.b16 %v4603, %v4601
  %v4913 = vpack.c.b16 %v4607, %v4605
  %v4914 = vpack.c.b16 %v4611, %v4609
  %v4923 = vunpack.c.l.b16 %v4658
  %v4924 = vunpack.c.l.b16 %v4672
  %v4925 = vunpack.c.l.b16 %v4686
  %v4926 = vunpack.c.l.b16 %v4700
  %v4927 = vunpack.c.l.b16 %v4714
  %v4928 = vunpack.c.l.b16 %v4728
  %v4929 = vunpack.c.l.b16 %v4742
  %v4930 = vunpack.c.l.b16 %v4756
  %v4931 = vunpack.c.l.b16 %v4770
  %v4932 = vunpack.c.l.b16 %v4784
  %v4933 = vunpack.c.l.b16 %v4798
  %v4934 = vunpack.c.l.b16 %v4812
  %v4935 = vunpack.c.l.b16 %v4826
  %v4936 = vunpack.c.l.b16 %v4840
  %v4937 = vunpack.c.l.b16 %v4854
  %v4938 = vunpack.c.l.b16 %v4868
  %v4939 = vpack.c.b16 %v4924, %v4923
  %v4940 = vpack.c.b16 %v4926, %v4925
  %v4941 = vpack.c.b16 %v4928, %v4927
  %v4942 = vpack.c.b16 %v4930, %v4929
  %v4943 = vpack.c.b16 %v4932, %v4931
  %v4944 = vpack.c.b16 %v4934, %v4933
  %v4945 = vpack.c.b16 %v4936, %v4935
  %v4946 = vpack.c.b16 %v4938, %v4937
  %v4955 = vpack.c.b16 %v4585, %v4583
  %v4956 = vpack.c.b16 %v4589, %v4587
  %v4957 = vpack.c.b16 %v4593, %v4591
  %v4958 = vpack.c.b16 %v4871, %v4595
  %v4959 = vpack.c.b16 %v4601, %v4599
  %v4960 = vpack.c.b16 %v4605, %v4603
  %v4961 = vpack.c.b16 %v4609, %v4607
  %v4962 = vpack.c.b16 %v4873, %v4611
  %v4971 = vunpack.c.l.b16 %v4892
  %v4972 = vunpack.c.l.b16 %v4906
  %v4973 = vpack.c.b16 %v4925, %v4924
  %v4974 = vpack.c.b16 %v4927, %v4926
  %v4975 = vpack.c.b16 %v4929, %v4928
  %v4976 = vpack.c.b16 %v4971, %v4930
  %v4977 = vpack.c.b16 %v4933, %v4932
  %v4978 = vpack.c.b16 %v4935, %v4934
  %v4979 = vpack.c.b16 %v4937, %v4936
  %v4980 = vpack.c.b16 %v4972, %v4938
  %v4989 = vld [vmem:[%s2] sm:$0xf]
  %v4990 = vld [vmem:[%s2 + $0x4] sm:$0xf]
  %v4991 = vld [vmem:[%s2 + $0x8] sm:$0xf]
  %v4992 = vld [vmem:[%s2 + $0xc] sm:$0xf]
  %v4993 = vld [vmem:[%s2 + $0x10] sm:$0xf]
  %v4994 = vld [vmem:[%s2 + $0x14] sm:$0xf]
  %v4995 = vld [vmem:[%s2 + $0x18] sm:$0xf]
  %v4996 = vld [vmem:[%s2 + $0x1c] sm:$0xf]
  %v4997 = vld [vmem:[%s2 + $0x20] sm:$0xf]
  %v4998 = vld [vmem:[%s2 + $0x24] sm:$0xf]
  %v4999 = vld [vmem:[%s2 + $0x28] sm:$0xf]
  %v5000 = vld [vmem:[%s2 + $0x2c] sm:$0xf]
  %v5001 = vld [vmem:[%s2 + $0x30] sm:$0xf]
  %v5002 = vld [vmem:[%s2 + $0x34] sm:$0xf]
  %v5003 = vld [vmem:[%s2 + $0x38] sm:$0xf]
  %v5004 = vld [vmem:[%s2 + $0x3c] sm:$0xf]
  %v5005 = vld [vmem:[%s2 + $0x40] sm:$0xf]
  %v5006 = vld [vmem:[%s2 + $0x44] sm:$0xf]
  %v5007 = vld [vmem:[%s2 + $0x48] sm:$0xf]
  %v5008 = vld [vmem:[%s2 + $0x4c] sm:$0xf]
  %v5009 = vld [vmem:[%s2 + $0x50] sm:$0xf]
  %v5010 = vld [vmem:[%s2 + $0x54] sm:$0xf]
  %v5011 = vld [vmem:[%s2 + $0x58] sm:$0xf]
  %v5012 = vld [vmem:[%s2 + $0x5c] sm:$0xf]
  %v5013 = vld [vmem:[%s2 + $0x60] sm:$0xf]
  %v5014 = vld [vmem:[%s2 + $0x64] sm:$0xf]
  %v5015 = vld [vmem:[%s2 + $0x68] sm:$0xf]
  %v5016 = vld [vmem:[%s2 + $0x6c] sm:$0xf]
  %v5017 = vld [vmem:[%s2 + $0x70] sm:$0xf]
  %v5018 = vld [vmem:[%s2 + $0x74] sm:$0xf]
  %v5019 = vld [vmem:[%s2 + $0x78] sm:$0xf]
  %v5020 = vld [vmem:[%s2 + $0x7c] sm:$0xf]
  %v5021 = vld [vmem:[%s2 + $0x80] sm:$0xf]
  %v5022 = vld [vmem:[%s2 + $0x84] sm:$0xf]
  %v5023 = vld [vmem:[%s2 + $0x88] sm:$0xf]
  %v5024 = vld [vmem:[%s2 + $0x8c] sm:$0xf]
  %v5025 = vld [vmem:[%s2 + $0x90] sm:$0xf]
  %v5026 = vld [vmem:[%s2 + $0x94] sm:$0xf]
  %v5027 = vld [vmem:[%s2 + $0x98] sm:$0xf]
  %v5028 = vld [vmem:[%s2 + $0x9c] sm:$0xf]
  %v5029 = vld [vmem:[%s2 + $0xa0] sm:$0xf]
  %v5030 = vld [vmem:[%s2 + $0xa4] sm:$0xf]
  %v5031 = vld [vmem:[%s2 + $0xa8] sm:$0xf]
  %v5032 = vld [vmem:[%s2 + $0xac] sm:$0xf]
  %v5033 = vld [vmem:[%s2 + $0xb0] sm:$0xf]
  %v5034 = vld [vmem:[%s2 + $0xb4] sm:$0xf]
  %v5035 = vld [vmem:[%s2 + $0xb8] sm:$0xf]
  %v5036 = vld [vmem:[%s2 + $0xbc] sm:$0xf]
  %v5037 = vld [vmem:[%s2 + $0xc0] sm:$0xf]
  %v5038 = vld [vmem:[%s2 + $0xc4] sm:$0xf]
  %v5039 = vld [vmem:[%s2 + $0xc8] sm:$0xf]
  %v5040 = vld [vmem:[%s2 + $0xcc] sm:$0xf]
  %v5041 = vld [vmem:[%s2 + $0xd0] sm:$0xf]
  %v5042 = vld [vmem:[%s2 + $0xd4] sm:$0xf]
  %v5043 = vld [vmem:[%s2 + $0xd8] sm:$0xf]
  %v5044 = vld [vmem:[%s2 + $0xdc] sm:$0xf]
  %v5045 = vld [vmem:[%s2 + $0xe0] sm:$0xf]
  %v5046 = vld [vmem:[%s2 + $0xe4] sm:$0xf]
  %v5047 = vld [vmem:[%s2 + $0xe8] sm:$0xf]
  %v5048 = vld [vmem:[%s2 + $0xec] sm:$0xf]
  %v5049 = vld [vmem:[%s2 + $0xf0] sm:$0xf]
  %v5050 = vld [vmem:[%s2 + $0xf4] sm:$0xf]
  %v5051 = vld [vmem:[%s2 + $0xf8] sm:$0xf]
  %v5052 = vld [vmem:[%s2 + $0xfc] sm:$0xf]
  %v5117 = vunpack.c.l.b16 %v4989
  %v5118 = vunpack.c.l.b16 %v4990
  %v5119 = vunpack.c.l.b16 %v4991
  %v5120 = vunpack.c.l.b16 %v4992
  %v5121 = vunpack.c.l.b16 %v4993
  %v5122 = vunpack.c.l.b16 %v4994
  %v5123 = vunpack.c.l.b16 %v4995
  %v5124 = vunpack.c.l.b16 %v4996
  %v5125 = vunpack.c.l.b16 %v4997
  %v5126 = vunpack.c.l.b16 %v4998
  %v5127 = vunpack.c.l.b16 %v4999
  %v5128 = vunpack.c.l.b16 %v5000
  %v5129 = vunpack.c.l.b16 %v5001
  %v5130 = vunpack.c.l.b16 %v5002
  %v5131 = vunpack.c.l.b16 %v5003
  %v5132 = vunpack.c.l.b16 %v5004
  %v5133 = vunpack.c.l.b16 %v5005
  %v5134 = vunpack.c.l.b16 %v5006
  %v5135 = vunpack.c.l.b16 %v5007
  %v5136 = vunpack.c.l.b16 %v5008
  %v5137 = vunpack.c.l.b16 %v5009
  %v5138 = vunpack.c.l.b16 %v5010
  %v5139 = vunpack.c.l.b16 %v5011
  %v5140 = vunpack.c.l.b16 %v5012
  %v5141 = vunpack.c.l.b16 %v5013
  %v5142 = vunpack.c.l.b16 %v5014
  %v5143 = vunpack.c.l.b16 %v5015
  %v5144 = vunpack.c.l.b16 %v5016
  %v5145 = vunpack.c.l.b16 %v5017
  %v5146 = vunpack.c.l.b16 %v5018
  %v5147 = vunpack.c.l.b16 %v5019
  %v5148 = vunpack.c.l.b16 %v5020
  %v5149 = vunpack.c.l.b16 %v5021
  %v5150 = vunpack.c.l.b16 %v5022
  %v5151 = vunpack.c.l.b16 %v5023
  %v5152 = vunpack.c.l.b16 %v5024
  %v5153 = vunpack.c.l.b16 %v5025
  %v5154 = vunpack.c.l.b16 %v5026
  %v5155 = vunpack.c.l.b16 %v5027
  %v5156 = vunpack.c.l.b16 %v5028
  %v5157 = vunpack.c.l.b16 %v5029
  %v5158 = vunpack.c.l.b16 %v5030
  %v5159 = vunpack.c.l.b16 %v5031
  %v5160 = vunpack.c.l.b16 %v5032
  %v5161 = vunpack.c.l.b16 %v5033
  %v5162 = vunpack.c.l.b16 %v5034
  %v5163 = vunpack.c.l.b16 %v5035
  %v5164 = vunpack.c.l.b16 %v5036
  %v5165 = vunpack.c.l.b16 %v5037
  %v5166 = vunpack.c.l.b16 %v5038
  %v5167 = vunpack.c.l.b16 %v5039
  %v5168 = vunpack.c.l.b16 %v5040
  %v5169 = vunpack.c.l.b16 %v5041
  %v5170 = vunpack.c.l.b16 %v5042
  %v5171 = vunpack.c.l.b16 %v5043
  %v5172 = vunpack.c.l.b16 %v5044
  %v5173 = vunpack.c.l.b16 %v5045
  %v5174 = vunpack.c.l.b16 %v5046
  %v5175 = vunpack.c.l.b16 %v5047
  %v5176 = vunpack.c.l.b16 %v5048
  %v5177 = vunpack.c.l.b16 %v5049
  %v5178 = vunpack.c.l.b16 %v5050
  %v5179 = vunpack.c.l.b16 %v5051
  %v5180 = vunpack.c.l.b16 %v5052
  %v5181 = vpack.c.b16 %v5118, %v5117
  %v5182 = vpack.c.b16 %v5120, %v5119
  %v5183 = vpack.c.b16 %v5122, %v5121
  %v5184 = vpack.c.b16 %v5124, %v5123
  %v5185 = vpack.c.b16 %v5126, %v5125
  %v5186 = vpack.c.b16 %v5128, %v5127
  %v5187 = vpack.c.b16 %v5130, %v5129
  %v5188 = vpack.c.b16 %v5132, %v5131
  %v5189 = vpack.c.b16 %v5134, %v5133
  %v5190 = vpack.c.b16 %v5136, %v5135
  %v5191 = vpack.c.b16 %v5138, %v5137
  %v5192 = vpack.c.b16 %v5140, %v5139
  %v5193 = vpack.c.b16 %v5142, %v5141
  %v5194 = vpack.c.b16 %v5144, %v5143
  %v5195 = vpack.c.b16 %v5146, %v5145
  %v5196 = vpack.c.b16 %v5148, %v5147
  %v5197 = vpack.c.b16 %v5150, %v5149
  %v5198 = vpack.c.b16 %v5152, %v5151
  %v5199 = vpack.c.b16 %v5154, %v5153
  %v5200 = vpack.c.b16 %v5156, %v5155
  %v5201 = vpack.c.b16 %v5158, %v5157
  %v5202 = vpack.c.b16 %v5160, %v5159
  %v5203 = vpack.c.b16 %v5162, %v5161
  %v5204 = vpack.c.b16 %v5164, %v5163
  %v5205 = vpack.c.b16 %v5166, %v5165
  %v5206 = vpack.c.b16 %v5168, %v5167
  %v5207 = vpack.c.b16 %v5170, %v5169
  %v5208 = vpack.c.b16 %v5172, %v5171
  %v5209 = vpack.c.b16 %v5174, %v5173
  %v5210 = vpack.c.b16 %v5176, %v5175
  %v5211 = vpack.c.b16 %v5178, %v5177
  %v5212 = vpack.c.b16 %v5180, %v5179
  %5245 = vmatprep.subr.bf16.mxu0 0
  %5246 = vmatpush1.bf16.msra.mxu0 %v5181
  %5247 = vmatprep.subr.bf16.mxu0 0
  %5248 = vmatpush1.bf16.msra.mxu0 %v5182
  %5249 = vmatprep.subr.bf16.mxu0 0
  %5250 = vmatpush1.bf16.msra.mxu0 %v5183
  %5251 = vmatprep.subr.bf16.mxu0 0
  %5252 = vmatpush1.bf16.msra.mxu0 %v5184
  %5253 = vmatprep.subr.bf16.mxu0 0
  %5254 = vmatpush1.bf16.msra.mxu0 %v5185
  %5255 = vmatprep.subr.bf16.mxu0 0
  %5256 = vmatpush1.bf16.msra.mxu0 %v5186
  %5257 = vmatprep.subr.bf16.mxu0 0
  %5258 = vmatpush1.bf16.msra.mxu0 %v5187
  %5259 = vmatprep.subr.bf16.mxu0 0
  %5260 = vmatpush1.bf16.msra.mxu0 %v5188
  %5261 = vmatprep.subr.bf16.mxu0 0
  %5262 = vmatpush1.bf16.msra.mxu0 %v5189
  %5263 = vmatprep.subr.bf16.mxu0 0
  %5264 = vmatpush1.bf16.msra.mxu0 %v5190
  %5265 = vmatprep.subr.bf16.mxu0 0
  %5266 = vmatpush1.bf16.msra.mxu0 %v5191
  %5267 = vmatprep.subr.bf16.mxu0 0
  %5268 = vmatpush1.bf16.msra.mxu0 %v5192
  %5269 = vmatprep.subr.bf16.mxu0 0
  %5270 = vmatpush1.bf16.msra.mxu0 %v5193
  %5271 = vmatprep.subr.bf16.mxu0 0
  %5272 = vmatpush1.bf16.msra.mxu0 %v5194
  %5273 = vmatprep.subr.bf16.mxu0 0
  %5274 = vmatpush1.bf16.msra.mxu0 %v5195
  %5275 = vmatprep.subr.bf16.mxu0 0
  %5276 = vmatpush1.bf16.msra.mxu0 %v5196
  %5277 = vmatprep.mubr.bf16.mxu0 %v4939
  %5278 = vmatmul.mubr.bf16.gmra.mrb[0].mxu0 %v4907
  %v5279 = vpop.f32.mrb[0].mxu0
  %v5280 = vadd.f32 0.0, %v5279
  %v5281 = vpop.f32.mrb[0].mxu0
  %v5282 = vpop.f32.mrb[0].mxu0
  %v5283 = vadd.f32 0.0, %v5282
  %v5284 = vpop.f32.mrb[0].mxu0
  %5285 = vmatprep.mubr.bf16.mxu0 %v4940
  %5286 = vmatmul.mubr.bf16.gmra.mrb[0].mxu0 %v4908
  %v5287 = vpop.f32.mrb[0].mxu0
  %v5288 = vadd.f32 0.0, %v5287
  %v5289 = vpop.f32.mrb[0].mxu0
  %v5290 = vpop.f32.mrb[0].mxu0
  %v5291 = vadd.f32 0.0, %v5290
  %v5292 = vpop.f32.mrb[0].mxu0
  %5293 = vmatprep.mubr.bf16.mxu0 %v4941
  %5294 = vmatmul.mubr.bf16.gmra.mrb[0].mxu0 %v4909
  %v5295 = vpop.f32.mrb[0].mxu0
  %v5296 = vadd.f32 0.0, %v5295
  %v5297 = vpop.f32.mrb[0].mxu0
  %v5298 = vpop.f32.mrb[0].mxu0
  %v5299 = vadd.f32 0.0, %v5298
  %v5300 = vpop.f32.mrb[0].mxu0
  %5301 = vmatprep.mubr.bf16.mxu0 %v4942
  %5302 = vmatmul.mubr.bf16.gmra.mrb[0].mxu0 %v4910
  %v5303 = vpop.f32.mrb[0].mxu0
  %v5304 = vadd.f32 0.0, %v5303
  %v5305 = vpop.f32.mrb[0].mxu0
  %v5306 = vpop.f32.mrb[0].mxu0
  %v5307 = vadd.f32 0.0, %v5306
  %v5308 = vpop.f32.mrb[0].mxu0
  %5309 = vmatprep.mubr.bf16.mxu0 %v4943
  %5310 = vmatmul.mubr.bf16.gmra.mrb[0].mxu0 %v4911
  %v5311 = vpop.f32.mrb[0].mxu0
  %v5312 = vadd.f32 0.0, %v5311
  %v5313 = vpop.f32.mrb[0].mxu0
  %v5314 = vpop.f32.mrb[0].mxu0
  %v5315 = vadd.f32 0.0, %v5314
  %v5316 = vpop.f32.mrb[0].mxu0
  %5317 = vmatprep.mubr.bf16.mxu0 %v4944
  %5318 = vmatmul.mubr.bf16.gmra.mrb[0].mxu0 %v4912
  %v5319 = vpop.f32.mrb[0].mxu0
  %v5320 = vadd.f32 0.0, %v5319
  %v5321 = vpop.f32.mrb[0].mxu0
  %v5322 = vpop.f32.mrb[0].mxu0
  %v5323 = vadd.f32 0.0, %v5322
  %v5324 = vpop.f32.mrb[0].mxu0
  %5325 = vmatprep.mubr.bf16.mxu0 %v4945
  %5326 = vmatmul.mubr.bf16.gmra.mrb[0].mxu0 %v4913
  %v5327 = vpop.f32.mrb[0].mxu0
  %v5328 = vadd.f32 0.0, %v5327
  %v5329 = vpop.f32.mrb[0].mxu0
  %v5330 = vpop.f32.mrb[0].mxu0
  %v5331 = vadd.f32 0.0, %v5330
  %v5332 = vpop.f32.mrb[0].mxu0
  %5333 = vmatprep.mubr.bf16.mxu0 %v4946
  %5334 = vmatmul.mubr.bf16.gmra.mrb[0].mxu0 %v4914
  %v5335 = vpop.f32.mrb[0].mxu0
  %v5336 = vadd.f32 0.0, %v5335
  %v5337 = vpop.f32.mrb[0].mxu0
  %v5338 = vpop.f32.mrb[0].mxu0
  %v5339 = vadd.f32 0.0, %v5338
  %v5340 = vpop.f32.mrb[0].mxu0
  %5341 = vdwg.mxu0
  %5342 = vmatprep.subr.bf16.mxu0 0
  %5343 = vmatpush1.bf16.msra.mxu0 %v5197
  %5344 = vmatprep.subr.bf16.mxu0 0
  %5345 = vmatpush1.bf16.msra.mxu0 %v5198
  %5346 = vmatprep.subr.bf16.mxu0 0
  %5347 = vmatpush1.bf16.msra.mxu0 %v5199
  %5348 = vmatprep.subr.bf16.mxu0 0
  %5349 = vmatpush1.bf16.msra.mxu0 %v5200
  %5350 = vmatprep.subr.bf16.mxu0 0
  %5351 = vmatpush1.bf16.msra.mxu0 %v5201
  %5352 = vmatprep.subr.bf16.mxu0 0
  %5353 = vmatpush1.bf16.msra.mxu0 %v5202
  %5354 = vmatprep.subr.bf16.mxu0 0
  %5355 = vmatpush1.bf16.msra.mxu0 %v5203
  %5356 = vmatprep.subr.bf16.mxu0 0
  %5357 = vmatpush1.bf16.msra.mxu0 %v5204
  %5358 = vmatprep.subr.bf16.mxu0 0
  %5359 = vmatpush1.bf16.msra.mxu0 %v5205
  %5360 = vmatprep.subr.bf16.mxu0 0
  %5361 = vmatpush1.bf16.msra.mxu0 %v5206
  %5362 = vmatprep.subr.bf16.mxu0 0
  %5363 = vmatpush1.bf16.msra.mxu0 %v5207
  %5364 = vmatprep.subr.bf16.mxu0 0
  %5365 = vmatpush1.bf16.msra.mxu0 %v5208
  %5366 = vmatprep.subr.bf16.mxu0 0
  %5367 = vmatpush1.bf16.msra.mxu0 %v5209
  %5368 = vmatprep.subr.bf16.mxu0 0
  %5369 = vmatpush1.bf16.msra.mxu0 %v5210
  %5370 = vmatprep.subr.bf16.mxu0 0
  %5371 = vmatpush1.bf16.msra.mxu0 %v5211
  %5372 = vmatprep.subr.bf16.mxu0 0
  %5373 = vmatpush1.bf16.msra.mxu0 %v5212
  %5374 = vmatprep.mubr.bf16.mxu0 %v4973
  %5375 = vmatmul.mubr.bf16.gmra.mrb[0].mxu0 %v4955
  %v5376 = vpop.f32.mrb[0].mxu0
  %v5377 = vadd.f32 %v5280, %v5376
  %v5378 = vpop.f32.mrb[0].mxu0
  %v5379 = vpop.f32.mrb[0].mxu0
  %v5380 = vadd.f32 %v5283, %v5379
  %v5381 = vpop.f32.mrb[0].mxu0
  %5382 = vmatprep.mubr.bf16.mxu0 %v4974
  %5383 = vmatmul.mubr.bf16.gmra.mrb[0].mxu0 %v4956
  %v5384 = vpop.f32.mrb[0].mxu0
  %v5385 = vadd.f32 %v5288, %v5384
  %v5386 = vpop.f32.mrb[0].mxu0
  %v5387 = vpop.f32.mrb[0].mxu0
  %v5388 = vadd.f32 %v5291, %v5387
  %v5389 = vpop.f32.mrb[0].mxu0
  %5390 = vmatprep.mubr.bf16.mxu0 %v4975
  %5391 = vmatmul.mubr.bf16.gmra.mrb[0].mxu0 %v4957
  %v5392 = vpop.f32.mrb[0].mxu0
  %v5393 = vadd.f32 %v5296, %v5392
  %v5394 = vpop.f32.mrb[0].mxu0
  %v5395 = vpop.f32.mrb[0].mxu0
  %v5396 = vadd.f32 %v5299, %v5395
  %v5397 = vpop.f32.mrb[0].mxu0
  %5398 = vmatprep.mubr.bf16.mxu0 %v4976
  %5399 = vmatmul.mubr.bf16.gmra.mrb[0].mxu0 %v4958
  %v5400 = vpop.f32.mrb[0].mxu0
  %v5401 = vadd.f32 %v5304, %v5400
  %v5402 = vpop.f32.mrb[0].mxu0
  %v5403 = vpop.f32.mrb[0].mxu0
  %v5404 = vadd.f32 %v5307, %v5403
  %v5405 = vpop.f32.mrb[0].mxu0
  %5406 = vmatprep.mubr.bf16.mxu0 %v4977
  %5407 = vmatmul.mubr.bf16.gmra.mrb[0].mxu0 %v4959
  %v5408 = vpop.f32.mrb[0].mxu0
  %v5409 = vadd.f32 %v5312, %v5408
  %v5410 = vpop.f32.mrb[0].mxu0
  %v5411 = vpop.f32.mrb[0].mxu0
  %v5412 = vadd.f32 %v5315, %v5411
  %v5413 = vpop.f32.mrb[0].mxu0
  %5414 = vmatprep.mubr.bf16.mxu0 %v4978
  %5415 = vmatmul.mubr.bf16.gmra.mrb[0].mxu0 %v4960
  %v5416 = vpop.f32.mrb[0].mxu0
  %v5417 = vadd.f32 %v5320, %v5416
  %v5418 = vpop.f32.mrb[0].mxu0
  %v5419 = vpop.f32.mrb[0].mxu0
  %v5420 = vadd.f32 %v5323, %v5419
  %v5421 = vpop.f32.mrb[0].mxu0
  %5422 = vmatprep.mubr.bf16.mxu0 %v4979
  %5423 = vmatmul.mubr.bf16.gmra.mrb[0].mxu0 %v4961
  %v5424 = vpop.f32.mrb[0].mxu0
  %v5425 = vadd.f32 %v5328, %v5424
  %v5426 = vpop.f32.mrb[0].mxu0
  %v5427 = vpop.f32.mrb[0].mxu0
  %v5428 = vadd.f32 %v5331, %v5427
  %v5429 = vpop.f32.mrb[0].mxu0
  %5430 = vmatprep.mubr.bf16.mxu0 %v4980
  %5431 = vmatmul.mubr.bf16.gmra.mrb[0].mxu0 %v4962
  %v5432 = vpop.f32.mrb[0].mxu0
  %v5433 = vadd.f32 %v5336, %v5432
  %v5434 = vpop.f32.mrb[0].mxu0
  %v5435 = vpop.f32.mrb[0].mxu0
  %v5436 = vadd.f32 %v5339, %v5435
  %v5437 = vpop.f32.mrb[0].mxu0
  %5438 = vdwg.mxu0
  %5439 = vst [vmem:[%s3] sm:$0xff] %v5377
  %5440 = vst [vmem:[%s3 + $0x8] sm:$0xff] %v5380
  %5441 = vst [vmem:[%s3 + $0x10] sm:$0xff] %v5385
  %5442 = vst [vmem:[%s3 + $0x18] sm:$0xff] %v5388
  %5443 = vst [vmem:[%s3 + $0x20] sm:$0xff] %v5393
  %5444 = vst [vmem:[%s3 + $0x28] sm:$0xff] %v5396
  %5445 = vst [vmem:[%s3 + $0x30] sm:$0xff] %v5401
  %5446 = vst [vmem:[%s3 + $0x38] sm:$0xff] %v5404
  %5447 = vst [vmem:[%s3 + $0x40] sm:$0xff] %v5409
  %5448 = vst [vmem:[%s3 + $0x48] sm:$0xff] %v5412
  %5449 = vst [vmem:[%s3 + $0x50] sm:$0xff] %v5417
  %5450 = vst [vmem:[%s3 + $0x58] sm:$0xff] %v5420
  %5451 = vst [vmem:[%s3 + $0x60] sm:$0xff] %v5425
  %5452 = vst [vmem:[%s3 + $0x68] sm:$0xff] %v5428
  %5453 = vst [vmem:[%s3 + $0x70] sm:$0xff] %v5433
  %5454 = vst [vmem:[%s3 + $0x78] sm:$0xff] %v5436
  %v5455 = vadd.f32 %v5377, %v5380
  %v5456 = vadd.f32 %v5455, %v5385
  %v5457 = vadd.f32 %v5456, %v5388
  %v5458 = vadd.f32 %v5457, %v5393
  %v5459 = vadd.f32 %v5458, %v5396
  %v5460 = vadd.f32 %v5459, %v5401
  %v5461 = vadd.f32 %v5460, %v5404
  %v5462 = vadd.f32 %v5461, %v5409
  %v5463 = vadd.f32 %v5462, %v5412
  %v5464 = vadd.f32 %v5463, %v5417
  %v5465 = vadd.f32 %v5464, %v5420
  %v5466 = vadd.f32 %v5465, %v5425
  %v5467 = vadd.f32 %v5466, %v5428
  %v5468 = vadd.f32 %v5467, %v5433
  %v5469 = vadd.f32 %v5468, %v5436
  %v5470 = vrot.slane %v5469, 4
  %v5471 = vadd.f32 %v5469, %v5470
  %v5472 = vrot.slane %v5471, 2
  %v5473 = vadd.f32 %v5471, %v5472
  %v5474 = vrot.slane %v5473, 1
  %v5475 = vadd.f32 %v5473, %v5474
  %v5476 = vadd.f32 %v5475, 0.0
  %v5477 = vmul.f32 %v5377, %v5377
  %v5478 = vmul.f32 %v5380, %v5380
  %v5479 = vmul.f32 %v5385, %v5385
  %v5480 = vmul.f32 %v5388, %v5388
  %v5481 = vmul.f32 %v5393, %v5393
  %v5482 = vmul.f32 %v5396, %v5396
  %v5483 = vmul.f32 %v5401, %v5401
  %v5484 = vmul.f32 %v5404, %v5404
  %v5485 = vmul.f32 %v5409, %v5409
  %v5486 = vmul.f32 %v5412, %v5412
  %v5487 = vmul.f32 %v5417, %v5417
  %v5488 = vmul.f32 %v5420, %v5420
  %v5489 = vmul.f32 %v5425, %v5425
  %v5490 = vmul.f32 %v5428, %v5428
  %v5491 = vmul.f32 %v5433, %v5433
  %v5492 = vmul.f32 %v5436, %v5436
  %v5493 = vadd.f32 %v5477, %v5478
  %v5494 = vadd.f32 %v5493, %v5479
  %v5495 = vadd.f32 %v5494, %v5480
  %v5496 = vadd.f32 %v5495, %v5481
  %v5497 = vadd.f32 %v5496, %v5482
  %v5498 = vadd.f32 %v5497, %v5483
  %v5499 = vadd.f32 %v5498, %v5484
  %v5500 = vadd.f32 %v5499, %v5485
  %v5501 = vadd.f32 %v5500, %v5486
  %v5502 = vadd.f32 %v5501, %v5487
  %v5503 = vadd.f32 %v5502, %v5488
  %v5504 = vadd.f32 %v5503, %v5489
  %v5505 = vadd.f32 %v5504, %v5490
  %v5506 = vadd.f32 %v5505, %v5491
  %v5507 = vadd.f32 %v5506, %v5492
  %v5508 = vrot.slane %v5507, 4
  %v5509 = vadd.f32 %v5507, %v5508
  %v5510 = vrot.slane %v5509, 2
  %v5511 = vadd.f32 %v5509, %v5510
  %v5512 = vrot.slane %v5511, 1
  %v5513 = vadd.f32 %v5511, %v5512
  %v5514 = vadd.f32 %v5513, 0.0
  %vm5515 = vcmask 1042432
  %vm5516 = vcmask 1046532
  %vm5517 = vmor %vm5515, %vm5516
  %v5518 = vrot.slane %v4613, 5
  %v5519 = vrot.slane %v5518, 4
  %v5520 = vrot.slane %v4614, 5
  %v5521 = vsel %vm5517, %v5519, %v5520
  %v5522 = vrot.slane %v4615, 5
  %v5523 = vrot.slane %v5522, 4
  %v5524 = vrot.slane %v4616, 5
  %v5525 = vsel %vm5517, %v5523, %v5524
  %v5526 = vrot.slane %v4617, 5
  %v5527 = vrot.slane %v5526, 4
  %v5528 = vrot.slane %v4618, 5
  %v5529 = vsel %vm5517, %v5527, %v5528
  %v5530 = vrot.slane %v4619, 5
  %v5531 = vrot.slane %v5530, 4
  %v5532 = vrot.slane %v4620, 5
  %v5533 = vsel %vm5517, %v5531, %v5532
  %v5534 = vrot.slane %v4621, 5
  %v5535 = vrot.slane %v5534, 4
  %v5536 = vrot.slane %v4622, 5
  %v5537 = vsel %vm5517, %v5535, %v5536
  %v5538 = vrot.slane %v4623, 5
  %v5539 = vrot.slane %v5538, 4
  %v5540 = vrot.slane %v4624, 5
  %v5541 = vsel %vm5517, %v5539, %v5540
  %v5542 = vrot.slane %v4625, 5
  %v5543 = vrot.slane %v5542, 4
  %v5544 = vrot.slane %v4626, 5
  %v5545 = vsel %vm5517, %v5543, %v5544
  %v5546 = vrot.slane %v4627, 5
  %v5547 = vrot.slane %v5546, 4
  %v5548 = vrot.slane %v4628, 5
  %v5549 = vsel %vm5517, %v5547, %v5548
  %v5550 = vrot.slane %v4629, 5
  %v5551 = vrot.slane %v5550, 4
  %v5552 = vrot.slane %v4630, 5
  %v5553 = vsel %vm5517, %v5551, %v5552
  %v5554 = vrot.slane %v4631, 5
  %v5555 = vrot.slane %v5554, 4
  %v5556 = vrot.slane %v4632, 5
  %v5557 = vsel %vm5517, %v5555, %v5556
  %v5558 = vrot.slane %v4633, 5
  %v5559 = vrot.slane %v5558, 4
  %v5560 = vrot.slane %v4634, 5
  %v5561 = vsel %vm5517, %v5559, %v5560
  %v5562 = vrot.slane %v4635, 5
  %v5563 = vrot.slane %v5562, 4
  %v5564 = vrot.slane %v4636, 5
  %v5565 = vsel %vm5517, %v5563, %v5564
  %v5566 = vrot.slane %v4637, 5
  %v5567 = vrot.slane %v5566, 4
  %v5568 = vrot.slane %v4638, 5
  %v5569 = vsel %vm5517, %v5567, %v5568
  %v5570 = vrot.slane %v4639, 5
  %v5571 = vrot.slane %v5570, 4
  %v5572 = vrot.slane %v4640, 5
  %v5573 = vsel %vm5517, %v5571, %v5572
  %v5574 = vrot.slane %v4641, 5
  %v5575 = vrot.slane %v5574, 4
  %v5576 = vrot.slane %v4642, 5
  %v5577 = vsel %vm5517, %v5575, %v5576
  %v5578 = vrot.slane %v4643, 5
  %v5579 = vrot.slane %v5578, 4
  %v5580 = vrot.slane %v4644, 5
  %v5581 = vsel %vm5517, %v5579, %v5580
  %v5582 = vrot.slane %v4875, 5
  %v5583 = vrot.slane %v5582, 4
  %v5584 = vrot.slane %v4876, 5
  %v5585 = vsel %vm5517, %v5583, %v5584
  %v5586 = vrot.slane %v4877, 5
  %v5587 = vrot.slane %v5586, 4
  %v5588 = vrot.slane %v4878, 5
  %v5589 = vsel %vm5517, %v5587, %v5588
  %v5590 = vunpack.c.l.b16 %v5521
  %v5591 = vunpack.c.l.b16 %v5525
  %v5592 = vunpack.c.l.b16 %v5529
  %v5593 = vunpack.c.l.b16 %v5533
  %v5594 = vunpack.c.l.b16 %v5537
  %v5595 = vunpack.c.l.b16 %v5541
  %v5596 = vunpack.c.l.b16 %v5545
  %v5597 = vunpack.c.l.b16 %v5549
  %v5598 = vunpack.c.l.b16 %v5553
  %v5599 = vunpack.c.l.b16 %v5557
  %v5600 = vunpack.c.l.b16 %v5561
  %v5601 = vunpack.c.l.b16 %v5565
  %v5602 = vunpack.c.l.b16 %v5569
  %v5603 = vunpack.c.l.b16 %v5573
  %v5604 = vunpack.c.l.b16 %v5577
  %v5605 = vunpack.c.l.b16 %v5581
  %v5606 = vpack.c.b16 %v5591, %v5590
  %v5607 = vpack.c.b16 %v5593, %v5592
  %v5608 = vpack.c.b16 %v5595, %v5594
  %v5609 = vpack.c.b16 %v5597, %v5596
  %v5610 = vpack.c.b16 %v5599, %v5598
  %v5611 = vpack.c.b16 %v5601, %v5600
  %v5612 = vpack.c.b16 %v5603, %v5602
  %v5613 = vpack.c.b16 %v5605, %v5604
  %v5622 = vunpack.c.l.b16 %v5585
  %v5623 = vunpack.c.l.b16 %v5589
  %v5624 = vpack.c.b16 %v5592, %v5591
  %v5625 = vpack.c.b16 %v5594, %v5593
  %v5626 = vpack.c.b16 %v5596, %v5595
  %v5627 = vpack.c.b16 %v5622, %v5597
  %v5628 = vpack.c.b16 %v5600, %v5599
  %v5629 = vpack.c.b16 %v5602, %v5601
  %v5630 = vpack.c.b16 %v5604, %v5603
  %v5631 = vpack.c.b16 %v5623, %v5605
  %s5640 = scalar_lea.vmem %s2, 256
  %v5641 = vld [vmem:[%s5640] sm:$0xf]
  %v5642 = vld [vmem:[%s5640 + $0x4] sm:$0xf]
  %v5643 = vld [vmem:[%s5640 + $0x8] sm:$0xf]
  %v5644 = vld [vmem:[%s5640 + $0xc] sm:$0xf]
  %v5645 = vld [vmem:[%s5640 + $0x10] sm:$0xf]
  %v5646 = vld [vmem:[%s5640 + $0x14] sm:$0xf]
  %v5647 = vld [vmem:[%s5640 + $0x18] sm:$0xf]
  %v5648 = vld [vmem:[%s5640 + $0x1c] sm:$0xf]
  %v5649 = vld [vmem:[%s5640 + $0x20] sm:$0xf]
  %v5650 = vld [vmem:[%s5640 + $0x24] sm:$0xf]
  %v5651 = vld [vmem:[%s5640 + $0x28] sm:$0xf]
  %v5652 = vld [vmem:[%s5640 + $0x2c] sm:$0xf]
  %v5653 = vld [vmem:[%s5640 + $0x30] sm:$0xf]
  %v5654 = vld [vmem:[%s5640 + $0x34] sm:$0xf]
  %v5655 = vld [vmem:[%s5640 + $0x38] sm:$0xf]
  %v5656 = vld [vmem:[%s5640 + $0x3c] sm:$0xf]
  %v5657 = vld [vmem:[%s5640 + $0x40] sm:$0xf]
  %v5658 = vld [vmem:[%s5640 + $0x44] sm:$0xf]
  %v5659 = vld [vmem:[%s5640 + $0x48] sm:$0xf]
  %v5660 = vld [vmem:[%s5640 + $0x4c] sm:$0xf]
  %v5661 = vld [vmem:[%s5640 + $0x50] sm:$0xf]
  %v5662 = vld [vmem:[%s5640 + $0x54] sm:$0xf]
  %v5663 = vld [vmem:[%s5640 + $0x58] sm:$0xf]
  %v5664 = vld [vmem:[%s5640 + $0x5c] sm:$0xf]
  %v5665 = vld [vmem:[%s5640 + $0x60] sm:$0xf]
  %v5666 = vld [vmem:[%s5640 + $0x64] sm:$0xf]
  %v5667 = vld [vmem:[%s5640 + $0x68] sm:$0xf]
  %v5668 = vld [vmem:[%s5640 + $0x6c] sm:$0xf]
  %v5669 = vld [vmem:[%s5640 + $0x70] sm:$0xf]
  %v5670 = vld [vmem:[%s5640 + $0x74] sm:$0xf]
  %v5671 = vld [vmem:[%s5640 + $0x78] sm:$0xf]
  %v5672 = vld [vmem:[%s5640 + $0x7c] sm:$0xf]
  %v5673 = vld [vmem:[%s5640 + $0x80] sm:$0xf]
  %v5674 = vld [vmem:[%s5640 + $0x84] sm:$0xf]
  %v5675 = vld [vmem:[%s5640 + $0x88] sm:$0xf]
  %v5676 = vld [vmem:[%s5640 + $0x8c] sm:$0xf]
  %v5677 = vld [vmem:[%s5640 + $0x90] sm:$0xf]
  %v5678 = vld [vmem:[%s5640 + $0x94] sm:$0xf]
  %v5679 = vld [vmem:[%s5640 + $0x98] sm:$0xf]
  %v5680 = vld [vmem:[%s5640 + $0x9c] sm:$0xf]
  %v5681 = vld [vmem:[%s5640 + $0xa0] sm:$0xf]
  %v5682 = vld [vmem:[%s5640 + $0xa4] sm:$0xf]
  %v5683 = vld [vmem:[%s5640 + $0xa8] sm:$0xf]
  %v5684 = vld [vmem:[%s5640 + $0xac] sm:$0xf]
  %v5685 = vld [vmem:[%s5640 + $0xb0] sm:$0xf]
  %v5686 = vld [vmem:[%s5640 + $0xb4] sm:$0xf]
  %v5687 = vld [vmem:[%s5640 + $0xb8] sm:$0xf]
  %v5688 = vld [vmem:[%s5640 + $0xbc] sm:$0xf]
  %v5689 = vld [vmem:[%s5640 + $0xc0] sm:$0xf]
  %v5690 = vld [vmem:[%s5640 + $0xc4] sm:$0xf]
  %v5691 = vld [vmem:[%s5640 + $0xc8] sm:$0xf]
  %v5692 = vld [vmem:[%s5640 + $0xcc] sm:$0xf]
  %v5693 = vld [vmem:[%s5640 + $0xd0] sm:$0xf]
  %v5694 = vld [vmem:[%s5640 + $0xd4] sm:$0xf]
  %v5695 = vld [vmem:[%s5640 + $0xd8] sm:$0xf]
  %v5696 = vld [vmem:[%s5640 + $0xdc] sm:$0xf]
  %v5697 = vld [vmem:[%s5640 + $0xe0] sm:$0xf]
  %v5698 = vld [vmem:[%s5640 + $0xe4] sm:$0xf]
  %v5699 = vld [vmem:[%s5640 + $0xe8] sm:$0xf]
  %v5700 = vld [vmem:[%s5640 + $0xec] sm:$0xf]
  %v5701 = vld [vmem:[%s5640 + $0xf0] sm:$0xf]
  %v5702 = vld [vmem:[%s5640 + $0xf4] sm:$0xf]
  %v5703 = vld [vmem:[%s5640 + $0xf8] sm:$0xf]
  %v5704 = vld [vmem:[%s5640 + $0xfc] sm:$0xf]
  %v5769 = vunpack.c.l.b16 %v5641
  %v5770 = vunpack.c.l.b16 %v5642
  %v5771 = vunpack.c.l.b16 %v5643
  %v5772 = vunpack.c.l.b16 %v5644
  %v5773 = vunpack.c.l.b16 %v5645
  %v5774 = vunpack.c.l.b16 %v5646
  %v5775 = vunpack.c.l.b16 %v5647
  %v5776 = vunpack.c.l.b16 %v5648
  %v5777 = vunpack.c.l.b16 %v5649
  %v5778 = vunpack.c.l.b16 %v5650
  %v5779 = vunpack.c.l.b16 %v5651
  %v5780 = vunpack.c.l.b16 %v5652
  %v5781 = vunpack.c.l.b16 %v5653
  %v5782 = vunpack.c.l.b16 %v5654
  %v5783 = vunpack.c.l.b16 %v5655
  %v5784 = vunpack.c.l.b16 %v5656
  %v5785 = vunpack.c.l.b16 %v5657
  %v5786 = vunpack.c.l.b16 %v5658
  %v5787 = vunpack.c.l.b16 %v5659
  %v5788 = vunpack.c.l.b16 %v5660
  %v5789 = vunpack.c.l.b16 %v5661
  %v5790 = vunpack.c.l.b16 %v5662
  %v5791 = vunpack.c.l.b16 %v5663
  %v5792 = vunpack.c.l.b16 %v5664
  %v5793 = vunpack.c.l.b16 %v5665
  %v5794 = vunpack.c.l.b16 %v5666
  %v5795 = vunpack.c.l.b16 %v5667
  %v5796 = vunpack.c.l.b16 %v5668
  %v5797 = vunpack.c.l.b16 %v5669
  %v5798 = vunpack.c.l.b16 %v5670
  %v5799 = vunpack.c.l.b16 %v5671
  %v5800 = vunpack.c.l.b16 %v5672
  %v5801 = vunpack.c.l.b16 %v5673
  %v5802 = vunpack.c.l.b16 %v5674
  %v5803 = vunpack.c.l.b16 %v5675
  %v5804 = vunpack.c.l.b16 %v5676
  %v5805 = vunpack.c.l.b16 %v5677
  %v5806 = vunpack.c.l.b16 %v5678
  %v5807 = vunpack.c.l.b16 %v5679
  %v5808 = vunpack.c.l.b16 %v5680
  %v5809 = vunpack.c.l.b16 %v5681
  %v5810 = vunpack.c.l.b16 %v5682
  %v5811 = vunpack.c.l.b16 %v5683
  %v5812 = vunpack.c.l.b16 %v5684
  %v5813 = vunpack.c.l.b16 %v5685
  %v5814 = vunpack.c.l.b16 %v5686
  %v5815 = vunpack.c.l.b16 %v5687
  %v5816 = vunpack.c.l.b16 %v5688
  %v5817 = vunpack.c.l.b16 %v5689
  %v5818 = vunpack.c.l.b16 %v5690
  %v5819 = vunpack.c.l.b16 %v5691
  %v5820 = vunpack.c.l.b16 %v5692
  %v5821 = vunpack.c.l.b16 %v5693
  %v5822 = vunpack.c.l.b16 %v5694
  %v5823 = vunpack.c.l.b16 %v5695
  %v5824 = vunpack.c.l.b16 %v5696
  %v5825 = vunpack.c.l.b16 %v5697
  %v5826 = vunpack.c.l.b16 %v5698
  %v5827 = vunpack.c.l.b16 %v5699
  %v5828 = vunpack.c.l.b16 %v5700
  %v5829 = vunpack.c.l.b16 %v5701
  %v5830 = vunpack.c.l.b16 %v5702
  %v5831 = vunpack.c.l.b16 %v5703
  %v5832 = vunpack.c.l.b16 %v5704
  %v5833 = vpack.c.b16 %v5770, %v5769
  %v5834 = vpack.c.b16 %v5772, %v5771
  %v5835 = vpack.c.b16 %v5774, %v5773
  %v5836 = vpack.c.b16 %v5776, %v5775
  %v5837 = vpack.c.b16 %v5778, %v5777
  %v5838 = vpack.c.b16 %v5780, %v5779
  %v5839 = vpack.c.b16 %v5782, %v5781
  %v5840 = vpack.c.b16 %v5784, %v5783
  %v5841 = vpack.c.b16 %v5786, %v5785
  %v5842 = vpack.c.b16 %v5788, %v5787
  %v5843 = vpack.c.b16 %v5790, %v5789
  %v5844 = vpack.c.b16 %v5792, %v5791
  %v5845 = vpack.c.b16 %v5794, %v5793
  %v5846 = vpack.c.b16 %v5796, %v5795
  %v5847 = vpack.c.b16 %v5798, %v5797
  %v5848 = vpack.c.b16 %v5800, %v5799
  %v5849 = vpack.c.b16 %v5802, %v5801
  %v5850 = vpack.c.b16 %v5804, %v5803
  %v5851 = vpack.c.b16 %v5806, %v5805
  %v5852 = vpack.c.b16 %v5808, %v5807
  %v5853 = vpack.c.b16 %v5810, %v5809
  %v5854 = vpack.c.b16 %v5812, %v5811
  %v5855 = vpack.c.b16 %v5814, %v5813
  %v5856 = vpack.c.b16 %v5816, %v5815
  %v5857 = vpack.c.b16 %v5818, %v5817
  %v5858 = vpack.c.b16 %v5820, %v5819
  %v5859 = vpack.c.b16 %v5822, %v5821
  %v5860 = vpack.c.b16 %v5824, %v5823
  %v5861 = vpack.c.b16 %v5826, %v5825
  %v5862 = vpack.c.b16 %v5828, %v5827
  %v5863 = vpack.c.b16 %v5830, %v5829
  %v5864 = vpack.c.b16 %v5832, %v5831
  %5897 = vmatprep.subr.bf16.mxu0 0
  %5898 = vmatpush1.bf16.msra.mxu0 %v5833
  %5899 = vmatprep.subr.bf16.mxu0 0
  %5900 = vmatpush1.bf16.msra.mxu0 %v5834
  %5901 = vmatprep.subr.bf16.mxu0 0
  %5902 = vmatpush1.bf16.msra.mxu0 %v5835
  %5903 = vmatprep.subr.bf16.mxu0 0
  %5904 = vmatpush1.bf16.msra.mxu0 %v5836
  %5905 = vmatprep.subr.bf16.mxu0 0
  %5906 = vmatpush1.bf16.msra.mxu0 %v5837
  %5907 = vmatprep.subr.bf16.mxu0 0
  %5908 = vmatpush1.bf16.msra.mxu0 %v5838
  %5909 = vmatprep.subr.bf16.mxu0 0
  %5910 = vmatpush1.bf16.msra.mxu0 %v5839
  %5911 = vmatprep.subr.bf16.mxu0 0
  %5912 = vmatpush1.bf16.msra.mxu0 %v5840
  %5913 = vmatprep.subr.bf16.mxu0 0
  %5914 = vmatpush1.bf16.msra.mxu0 %v5841
  %5915 = vmatprep.subr.bf16.mxu0 0
  %5916 = vmatpush1.bf16.msra.mxu0 %v5842
  %5917 = vmatprep.subr.bf16.mxu0 0
  %5918 = vmatpush1.bf16.msra.mxu0 %v5843
  %5919 = vmatprep.subr.bf16.mxu0 0
  %5920 = vmatpush1.bf16.msra.mxu0 %v5844
  %5921 = vmatprep.subr.bf16.mxu0 0
  %5922 = vmatpush1.bf16.msra.mxu0 %v5845
  %5923 = vmatprep.subr.bf16.mxu0 0
  %5924 = vmatpush1.bf16.msra.mxu0 %v5846
  %5925 = vmatprep.subr.bf16.mxu0 0
  %5926 = vmatpush1.bf16.msra.mxu0 %v5847
  %5927 = vmatprep.subr.bf16.mxu0 0
  %5928 = vmatpush1.bf16.msra.mxu0 %v5848
  %5929 = vmatprep.mubr.bf16.mxu0 %v5606
  %5930 = vmatmul.mubr.bf16.gmra.mrb[0].mxu0 %v4939
  %v5931 = vpop.f32.mrb[0].mxu0
  %v5932 = vadd.f32 0.0, %v5931
  %v5933 = vpop.f32.mrb[0].mxu0
  %v5934 = vpop.f32.mrb[0].mxu0
  %v5935 = vadd.f32 0.0, %v5934
  %v5936 = vpop.f32.mrb[0].mxu0
  %5937 = vmatprep.mubr.bf16.mxu0 %v5607
  %5938 = vmatmul.mubr.bf16.gmra.mrb[0].mxu0 %v4940
  %v5939 = vpop.f32.mrb[0].mxu0
  %v5940 = vadd.f32 0.0, %v5939
  %v5941 = vpop.f32.mrb[0].mxu0
  %v5942 = vpop.f32.mrb[0].mxu0
  %v5943 = vadd.f32 0.0, %v5942
  %v5944 = vpop.f32.mrb[0].mxu0
  %5945 = vmatprep.mubr.bf16.mxu0 %v5608
  %5946 = vmatmul.mubr.bf16.gmra.mrb[0].mxu0 %v4941
  %v5947 = vpop.f32.mrb[0].mxu0
  %v5948 = vadd.f32 0.0, %v5947
  %v5949 = vpop.f32.mrb[0].mxu0
  %v5950 = vpop.f32.mrb[0].mxu0
  %v5951 = vadd.f32 0.0, %v5950
  %v5952 = vpop.f32.mrb[0].mxu0
  %5953 = vmatprep.mubr.bf16.mxu0 %v5609
  %5954 = vmatmul.mubr.bf16.gmra.mrb[0].mxu0 %v4942
  %v5955 = vpop.f32.mrb[0].mxu0
  %v5956 = vadd.f32 0.0, %v5955
  %v5957 = vpop.f32.mrb[0].mxu0
  %v5958 = vpop.f32.mrb[0].mxu0
  %v5959 = vadd.f32 0.0, %v5958
  %v5960 = vpop.f32.mrb[0].mxu0
  %5961 = vmatprep.mubr.bf16.mxu0 %v5610
  %5962 = vmatmul.mubr.bf16.gmra.mrb[0].mxu0 %v4943
  %v5963 = vpop.f32.mrb[0].mxu0
  %v5964 = vadd.f32 0.0, %v5963
  %v5965 = vpop.f32.mrb[0].mxu0
  %v5966 = vpop.f32.mrb[0].mxu0
  %v5967 = vadd.f32 0.0, %v5966
  %v5968 = vpop.f32.mrb[0].mxu0
  %5969 = vmatprep.mubr.bf16.mxu0 %v5611
  %5970 = vmatmul.mubr.bf16.gmra.mrb[0].mxu0 %v4944
  %v5971 = vpop.f32.mrb[0].mxu0
  %v5972 = vadd.f32 0.0, %v5971
  %v5973 = vpop.f32.mrb[0].mxu0
  %v5974 = vpop.f32.mrb[0].mxu0
  %v5975 = vadd.f32 0.0, %v5974
  %v5976 = vpop.f32.mrb[0].mxu0
  %5977 = vmatprep.mubr.bf16.mxu0 %v5612
  %5978 = vmatmul.mubr.bf16.gmra.mrb[0].mxu0 %v4945
  %v5979 = vpop.f32.mrb[0].mxu0
  %v5980 = vadd.f32 0.0, %v5979
  %v5981 = vpop.f32.mrb[0].mxu0
  %v5982 = vpop.f32.mrb[0].mxu0
  %v5983 = vadd.f32 0.0, %v5982
  %v5984 = vpop.f32.mrb[0].mxu0
  %5985 = vmatprep.mubr.bf16.mxu0 %v5613
  %5986 = vmatmul.mubr.bf16.gmra.mrb[0].mxu0 %v4946
  %v5987 = vpop.f32.mrb[0].mxu0
  %v5988 = vadd.f32 0.0, %v5987
  %v5989 = vpop.f32.mrb[0].mxu0
  %v5990 = vpop.f32.mrb[0].mxu0
  %v5991 = vadd.f32 0.0, %v5990
  %v5992 = vpop.f32.mrb[0].mxu0
  %5993 = vdwg.mxu0
  %5994 = vmatprep.subr.bf16.mxu0 0
  %5995 = vmatpush1.bf16.msra.mxu0 %v5849
  %5996 = vmatprep.subr.bf16.mxu0 0
  %5997 = vmatpush1.bf16.msra.mxu0 %v5850
  %5998 = vmatprep.subr.bf16.mxu0 0
  %5999 = vmatpush1.bf16.msra.mxu0 %v5851
  %6000 = vmatprep.subr.bf16.mxu0 0
  %6001 = vmatpush1.bf16.msra.mxu0 %v5852
  %6002 = vmatprep.subr.bf16.mxu0 0
  %6003 = vmatpush1.bf16.msra.mxu0 %v5853
  %6004 = vmatprep.subr.bf16.mxu0 0
  %6005 = vmatpush1.bf16.msra.mxu0 %v5854
  %6006 = vmatprep.subr.bf16.mxu0 0
  %6007 = vmatpush1.bf16.msra.mxu0 %v5855
  %6008 = vmatprep.subr.bf16.mxu0 0
  %6009 = vmatpush1.bf16.msra.mxu0 %v5856
  %6010 = vmatprep.subr.bf16.mxu0 0
  %6011 = vmatpush1.bf16.msra.mxu0 %v5857
  %6012 = vmatprep.subr.bf16.mxu0 0
  %6013 = vmatpush1.bf16.msra.mxu0 %v5858
  %6014 = vmatprep.subr.bf16.mxu0 0
  %6015 = vmatpush1.bf16.msra.mxu0 %v5859
  %6016 = vmatprep.subr.bf16.mxu0 0
  %6017 = vmatpush1.bf16.msra.mxu0 %v5860
  %6018 = vmatprep.subr.bf16.mxu0 0
  %6019 = vmatpush1.bf16.msra.mxu0 %v5861
  %6020 = vmatprep.subr.bf16.mxu0 0
  %6021 = vmatpush1.bf16.msra.mxu0 %v5862
  %6022 = vmatprep.subr.bf16.mxu0 0
  %6023 = vmatpush1.bf16.msra.mxu0 %v5863
  %6024 = vmatprep.subr.bf16.mxu0 0
  %6025 = vmatpush1.bf16.msra.mxu0 %v5864
  %6026 = vmatprep.mubr.bf16.mxu0 %v5624
  %6027 = vmatmul.mubr.bf16.gmra.mrb[0].mxu0 %v4973
  %v6028 = vpop.f32.mrb[0].mxu0
  %v6029 = vadd.f32 %v5932, %v6028
  %v6030 = vpop.f32.mrb[0].mxu0
  %v6031 = vpop.f32.mrb[0].mxu0
  %v6032 = vadd.f32 %v5935, %v6031
  %v6033 = vpop.f32.mrb[0].mxu0
  %6034 = vmatprep.mubr.bf16.mxu0 %v5625
  %6035 = vmatmul.mubr.bf16.gmra.mrb[0].mxu0 %v4974
  %v6036 = vpop.f32.mrb[0].mxu0
  %v6037 = vadd.f32 %v5940, %v6036
  %v6038 = vpop.f32.mrb[0].mxu0
  %v6039 = vpop.f32.mrb[0].mxu0
  %v6040 = vadd.f32 %v5943, %v6039
  %v6041 = vpop.f32.mrb[0].mxu0
  %6042 = vmatprep.mubr.bf16.mxu0 %v5626
  %6043 = vmatmul.mubr.bf16.gmra.mrb[0].mxu0 %v4975
  %v6044 = vpop.f32.mrb[0].mxu0
  %v6045 = vadd.f32 %v5948, %v6044
  %v6046 = vpop.f32.mrb[0].mxu0
  %v6047 = vpop.f32.mrb[0].mxu0
  %v6048 = vadd.f32 %v5951, %v6047
  %v6049 = vpop.f32.mrb[0].mxu0
  %6050 = vmatprep.mubr.bf16.mxu0 %v5627
  %6051 = vmatmul.mubr.bf16.gmra.mrb[0].mxu0 %v4976
  %v6052 = vpop.f32.mrb[0].mxu0
  %v6053 = vadd.f32 %v5956, %v6052
  %v6054 = vpop.f32.mrb[0].mxu0
  %v6055 = vpop.f32.mrb[0].mxu0
  %v6056 = vadd.f32 %v5959, %v6055
  %v6057 = vpop.f32.mrb[0].mxu0
  %6058 = vmatprep.mubr.bf16.mxu0 %v5628
  %6059 = vmatmul.mubr.bf16.gmra.mrb[0].mxu0 %v4977
  %v6060 = vpop.f32.mrb[0].mxu0
  %v6061 = vadd.f32 %v5964, %v6060
  %v6062 = vpop.f32.mrb[0].mxu0
  %v6063 = vpop.f32.mrb[0].mxu0
  %v6064 = vadd.f32 %v5967, %v6063
  %v6065 = vpop.f32.mrb[0].mxu0
  %6066 = vmatprep.mubr.bf16.mxu0 %v5629
  %6067 = vmatmul.mubr.bf16.gmra.mrb[0].mxu0 %v4978
  %v6068 = vpop.f32.mrb[0].mxu0
  %v6069 = vadd.f32 %v5972, %v6068
  %v6070 = vpop.f32.mrb[0].mxu0
  %v6071 = vpop.f32.mrb[0].mxu0
  %v6072 = vadd.f32 %v5975, %v6071
  %v6073 = vpop.f32.mrb[0].mxu0
  %6074 = vmatprep.mubr.bf16.mxu0 %v5630
  %6075 = vmatmul.mubr.bf16.gmra.mrb[0].mxu0 %v4979
  %v6076 = vpop.f32.mrb[0].mxu0
  %v6077 = vadd.f32 %v5980, %v6076
  %v6078 = vpop.f32.mrb[0].mxu0
  %v6079 = vpop.f32.mrb[0].mxu0
  %v6080 = vadd.f32 %v5983, %v6079
  %v6081 = vpop.f32.mrb[0].mxu0
  %6082 = vmatprep.mubr.bf16.mxu0 %v5631
  %6083 = vmatmul.mubr.bf16.gmra.mrb[0].mxu0 %v4980
  %v6084 = vpop.f32.mrb[0].mxu0
  %v6085 = vadd.f32 %v5988, %v6084
  %v6086 = vpop.f32.mrb[0].mxu0
  %v6087 = vpop.f32.mrb[0].mxu0
  %v6088 = vadd.f32 %v5991, %v6087
  %v6089 = vpop.f32.mrb[0].mxu0
  %6090 = vdwg.mxu0
  %s6091 = scalar_lea.vmem %s3, 128
  %6092 = vst [vmem:[%s6091] sm:$0xff] %v6029
  %6093 = vst [vmem:[%s6091 + $0x8] sm:$0xff] %v6032
  %6094 = vst [vmem:[%s6091 + $0x10] sm:$0xff] %v6037
  %6095 = vst [vmem:[%s6091 + $0x18] sm:$0xff] %v6040
  %6096 = vst [vmem:[%s6091 + $0x20] sm:$0xff] %v6045
  %6097 = vst [vmem:[%s6091 + $0x28] sm:$0xff] %v6048
  %6098 = vst [vmem:[%s6091 + $0x30] sm:$0xff] %v6053
  %6099 = vst [vmem:[%s6091 + $0x38] sm:$0xff] %v6056
  %6100 = vst [vmem:[%s6091 + $0x40] sm:$0xff] %v6061
  %6101 = vst [vmem:[%s6091 + $0x48] sm:$0xff] %v6064
  %6102 = vst [vmem:[%s6091 + $0x50] sm:$0xff] %v6069
  %6103 = vst [vmem:[%s6091 + $0x58] sm:$0xff] %v6072
  %6104 = vst [vmem:[%s6091 + $0x60] sm:$0xff] %v6077
  %6105 = vst [vmem:[%s6091 + $0x68] sm:$0xff] %v6080
  %6106 = vst [vmem:[%s6091 + $0x70] sm:$0xff] %v6085
  %6107 = vst [vmem:[%s6091 + $0x78] sm:$0xff] %v6088
  %v6108 = vadd.f32 %v6029, %v6032
  %v6109 = vadd.f32 %v6108, %v6037
  %v6110 = vadd.f32 %v6109, %v6040
  %v6111 = vadd.f32 %v6110, %v6045
  %v6112 = vadd.f32 %v6111, %v6048
  %v6113 = vadd.f32 %v6112, %v6053
  %v6114 = vadd.f32 %v6113, %v6056
  %v6115 = vadd.f32 %v6114, %v6061
  %v6116 = vadd.f32 %v6115, %v6064
  %v6117 = vadd.f32 %v6116, %v6069
  %v6118 = vadd.f32 %v6117, %v6072
  %v6119 = vadd.f32 %v6118, %v6077
  %v6120 = vadd.f32 %v6119, %v6080
  %v6121 = vadd.f32 %v6120, %v6085
  %v6122 = vadd.f32 %v6121, %v6088
  %v6123 = vrot.slane %v6122, 4
  %v6124 = vadd.f32 %v6122, %v6123
  %v6125 = vrot.slane %v6124, 2
  %v6126 = vadd.f32 %v6124, %v6125
  %v6127 = vrot.slane %v6126, 1
  %v6128 = vadd.f32 %v6126, %v6127
  %v6129 = vadd.f32 %v5476, %v6128
  %v6130 = vmul.f32 %v6029, %v6029
  %v6131 = vmul.f32 %v6032, %v6032
  %v6132 = vmul.f32 %v6037, %v6037
  %v6133 = vmul.f32 %v6040, %v6040
  %v6134 = vmul.f32 %v6045, %v6045
  %v6135 = vmul.f32 %v6048, %v6048
  %v6136 = vmul.f32 %v6053, %v6053
  %v6137 = vmul.f32 %v6056, %v6056
  %v6138 = vmul.f32 %v6061, %v6061
  %v6139 = vmul.f32 %v6064, %v6064
  %v6140 = vmul.f32 %v6069, %v6069
  %v6141 = vmul.f32 %v6072, %v6072
  %v6142 = vmul.f32 %v6077, %v6077
  %v6143 = vmul.f32 %v6080, %v6080
  %v6144 = vmul.f32 %v6085, %v6085
  %v6145 = vmul.f32 %v6088, %v6088
  %v6146 = vadd.f32 %v6130, %v6131
  %v6147 = vadd.f32 %v6146, %v6132
  %v6148 = vadd.f32 %v6147, %v6133
  %v6149 = vadd.f32 %v6148, %v6134
  %v6150 = vadd.f32 %v6149, %v6135
  %v6151 = vadd.f32 %v6150, %v6136
  %v6152 = vadd.f32 %v6151, %v6137
  %v6153 = vadd.f32 %v6152, %v6138
  %v6154 = vadd.f32 %v6153, %v6139
  %v6155 = vadd.f32 %v6154, %v6140
  %v6156 = vadd.f32 %v6155, %v6141
  %v6157 = vadd.f32 %v6156, %v6142
  %v6158 = vadd.f32 %v6157, %v6143
  %v6159 = vadd.f32 %v6158, %v6144
  %v6160 = vadd.f32 %v6159, %v6145
  %v6161 = vrot.slane %v6160, 4
  %v6162 = vadd.f32 %v6160, %v6161
  %v6163 = vrot.slane %v6162, 2
  %v6164 = vadd.f32 %v6162, %v6163
  %v6165 = vrot.slane %v6164, 1
  %v6166 = vadd.f32 %v6164, %v6165
  %v6167 = vadd.f32 %v5514, %v6166
  %v6170 = vunpack.c.l.b16 %v4554
  %v6171 = vunpack.c.h.b16 %v4554
  %v6172 = vunpack.c.l.b16 %v4564
  %v6173 = vunpack.c.h.b16 %v4564
  %v6174 = vpack.c.b16 %v6170, %v6170
  %v6175 = vpack.c.b16 %v6171, %v6171
  %v6176 = vpack.c.b16 %v6172, %v6172
  %v6177 = vpack.c.b16 %v6173, %v6173
  %v6179 = vshrl.u32 %v6174, 16
  %v6181 = vrot.slane %v6179, 4
  %v6182 = vshll.u32 %v6174, 16
  %v6184 = vrot.slane %v6182, 5
  %v6185 = vor.u32 %v6181, %v6184
  %v6186 = vrot.slane %v6185, 4
  %v6188 = vshll.u32 %v6175, 16
  %v6190 = vrot.slane %v6188, 5
  %v6191 = vsel %vm261, %v6186, %v6190
  %v6193 = vshrl.u32 %v6176, 16
  %v6195 = vrot.slane %v6193, 4
  %v6196 = vshll.u32 %v6176, 16
  %v6198 = vrot.slane %v6196, 5
  %v6199 = vor.u32 %v6195, %v6198
  %v6200 = vrot.slane %v6199, 4
  %v6202 = vshll.u32 %v6177, 16
  %v6204 = vrot.slane %v6202, 5
  %v6205 = vsel %vm261, %v6200, %v6204
  %v6206 = vpack.c.b16 %v6170, %v4871
  %v6207 = vpack.c.b16 %v6172, %v4873
  %v6210 = vunpack.c.l.b16 %v6191
  %v6211 = vunpack.c.l.b16 %v6205
  %v6212 = vpack.c.b16 %v6210, %v4971
  %v6213 = vpack.c.b16 %v6211, %v4972
  %s6216 = scalar_lea.vmem %s2, 512
  %v6217 = vld [vmem:[%s6216] sm:$0xf]
  %v6218 = vld [vmem:[%s6216 + $0x4] sm:$0xf]
  %v6219 = vld [vmem:[%s6216 + $0x8] sm:$0xf]
  %v6220 = vld [vmem:[%s6216 + $0xc] sm:$0xf]
  %v6221 = vld [vmem:[%s6216 + $0x10] sm:$0xf]
  %v6222 = vld [vmem:[%s6216 + $0x14] sm:$0xf]
  %v6223 = vld [vmem:[%s6216 + $0x18] sm:$0xf]
  %v6224 = vld [vmem:[%s6216 + $0x1c] sm:$0xf]
  %v6225 = vld [vmem:[%s6216 + $0x20] sm:$0xf]
  %v6226 = vld [vmem:[%s6216 + $0x24] sm:$0xf]
  %v6227 = vld [vmem:[%s6216 + $0x28] sm:$0xf]
  %v6228 = vld [vmem:[%s6216 + $0x2c] sm:$0xf]
  %v6229 = vld [vmem:[%s6216 + $0x30] sm:$0xf]
  %v6230 = vld [vmem:[%s6216 + $0x34] sm:$0xf]
  %v6231 = vld [vmem:[%s6216 + $0x38] sm:$0xf]
  %v6232 = vld [vmem:[%s6216 + $0x3c] sm:$0xf]
  %v6233 = vld [vmem:[%s6216 + $0x40] sm:$0xf]
  %v6234 = vld [vmem:[%s6216 + $0x44] sm:$0xf]
  %v6235 = vld [vmem:[%s6216 + $0x48] sm:$0xf]
  %v6236 = vld [vmem:[%s6216 + $0x4c] sm:$0xf]
  %v6237 = vld [vmem:[%s6216 + $0x50] sm:$0xf]
  %v6238 = vld [vmem:[%s6216 + $0x54] sm:$0xf]
  %v6239 = vld [vmem:[%s6216 + $0x58] sm:$0xf]
  %v6240 = vld [vmem:[%s6216 + $0x5c] sm:$0xf]
  %v6241 = vld [vmem:[%s6216 + $0x60] sm:$0xf]
  %v6242 = vld [vmem:[%s6216 + $0x64] sm:$0xf]
  %v6243 = vld [vmem:[%s6216 + $0x68] sm:$0xf]
  %v6244 = vld [vmem:[%s6216 + $0x6c] sm:$0xf]
  %v6245 = vld [vmem:[%s6216 + $0x70] sm:$0xf]
  %v6246 = vld [vmem:[%s6216 + $0x74] sm:$0xf]
  %v6247 = vld [vmem:[%s6216 + $0x78] sm:$0xf]
  %v6248 = vld [vmem:[%s6216 + $0x7c] sm:$0xf]
  %v6249 = vld [vmem:[%s6216 + $0x80] sm:$0xf]
  %v6250 = vld [vmem:[%s6216 + $0x84] sm:$0xf]
  %v6251 = vld [vmem:[%s6216 + $0x88] sm:$0xf]
  %v6252 = vld [vmem:[%s6216 + $0x8c] sm:$0xf]
  %v6253 = vld [vmem:[%s6216 + $0x90] sm:$0xf]
  %v6254 = vld [vmem:[%s6216 + $0x94] sm:$0xf]
  %v6255 = vld [vmem:[%s6216 + $0x98] sm:$0xf]
  %v6256 = vld [vmem:[%s6216 + $0x9c] sm:$0xf]
  %v6257 = vld [vmem:[%s6216 + $0xa0] sm:$0xf]
  %v6258 = vld [vmem:[%s6216 + $0xa4] sm:$0xf]
  %v6259 = vld [vmem:[%s6216 + $0xa8] sm:$0xf]
  %v6260 = vld [vmem:[%s6216 + $0xac] sm:$0xf]
  %v6261 = vld [vmem:[%s6216 + $0xb0] sm:$0xf]
  %v6262 = vld [vmem:[%s6216 + $0xb4] sm:$0xf]
  %v6263 = vld [vmem:[%s6216 + $0xb8] sm:$0xf]
  %v6264 = vld [vmem:[%s6216 + $0xbc] sm:$0xf]
  %v6265 = vld [vmem:[%s6216 + $0xc0] sm:$0xf]
  %v6266 = vld [vmem:[%s6216 + $0xc4] sm:$0xf]
  %v6267 = vld [vmem:[%s6216 + $0xc8] sm:$0xf]
  %v6268 = vld [vmem:[%s6216 + $0xcc] sm:$0xf]
  %v6269 = vld [vmem:[%s6216 + $0xd0] sm:$0xf]
  %v6270 = vld [vmem:[%s6216 + $0xd4] sm:$0xf]
  %v6271 = vld [vmem:[%s6216 + $0xd8] sm:$0xf]
  %v6272 = vld [vmem:[%s6216 + $0xdc] sm:$0xf]
  %v6273 = vld [vmem:[%s6216 + $0xe0] sm:$0xf]
  %v6274 = vld [vmem:[%s6216 + $0xe4] sm:$0xf]
  %v6275 = vld [vmem:[%s6216 + $0xe8] sm:$0xf]
  %v6276 = vld [vmem:[%s6216 + $0xec] sm:$0xf]
  %v6277 = vld [vmem:[%s6216 + $0xf0] sm:$0xf]
  %v6278 = vld [vmem:[%s6216 + $0xf4] sm:$0xf]
  %v6279 = vld [vmem:[%s6216 + $0xf8] sm:$0xf]
  %v6280 = vld [vmem:[%s6216 + $0xfc] sm:$0xf]
  %v6345 = vunpack.c.l.b16 %v6217
  %v6346 = vunpack.c.l.b16 %v6218
  %v6347 = vunpack.c.l.b16 %v6219
  %v6348 = vunpack.c.l.b16 %v6220
  %v6349 = vunpack.c.l.b16 %v6221
  %v6350 = vunpack.c.l.b16 %v6222
  %v6351 = vunpack.c.l.b16 %v6223
  %v6352 = vunpack.c.l.b16 %v6224
  %v6353 = vunpack.c.l.b16 %v6225
  %v6354 = vunpack.c.l.b16 %v6226
  %v6355 = vunpack.c.l.b16 %v6227
  %v6356 = vunpack.c.l.b16 %v6228
  %v6357 = vunpack.c.l.b16 %v6229
  %v6358 = vunpack.c.l.b16 %v6230
  %v6359 = vunpack.c.l.b16 %v6231
  %v6360 = vunpack.c.l.b16 %v6232
  %v6361 = vunpack.c.l.b16 %v6233
  %v6362 = vunpack.c.l.b16 %v6234
  %v6363 = vunpack.c.l.b16 %v6235
  %v6364 = vunpack.c.l.b16 %v6236
  %v6365 = vunpack.c.l.b16 %v6237
  %v6366 = vunpack.c.l.b16 %v6238
  %v6367 = vunpack.c.l.b16 %v6239
  %v6368 = vunpack.c.l.b16 %v6240
  %v6369 = vunpack.c.l.b16 %v6241
  %v6370 = vunpack.c.l.b16 %v6242
  %v6371 = vunpack.c.l.b16 %v6243
  %v6372 = vunpack.c.l.b16 %v6244
  %v6373 = vunpack.c.l.b16 %v6245
  %v6374 = vunpack.c.l.b16 %v6246
  %v6375 = vunpack.c.l.b16 %v6247
  %v6376 = vunpack.c.l.b16 %v6248
  %v6377 = vunpack.c.l.b16 %v6249
  %v6378 = vunpack.c.l.b16 %v6250
  %v6379 = vunpack.c.l.b16 %v6251
  %v6380 = vunpack.c.l.b16 %v6252
  %v6381 = vunpack.c.l.b16 %v6253
  %v6382 = vunpack.c.l.b16 %v6254
  %v6383 = vunpack.c.l.b16 %v6255
  %v6384 = vunpack.c.l.b16 %v6256
  %v6385 = vunpack.c.l.b16 %v6257
  %v6386 = vunpack.c.l.b16 %v6258
  %v6387 = vunpack.c.l.b16 %v6259
  %v6388 = vunpack.c.l.b16 %v6260
  %v6389 = vunpack.c.l.b16 %v6261
  %v6390 = vunpack.c.l.b16 %v6262
  %v6391 = vunpack.c.l.b16 %v6263
  %v6392 = vunpack.c.l.b16 %v6264
  %v6393 = vunpack.c.l.b16 %v6265
  %v6394 = vunpack.c.l.b16 %v6266
  %v6395 = vunpack.c.l.b16 %v6267
  %v6396 = vunpack.c.l.b16 %v6268
  %v6397 = vunpack.c.l.b16 %v6269
  %v6398 = vunpack.c.l.b16 %v6270
  %v6399 = vunpack.c.l.b16 %v6271
  %v6400 = vunpack.c.l.b16 %v6272
  %v6401 = vunpack.c.l.b16 %v6273
  %v6402 = vunpack.c.l.b16 %v6274
  %v6403 = vunpack.c.l.b16 %v6275
  %v6404 = vunpack.c.l.b16 %v6276
  %v6405 = vunpack.c.l.b16 %v6277
  %v6406 = vunpack.c.l.b16 %v6278
  %v6407 = vunpack.c.l.b16 %v6279
  %v6408 = vunpack.c.l.b16 %v6280
  %v6409 = vpack.c.b16 %v6346, %v6345
  %v6410 = vpack.c.b16 %v6348, %v6347
  %v6411 = vpack.c.b16 %v6350, %v6349
  %v6412 = vpack.c.b16 %v6352, %v6351
  %v6413 = vpack.c.b16 %v6354, %v6353
  %v6414 = vpack.c.b16 %v6356, %v6355
  %v6415 = vpack.c.b16 %v6358, %v6357
  %v6416 = vpack.c.b16 %v6360, %v6359
  %v6417 = vpack.c.b16 %v6362, %v6361
  %v6418 = vpack.c.b16 %v6364, %v6363
  %v6419 = vpack.c.b16 %v6366, %v6365
  %v6420 = vpack.c.b16 %v6368, %v6367
  %v6421 = vpack.c.b16 %v6370, %v6369
  %v6422 = vpack.c.b16 %v6372, %v6371
  %v6423 = vpack.c.b16 %v6374, %v6373
  %v6424 = vpack.c.b16 %v6376, %v6375
  %v6425 = vpack.c.b16 %v6378, %v6377
  %v6426 = vpack.c.b16 %v6380, %v6379
  %v6427 = vpack.c.b16 %v6382, %v6381
  %v6428 = vpack.c.b16 %v6384, %v6383
  %v6429 = vpack.c.b16 %v6386, %v6385
  %v6430 = vpack.c.b16 %v6388, %v6387
  %v6431 = vpack.c.b16 %v6390, %v6389
  %v6432 = vpack.c.b16 %v6392, %v6391
  %v6433 = vpack.c.b16 %v6394, %v6393
  %v6434 = vpack.c.b16 %v6396, %v6395
  %v6435 = vpack.c.b16 %v6398, %v6397
  %v6436 = vpack.c.b16 %v6400, %v6399
  %v6437 = vpack.c.b16 %v6402, %v6401
  %v6438 = vpack.c.b16 %v6404, %v6403
  %v6439 = vpack.c.b16 %v6406, %v6405
  %v6440 = vpack.c.b16 %v6408, %v6407
  %6473 = vmatprep.subr.bf16.mxu0 0
  %6474 = vmatpush1.bf16.msra.mxu0 %v6409
  %6475 = vmatprep.subr.bf16.mxu0 0
  %6476 = vmatpush1.bf16.msra.mxu0 %v6410
  %6477 = vmatprep.subr.bf16.mxu0 0
  %6478 = vmatpush1.bf16.msra.mxu0 %v6411
  %6479 = vmatprep.subr.bf16.mxu0 0
  %6480 = vmatpush1.bf16.msra.mxu0 %v6412
  %6481 = vmatprep.subr.bf16.mxu0 0
  %6482 = vmatpush1.bf16.msra.mxu0 %v6413
  %6483 = vmatprep.subr.bf16.mxu0 0
  %6484 = vmatpush1.bf16.msra.mxu0 %v6414
  %6485 = vmatprep.subr.bf16.mxu0 0
  %6486 = vmatpush1.bf16.msra.mxu0 %v6415
  %6487 = vmatprep.subr.bf16.mxu0 0
  %6488 = vmatpush1.bf16.msra.mxu0 %v6416
  %6489 = vmatprep.subr.bf16.mxu0 0
  %6490 = vmatpush1.bf16.msra.mxu0 %v6417
  %6491 = vmatprep.subr.bf16.mxu0 0
  %6492 = vmatpush1.bf16.msra.mxu0 %v6418
  %6493 = vmatprep.subr.bf16.mxu0 0
  %6494 = vmatpush1.bf16.msra.mxu0 %v6419
  %6495 = vmatprep.subr.bf16.mxu0 0
  %6496 = vmatpush1.bf16.msra.mxu0 %v6420
  %6497 = vmatprep.subr.bf16.mxu0 0
  %6498 = vmatpush1.bf16.msra.mxu0 %v6421
  %6499 = vmatprep.subr.bf16.mxu0 0
  %6500 = vmatpush1.bf16.msra.mxu0 %v6422
  %6501 = vmatprep.subr.bf16.mxu0 0
  %6502 = vmatpush1.bf16.msra.mxu0 %v6423
  %6503 = vmatprep.subr.bf16.mxu0 0
  %6504 = vmatpush1.bf16.msra.mxu0 %v6424
  %6505 = vmatprep.mubr.bf16.mxu0 %v4973
  %6506 = vmatmul.mubr.bf16.gmra.mrb[0].mxu0 %v4955
  %v6507 = vpop.f32.mrb[0].mxu0
  %v6508 = vadd.f32 0.0, %v6507
  %v6509 = vpop.f32.mrb[0].mxu0
  %v6510 = vpop.f32.mrb[0].mxu0
  %v6511 = vadd.f32 0.0, %v6510
  %v6512 = vpop.f32.mrb[0].mxu0
  %6513 = vmatprep.mubr.bf16.mxu0 %v4974
  %6514 = vmatmul.mubr.bf16.gmra.mrb[0].mxu0 %v4956
  %v6515 = vpop.f32.mrb[0].mxu0
  %v6516 = vadd.f32 0.0, %v6515
  %v6517 = vpop.f32.mrb[0].mxu0
  %v6518 = vpop.f32.mrb[0].mxu0
  %v6519 = vadd.f32 0.0, %v6518
  %v6520 = vpop.f32.mrb[0].mxu0
  %6521 = vmatprep.mubr.bf16.mxu0 %v4975
  %6522 = vmatmul.mubr.bf16.gmra.mrb[0].mxu0 %v4957
  %v6523 = vpop.f32.mrb[0].mxu0
  %v6524 = vadd.f32 0.0, %v6523
  %v6525 = vpop.f32.mrb[0].mxu0
  %v6526 = vpop.f32.mrb[0].mxu0
  %v6527 = vadd.f32 0.0, %v6526
  %v6528 = vpop.f32.mrb[0].mxu0
  %6529 = vmatprep.mubr.bf16.mxu0 %v4976
  %6530 = vmatmul.mubr.bf16.gmra.mrb[0].mxu0 %v4958
  %v6531 = vpop.f32.mrb[0].mxu0
  %v6532 = vadd.f32 0.0, %v6531
  %v6533 = vpop.f32.mrb[0].mxu0
  %v6534 = vpop.f32.mrb[0].mxu0
  %v6535 = vadd.f32 0.0, %v6534
  %v6536 = vpop.f32.mrb[0].mxu0
  %6537 = vmatprep.mubr.bf16.mxu0 %v4977
  %6538 = vmatmul.mubr.bf16.gmra.mrb[0].mxu0 %v4959
  %v6539 = vpop.f32.mrb[0].mxu0
  %v6540 = vadd.f32 0.0, %v6539
  %v6541 = vpop.f32.mrb[0].mxu0
  %v6542 = vpop.f32.mrb[0].mxu0
  %v6543 = vadd.f32 0.0, %v6542
  %v6544 = vpop.f32.mrb[0].mxu0
  %6545 = vmatprep.mubr.bf16.mxu0 %v4978
  %6546 = vmatmul.mubr.bf16.gmra.mrb[0].mxu0 %v4960
  %v6547 = vpop.f32.mrb[0].mxu0
  %v6548 = vadd.f32 0.0, %v6547
  %v6549 = vpop.f32.mrb[0].mxu0
  %v6550 = vpop.f32.mrb[0].mxu0
  %v6551 = vadd.f32 0.0, %v6550
  %v6552 = vpop.f32.mrb[0].mxu0
  %6553 = vmatprep.mubr.bf16.mxu0 %v4979
  %6554 = vmatmul.mubr.bf16.gmra.mrb[0].mxu0 %v4961
  %v6555 = vpop.f32.mrb[0].mxu0
  %v6556 = vadd.f32 0.0, %v6555
  %v6557 = vpop.f32.mrb[0].mxu0
  %v6558 = vpop.f32.mrb[0].mxu0
  %v6559 = vadd.f32 0.0, %v6558
  %v6560 = vpop.f32.mrb[0].mxu0
  %6561 = vmatprep.mubr.bf16.mxu0 %v4980
  %6562 = vmatmul.mubr.bf16.gmra.mrb[0].mxu0 %v4962
  %v6563 = vpop.f32.mrb[0].mxu0
  %v6564 = vadd.f32 0.0, %v6563
  %v6565 = vpop.f32.mrb[0].mxu0
  %v6566 = vpop.f32.mrb[0].mxu0
  %v6567 = vadd.f32 0.0, %v6566
  %v6568 = vpop.f32.mrb[0].mxu0
  %6569 = vdwg.mxu0
  %6570 = vmatprep.subr.bf16.mxu0 0
  %6571 = vmatpush1.bf16.msra.mxu0 %v6425
  %6572 = vmatprep.subr.bf16.mxu0 0
  %6573 = vmatpush1.bf16.msra.mxu0 %v6426
  %6574 = vmatprep.subr.bf16.mxu0 0
  %6575 = vmatpush1.bf16.msra.mxu0 %v6427
  %6576 = vmatprep.subr.bf16.mxu0 0
  %6577 = vmatpush1.bf16.msra.mxu0 %v6428
  %6578 = vmatprep.subr.bf16.mxu0 0
  %6579 = vmatpush1.bf16.msra.mxu0 %v6429
  %6580 = vmatprep.subr.bf16.mxu0 0
  %6581 = vmatpush1.bf16.msra.mxu0 %v6430
  %6582 = vmatprep.subr.bf16.mxu0 0
  %6583 = vmatpush1.bf16.msra.mxu0 %v6431
  %6584 = vmatprep.subr.bf16.mxu0 0
  %6585 = vmatpush1.bf16.msra.mxu0 %v6432
  %6586 = vmatprep.subr.bf16.mxu0 0
  %6587 = vmatpush1.bf16.msra.mxu0 %v6433
  %6588 = vmatprep.subr.bf16.mxu0 0
  %6589 = vmatpush1.bf16.msra.mxu0 %v6434
  %6590 = vmatprep.subr.bf16.mxu0 0
  %6591 = vmatpush1.bf16.msra.mxu0 %v6435
  %6592 = vmatprep.subr.bf16.mxu0 0
  %6593 = vmatpush1.bf16.msra.mxu0 %v6436
  %6594 = vmatprep.subr.bf16.mxu0 0
  %6595 = vmatpush1.bf16.msra.mxu0 %v6437
  %6596 = vmatprep.subr.bf16.mxu0 0
  %6597 = vmatpush1.bf16.msra.mxu0 %v6438
  %6598 = vmatprep.subr.bf16.mxu0 0
  %6599 = vmatpush1.bf16.msra.mxu0 %v6439
  %6600 = vmatprep.subr.bf16.mxu0 0
  %6601 = vmatpush1.bf16.msra.mxu0 %v6440
  %6602 = vmatprep.mubr.bf16.mxu0 %v4940
  %6603 = vmatmul.mubr.bf16.gmra.mrb[0].mxu0 %v4908
  %v6604 = vpop.f32.mrb[0].mxu0
  %v6605 = vadd.f32 %v6508, %v6604
  %v6606 = vpop.f32.mrb[0].mxu0
  %v6607 = vpop.f32.mrb[0].mxu0
  %v6608 = vadd.f32 %v6511, %v6607
  %v6609 = vpop.f32.mrb[0].mxu0
  %6610 = vmatprep.mubr.bf16.mxu0 %v4941
  %6611 = vmatmul.mubr.bf16.gmra.mrb[0].mxu0 %v4909
  %v6612 = vpop.f32.mrb[0].mxu0
  %v6613 = vadd.f32 %v6516, %v6612
  %v6614 = vpop.f32.mrb[0].mxu0
  %v6615 = vpop.f32.mrb[0].mxu0
  %v6616 = vadd.f32 %v6519, %v6615
  %v6617 = vpop.f32.mrb[0].mxu0
  %6618 = vmatprep.mubr.bf16.mxu0 %v4942
  %6619 = vmatmul.mubr.bf16.gmra.mrb[0].mxu0 %v4910
  %v6620 = vpop.f32.mrb[0].mxu0
  %v6621 = vadd.f32 %v6524, %v6620
  %v6622 = vpop.f32.mrb[0].mxu0
  %v6623 = vpop.f32.mrb[0].mxu0
  %v6624 = vadd.f32 %v6527, %v6623
  %v6625 = vpop.f32.mrb[0].mxu0
  %6626 = vmatprep.mubr.bf16.mxu0 %v6212
  %6627 = vmatmul.mubr.bf16.gmra.mrb[0].mxu0 %v6206
  %v6628 = vpop.f32.mrb[0].mxu0
  %v6629 = vadd.f32 %v6532, %v6628
  %v6630 = vpop.f32.mrb[0].mxu0
  %v6631 = vpop.f32.mrb[0].mxu0
  %v6632 = vadd.f32 %v6535, %v6631
  %v6633 = vpop.f32.mrb[0].mxu0
  %6634 = vmatprep.mubr.bf16.mxu0 %v4944
  %6635 = vmatmul.mubr.bf16.gmra.mrb[0].mxu0 %v4912
  %v6636 = vpop.f32.mrb[0].mxu0
  %v6637 = vadd.f32 %v6540, %v6636
  %v6638 = vpop.f32.mrb[0].mxu0
  %v6639 = vpop.f32.mrb[0].mxu0
  %v6640 = vadd.f32 %v6543, %v6639
  %v6641 = vpop.f32.mrb[0].mxu0
  %6642 = vmatprep.mubr.bf16.mxu0 %v4945
  %6643 = vmatmul.mubr.bf16.gmra.mrb[0].mxu0 %v4913
  %v6644 = vpop.f32.mrb[0].mxu0
  %v6645 = vadd.f32 %v6548, %v6644
  %v6646 = vpop.f32.mrb[0].mxu0
  %v6647 = vpop.f32.mrb[0].mxu0
  %v6648 = vadd.f32 %v6551, %v6647
  %v6649 = vpop.f32.mrb[0].mxu0
  %6650 = vmatprep.mubr.bf16.mxu0 %v4946
  %6651 = vmatmul.mubr.bf16.gmra.mrb[0].mxu0 %v4914
  %v6652 = vpop.f32.mrb[0].mxu0
  %v6653 = vadd.f32 %v6556, %v6652
  %v6654 = vpop.f32.mrb[0].mxu0
  %v6655 = vpop.f32.mrb[0].mxu0
  %v6656 = vadd.f32 %v6559, %v6655
  %v6657 = vpop.f32.mrb[0].mxu0
  %6658 = vmatprep.mubr.bf16.mxu0 %v6213
  %6659 = vmatmul.mubr.bf16.gmra.mrb[0].mxu0 %v6207
  %v6660 = vpop.f32.mrb[0].mxu0
  %v6661 = vadd.f32 %v6564, %v6660
  %v6662 = vpop.f32.mrb[0].mxu0
  %v6663 = vpop.f32.mrb[0].mxu0
  %v6664 = vadd.f32 %v6567, %v6663
  %v6665 = vpop.f32.mrb[0].mxu0
  %6666 = vdwg.mxu0
  %s6667 = scalar_lea.vmem %s3, 256
  %6668 = vst [vmem:[%s6667] sm:$0xff] %v6605
  %6669 = vst [vmem:[%s6667 + $0x8] sm:$0xff] %v6608
  %6670 = vst [vmem:[%s6667 + $0x10] sm:$0xff] %v6613
  %6671 = vst [vmem:[%s6667 + $0x18] sm:$0xff] %v6616
  %6672 = vst [vmem:[%s6667 + $0x20] sm:$0xff] %v6621
  %6673 = vst [vmem:[%s6667 + $0x28] sm:$0xff] %v6624
  %6674 = vst [vmem:[%s6667 + $0x30] sm:$0xff] %v6629
  %6675 = vst [vmem:[%s6667 + $0x38] sm:$0xff] %v6632
  %6676 = vst [vmem:[%s6667 + $0x40] sm:$0xff] %v6637
  %6677 = vst [vmem:[%s6667 + $0x48] sm:$0xff] %v6640
  %6678 = vst [vmem:[%s6667 + $0x50] sm:$0xff] %v6645
  %6679 = vst [vmem:[%s6667 + $0x58] sm:$0xff] %v6648
  %6680 = vst [vmem:[%s6667 + $0x60] sm:$0xff] %v6653
  %6681 = vst [vmem:[%s6667 + $0x68] sm:$0xff] %v6656
  %6682 = vst [vmem:[%s6667 + $0x70] sm:$0xff] %v6661
  %6683 = vst [vmem:[%s6667 + $0x78] sm:$0xff] %v6664
  %v6684 = vadd.f32 %v6605, %v6608
  %v6685 = vadd.f32 %v6684, %v6613
  %v6686 = vadd.f32 %v6685, %v6616
  %v6687 = vadd.f32 %v6686, %v6621
  %v6688 = vadd.f32 %v6687, %v6624
  %v6689 = vadd.f32 %v6688, %v6629
  %v6690 = vadd.f32 %v6689, %v6632
  %v6691 = vadd.f32 %v6690, %v6637
  %v6692 = vadd.f32 %v6691, %v6640
  %v6693 = vadd.f32 %v6692, %v6645
  %v6694 = vadd.f32 %v6693, %v6648
  %v6695 = vadd.f32 %v6694, %v6653
  %v6696 = vadd.f32 %v6695, %v6656
  %v6697 = vadd.f32 %v6696, %v6661
  %v6698 = vadd.f32 %v6697, %v6664
  %v6699 = vrot.slane %v6698, 4
  %v6700 = vadd.f32 %v6698, %v6699
  %v6701 = vrot.slane %v6700, 2
  %v6702 = vadd.f32 %v6700, %v6701
  %v6703 = vrot.slane %v6702, 1
  %v6704 = vadd.f32 %v6702, %v6703
  %v6705 = vadd.f32 %v6129, %v6704
  %v6706 = vmul.f32 %v6605, %v6605
  %v6707 = vmul.f32 %v6608, %v6608
  %v6708 = vmul.f32 %v6613, %v6613
  %v6709 = vmul.f32 %v6616, %v6616
  %v6710 = vmul.f32 %v6621, %v6621
  %v6711 = vmul.f32 %v6624, %v6624
  %v6712 = vmul.f32 %v6629, %v6629
  %v6713 = vmul.f32 %v6632, %v6632
  %v6714 = vmul.f32 %v6637, %v6637
  %v6715 = vmul.f32 %v6640, %v6640
  %v6716 = vmul.f32 %v6645, %v6645
  %v6717 = vmul.f32 %v6648, %v6648
  %v6718 = vmul.f32 %v6653, %v6653
  %v6719 = vmul.f32 %v6656, %v6656
  %v6720 = vmul.f32 %v6661, %v6661
  %v6721 = vmul.f32 %v6664, %v6664
  %v6722 = vadd.f32 %v6706, %v6707
  %v6723 = vadd.f32 %v6722, %v6708
  %v6724 = vadd.f32 %v6723, %v6709
  %v6725 = vadd.f32 %v6724, %v6710
  %v6726 = vadd.f32 %v6725, %v6711
  %v6727 = vadd.f32 %v6726, %v6712
  %v6728 = vadd.f32 %v6727, %v6713
  %v6729 = vadd.f32 %v6728, %v6714
  %v6730 = vadd.f32 %v6729, %v6715
  %v6731 = vadd.f32 %v6730, %v6716
  %v6732 = vadd.f32 %v6731, %v6717
  %v6733 = vadd.f32 %v6732, %v6718
  %v6734 = vadd.f32 %v6733, %v6719
  %v6735 = vadd.f32 %v6734, %v6720
  %v6736 = vadd.f32 %v6735, %v6721
  %v6737 = vrot.slane %v6736, 4
  %v6738 = vadd.f32 %v6736, %v6737
  %v6739 = vrot.slane %v6738, 2
  %v6740 = vadd.f32 %v6738, %v6739
  %v6741 = vrot.slane %v6740, 1
  %v6742 = vadd.f32 %v6740, %v6741
  %v6743 = vadd.f32 %v6167, %v6742
  %v6744 = vrot.slane %v6174, 5
  %v6745 = vrot.slane %v6744, 4
  %v6746 = vrot.slane %v6175, 5
  %v6747 = vsel %vm5517, %v6745, %v6746
  %v6748 = vrot.slane %v6176, 5
  %v6749 = vrot.slane %v6748, 4
  %v6750 = vrot.slane %v6177, 5
  %v6751 = vsel %vm5517, %v6749, %v6750
  %v6752 = vunpack.c.l.b16 %v6747
  %v6753 = vunpack.c.l.b16 %v6751
  %v6754 = vpack.c.b16 %v6752, %v5622
  %v6755 = vpack.c.b16 %v6753, %v5623
  %s6758 = scalar_lea.vmem %s2, 768
  %v6759 = vld [vmem:[%s6758] sm:$0xf]
  %v6760 = vld [vmem:[%s6758 + $0x4] sm:$0xf]
  %v6761 = vld [vmem:[%s6758 + $0x8] sm:$0xf]
  %v6762 = vld [vmem:[%s6758 + $0xc] sm:$0xf]
  %v6763 = vld [vmem:[%s6758 + $0x10] sm:$0xf]
  %v6764 = vld [vmem:[%s6758 + $0x14] sm:$0xf]
  %v6765 = vld [vmem:[%s6758 + $0x18] sm:$0xf]
  %v6766 = vld [vmem:[%s6758 + $0x1c] sm:$0xf]
  %v6767 = vld [vmem:[%s6758 + $0x20] sm:$0xf]
  %v6768 = vld [vmem:[%s6758 + $0x24] sm:$0xf]
  %v6769 = vld [vmem:[%s6758 + $0x28] sm:$0xf]
  %v6770 = vld [vmem:[%s6758 + $0x2c] sm:$0xf]
  %v6771 = vld [vmem:[%s6758 + $0x30] sm:$0xf]
  %v6772 = vld [vmem:[%s6758 + $0x34] sm:$0xf]
  %v6773 = vld [vmem:[%s6758 + $0x38] sm:$0xf]
  %v6774 = vld [vmem:[%s6758 + $0x3c] sm:$0xf]
  %v6775 = vld [vmem:[%s6758 + $0x40] sm:$0xf]
  %v6776 = vld [vmem:[%s6758 + $0x44] sm:$0xf]
  %v6777 = vld [vmem:[%s6758 + $0x48] sm:$0xf]
  %v6778 = vld [vmem:[%s6758 + $0x4c] sm:$0xf]
  %v6779 = vld [vmem:[%s6758 + $0x50] sm:$0xf]
  %v6780 = vld [vmem:[%s6758 + $0x54] sm:$0xf]
  %v6781 = vld [vmem:[%s6758 + $0x58] sm:$0xf]
  %v6782 = vld [vmem:[%s6758 + $0x5c] sm:$0xf]
  %v6783 = vld [vmem:[%s6758 + $0x60] sm:$0xf]
  %v6784 = vld [vmem:[%s6758 + $0x64] sm:$0xf]
  %v6785 = vld [vmem:[%s6758 + $0x68] sm:$0xf]
  %v6786 = vld [vmem:[%s6758 + $0x6c] sm:$0xf]
  %v6787 = vld [vmem:[%s6758 + $0x70] sm:$0xf]
  %v6788 = vld [vmem:[%s6758 + $0x74] sm:$0xf]
  %v6789 = vld [vmem:[%s6758 + $0x78] sm:$0xf]
  %v6790 = vld [vmem:[%s6758 + $0x7c] sm:$0xf]
  %v6791 = vld [vmem:[%s6758 + $0x80] sm:$0xf]
  %v6792 = vld [vmem:[%s6758 + $0x84] sm:$0xf]
  %v6793 = vld [vmem:[%s6758 + $0x88] sm:$0xf]
  %v6794 = vld [vmem:[%s6758 + $0x8c] sm:$0xf]
  %v6795 = vld [vmem:[%s6758 + $0x90] sm:$0xf]
  %v6796 = vld [vmem:[%s6758 + $0x94] sm:$0xf]
  %v6797 = vld [vmem:[%s6758 + $0x98] sm:$0xf]
  %v6798 = vld [vmem:[%s6758 + $0x9c] sm:$0xf]
  %v6799 = vld [vmem:[%s6758 + $0xa0] sm:$0xf]
  %v6800 = vld [vmem:[%s6758 + $0xa4] sm:$0xf]
  %v6801 = vld [vmem:[%s6758 + $0xa8] sm:$0xf]
  %v6802 = vld [vmem:[%s6758 + $0xac] sm:$0xf]
  %v6803 = vld [vmem:[%s6758 + $0xb0] sm:$0xf]
  %v6804 = vld [vmem:[%s6758 + $0xb4] sm:$0xf]
  %v6805 = vld [vmem:[%s6758 + $0xb8] sm:$0xf]
  %v6806 = vld [vmem:[%s6758 + $0xbc] sm:$0xf]
  %v6807 = vld [vmem:[%s6758 + $0xc0] sm:$0xf]
  %v6808 = vld [vmem:[%s6758 + $0xc4] sm:$0xf]
  %v6809 = vld [vmem:[%s6758 + $0xc8] sm:$0xf]
  %v6810 = vld [vmem:[%s6758 + $0xcc] sm:$0xf]
  %v6811 = vld [vmem:[%s6758 + $0xd0] sm:$0xf]
  %v6812 = vld [vmem:[%s6758 + $0xd4] sm:$0xf]
  %v6813 = vld [vmem:[%s6758 + $0xd8] sm:$0xf]
  %v6814 = vld [vmem:[%s6758 + $0xdc] sm:$0xf]
  %v6815 = vld [vmem:[%s6758 + $0xe0] sm:$0xf]
  %v6816 = vld [vmem:[%s6758 + $0xe4] sm:$0xf]
  %v6817 = vld [vmem:[%s6758 + $0xe8] sm:$0xf]
  %v6818 = vld [vmem:[%s6758 + $0xec] sm:$0xf]
  %v6819 = vld [vmem:[%s6758 + $0xf0] sm:$0xf]
  %v6820 = vld [vmem:[%s6758 + $0xf4] sm:$0xf]
  %v6821 = vld [vmem:[%s6758 + $0xf8] sm:$0xf]
  %v6822 = vld [vmem:[%s6758 + $0xfc] sm:$0xf]
  %v6887 = vunpack.c.l.b16 %v6759
  %v6888 = vunpack.c.l.b16 %v6760
  %v6889 = vunpack.c.l.b16 %v6761
  %v6890 = vunpack.c.l.b16 %v6762
  %v6891 = vunpack.c.l.b16 %v6763
  %v6892 = vunpack.c.l.b16 %v6764
  %v6893 = vunpack.c.l.b16 %v6765
  %v6894 = vunpack.c.l.b16 %v6766
  %v6895 = vunpack.c.l.b16 %v6767
  %v6896 = vunpack.c.l.b16 %v6768
  %v6897 = vunpack.c.l.b16 %v6769
  %v6898 = vunpack.c.l.b16 %v6770
  %v6899 = vunpack.c.l.b16 %v6771
  %v6900 = vunpack.c.l.b16 %v6772
  %v6901 = vunpack.c.l.b16 %v6773
  %v6902 = vunpack.c.l.b16 %v6774
  %v6903 = vunpack.c.l.b16 %v6775
  %v6904 = vunpack.c.l.b16 %v6776
  %v6905 = vunpack.c.l.b16 %v6777
  %v6906 = vunpack.c.l.b16 %v6778
  %v6907 = vunpack.c.l.b16 %v6779
  %v6908 = vunpack.c.l.b16 %v6780
  %v6909 = vunpack.c.l.b16 %v6781
  %v6910 = vunpack.c.l.b16 %v6782
  %v6911 = vunpack.c.l.b16 %v6783
  %v6912 = vunpack.c.l.b16 %v6784
  %v6913 = vunpack.c.l.b16 %v6785
  %v6914 = vunpack.c.l.b16 %v6786
  %v6915 = vunpack.c.l.b16 %v6787
  %v6916 = vunpack.c.l.b16 %v6788
  %v6917 = vunpack.c.l.b16 %v6789
  %v6918 = vunpack.c.l.b16 %v6790
  %v6919 = vunpack.c.l.b16 %v6791
  %v6920 = vunpack.c.l.b16 %v6792
  %v6921 = vunpack.c.l.b16 %v6793
  %v6922 = vunpack.c.l.b16 %v6794
  %v6923 = vunpack.c.l.b16 %v6795
  %v6924 = vunpack.c.l.b16 %v6796
  %v6925 = vunpack.c.l.b16 %v6797
  %v6926 = vunpack.c.l.b16 %v6798
  %v6927 = vunpack.c.l.b16 %v6799
  %v6928 = vunpack.c.l.b16 %v6800
  %v6929 = vunpack.c.l.b16 %v6801
  %v6930 = vunpack.c.l.b16 %v6802
  %v6931 = vunpack.c.l.b16 %v6803
  %v6932 = vunpack.c.l.b16 %v6804
  %v6933 = vunpack.c.l.b16 %v6805
  %v6934 = vunpack.c.l.b16 %v6806
  %v6935 = vunpack.c.l.b16 %v6807
  %v6936 = vunpack.c.l.b16 %v6808
  %v6937 = vunpack.c.l.b16 %v6809
  %v6938 = vunpack.c.l.b16 %v6810
  %v6939 = vunpack.c.l.b16 %v6811
  %v6940 = vunpack.c.l.b16 %v6812
  %v6941 = vunpack.c.l.b16 %v6813
  %v6942 = vunpack.c.l.b16 %v6814
  %v6943 = vunpack.c.l.b16 %v6815
  %v6944 = vunpack.c.l.b16 %v6816
  %v6945 = vunpack.c.l.b16 %v6817
  %v6946 = vunpack.c.l.b16 %v6818
  %v6947 = vunpack.c.l.b16 %v6819
  %v6948 = vunpack.c.l.b16 %v6820
  %v6949 = vunpack.c.l.b16 %v6821
  %v6950 = vunpack.c.l.b16 %v6822
  %v6951 = vpack.c.b16 %v6888, %v6887
  %v6952 = vpack.c.b16 %v6890, %v6889
  %v6953 = vpack.c.b16 %v6892, %v6891
  %v6954 = vpack.c.b16 %v6894, %v6893
  %v6955 = vpack.c.b16 %v6896, %v6895
  %v6956 = vpack.c.b16 %v6898, %v6897
  %v6957 = vpack.c.b16 %v6900, %v6899
  %v6958 = vpack.c.b16 %v6902, %v6901
  %v6959 = vpack.c.b16 %v6904, %v6903
  %v6960 = vpack.c.b16 %v6906, %v6905
  %v6961 = vpack.c.b16 %v6908, %v6907
  %v6962 = vpack.c.b16 %v6910, %v6909
  %v6963 = vpack.c.b16 %v6912, %v6911
  %v6964 = vpack.c.b16 %v6914, %v6913
  %v6965 = vpack.c.b16 %v6916, %v6915
  %v6966 = vpack.c.b16 %v6918, %v6917
  %v6967 = vpack.c.b16 %v6920, %v6919
  %v6968 = vpack.c.b16 %v6922, %v6921
  %v6969 = vpack.c.b16 %v6924, %v6923
  %v6970 = vpack.c.b16 %v6926, %v6925
  %v6971 = vpack.c.b16 %v6928, %v6927
  %v6972 = vpack.c.b16 %v6930, %v6929
  %v6973 = vpack.c.b16 %v6932, %v6931
  %v6974 = vpack.c.b16 %v6934, %v6933
  %v6975 = vpack.c.b16 %v6936, %v6935
  %v6976 = vpack.c.b16 %v6938, %v6937
  %v6977 = vpack.c.b16 %v6940, %v6939
  %v6978 = vpack.c.b16 %v6942, %v6941
  %v6979 = vpack.c.b16 %v6944, %v6943
  %v6980 = vpack.c.b16 %v6946, %v6945
  %v6981 = vpack.c.b16 %v6948, %v6947
  %v6982 = vpack.c.b16 %v6950, %v6949
  %7015 = vmatprep.subr.bf16.mxu0 0
  %7016 = vmatpush1.bf16.msra.mxu0 %v6951
  %7017 = vmatprep.subr.bf16.mxu0 0
  %7018 = vmatpush1.bf16.msra.mxu0 %v6952
  %7019 = vmatprep.subr.bf16.mxu0 0
  %7020 = vmatpush1.bf16.msra.mxu0 %v6953
  %7021 = vmatprep.subr.bf16.mxu0 0
  %7022 = vmatpush1.bf16.msra.mxu0 %v6954
  %7023 = vmatprep.subr.bf16.mxu0 0
  %7024 = vmatpush1.bf16.msra.mxu0 %v6955
  %7025 = vmatprep.subr.bf16.mxu0 0
  %7026 = vmatpush1.bf16.msra.mxu0 %v6956
  %7027 = vmatprep.subr.bf16.mxu0 0
  %7028 = vmatpush1.bf16.msra.mxu0 %v6957
  %7029 = vmatprep.subr.bf16.mxu0 0
  %7030 = vmatpush1.bf16.msra.mxu0 %v6958
  %7031 = vmatprep.subr.bf16.mxu0 0
  %7032 = vmatpush1.bf16.msra.mxu0 %v6959
  %7033 = vmatprep.subr.bf16.mxu0 0
  %7034 = vmatpush1.bf16.msra.mxu0 %v6960
  %7035 = vmatprep.subr.bf16.mxu0 0
  %7036 = vmatpush1.bf16.msra.mxu0 %v6961
  %7037 = vmatprep.subr.bf16.mxu0 0
  %7038 = vmatpush1.bf16.msra.mxu0 %v6962
  %7039 = vmatprep.subr.bf16.mxu0 0
  %7040 = vmatpush1.bf16.msra.mxu0 %v6963
  %7041 = vmatprep.subr.bf16.mxu0 0
  %7042 = vmatpush1.bf16.msra.mxu0 %v6964
  %7043 = vmatprep.subr.bf16.mxu0 0
  %7044 = vmatpush1.bf16.msra.mxu0 %v6965
  %7045 = vmatprep.subr.bf16.mxu0 0
  %7046 = vmatpush1.bf16.msra.mxu0 %v6966
  %7047 = vmatprep.mubr.bf16.mxu0 %v5624
  %7048 = vmatmul.mubr.bf16.gmra.mrb[0].mxu0 %v4973
  %v7049 = vpop.f32.mrb[0].mxu0
  %v7050 = vadd.f32 0.0, %v7049
  %v7051 = vpop.f32.mrb[0].mxu0
  %v7052 = vpop.f32.mrb[0].mxu0
  %v7053 = vadd.f32 0.0, %v7052
  %v7054 = vpop.f32.mrb[0].mxu0
  %7055 = vmatprep.mubr.bf16.mxu0 %v5625
  %7056 = vmatmul.mubr.bf16.gmra.mrb[0].mxu0 %v4974
  %v7057 = vpop.f32.mrb[0].mxu0
  %v7058 = vadd.f32 0.0, %v7057
  %v7059 = vpop.f32.mrb[0].mxu0
  %v7060 = vpop.f32.mrb[0].mxu0
  %v7061 = vadd.f32 0.0, %v7060
  %v7062 = vpop.f32.mrb[0].mxu0
  %7063 = vmatprep.mubr.bf16.mxu0 %v5626
  %7064 = vmatmul.mubr.bf16.gmra.mrb[0].mxu0 %v4975
  %v7065 = vpop.f32.mrb[0].mxu0
  %v7066 = vadd.f32 0.0, %v7065
  %v7067 = vpop.f32.mrb[0].mxu0
  %v7068 = vpop.f32.mrb[0].mxu0
  %v7069 = vadd.f32 0.0, %v7068
  %v7070 = vpop.f32.mrb[0].mxu0
  %7071 = vmatprep.mubr.bf16.mxu0 %v5627
  %7072 = vmatmul.mubr.bf16.gmra.mrb[0].mxu0 %v4976
  %v7073 = vpop.f32.mrb[0].mxu0
  %v7074 = vadd.f32 0.0, %v7073
  %v7075 = vpop.f32.mrb[0].mxu0
  %v7076 = vpop.f32.mrb[0].mxu0
  %v7077 = vadd.f32 0.0, %v7076
  %v7078 = vpop.f32.mrb[0].mxu0
  %7079 = vmatprep.mubr.bf16.mxu0 %v5628
  %7080 = vmatmul.mubr.bf16.gmra.mrb[0].mxu0 %v4977
  %v7081 = vpop.f32.mrb[0].mxu0
  %v7082 = vadd.f32 0.0, %v7081
  %v7083 = vpop.f32.mrb[0].mxu0
  %v7084 = vpop.f32.mrb[0].mxu0
  %v7085 = vadd.f32 0.0, %v7084
  %v7086 = vpop.f32.mrb[0].mxu0
  %7087 = vmatprep.mubr.bf16.mxu0 %v5629
  %7088 = vmatmul.mubr.bf16.gmra.mrb[0].mxu0 %v4978
  %v7089 = vpop.f32.mrb[0].mxu0
  %v7090 = vadd.f32 0.0, %v7089
  %v7091 = vpop.f32.mrb[0].mxu0
  %v7092 = vpop.f32.mrb[0].mxu0
  %v7093 = vadd.f32 0.0, %v7092
  %v7094 = vpop.f32.mrb[0].mxu0
  %7095 = vmatprep.mubr.bf16.mxu0 %v5630
  %7096 = vmatmul.mubr.bf16.gmra.mrb[0].mxu0 %v4979
  %v7097 = vpop.f32.mrb[0].mxu0
  %v7098 = vadd.f32 0.0, %v7097
  %v7099 = vpop.f32.mrb[0].mxu0
  %v7100 = vpop.f32.mrb[0].mxu0
  %v7101 = vadd.f32 0.0, %v7100
  %v7102 = vpop.f32.mrb[0].mxu0
  %7103 = vmatprep.mubr.bf16.mxu0 %v5631
  %7104 = vmatmul.mubr.bf16.gmra.mrb[0].mxu0 %v4980
  %v7105 = vpop.f32.mrb[0].mxu0
  %v7106 = vadd.f32 0.0, %v7105
  %v7107 = vpop.f32.mrb[0].mxu0
  %v7108 = vpop.f32.mrb[0].mxu0
  %v7109 = vadd.f32 0.0, %v7108
  %v7110 = vpop.f32.mrb[0].mxu0
  %7111 = vdwg.mxu0
  %7112 = vmatprep.subr.bf16.mxu0 0
  %7113 = vmatpush1.bf16.msra.mxu0 %v6967
  %7114 = vmatprep.subr.bf16.mxu0 0
  %7115 = vmatpush1.bf16.msra.mxu0 %v6968
  %7116 = vmatprep.subr.bf16.mxu0 0
  %7117 = vmatpush1.bf16.msra.mxu0 %v6969
  %7118 = vmatprep.subr.bf16.mxu0 0
  %7119 = vmatpush1.bf16.msra.mxu0 %v6970
  %7120 = vmatprep.subr.bf16.mxu0 0
  %7121 = vmatpush1.bf16.msra.mxu0 %v6971
  %7122 = vmatprep.subr.bf16.mxu0 0
  %7123 = vmatpush1.bf16.msra.mxu0 %v6972
  %7124 = vmatprep.subr.bf16.mxu0 0
  %7125 = vmatpush1.bf16.msra.mxu0 %v6973
  %7126 = vmatprep.subr.bf16.mxu0 0
  %7127 = vmatpush1.bf16.msra.mxu0 %v6974
  %7128 = vmatprep.subr.bf16.mxu0 0
  %7129 = vmatpush1.bf16.msra.mxu0 %v6975
  %7130 = vmatprep.subr.bf16.mxu0 0
  %7131 = vmatpush1.bf16.msra.mxu0 %v6976
  %7132 = vmatprep.subr.bf16.mxu0 0
  %7133 = vmatpush1.bf16.msra.mxu0 %v6977
  %7134 = vmatprep.subr.bf16.mxu0 0
  %7135 = vmatpush1.bf16.msra.mxu0 %v6978
  %7136 = vmatprep.subr.bf16.mxu0 0
  %7137 = vmatpush1.bf16.msra.mxu0 %v6979
  %7138 = vmatprep.subr.bf16.mxu0 0
  %7139 = vmatpush1.bf16.msra.mxu0 %v6980
  %7140 = vmatprep.subr.bf16.mxu0 0
  %7141 = vmatpush1.bf16.msra.mxu0 %v6981
  %7142 = vmatprep.subr.bf16.mxu0 0
  %7143 = vmatpush1.bf16.msra.mxu0 %v6982
  %7144 = vmatprep.mubr.bf16.mxu0 %v5607
  %7145 = vmatmul.mubr.bf16.gmra.mrb[0].mxu0 %v4940
  %v7146 = vpop.f32.mrb[0].mxu0
  %v7147 = vadd.f32 %v7050, %v7146
  %v7148 = vpop.f32.mrb[0].mxu0
  %v7149 = vpop.f32.mrb[0].mxu0
  %v7150 = vadd.f32 %v7053, %v7149
  %v7151 = vpop.f32.mrb[0].mxu0
  %7152 = vmatprep.mubr.bf16.mxu0 %v5608
  %7153 = vmatmul.mubr.bf16.gmra.mrb[0].mxu0 %v4941
  %v7154 = vpop.f32.mrb[0].mxu0
  %v7155 = vadd.f32 %v7058, %v7154
  %v7156 = vpop.f32.mrb[0].mxu0
  %v7157 = vpop.f32.mrb[0].mxu0
  %v7158 = vadd.f32 %v7061, %v7157
  %v7159 = vpop.f32.mrb[0].mxu0
  %7160 = vmatprep.mubr.bf16.mxu0 %v5609
  %7161 = vmatmul.mubr.bf16.gmra.mrb[0].mxu0 %v4942
  %v7162 = vpop.f32.mrb[0].mxu0
  %v7163 = vadd.f32 %v7066, %v7162
  %v7164 = vpop.f32.mrb[0].mxu0
  %v7165 = vpop.f32.mrb[0].mxu0
  %v7166 = vadd.f32 %v7069, %v7165
  %v7167 = vpop.f32.mrb[0].mxu0
  %7168 = vmatprep.mubr.bf16.mxu0 %v6754
  %7169 = vmatmul.mubr.bf16.gmra.mrb[0].mxu0 %v6212
  %v7170 = vpop.f32.mrb[0].mxu0
  %v7171 = vadd.f32 %v7074, %v7170
  %v7172 = vpop.f32.mrb[0].mxu0
  %v7173 = vpop.f32.mrb[0].mxu0
  %v7174 = vadd.f32 %v7077, %v7173
  %v7175 = vpop.f32.mrb[0].mxu0
  %7176 = vmatprep.mubr.bf16.mxu0 %v5611
  %7177 = vmatmul.mubr.bf16.gmra.mrb[0].mxu0 %v4944
  %v7178 = vpop.f32.mrb[0].mxu0
  %v7179 = vadd.f32 %v7082, %v7178
  %v7180 = vpop.f32.mrb[0].mxu0
  %v7181 = vpop.f32.mrb[0].mxu0
  %v7182 = vadd.f32 %v7085, %v7181
  %v7183 = vpop.f32.mrb[0].mxu0
  %7184 = vmatprep.mubr.bf16.mxu0 %v5612
  %7185 = vmatmul.mubr.bf16.gmra.mrb[0].mxu0 %v4945
  %v7186 = vpop.f32.mrb[0].mxu0
  %v7187 = vadd.f32 %v7090, %v7186
  %v7188 = vpop.f32.mrb[0].mxu0
  %v7189 = vpop.f32.mrb[0].mxu0
  %v7190 = vadd.f32 %v7093, %v7189
  %v7191 = vpop.f32.mrb[0].mxu0
  %7192 = vmatprep.mubr.bf16.mxu0 %v5613
  %7193 = vmatmul.mubr.bf16.gmra.mrb[0].mxu0 %v4946
  %v7194 = vpop.f32.mrb[0].mxu0
  %v7195 = vadd.f32 %v7098, %v7194
  %v7196 = vpop.f32.mrb[0].mxu0
  %v7197 = vpop.f32.mrb[0].mxu0
  %v7198 = vadd.f32 %v7101, %v7197
  %v7199 = vpop.f32.mrb[0].mxu0
  %7200 = vmatprep.mubr.bf16.mxu0 %v6755
  %7201 = vmatmul.mubr.bf16.gmra.mrb[0].mxu0 %v6213
  %v7202 = vpop.f32.mrb[0].mxu0
  %v7203 = vadd.f32 %v7106, %v7202
  %v7204 = vpop.f32.mrb[0].mxu0
  %v7205 = vpop.f32.mrb[0].mxu0
  %v7206 = vadd.f32 %v7109, %v7205
  %v7207 = vpop.f32.mrb[0].mxu0
  %7208 = vdwg.mxu0
  %s7209 = scalar_lea.vmem %s3, 384
  %7210 = vst [vmem:[%s7209] sm:$0xff] %v7147
  %7211 = vst [vmem:[%s7209 + $0x8] sm:$0xff] %v7150
  %7212 = vst [vmem:[%s7209 + $0x10] sm:$0xff] %v7155
  %7213 = vst [vmem:[%s7209 + $0x18] sm:$0xff] %v7158
  %7214 = vst [vmem:[%s7209 + $0x20] sm:$0xff] %v7163
  %7215 = vst [vmem:[%s7209 + $0x28] sm:$0xff] %v7166
  %7216 = vst [vmem:[%s7209 + $0x30] sm:$0xff] %v7171
  %7217 = vst [vmem:[%s7209 + $0x38] sm:$0xff] %v7174
  %7218 = vst [vmem:[%s7209 + $0x40] sm:$0xff] %v7179
  %7219 = vst [vmem:[%s7209 + $0x48] sm:$0xff] %v7182
  %7220 = vst [vmem:[%s7209 + $0x50] sm:$0xff] %v7187
  %7221 = vst [vmem:[%s7209 + $0x58] sm:$0xff] %v7190
  %7222 = vst [vmem:[%s7209 + $0x60] sm:$0xff] %v7195
  %7223 = vst [vmem:[%s7209 + $0x68] sm:$0xff] %v7198
  %7224 = vst [vmem:[%s7209 + $0x70] sm:$0xff] %v7203
  %7225 = vst [vmem:[%s7209 + $0x78] sm:$0xff] %v7206
  %v7226 = vadd.f32 %v7147, %v7150
  %v7227 = vadd.f32 %v7226, %v7155
  %v7228 = vadd.f32 %v7227, %v7158
  %v7229 = vadd.f32 %v7228, %v7163
  %v7230 = vadd.f32 %v7229, %v7166
  %v7231 = vadd.f32 %v7230, %v7171
  %v7232 = vadd.f32 %v7231, %v7174
  %v7233 = vadd.f32 %v7232, %v7179
  %v7234 = vadd.f32 %v7233, %v7182
  %v7235 = vadd.f32 %v7234, %v7187
  %v7236 = vadd.f32 %v7235, %v7190
  %v7237 = vadd.f32 %v7236, %v7195
  %v7238 = vadd.f32 %v7237, %v7198
  %v7239 = vadd.f32 %v7238, %v7203
  %v7240 = vadd.f32 %v7239, %v7206
  %v7241 = vrot.slane %v7240, 4
  %v7242 = vadd.f32 %v7240, %v7241
  %v7243 = vrot.slane %v7242, 2
  %v7244 = vadd.f32 %v7242, %v7243
  %v7245 = vrot.slane %v7244, 1
  %v7246 = vadd.f32 %v7244, %v7245
  %v7247 = vadd.f32 %v6705, %v7246
  %v7248 = vmul.f32 %v7147, %v7147
  %v7249 = vmul.f32 %v7150, %v7150
  %v7250 = vmul.f32 %v7155, %v7155
  %v7251 = vmul.f32 %v7158, %v7158
  %v7252 = vmul.f32 %v7163, %v7163
  %v7253 = vmul.f32 %v7166, %v7166
  %v7254 = vmul.f32 %v7171, %v7171
  %v7255 = vmul.f32 %v7174, %v7174
  %v7256 = vmul.f32 %v7179, %v7179
  %v7257 = vmul.f32 %v7182, %v7182
  %v7258 = vmul.f32 %v7187, %v7187
  %v7259 = vmul.f32 %v7190, %v7190
  %v7260 = vmul.f32 %v7195, %v7195
  %v7261 = vmul.f32 %v7198, %v7198
  %v7262 = vmul.f32 %v7203, %v7203
  %v7263 = vmul.f32 %v7206, %v7206
  %v7264 = vadd.f32 %v7248, %v7249
  %v7265 = vadd.f32 %v7264, %v7250
  %v7266 = vadd.f32 %v7265, %v7251
  %v7267 = vadd.f32 %v7266, %v7252
  %v7268 = vadd.f32 %v7267, %v7253
  %v7269 = vadd.f32 %v7268, %v7254
  %v7270 = vadd.f32 %v7269, %v7255
  %v7271 = vadd.f32 %v7270, %v7256
  %v7272 = vadd.f32 %v7271, %v7257
  %v7273 = vadd.f32 %v7272, %v7258
  %v7274 = vadd.f32 %v7273, %v7259
  %v7275 = vadd.f32 %v7274, %v7260
  %v7276 = vadd.f32 %v7275, %v7261
  %v7277 = vadd.f32 %v7276, %v7262
  %v7278 = vadd.f32 %v7277, %v7263
  %v7279 = vrot.slane %v7278, 4
  %v7280 = vadd.f32 %v7278, %v7279
  %v7281 = vrot.slane %v7280, 2
  %v7282 = vadd.f32 %v7280, %v7281
  %v7283 = vrot.slane %v7282, 1
  %v7284 = vadd.f32 %v7282, %v7283
  %v7285 = vadd.f32 %v6743, %v7284
  %7286 = vst [vmem:[%s4] sm:$0x1] %v7247
  %7287 = vst [vmem:[%s4 + $0x1] sm:$0x1] %v7285
  // Predicated region
  $region14: #{unet_innermost_forward.1} parent=0 // pred_check
    _
  $region15: #{unet_innermost_forward.1} parent=0 // pred_check_branch
    %7289 = sbr.rel (0) target = $region17
  $region16: #{unet_innermost_forward.1} parent=0 // pred_region
    _
  $region17: #{unet_innermost_forward.1} parent=0 // pred_fallthru
    _
  // Predicated region
  $region18: #{unet_innermost_forward.1} parent=0 // pred_check
    _
  $region19: #{unet_innermost_forward.1} parent=0 // pred_check_branch
    %7291 = sbr.rel (0) target = $region21
  $region20: #{unet_innermost_forward.1} parent=0 // pred_region
    _
  $region21: #{unet_innermost_forward.1} parent=0 // pred_fallthru
    _
  // Predicated region
  $region22: #{unet_innermost_forward.1} parent=0 // pred_check
    _
  $region23: #{unet_innermost_forward.1} parent=0 // pred_check_branch
    %7293 = sbr.rel (0) target = $region25
  $region24: #{unet_innermost_forward.1} parent=0 // pred_region
    _
  $region25: #{unet_innermost_forward.1} parent=0 // pred_fallthru
    _
  // Predicated region
  $region26: #{unet_innermost_forward.1} parent=0 // pred_check
    _
  $region27: #{unet_innermost_forward.1} parent=0 // pred_check_branch
    %7295 = sbr.rel (0) target = $region29
  $region28: #{unet_innermost_forward.1} parent=0 // pred_region
    _
  $region29: #{unet_innermost_forward.1} parent=0 // pred_fallthru
    _

</llo_original>
